<compile_context>
chip_gen: v5e
topology: v5e:2x2
jax: 0.10.0
libtpu: 0.0.40
codegen_flags: <defaults>
</compile_context>

<pallas_src>
import jax
import jax.numpy as jnp
from jax.experimental import pallas as pl
from jax.experimental.pallas import tpu as pltpu

REF_PREC = jax.lax.Precision.HIGHEST   # reference precision (faithful f32)


# ---------------------------------------------------------------------------
# Kernel 1: fused conv1 -> conv2 -> conv3 (all ReLU), gridded over batch
# ---------------------------------------------------------------------------
def conv_stack_kernel(xp_ref, w1_ref, b1_ref, w2_ref, b2_ref, w3_ref, b3_ref,
                      out_ref, halo_ref):
    # xp_ref  : [nb, B*B, 9*cin] bf16   im2col'd 2-plane input (built by XLA)
    # w1_ref  : [9*cin, C]       bf16   conv1 weights, rows ordered (kh,kw,cin)
    # w2/w3   : [9*C, C]         bf16   conv2/3 weights, rows ordered (kh,kw,cin)
    # b*_ref  : [1, C]           f32
    # out_ref : [nb, B*B, C]     bf16   conv3 activations (NHWC flatten order)
    # halo_ref: [nb, B+2, B+2, C] f32   zero-bordered scratch reused by conv2/3
    nb = xp_ref.shape[0]
    C = out_ref.shape[-1]
    H = halo_ref.shape[1] - 2
    W = halo_ref.shape[2] - 2
    M = nb * H * W

    # Zero only the four halo border strips (the interior is fully overwritten
    # before every read).  Re-done each grid step so correctness does not
    # depend on which TensorCore ran step 0 under "parallel" sharding.
    zrow = jnp.zeros((nb, 1, W + 2, C), halo_ref.dtype)
    zcol = jnp.zeros((nb, H + 2, 1, C), halo_ref.dtype)
    halo_ref[:, 0:1, :, :] = zrow
    halo_ref[:, H + 1:H + 2, :, :] = zrow
    halo_ref[:, :, 0:1, :] = zcol
    halo_ref[:, :, W + 1:W + 2, :] = zcol

    def mm_bias_relu(lhs_bf16, w_ref, b_ref):
        acc = jnp.dot(lhs_bf16, w_ref[...], preferred_element_type=jnp.float32)
        return jnp.maximum(acc + b_ref[...], 0.0)            # f32

    # conv1: slim K = 9*cin (=18) contraction; patches arrive pre-built.
    h = mm_bias_relu(xp_ref[...].reshape(M, xp_ref.shape[-1]), w1_ref, b1_ref)
    halo_ref[:, 1:H + 1, 1:W + 1, :] = h.reshape(nb, H, W, C)

    def patches():
        # In-kernel im2col from the VMEM halo buffer: [M, 9*C], columns ordered
        # (tap, channel) to match the weight-matrix row order.  Gather/concat in
        # f32 (proven lowering), one cast to bf16 for the native MXU path.
        taps = [halo_ref[:, dy:dy + H, dx:dx + W, :]
                for dy in range(3) for dx in range(3)]
        return jnp.concatenate(taps, axis=-1).reshape(M, 9 * C).astype(jnp.bfloat16)

    h = mm_bias_relu(patches(), w2_ref, b2_ref)
    halo_ref[:, 1:H + 1, 1:W + 1, :] = h.reshape(nb, H, W, C)
    h = mm_bias_relu(patches(), w3_ref, b3_ref)
    out_ref[...] = h.reshape(nb, H * W, C).astype(out_ref.dtype)


# ---------------------------------------------------------------------------
# Kernel 2: policy + value head (fused matmul, softmax, tanh), gridded over N
# ---------------------------------------------------------------------------
def _make_head_kernel(P):
    def head_kernel(f_ref, w_ref, b_ref, out_ref):
        # f_ref: [tn, F] bf16; w_ref: [F, Ppad] bf16 (= [fc1 | fc2 | 0-pad]);
        # b_ref: [1, Ppad] f32; out_ref: [tn, Ppad] f32
        #   cols [0, P)  -> softmax(move logits)
        #   col  P       -> tanh(value logit)
        #   cols > P     -> 0 (padding, sliced off by the wrapper)
        tn, Ppad = out_ref.shape
        z = jnp.dot(f_ref[...], w_ref[...],
                    preferred_element_type=jnp.float32) + b_ref[...]
        col = jax.lax.broadcasted_iota(jnp.int32, (tn, Ppad), 1)
        logits = jnp.where(col < P, z, jnp.float32(-1e30))
        m = jnp.max(logits, axis=1, keepdims=True)
        e = jnp.exp(logits - m)
        probs = e / jnp.sum(e, axis=1, keepdims=True)         # softmax(dim=1)
        out_ref[...] = jnp.where(col == P, jnp.tanh(z), probs)
    return head_kernel


# ---------------------------------------------------------------------------
# Block-size selection helpers
# ---------------------------------------------------------------------------
def _conv_block(n, target):
    # Boards per conv grid step: cap at `target`, but keep >= 2 grid steps for
    # any N >= 2 so megacore "parallel" sharding has work for both TCs on v7x.
    if n <= 1:
        return 1
    return max(1, min(target, (n + 1) // 2))


def _head_rows(npad, target):
    # Rows per head grid step: a multiple of 16 (bf16 sublane tiling) dividing
    # the padded batch, preferring >= 2 grid steps; otherwise one full block.
    if npad <= 16 or npad % 16 != 0:
        return npad
    cap = min(target, npad // 2)
    d = cap - (cap % 16)
    while d >= 16:
        if npad % d == 0:
            return d
        d -= 16
    return npad


# ---------------------------------------------------------------------------
# Forward wrapper
# ---------------------------------------------------------------------------
def go_nn_forward(params, x_nchw, *, boards_per_block=64, head_rows_per_block=256):
    N, cin, H, W = x_nchw.shape
    C = params["b1"].shape[-1]
    P = H * W
    Ppad = params["head_w"].shape[-1]
    F = C * H * W

    # --- batch blocking: pad N up instead of silently shrinking the block ----
    # Per-board VMEM is ~0.35 MB (f32 halo + f32 im2col temp + bf16 copies), so
    # nb=64 stays well under the 48 MiB scoped limit below.  Halve
    # boards_per_block if sizing near the limit on v7x (64 MiB physical VMEM).
    nb = _conv_block(N, boards_per_block)
    Npad = -(-N // nb) * nb
    if Npad != N:
        x_nchw = jnp.pad(x_nchw, ((0, Npad - N), (0, 0), (0, 0), (0, 0)))

    # --- input im2col in XLA (cin=2 -> only 18 channels, ~4.5 KB/board) ------
    # Absorbs the NCHW->NHWC transpose and gives conv1 a slim K=18 contraction.
    xpad = jnp.pad(x_nchw, ((0, 0), (0, 0), (1, 1), (1, 1)))
    taps = [xpad[:, :, dy:dy + H, dx:dx + W] for dy in range(3) for dx in range(3)]
    xp = jnp.stack(taps, axis=1)                    # [Npad, 9, cin, H, W]
    xp = jnp.transpose(xp, (0, 3, 4, 1, 2))         # [Npad, H, W, 9, cin]
    xp = xp.reshape(Npad, H * W, 9 * cin).astype(jnp.bfloat16)

    def full(a):
        return pl.BlockSpec(a.shape, lambda i, nd=a.ndim: (0,) * nd)

    cp = pltpu.CompilerParams(
        dimension_semantics=("parallel",),          # shard batch over v7x's 2 TCs
        vmem_limit_bytes=48 * 1024 * 1024)          # > v5e 16 MiB default, < v7x 64 MiB

    conv_out = pl.pallas_call(
        conv_stack_kernel,
        out_shape=jax.ShapeDtypeStruct((Npad, H * W, C), jnp.bfloat16),
        grid_spec=pltpu.PrefetchScalarGridSpec(
            num_scalar_prefetch=0,
            grid=(Npad // nb,),
            in_specs=[
                pl.BlockSpec((nb, H * W, 9 * cin), lambda i: (i, 0, 0)),
                full(params["w1"]), full(params["b1"]),
                full(params["w2"]), full(params["b2"]),
                full(params["w3"]), full(params["b3"]),
            ],
            out_specs=pl.BlockSpec((nb, H * W, C), lambda i: (i, 0, 0)),
            scratch_shapes=[pltpu.VMEM((nb, H + 2, W + 2, C), jnp.float32)],
        ),
        compiler_params=cp,
    )(xp, params["w1"], params["b1"], params["w2"], params["b2"],
      params["w3"], params["b3"])

    # NHWC flatten is a free row-major reshape on the HBM array; head weights
    # were row-permuted at prep time so torch's NCHW .view() semantics hold.
    feats = conv_out.reshape(Npad, F)

    tn = _head_rows(Npad, head_rows_per_block)
    head_out = pl.pallas_call(
        _make_head_kernel(P),
        out_shape=jax.ShapeDtypeStruct((Npad, Ppad), jnp.float32),
        grid_spec=pltpu.PrefetchScalarGridSpec(
            num_scalar_prefetch=0,
            grid=(Npad // tn,),
            in_specs=[
                pl.BlockSpec((tn, F), lambda i: (i, 0)),
                full(params["head_w"]), full(params["head_b"]),
            ],
            out_specs=pl.BlockSpec((tn, Ppad), lambda i: (i, 0)),
        ),
        compiler_params=cp,
    )(feats, params["head_w"], params["head_b"])

    move_probs = head_out[:N, :P]
    state_value = head_out[:N, P:P + 1]
    return move_probs, state_value


# ---------------------------------------------------------------------------
# Deterministic parameter setup (PyTorch layouts -> kernel layouts)
# ---------------------------------------------------------------------------
def init_raw_params(key, board_size):
    F = 64 * board_size * board_size
    P = board_size * board_size
    ks = jax.random.split(key, 10)
    return {
        "c1_w": jax.random.normal(ks[0], (64, 2, 3, 3), jnp.float32) * 0.05,
        "c1_b": jax.random.normal(ks[1], (64,), jnp.float32) * 0.01,
        "c2_w": jax.random.normal(ks[2], (64, 64, 3, 3), jnp.float32) * 0.05,
        "c2_b": jax.random.normal(ks[3], (64,), jnp.float32) * 0.01,
        "c3_w": jax.random.normal(ks[4], (64, 64, 3, 3), jnp.float32) * 0.05,
        "c3_b": jax.random.normal(ks[5], (64,), jnp.float32) * 0.01,
        "fc1_w": jax.random.normal(ks[6], (P, F), jnp.float32) * 0.02,
        "fc1_b": jax.random.normal(ks[7], (P,), jnp.float32) * 0.01,
        "fc2_w": jax.random.normal(ks[8], (1, F), jnp.float32) * 0.02,
        "fc2_b": jax.random.normal(ks[9], (1,), jnp.float32) * 0.01,
    }


def to_kernel_params(raw, board_size):
    C = raw["c1_w"].shape[0]                     # 64
    H = W = board_size
    P = board_size * board_size
    Ppad = -(-(P + 1) // 128) * 128              # fc1|fc2 columns padded to 128k

    def conv_mat(w):
        # [Cout, Cin, 3, 3] -> [9*Cin, Cout], rows ordered (kh, kw, cin) to
        # match the (tap, channel) im2col column order.  bf16 for the MXU.
        cout = w.shape[0]
        return jnp.transpose(w, (2, 3, 1, 0)).reshape(-1, cout).astype(jnp.bfloat16)

    def fc_nhwc(w):
        # torch rows indexed by NCHW flatten (c*H*W + i*W + j) -> NHWC flatten
        # ((i*W + j)*C + c), then transpose to [F, out].
        out = w.shape[0]
        return jnp.transpose(w.reshape(out, C, H, W), (0, 2, 3, 1)
                             ).reshape(out, H * W * C).T

    head_w = jnp.concatenate([fc_nhwc(raw["fc1_w"]), fc_nhwc(raw["fc2_w"])],
                             axis=1)                              # [F, P+1]
    head_w = jnp.pad(head_w, ((0, 0), (0, Ppad - (P + 1)))).astype(jnp.bfloat16)
    head_b = jnp.pad(jnp.concatenate([raw["fc1_b"], raw["fc2_b"]]),
                     (0, Ppad - (P + 1))).reshape(1, Ppad).astype(jnp.float32)
    return {
        "w1": conv_mat(raw["c1_w"]), "b1": raw["c1_b"].reshape(1, C),
        "w2": conv_mat(raw["c2_w"]), "b2": raw["c2_b"].reshape(1, C),
        "w3": conv_mat(raw["c3_w"]), "b3": raw["c3_b"].reshape(1, C),
        "head_w": head_w, "head_b": head_b,
    }


# ---------------------------------------------------------------------------
# Pure-JAX reference (mirrors the PyTorch forward exactly, f32/HIGHEST)
# ---------------------------------------------------------------------------
def reference_forward(raw, x_nchw):
    def conv(x, w, b):
        y = jax.lax.conv_general_dilated(
            x, w, (1, 1), ((1, 1), (1, 1)),
            dimension_numbers=("NCHW", "OIHW", "NCHW"), precision=REF_PREC)
        return jax.nn.relu(y + b[None, :, None, None])
    h = conv(x_nchw, raw["c1_w"], raw["c1_b"])
    h = conv(h, raw["c2_w"], raw["c2_b"])
    h = conv(h, raw["c3_w"], raw["c3_b"])
    f = h.reshape(x_nchw.shape[0], -1)
    probs = jax.nn.softmax(
        jnp.dot(f, raw["fc1_w"].T, precision=REF_PREC) + raw["fc1_b"], axis=1)
    value = jnp.tanh(jnp.dot(f, raw["fc2_w"].T, precision=REF_PREC) + raw["fc2_b"])
    return probs, value


if __name__ == "__main__":
    board_size = 8
    batch = 8                          # conv grid: 2 blocks x 4 boards each
    key = jax.random.PRNGKey(0)
    k_param, k_x = jax.random.split(key)

    raw = init_raw_params(k_param, board_size)
    params = to_kernel_params(raw, board_size)

    # input: NCHW, 2 channels (black/white stone planes)
    x = (jax.random.uniform(k_x, (batch, 2, board_size, board_size)) > 0.5
         ).astype(jnp.float32)

    fwd = jax.jit(go_nn_forward)
    move_probs, state_value = fwd(params, x)
    jax.block_until_ready((move_probs, state_value))

    ref_probs, ref_value = reference_forward(raw, x)

    assert move_probs.shape == (batch, board_size * board_size)
    assert state_value.shape == (batch, 1)
    assert jnp.allclose(jnp.sum(move_probs, axis=1), 1.0, atol=1e-5)
    # Kernel uses bf16 weights/activations with f32 accumulation (per perf
    # review); compare against the f32 HIGHEST reference with bf16 tolerances.
    assert jnp.allclose(move_probs, ref_probs, atol=1e-3, rtol=1e-2)
    assert jnp.allclose(state_value, ref_value, atol=1e-2, rtol=1e-2)

    print("KERNEL_OK")
</pallas_src>

<mosaic_0001>
module attributes {stable_mosaic.version = 11 : i64} {
  func.func @conv_stack_kernel(%arg0: i32, %arg1: memref<4x64x18xbf16, #tpu.memory_space<vmem>>, %arg2: memref<18x64xbf16, #tpu.memory_space<vmem>>, %arg3: memref<1x64xf32, #tpu.memory_space<vmem>>, %arg4: memref<576x64xbf16, #tpu.memory_space<vmem>>, %arg5: memref<1x64xf32, #tpu.memory_space<vmem>>, %arg6: memref<576x64xbf16, #tpu.memory_space<vmem>>, %arg7: memref<1x64xf32, #tpu.memory_space<vmem>>, %arg8: memref<4x64x64xbf16, #tpu.memory_space<vmem>>, %arg9: memref<4x10x10x64xf32, #tpu.memory_space<vmem>>) attributes {dimension_semantics = [#tpu.dimension_semantics<parallel>], iteration_bounds = array<i64: 2>, scalar_prefetch = 0 : i64, scratch_operands = 1 : i64, tpu.core_type = #tpu.core_type<tc>, window_params = [{transform_indices = @transform_0, window_bounds = array<i64: 4, 64, 18>}, {pipeline_mode = #tpu.pipeline_mode<synchronous>, transform_indices = @transform_1, window_bounds = array<i64: 18, 64>}, {pipeline_mode = #tpu.pipeline_mode<synchronous>, transform_indices = @transform_2, window_bounds = array<i64: 1, 64>}, {pipeline_mode = #tpu.pipeline_mode<synchronous>, transform_indices = @transform_3, window_bounds = array<i64: 576, 64>}, {pipeline_mode = #tpu.pipeline_mode<synchronous>, transform_indices = @transform_4, window_bounds = array<i64: 1, 64>}, {pipeline_mode = #tpu.pipeline_mode<synchronous>, transform_indices = @transform_5, window_bounds = array<i64: 576, 64>}, {pipeline_mode = #tpu.pipeline_mode<synchronous>, transform_indices = @transform_6, window_bounds = array<i64: 1, 64>}, {transform_indices = @transform_7, window_bounds = array<i64: 4, 64, 64>}]} {
    %cst = arith.constant 0.000000e+00 : f32
    %0 = vector.broadcast %cst : f32 to vector<4x1x10x64xf32>
    %cst_0 = arith.constant 0.000000e+00 : f32
    %1 = vector.broadcast %cst_0 : f32 to vector<4x10x1x64xf32>
    %c0 = arith.constant 0 : index
    %c0_1 = arith.constant 0 : index
    %c0_2 = arith.constant 0 : index
    %c0_3 = arith.constant 0 : index
    %2 = vector.load %arg9[%c0, %c0_1, %c0_2, %c0_3] : memref<4x10x10x64xf32, #tpu.memory_space<vmem>>, vector<4x1x10x64xf32>
    tpu.vector_store %arg9[%c0, %c0_1, %c0_2, %c0_3], %0 {strides = array<i32>} : memref<4x10x10x64xf32, #tpu.memory_space<vmem>>, vector<4x1x10x64xf32>,
    %c0_4 = arith.constant 0 : index
    %c9 = arith.constant 9 : index
    %c0_5 = arith.constant 0 : index
    %c0_6 = arith.constant 0 : index
    %3 = vector.load %arg9[%c0_4, %c9, %c0_5, %c0_6] : memref<4x10x10x64xf32, #tpu.memory_space<vmem>>, vector<4x1x10x64xf32>
    tpu.vector_store %arg9[%c0_4, %c9, %c0_5, %c0_6], %0 {strides = array<i32>} : memref<4x10x10x64xf32, #tpu.memory_space<vmem>>, vector<4x1x10x64xf32>,
    %c0_7 = arith.constant 0 : index
    %c0_8 = arith.constant 0 : index
    %c0_9 = arith.constant 0 : index
    %c0_10 = arith.constant 0 : index
    %4 = vector.load %arg9[%c0_7, %c0_8, %c0_9, %c0_10] : memref<4x10x10x64xf32, #tpu.memory_space<vmem>>, vector<4x10x1x64xf32>
    tpu.vector_store %arg9[%c0_7, %c0_8, %c0_9, %c0_10], %1 {strides = array<i32>} : memref<4x10x10x64xf32, #tpu.memory_space<vmem>>, vector<4x10x1x64xf32>,
    %c0_11 = arith.constant 0 : index
    %c0_12 = arith.constant 0 : index
    %c9_13 = arith.constant 9 : index
    %c0_14 = arith.constant 0 : index
    %5 = vector.load %arg9[%c0_11, %c0_12, %c9_13, %c0_14] : memref<4x10x10x64xf32, #tpu.memory_space<vmem>>, vector<4x10x1x64xf32>
    tpu.vector_store %arg9[%c0_11, %c0_12, %c9_13, %c0_14], %1 {strides = array<i32>} : memref<4x10x10x64xf32, #tpu.memory_space<vmem>>, vector<4x10x1x64xf32>,
    %c0_15 = arith.constant 0 : index
    %c0_16 = arith.constant 0 : index
    %c0_17 = arith.constant 0 : index
    %6 = vector.load %arg1[%c0_15, %c0_16, %c0_17] : memref<4x64x18xbf16, #tpu.memory_space<vmem>>, vector<4x64x18xbf16>
    %7 = vector.shape_cast %6 : vector<4x64x18xbf16> to vector<256x18xbf16>
    %c0_18 = arith.constant 0 : index
    %c0_19 = arith.constant 0 : index
    %8 = vector.load %arg2[%c0_18, %c0_19] : memref<18x64xbf16, #tpu.memory_space<vmem>>, vector<18x64xbf16>
    %cst_20 = arith.constant dense<0.000000e+00> : vector<256x64xf32>
    %9 = tpu.matmul %7, %8, %cst_20 {dimension_numbers = #tpu.dot_dimension_numbers<[1], [0], [0], [1], [0, 0, 1, 1], [], []>} : vector<256x18xbf16>, vector<18x64xbf16>, vector<256x64xf32> -> vector<256x64xf32>
    %c0_21 = arith.constant 0 : index
    %c0_22 = arith.constant 0 : index
    %10 = vector.load %arg3[%c0_21, %c0_22] : memref<1x64xf32, #tpu.memory_space<vmem>>, vector<1x64xf32>
    %11 = vector.broadcast %10 : vector<1x64xf32> to vector<256x64xf32>
    %12 = arith.addf %9, %11 : vector<256x64xf32>
    %cst_23 = arith.constant 0.000000e+00 : f32
    %13 = vector.broadcast %cst_23 : f32 to vector<256x64xf32>
    %14 = arith.maximumf %12, %13 : vector<256x64xf32>
    %15 = vector.shape_cast %14 : vector<256x64xf32> to vector<4x8x8x64xf32>
    %c0_24 = arith.constant 0 : index
    %c1 = arith.constant 1 : index
    %c1_25 = arith.constant 1 : index
    %c0_26 = arith.constant 0 : index
    %16 = vector.load %arg9[%c0_24, %c1, %c1_25, %c0_26] : memref<4x10x10x64xf32, #tpu.memory_space<vmem>>, vector<4x8x8x64xf32>
    tpu.vector_store %arg9[%c0_24, %c1, %c1_25, %c0_26], %15 {strides = array<i32>} : memref<4x10x10x64xf32, #tpu.memory_space<vmem>>, vector<4x8x8x64xf32>,
    %c0_27 = arith.constant 0 : index
    %c0_28 = arith.constant 0 : index
    %c0_29 = arith.constant 0 : index
    %c0_30 = arith.constant 0 : index
    %17 = vector.load %arg9[%c0_27, %c0_28, %c0_29, %c0_30] : memref<4x10x10x64xf32, #tpu.memory_space<vmem>>, vector<4x8x8x64xf32>
    %c0_31 = arith.constant 0 : index
    %c0_32 = arith.constant 0 : index
    %c1_33 = arith.constant 1 : index
    %c0_34 = arith.constant 0 : index
    %18 = vector.load %arg9[%c0_31, %c0_32, %c1_33, %c0_34] : memref<4x10x10x64xf32, #tpu.memory_space<vmem>>, vector<4x8x8x64xf32>
    %c0_35 = arith.constant 0 : index
    %c0_36 = arith.constant 0 : index
    %c2 = arith.constant 2 : index
    %c0_37 = arith.constant 0 : index
    %19 = vector.load %arg9[%c0_35, %c0_36, %c2, %c0_37] : memref<4x10x10x64xf32, #tpu.memory_space<vmem>>, vector<4x8x8x64xf32>
    %c0_38 = arith.constant 0 : index
    %c1_39 = arith.constant 1 : index
    %c0_40 = arith.constant 0 : index
    %c0_41 = arith.constant 0 : index
    %20 = vector.load %arg9[%c0_38, %c1_39, %c0_40, %c0_41] : memref<4x10x10x64xf32, #tpu.memory_space<vmem>>, vector<4x8x8x64xf32>
    %c0_42 = arith.constant 0 : index
    %c1_43 = arith.constant 1 : index
    %c1_44 = arith.constant 1 : index
    %c0_45 = arith.constant 0 : index
    %21 = vector.load %arg9[%c0_42, %c1_43, %c1_44, %c0_45] : memref<4x10x10x64xf32, #tpu.memory_space<vmem>>, vector<4x8x8x64xf32>
    %c0_46 = arith.constant 0 : index
    %c1_47 = arith.constant 1 : index
    %c2_48 = arith.constant 2 : index
    %c0_49 = arith.constant 0 : index
    %22 = vector.load %arg9[%c0_46, %c1_47, %c2_48, %c0_49] : memref<4x10x10x64xf32, #tpu.memory_space<vmem>>, vector<4x8x8x64xf32>
    %c0_50 = arith.constant 0 : index
    %c2_51 = arith.constant 2 : index
    %c0_52 = arith.constant 0 : index
    %c0_53 = arith.constant 0 : index
    %23 = vector.load %arg9[%c0_50, %c2_51, %c0_52, %c0_53] : memref<4x10x10x64xf32, #tpu.memory_space<vmem>>, vector<4x8x8x64xf32>
    %c0_54 = arith.constant 0 : index
    %c2_55 = arith.constant 2 : index
    %c1_56 = arith.constant 1 : index
    %c0_57 = arith.constant 0 : index
    %24 = vector.load %arg9[%c0_54, %c2_55, %c1_56, %c0_57] : memref<4x10x10x64xf32, #tpu.memory_space<vmem>>, vector<4x8x8x64xf32>
    %c0_58 = arith.constant 0 : index
    %c2_59 = arith.constant 2 : index
    %c2_60 = arith.constant 2 : index
    %c0_61 = arith.constant 0 : index
    %25 = vector.load %arg9[%c0_58, %c2_59, %c2_60, %c0_61] : memref<4x10x10x64xf32, #tpu.memory_space<vmem>>, vector<4x8x8x64xf32>
    %26 = tpu.concatenate %17, %18, %19, %20, %21, %22, %23, %24, %25 in 3 : vector<4x8x8x64xf32>, vector<4x8x8x64xf32>, vector<4x8x8x64xf32>, vector<4x8x8x64xf32>, vector<4x8x8x64xf32>, vector<4x8x8x64xf32>, vector<4x8x8x64xf32>, vector<4x8x8x64xf32>, vector<4x8x8x64xf32> -> vector<4x8x8x576xf32>
    %27 = vector.shape_cast %26 : vector<4x8x8x576xf32> to vector<256x576xf32>
    %28 = arith.truncf %27 : vector<256x576xf32> to vector<256x576xbf16>
    %c0_62 = arith.constant 0 : index
    %c0_63 = arith.constant 0 : index
    %29 = vector.load %arg4[%c0_62, %c0_63] : memref<576x64xbf16, #tpu.memory_space<vmem>>, vector<576x64xbf16>
    %cst_64 = arith.constant dense<0.000000e+00> : vector<256x64xf32>
    %30 = tpu.matmul %28, %29, %cst_64 {dimension_numbers = #tpu.dot_dimension_numbers<[1], [0], [0], [1], [0, 0, 1, 1], [], []>} : vector<256x576xbf16>, vector<576x64xbf16>, vector<256x64xf32> -> vector<256x64xf32>
    %c0_65 = arith.constant 0 : index
    %c0_66 = arith.constant 0 : index
    %31 = vector.load %arg5[%c0_65, %c0_66] : memref<1x64xf32, #tpu.memory_space<vmem>>, vector<1x64xf32>
    %32 = vector.broadcast %31 : vector<1x64xf32> to vector<256x64xf32>
    %33 = arith.addf %30, %32 : vector<256x64xf32>
    %cst_67 = arith.constant 0.000000e+00 : f32
    %34 = vector.broadcast %cst_67 : f32 to vector<256x64xf32>
    %35 = arith.maximumf %33, %34 : vector<256x64xf32>
    %36 = vector.shape_cast %35 : vector<256x64xf32> to vector<4x8x8x64xf32>
    %c0_68 = arith.constant 0 : index
    %c1_69 = arith.constant 1 : index
    %c1_70 = arith.constant 1 : index
    %c0_71 = arith.constant 0 : index
    %37 = vector.load %arg9[%c0_68, %c1_69, %c1_70, %c0_71] : memref<4x10x10x64xf32, #tpu.memory_space<vmem>>, vector<4x8x8x64xf32>
    tpu.vector_store %arg9[%c0_68, %c1_69, %c1_70, %c0_71], %36 {strides = array<i32>} : memref<4x10x10x64xf32, #tpu.memory_space<vmem>>, vector<4x8x8x64xf32>,
    %c0_72 = arith.constant 0 : index
    %c0_73 = arith.constant 0 : index
    %c0_74 = arith.constant 0 : index
    %c0_75 = arith.constant 0 : index
    %38 = vector.load %arg9[%c0_72, %c0_73, %c0_74, %c0_75] : memref<4x10x10x64xf32, #tpu.memory_space<vmem>>, vector<4x8x8x64xf32>
    %c0_76 = arith.constant 0 : index
    %c0_77 = arith.constant 0 : index
    %c1_78 = arith.constant 1 : index
    %c0_79 = arith.constant 0 : index
    %39 = vector.load %arg9[%c0_76, %c0_77, %c1_78, %c0_79] : memref<4x10x10x64xf32, #tpu.memory_space<vmem>>, vector<4x8x8x64xf32>
    %c0_80 = arith.constant 0 : index
    %c0_81 = arith.constant 0 : index
    %c2_82 = arith.constant 2 : index
    %c0_83 = arith.constant 0 : index
    %40 = vector.load %arg9[%c0_80, %c0_81, %c2_82, %c0_83] : memref<4x10x10x64xf32, #tpu.memory_space<vmem>>, vector<4x8x8x64xf32>
    %c0_84 = arith.constant 0 : index
    %c1_85 = arith.constant 1 : index
    %c0_86 = arith.constant 0 : index
    %c0_87 = arith.constant 0 : index
    %41 = vector.load %arg9[%c0_84, %c1_85, %c0_86, %c0_87] : memref<4x10x10x64xf32, #tpu.memory_space<vmem>>, vector<4x8x8x64xf32>
    %c0_88 = arith.constant 0 : index
    %c1_89 = arith.constant 1 : index
    %c1_90 = arith.constant 1 : index
    %c0_91 = arith.constant 0 : index
    %42 = vector.load %arg9[%c0_88, %c1_89, %c1_90, %c0_91] : memref<4x10x10x64xf32, #tpu.memory_space<vmem>>, vector<4x8x8x64xf32>
    %c0_92 = arith.constant 0 : index
    %c1_93 = arith.constant 1 : index
    %c2_94 = arith.constant 2 : index
    %c0_95 = arith.constant 0 : index
    %43 = vector.load %arg9[%c0_92, %c1_93, %c2_94, %c0_95] : memref<4x10x10x64xf32, #tpu.memory_space<vmem>>, vector<4x8x8x64xf32>
    %c0_96 = arith.constant 0 : index
    %c2_97 = arith.constant 2 : index
    %c0_98 = arith.constant 0 : index
    %c0_99 = arith.constant 0 : index
    %44 = vector.load %arg9[%c0_96, %c2_97, %c0_98, %c0_99] : memref<4x10x10x64xf32, #tpu.memory_space<vmem>>, vector<4x8x8x64xf32>
    %c0_100 = arith.constant 0 : index
    %c2_101 = arith.constant 2 : index
    %c1_102 = arith.constant 1 : index
    %c0_103 = arith.constant 0 : index
    %45 = vector.load %arg9[%c0_100, %c2_101, %c1_102, %c0_103] : memref<4x10x10x64xf32, #tpu.memory_space<vmem>>, vector<4x8x8x64xf32>
    %c0_104 = arith.constant 0 : index
    %c2_105 = arith.constant 2 : index
    %c2_106 = arith.constant 2 : index
    %c0_107 = arith.constant 0 : index
    %46 = vector.load %arg9[%c0_104, %c2_105, %c2_106, %c0_107] : memref<4x10x10x64xf32, #tpu.memory_space<vmem>>, vector<4x8x8x64xf32>
    %47 = tpu.concatenate %38, %39, %40, %41, %42, %43, %44, %45, %46 in 3 : vector<4x8x8x64xf32>, vector<4x8x8x64xf32>, vector<4x8x8x64xf32>, vector<4x8x8x64xf32>, vector<4x8x8x64xf32>, vector<4x8x8x64xf32>, vector<4x8x8x64xf32>, vector<4x8x8x64xf32>, vector<4x8x8x64xf32> -> vector<4x8x8x576xf32>
    %48 = vector.shape_cast %47 : vector<4x8x8x576xf32> to vector<256x576xf32>
    %49 = arith.truncf %48 : vector<256x576xf32> to vector<256x576xbf16>
    %c0_108 = arith.constant 0 : index
    %c0_109 = arith.constant 0 : index
    %50 = vector.load %arg6[%c0_108, %c0_109] : memref<576x64xbf16, #tpu.memory_space<vmem>>, vector<576x64xbf16>
    %cst_110 = arith.constant dense<0.000000e+00> : vector<256x64xf32>
    %51 = tpu.matmul %49, %50, %cst_110 {dimension_numbers = #tpu.dot_dimension_numbers<[1], [0], [0], [1], [0, 0, 1, 1], [], []>} : vector<256x576xbf16>, vector<576x64xbf16>, vector<256x64xf32> -> vector<256x64xf32>
    %c0_111 = arith.constant 0 : index
    %c0_112 = arith.constant 0 : index
    %52 = vector.load %arg7[%c0_111, %c0_112] : memref<1x64xf32, #tpu.memory_space<vmem>>, vector<1x64xf32>
    %53 = vector.broadcast %52 : vector<1x64xf32> to vector<256x64xf32>
    %54 = arith.addf %51, %53 : vector<256x64xf32>
    %cst_113 = arith.constant 0.000000e+00 : f32
    %55 = vector.broadcast %cst_113 : f32 to vector<256x64xf32>
    %56 = arith.maximumf %54, %55 : vector<256x64xf32>
    %57 = vector.shape_cast %56 : vector<256x64xf32> to vector<4x64x64xf32>
    %58 = arith.truncf %57 : vector<4x64x64xf32> to vector<4x64x64xbf16>
    %c0_114 = arith.constant 0 : index
    %c0_115 = arith.constant 0 : index
    %c0_116 = arith.constant 0 : index
    %59 = vector.load %arg8[%c0_114, %c0_115, %c0_116] : memref<4x64x64xbf16, #tpu.memory_space<vmem>>, vector<4x64x64xbf16>
    tpu.vector_store %arg8[%c0_114, %c0_115, %c0_116], %58 {strides = array<i32>} : memref<4x64x64xbf16, #tpu.memory_space<vmem>>, vector<4x64x64xbf16>,
    return
  }
  func.func @transform_0(%arg0: i32) -> (i32, i32, i32) {
    %c0_i32 = arith.constant 0 : i32
    %c0_i32_0 = arith.constant 0 : i32
    %c0_i32_1 = arith.constant 0 : i32
    return %arg0, %c0_i32, %c0_i32_0 : i32, i32, i32
  }
  func.func @transform_1(%arg0: i32) -> (i32, i32) {
    %c0_i32 = arith.constant 0 : i32
    %c0_i32_0 = arith.constant 0 : i32
    %c0_i32_1 = arith.constant 0 : i32
    return %c0_i32, %c0_i32_0 : i32, i32
  }
  func.func @transform_2(%arg0: i32) -> (i32, i32) {
    %c0_i32 = arith.constant 0 : i32
    %c0_i32_0 = arith.constant 0 : i32
    %c0_i32_1 = arith.constant 0 : i32
    return %c0_i32, %c0_i32_0 : i32, i32
  }
  func.func @transform_3(%arg0: i32) -> (i32, i32) {
    %c0_i32 = arith.constant 0 : i32
    %c0_i32_0 = arith.constant 0 : i32
    %c0_i32_1 = arith.constant 0 : i32
    return %c0_i32, %c0_i32_0 : i32, i32
  }
  func.func @transform_4(%arg0: i32) -> (i32, i32) {
    %c0_i32 = arith.constant 0 : i32
    %c0_i32_0 = arith.constant 0 : i32
    %c0_i32_1 = arith.constant 0 : i32
    return %c0_i32, %c0_i32_0 : i32, i32
  }
  func.func @transform_5(%arg0: i32) -> (i32, i32) {
    %c0_i32 = arith.constant 0 : i32
    %c0_i32_0 = arith.constant 0 : i32
    %c0_i32_1 = arith.constant 0 : i32
    return %c0_i32, %c0_i32_0 : i32, i32
  }
  func.func @transform_6(%arg0: i32) -> (i32, i32) {
    %c0_i32 = arith.constant 0 : i32
    %c0_i32_0 = arith.constant 0 : i32
    %c0_i32_1 = arith.constant 0 : i32
    return %c0_i32, %c0_i32_0 : i32, i32
  }
  func.func @transform_7(%arg0: i32) -> (i32, i32, i32) {
    %c0_i32 = arith.constant 0 : i32
    %c0_i32_0 = arith.constant 0 : i32
    %c0_i32_1 = arith.constant 0 : i32
    return %arg0, %c0_i32, %c0_i32_0 : i32, i32, i32
  }
}

module attributes {stable_mosaic.version = 11 : i64} {
  func.func @head_kernel(%arg0: i32, %arg1: memref<8x4096xbf16, #tpu.memory_space<vmem>>, %arg2: memref<4096x128xbf16, #tpu.memory_space<vmem>>, %arg3: memref<1x128xf32, #tpu.memory_space<vmem>>, %arg4: memref<8x128xf32, #tpu.memory_space<vmem>>) attributes {dimension_semantics = [#tpu.dimension_semantics<parallel>], iteration_bounds = array<i64: 1>, scalar_prefetch = 0 : i64, scratch_operands = 0 : i64, tpu.core_type = #tpu.core_type<tc>, window_params = [{transform_indices = @transform_0, window_bounds = array<i64: 8, 4096>}, {pipeline_mode = #tpu.pipeline_mode<synchronous>, transform_indices = @transform_1, window_bounds = array<i64: 4096, 128>}, {pipeline_mode = #tpu.pipeline_mode<synchronous>, transform_indices = @transform_2, window_bounds = array<i64: 1, 128>}, {transform_indices = @transform_3, window_bounds = array<i64: 8, 128>}]} {
    %c0 = arith.constant 0 : index
    %c0_0 = arith.constant 0 : index
    %0 = vector.load %arg1[%c0, %c0_0] : memref<8x4096xbf16, #tpu.memory_space<vmem>>, vector<8x4096xbf16>
    %c0_1 = arith.constant 0 : index
    %c0_2 = arith.constant 0 : index
    %1 = vector.load %arg2[%c0_1, %c0_2] : memref<4096x128xbf16, #tpu.memory_space<vmem>>, vector<4096x128xbf16>
    %cst = arith.constant dense<0.000000e+00> : vector<8x128xf32>
    %2 = tpu.matmul %0, %1, %cst {dimension_numbers = #tpu.dot_dimension_numbers<[1], [0], [0], [1], [0, 0, 1, 1], [], []>} : vector<8x4096xbf16>, vector<4096x128xbf16>, vector<8x128xf32> -> vector<8x128xf32>
    %c0_3 = arith.constant 0 : index
    %c0_4 = arith.constant 0 : index
    %3 = vector.load %arg3[%c0_3, %c0_4] : memref<1x128xf32, #tpu.memory_space<vmem>>, vector<1x128xf32>
    %4 = vector.broadcast %3 : vector<1x128xf32> to vector<8x128xf32>
    %5 = arith.addf %2, %4 : vector<8x128xf32>
    %6 = tpu.iota {dimensions = array<i32: 1>} : vector<8x128xi32>
    %c64_i32 = arith.constant 64 : i32
    %7 = vector.broadcast %c64_i32 : i32 to vector<8x128xi32>
    %8 = arith.cmpi slt, %6, %7 : vector<8x128xi32>
    %cst_5 = arith.constant -1.000000e+30 : f32
    %9 = vector.broadcast %cst_5 : f32 to vector<8x128xf32>
    %10 = arith.select %8, %5, %9 : vector<8x128xi1>, vector<8x128xf32>
    %cst_6 = arith.constant dense<0xFF800000> : vector<8xf32>
    %11 = vector.multi_reduction <maximumf>, %10, %cst_6 [1] : vector<8x128xf32> to vector<8xf32>
    %12 = vector.shape_cast %11 : vector<8xf32> to vector<8x1xf32>
    %13 = vector.broadcast %12 : vector<8x1xf32> to vector<8x128xf32>
    %14 = arith.subf %10, %13 : vector<8x128xf32>
    %15 = math.exp %14 : vector<8x128xf32>
    %cst_7 = arith.constant dense<0.000000e+00> : vector<8xf32>
    %16 = vector.multi_reduction <add>, %15, %cst_7 [1] : vector<8x128xf32> to vector<8xf32>
    %17 = vector.shape_cast %16 : vector<8xf32> to vector<8x1xf32>
    %18 = vector.broadcast %17 : vector<8x1xf32> to vector<8x128xf32>
    %19 = arith.divf %15, %18 : vector<8x128xf32>
    %c64_i32_8 = arith.constant 64 : i32
    %20 = vector.broadcast %c64_i32_8 : i32 to vector<8x128xi32>
    %21 = arith.cmpi eq, %6, %20 : vector<8x128xi32>
    %22 = math.tanh %5 : vector<8x128xf32>
    %23 = arith.select %21, %22, %19 : vector<8x128xi1>, vector<8x128xf32>
    %c0_9 = arith.constant 0 : index
    %c0_10 = arith.constant 0 : index
    %24 = vector.load %arg4[%c0_9, %c0_10] : memref<8x128xf32, #tpu.memory_space<vmem>>, vector<8x128xf32>
    tpu.vector_store %arg4[%c0_9, %c0_10], %23 {strides = array<i32>} : memref<8x128xf32, #tpu.memory_space<vmem>>, vector<8x128xf32>,
    return
  }
  func.func @transform_0(%arg0: i32) -> (i32, i32) {
    %c0_i32 = arith.constant 0 : i32
    %c0_i32_0 = arith.constant 0 : i32
    return %arg0, %c0_i32 : i32, i32
  }
  func.func @transform_1(%arg0: i32) -> (i32, i32) {
    %c0_i32 = arith.constant 0 : i32
    %c0_i32_0 = arith.constant 0 : i32
    %c0_i32_1 = arith.constant 0 : i32
    return %c0_i32, %c0_i32_0 : i32, i32
  }
  func.func @transform_2(%arg0: i32) -> (i32, i32) {
    %c0_i32 = arith.constant 0 : i32
    %c0_i32_0 = arith.constant 0 : i32
    %c0_i32_1 = arith.constant 0 : i32
    return %c0_i32, %c0_i32_0 : i32, i32
  }
  func.func @transform_3(%arg0: i32) -> (i32, i32) {
    %c0_i32 = arith.constant 0 : i32
    %c0_i32_0 = arith.constant 0 : i32
    return %arg0, %c0_i32 : i32, i32
  }
}

</mosaic_0001>

<llo_original>
// kernel: go_nn_forward.3
$region0: #{go_nn_forward.3}
  #allocation0 [shape = 'u32[]', space=smem, size = 0x4, offset = 0x4, fixed_abs, tag = 'smem constant byte address 0x4 - core index']
  #allocation1 [shape = 'u32[72,128]{1,0:T(1,128)}', space=vmem, size = 0x9000, scoped, tag = 'internal scratch']
  %s0 = inlined_call_operand.vmem [shape: bf16[8,4096], index: 0, kind: input, shape index: {}]
  %s1 = inlined_call_operand.vmem [shape: bf16[4096,128], index: 1, kind: input, shape index: {}]
  %s2 = inlined_call_operand.vmem [shape: f32[1,128], index: 2, kind: input, shape index: {}]
  %s3 = inlined_call_operand.vmem [shape: f32[8,128], index: 3, kind: output, shape index: {}]
  %s4 = sld [smem:[#allocation0]]
  $region22: #{go_nn_forward.3} parent=0
    _
  %s6 = ssub.s32 1, %s4
  %s7 = scalar_select 0, %s6, %s4
  // Predicated region
  $region2: #{go_nn_forward.3} parent=0 // pred_check
    _
  $region3: #{go_nn_forward.3} parent=0 // pred_check_branch
    %9 = sbr.rel (0) target = $region5
  $region4: #{go_nn_forward.3} parent=0 // pred_region
    _
  $region5: #{go_nn_forward.3} parent=0 // pred_fallthru
    _
  // Predicated region
  $region6: #{go_nn_forward.3} parent=0 // pred_check
    _
  $region7: #{go_nn_forward.3} parent=0 // pred_check_branch
    %11 = sbr.rel (0) target = $region9
  $region8: #{go_nn_forward.3} parent=0 // pred_region
    _
  $region9: #{go_nn_forward.3} parent=0 // pred_fallthru
    _
  // Predicated region
  $region10: #{go_nn_forward.3} parent=0 // pred_check
    _
  $region11: #{go_nn_forward.3} parent=0 // pred_check_branch
    %13 = sbr.rel (0) target = $region13
  $region12: #{go_nn_forward.3} parent=0 // pred_region
    _
  $region13: #{go_nn_forward.3} parent=0 // pred_fallthru
    _
  %v14 = vld [vmem:[%s0] sm:$0xff]
  %v15 = vld [vmem:[%s0 + $0x8] sm:$0xff]
  %v16 = vld [vmem:[%s0 + $0x10] sm:$0xff]
  %v17 = vld [vmem:[%s0 + $0x18] sm:$0xff]
  %v18 = vld [vmem:[%s0 + $0x20] sm:$0xff]
  %v19 = vld [vmem:[%s0 + $0x28] sm:$0xff]
  %v20 = vld [vmem:[%s0 + $0x30] sm:$0xff]
  %v21 = vld [vmem:[%s0 + $0x38] sm:$0xff]
  %v22 = vld [vmem:[%s0 + $0x40] sm:$0xff]
  %v23 = vld [vmem:[%s0 + $0x48] sm:$0xff]
  %v24 = vld [vmem:[%s0 + $0x50] sm:$0xff]
  %v25 = vld [vmem:[%s0 + $0x58] sm:$0xff]
  %v26 = vld [vmem:[%s0 + $0x60] sm:$0xff]
  %v27 = vld [vmem:[%s0 + $0x68] sm:$0xff]
  %v28 = vld [vmem:[%s0 + $0x70] sm:$0xff]
  %v29 = vld [vmem:[%s0 + $0x78] sm:$0xff]
  %v30 = vld [vmem:[%s1] sm:$0xf]
  %v31 = vld [vmem:[%s1 + $0x4] sm:$0xf]
  %v32 = vld [vmem:[%s1 + $0x8] sm:$0xf]
  %v33 = vld [vmem:[%s1 + $0xc] sm:$0xf]
  %v34 = vld [vmem:[%s1 + $0x10] sm:$0xf]
  %v35 = vld [vmem:[%s1 + $0x14] sm:$0xf]
  %v36 = vld [vmem:[%s1 + $0x18] sm:$0xf]
  %v37 = vld [vmem:[%s1 + $0x1c] sm:$0xf]
  %v38 = vld [vmem:[%s1 + $0x20] sm:$0xf]
  %v39 = vld [vmem:[%s1 + $0x24] sm:$0xf]
  %v40 = vld [vmem:[%s1 + $0x28] sm:$0xf]
  %v41 = vld [vmem:[%s1 + $0x2c] sm:$0xf]
  %v42 = vld [vmem:[%s1 + $0x30] sm:$0xf]
  %v43 = vld [vmem:[%s1 + $0x34] sm:$0xf]
  %v44 = vld [vmem:[%s1 + $0x38] sm:$0xf]
  %v45 = vld [vmem:[%s1 + $0x3c] sm:$0xf]
  %v46 = vld [vmem:[%s1 + $0x40] sm:$0xf]
  %v47 = vld [vmem:[%s1 + $0x44] sm:$0xf]
  %v48 = vld [vmem:[%s1 + $0x48] sm:$0xf]
  %v49 = vld [vmem:[%s1 + $0x4c] sm:$0xf]
  %v50 = vld [vmem:[%s1 + $0x50] sm:$0xf]
  %v51 = vld [vmem:[%s1 + $0x54] sm:$0xf]
  %v52 = vld [vmem:[%s1 + $0x58] sm:$0xf]
  %v53 = vld [vmem:[%s1 + $0x5c] sm:$0xf]
  %v54 = vld [vmem:[%s1 + $0x60] sm:$0xf]
  %v55 = vld [vmem:[%s1 + $0x64] sm:$0xf]
  %v56 = vld [vmem:[%s1 + $0x68] sm:$0xf]
  %v57 = vld [vmem:[%s1 + $0x6c] sm:$0xf]
  %v58 = vld [vmem:[%s1 + $0x70] sm:$0xf]
  %v59 = vld [vmem:[%s1 + $0x74] sm:$0xf]
  %v60 = vld [vmem:[%s1 + $0x78] sm:$0xf]
  %v61 = vld [vmem:[%s1 + $0x7c] sm:$0xf]
  %v62 = vld [vmem:[%s1 + $0x80] sm:$0xf]
  %v63 = vld [vmem:[%s1 + $0x84] sm:$0xf]
  %v64 = vld [vmem:[%s1 + $0x88] sm:$0xf]
  %v65 = vld [vmem:[%s1 + $0x8c] sm:$0xf]
  %v66 = vld [vmem:[%s1 + $0x90] sm:$0xf]
  %v67 = vld [vmem:[%s1 + $0x94] sm:$0xf]
  %v68 = vld [vmem:[%s1 + $0x98] sm:$0xf]
  %v69 = vld [vmem:[%s1 + $0x9c] sm:$0xf]
  %v70 = vld [vmem:[%s1 + $0xa0] sm:$0xf]
  %v71 = vld [vmem:[%s1 + $0xa4] sm:$0xf]
  %v72 = vld [vmem:[%s1 + $0xa8] sm:$0xf]
  %v73 = vld [vmem:[%s1 + $0xac] sm:$0xf]
  %v74 = vld [vmem:[%s1 + $0xb0] sm:$0xf]
  %v75 = vld [vmem:[%s1 + $0xb4] sm:$0xf]
  %v76 = vld [vmem:[%s1 + $0xb8] sm:$0xf]
  %v77 = vld [vmem:[%s1 + $0xbc] sm:$0xf]
  %v78 = vld [vmem:[%s1 + $0xc0] sm:$0xf]
  %v79 = vld [vmem:[%s1 + $0xc4] sm:$0xf]
  %v80 = vld [vmem:[%s1 + $0xc8] sm:$0xf]
  %v81 = vld [vmem:[%s1 + $0xcc] sm:$0xf]
  %v82 = vld [vmem:[%s1 + $0xd0] sm:$0xf]
  %v83 = vld [vmem:[%s1 + $0xd4] sm:$0xf]
  %v84 = vld [vmem:[%s1 + $0xd8] sm:$0xf]
  %v85 = vld [vmem:[%s1 + $0xdc] sm:$0xf]
  %v86 = vld [vmem:[%s1 + $0xe0] sm:$0xf]
  %v87 = vld [vmem:[%s1 + $0xe4] sm:$0xf]
  %v88 = vld [vmem:[%s1 + $0xe8] sm:$0xf]
  %v89 = vld [vmem:[%s1 + $0xec] sm:$0xf]
  %v90 = vld [vmem:[%s1 + $0xf0] sm:$0xf]
  %v91 = vld [vmem:[%s1 + $0xf4] sm:$0xf]
  %v92 = vld [vmem:[%s1 + $0xf8] sm:$0xf]
  %v93 = vld [vmem:[%s1 + $0xfc] sm:$0xf]
  %v94 = vld [vmem:[%s1 + $0x100] sm:$0xf]
  %v95 = vld [vmem:[%s1 + $0x104] sm:$0xf]
  %v96 = vld [vmem:[%s1 + $0x108] sm:$0xf]
  %v97 = vld [vmem:[%s1 + $0x10c] sm:$0xf]
  %v98 = vld [vmem:[%s1 + $0x110] sm:$0xf]
  %v99 = vld [vmem:[%s1 + $0x114] sm:$0xf]
  %v100 = vld [vmem:[%s1 + $0x118] sm:$0xf]
  %v101 = vld [vmem:[%s1 + $0x11c] sm:$0xf]
  %v102 = vld [vmem:[%s1 + $0x120] sm:$0xf]
  %v103 = vld [vmem:[%s1 + $0x124] sm:$0xf]
  %v104 = vld [vmem:[%s1 + $0x128] sm:$0xf]
  %v105 = vld [vmem:[%s1 + $0x12c] sm:$0xf]
  %v106 = vld [vmem:[%s1 + $0x130] sm:$0xf]
  %v107 = vld [vmem:[%s1 + $0x134] sm:$0xf]
  %v108 = vld [vmem:[%s1 + $0x138] sm:$0xf]
  %v109 = vld [vmem:[%s1 + $0x13c] sm:$0xf]
  %v110 = vld [vmem:[%s1 + $0x140] sm:$0xf]
  %v111 = vld [vmem:[%s1 + $0x144] sm:$0xf]
  %v112 = vld [vmem:[%s1 + $0x148] sm:$0xf]
  %v113 = vld [vmem:[%s1 + $0x14c] sm:$0xf]
  %v114 = vld [vmem:[%s1 + $0x150] sm:$0xf]
  %v115 = vld [vmem:[%s1 + $0x154] sm:$0xf]
  %v116 = vld [vmem:[%s1 + $0x158] sm:$0xf]
  %v117 = vld [vmem:[%s1 + $0x15c] sm:$0xf]
  %v118 = vld [vmem:[%s1 + $0x160] sm:$0xf]
  %v119 = vld [vmem:[%s1 + $0x164] sm:$0xf]
  %v120 = vld [vmem:[%s1 + $0x168] sm:$0xf]
  %v121 = vld [vmem:[%s1 + $0x16c] sm:$0xf]
  %v122 = vld [vmem:[%s1 + $0x170] sm:$0xf]
  %v123 = vld [vmem:[%s1 + $0x174] sm:$0xf]
  %v124 = vld [vmem:[%s1 + $0x178] sm:$0xf]
  %v125 = vld [vmem:[%s1 + $0x17c] sm:$0xf]
  %v126 = vld [vmem:[%s1 + $0x180] sm:$0xf]
  %v127 = vld [vmem:[%s1 + $0x184] sm:$0xf]
  %v128 = vld [vmem:[%s1 + $0x188] sm:$0xf]
  %v129 = vld [vmem:[%s1 + $0x18c] sm:$0xf]
  %v130 = vld [vmem:[%s1 + $0x190] sm:$0xf]
  %v131 = vld [vmem:[%s1 + $0x194] sm:$0xf]
  %v132 = vld [vmem:[%s1 + $0x198] sm:$0xf]
  %v133 = vld [vmem:[%s1 + $0x19c] sm:$0xf]
  %v134 = vld [vmem:[%s1 + $0x1a0] sm:$0xf]
  %v135 = vld [vmem:[%s1 + $0x1a4] sm:$0xf]
  %v136 = vld [vmem:[%s1 + $0x1a8] sm:$0xf]
  %v137 = vld [vmem:[%s1 + $0x1ac] sm:$0xf]
  %v138 = vld [vmem:[%s1 + $0x1b0] sm:$0xf]
  %v139 = vld [vmem:[%s1 + $0x1b4] sm:$0xf]
  %v140 = vld [vmem:[%s1 + $0x1b8] sm:$0xf]
  %v141 = vld [vmem:[%s1 + $0x1bc] sm:$0xf]
  %v142 = vld [vmem:[%s1 + $0x1c0] sm:$0xf]
  %v143 = vld [vmem:[%s1 + $0x1c4] sm:$0xf]
  %v144 = vld [vmem:[%s1 + $0x1c8] sm:$0xf]
  %v145 = vld [vmem:[%s1 + $0x1cc] sm:$0xf]
  %v146 = vld [vmem:[%s1 + $0x1d0] sm:$0xf]
  %v147 = vld [vmem:[%s1 + $0x1d4] sm:$0xf]
  %v148 = vld [vmem:[%s1 + $0x1d8] sm:$0xf]
  %v149 = vld [vmem:[%s1 + $0x1dc] sm:$0xf]
  %v150 = vld [vmem:[%s1 + $0x1e0] sm:$0xf]
  %v151 = vld [vmem:[%s1 + $0x1e4] sm:$0xf]
  %v152 = vld [vmem:[%s1 + $0x1e8] sm:$0xf]
  %v153 = vld [vmem:[%s1 + $0x1ec] sm:$0xf]
  %v154 = vld [vmem:[%s1 + $0x1f0] sm:$0xf]
  %v155 = vld [vmem:[%s1 + $0x1f4] sm:$0xf]
  %v156 = vld [vmem:[%s1 + $0x1f8] sm:$0xf]
  %v157 = vld [vmem:[%s1 + $0x1fc] sm:$0xf]
  %v158 = vld [vmem:[%s1 + $0x200] sm:$0xf]
  %v159 = vld [vmem:[%s1 + $0x204] sm:$0xf]
  %v160 = vld [vmem:[%s1 + $0x208] sm:$0xf]
  %v161 = vld [vmem:[%s1 + $0x20c] sm:$0xf]
  %v162 = vld [vmem:[%s1 + $0x210] sm:$0xf]
  %v163 = vld [vmem:[%s1 + $0x214] sm:$0xf]
  %v164 = vld [vmem:[%s1 + $0x218] sm:$0xf]
  %v165 = vld [vmem:[%s1 + $0x21c] sm:$0xf]
  %v166 = vld [vmem:[%s1 + $0x220] sm:$0xf]
  %v167 = vld [vmem:[%s1 + $0x224] sm:$0xf]
  %v168 = vld [vmem:[%s1 + $0x228] sm:$0xf]
  %v169 = vld [vmem:[%s1 + $0x22c] sm:$0xf]
  %v170 = vld [vmem:[%s1 + $0x230] sm:$0xf]
  %v171 = vld [vmem:[%s1 + $0x234] sm:$0xf]
  %v172 = vld [vmem:[%s1 + $0x238] sm:$0xf]
  %v173 = vld [vmem:[%s1 + $0x23c] sm:$0xf]
  %v174 = vld [vmem:[%s1 + $0x240] sm:$0xf]
  %v175 = vld [vmem:[%s1 + $0x244] sm:$0xf]
  %v176 = vld [vmem:[%s1 + $0x248] sm:$0xf]
  %v177 = vld [vmem:[%s1 + $0x24c] sm:$0xf]
  %v178 = vld [vmem:[%s1 + $0x250] sm:$0xf]
  %v179 = vld [vmem:[%s1 + $0x254] sm:$0xf]
  %v180 = vld [vmem:[%s1 + $0x258] sm:$0xf]
  %v181 = vld [vmem:[%s1 + $0x25c] sm:$0xf]
  %v182 = vld [vmem:[%s1 + $0x260] sm:$0xf]
  %v183 = vld [vmem:[%s1 + $0x264] sm:$0xf]
  %v184 = vld [vmem:[%s1 + $0x268] sm:$0xf]
  %v185 = vld [vmem:[%s1 + $0x26c] sm:$0xf]
  %v186 = vld [vmem:[%s1 + $0x270] sm:$0xf]
  %v187 = vld [vmem:[%s1 + $0x274] sm:$0xf]
  %v188 = vld [vmem:[%s1 + $0x278] sm:$0xf]
  %v189 = vld [vmem:[%s1 + $0x27c] sm:$0xf]
  %v190 = vld [vmem:[%s1 + $0x280] sm:$0xf]
  %v191 = vld [vmem:[%s1 + $0x284] sm:$0xf]
  %v192 = vld [vmem:[%s1 + $0x288] sm:$0xf]
  %v193 = vld [vmem:[%s1 + $0x28c] sm:$0xf]
  %v194 = vld [vmem:[%s1 + $0x290] sm:$0xf]
  %v195 = vld [vmem:[%s1 + $0x294] sm:$0xf]
  %v196 = vld [vmem:[%s1 + $0x298] sm:$0xf]
  %v197 = vld [vmem:[%s1 + $0x29c] sm:$0xf]
  %v198 = vld [vmem:[%s1 + $0x2a0] sm:$0xf]
  %v199 = vld [vmem:[%s1 + $0x2a4] sm:$0xf]
  %v200 = vld [vmem:[%s1 + $0x2a8] sm:$0xf]
  %v201 = vld [vmem:[%s1 + $0x2ac] sm:$0xf]
  %v202 = vld [vmem:[%s1 + $0x2b0] sm:$0xf]
  %v203 = vld [vmem:[%s1 + $0x2b4] sm:$0xf]
  %v204 = vld [vmem:[%s1 + $0x2b8] sm:$0xf]
  %v205 = vld [vmem:[%s1 + $0x2bc] sm:$0xf]
  %v206 = vld [vmem:[%s1 + $0x2c0] sm:$0xf]
  %v207 = vld [vmem:[%s1 + $0x2c4] sm:$0xf]
  %v208 = vld [vmem:[%s1 + $0x2c8] sm:$0xf]
  %v209 = vld [vmem:[%s1 + $0x2cc] sm:$0xf]
  %v210 = vld [vmem:[%s1 + $0x2d0] sm:$0xf]
  %v211 = vld [vmem:[%s1 + $0x2d4] sm:$0xf]
  %v212 = vld [vmem:[%s1 + $0x2d8] sm:$0xf]
  %v213 = vld [vmem:[%s1 + $0x2dc] sm:$0xf]
  %v214 = vld [vmem:[%s1 + $0x2e0] sm:$0xf]
  %v215 = vld [vmem:[%s1 + $0x2e4] sm:$0xf]
  %v216 = vld [vmem:[%s1 + $0x2e8] sm:$0xf]
  %v217 = vld [vmem:[%s1 + $0x2ec] sm:$0xf]
  %v218 = vld [vmem:[%s1 + $0x2f0] sm:$0xf]
  %v219 = vld [vmem:[%s1 + $0x2f4] sm:$0xf]
  %v220 = vld [vmem:[%s1 + $0x2f8] sm:$0xf]
  %v221 = vld [vmem:[%s1 + $0x2fc] sm:$0xf]
  %v222 = vld [vmem:[%s1 + $0x300] sm:$0xf]
  %v223 = vld [vmem:[%s1 + $0x304] sm:$0xf]
  %v224 = vld [vmem:[%s1 + $0x308] sm:$0xf]
  %v225 = vld [vmem:[%s1 + $0x30c] sm:$0xf]
  %v226 = vld [vmem:[%s1 + $0x310] sm:$0xf]
  %v227 = vld [vmem:[%s1 + $0x314] sm:$0xf]
  %v228 = vld [vmem:[%s1 + $0x318] sm:$0xf]
  %v229 = vld [vmem:[%s1 + $0x31c] sm:$0xf]
  %v230 = vld [vmem:[%s1 + $0x320] sm:$0xf]
  %v231 = vld [vmem:[%s1 + $0x324] sm:$0xf]
  %v232 = vld [vmem:[%s1 + $0x328] sm:$0xf]
  %v233 = vld [vmem:[%s1 + $0x32c] sm:$0xf]
  %v234 = vld [vmem:[%s1 + $0x330] sm:$0xf]
  %v235 = vld [vmem:[%s1 + $0x334] sm:$0xf]
  %v236 = vld [vmem:[%s1 + $0x338] sm:$0xf]
  %v237 = vld [vmem:[%s1 + $0x33c] sm:$0xf]
  %v238 = vld [vmem:[%s1 + $0x340] sm:$0xf]
  %v239 = vld [vmem:[%s1 + $0x344] sm:$0xf]
  %v240 = vld [vmem:[%s1 + $0x348] sm:$0xf]
  %v241 = vld [vmem:[%s1 + $0x34c] sm:$0xf]
  %v242 = vld [vmem:[%s1 + $0x350] sm:$0xf]
  %v243 = vld [vmem:[%s1 + $0x354] sm:$0xf]
  %v244 = vld [vmem:[%s1 + $0x358] sm:$0xf]
  %v245 = vld [vmem:[%s1 + $0x35c] sm:$0xf]
  %v246 = vld [vmem:[%s1 + $0x360] sm:$0xf]
  %v247 = vld [vmem:[%s1 + $0x364] sm:$0xf]
  %v248 = vld [vmem:[%s1 + $0x368] sm:$0xf]
  %v249 = vld [vmem:[%s1 + $0x36c] sm:$0xf]
  %v250 = vld [vmem:[%s1 + $0x370] sm:$0xf]
  %v251 = vld [vmem:[%s1 + $0x374] sm:$0xf]
  %v252 = vld [vmem:[%s1 + $0x378] sm:$0xf]
  %v253 = vld [vmem:[%s1 + $0x37c] sm:$0xf]
  %v254 = vld [vmem:[%s1 + $0x380] sm:$0xf]
  %v255 = vld [vmem:[%s1 + $0x384] sm:$0xf]
  %v256 = vld [vmem:[%s1 + $0x388] sm:$0xf]
  %v257 = vld [vmem:[%s1 + $0x38c] sm:$0xf]
  %v258 = vld [vmem:[%s1 + $0x390] sm:$0xf]
  %v259 = vld [vmem:[%s1 + $0x394] sm:$0xf]
  %v260 = vld [vmem:[%s1 + $0x398] sm:$0xf]
  %v261 = vld [vmem:[%s1 + $0x39c] sm:$0xf]
  %v262 = vld [vmem:[%s1 + $0x3a0] sm:$0xf]
  %v263 = vld [vmem:[%s1 + $0x3a4] sm:$0xf]
  %v264 = vld [vmem:[%s1 + $0x3a8] sm:$0xf]
  %v265 = vld [vmem:[%s1 + $0x3ac] sm:$0xf]
  %v266 = vld [vmem:[%s1 + $0x3b0] sm:$0xf]
  %v267 = vld [vmem:[%s1 + $0x3b4] sm:$0xf]
  %v268 = vld [vmem:[%s1 + $0x3b8] sm:$0xf]
  %v269 = vld [vmem:[%s1 + $0x3bc] sm:$0xf]
  %v270 = vld [vmem:[%s1 + $0x3c0] sm:$0xf]
  %v271 = vld [vmem:[%s1 + $0x3c4] sm:$0xf]
  %v272 = vld [vmem:[%s1 + $0x3c8] sm:$0xf]
  %v273 = vld [vmem:[%s1 + $0x3cc] sm:$0xf]
  %v274 = vld [vmem:[%s1 + $0x3d0] sm:$0xf]
  %v275 = vld [vmem:[%s1 + $0x3d4] sm:$0xf]
  %v276 = vld [vmem:[%s1 + $0x3d8] sm:$0xf]
  %v277 = vld [vmem:[%s1 + $0x3dc] sm:$0xf]
  %v278 = vld [vmem:[%s1 + $0x3e0] sm:$0xf]
  %v279 = vld [vmem:[%s1 + $0x3e4] sm:$0xf]
  %v280 = vld [vmem:[%s1 + $0x3e8] sm:$0xf]
  %v281 = vld [vmem:[%s1 + $0x3ec] sm:$0xf]
  %v282 = vld [vmem:[%s1 + $0x3f0] sm:$0xf]
  %v283 = vld [vmem:[%s1 + $0x3f4] sm:$0xf]
  %v284 = vld [vmem:[%s1 + $0x3f8] sm:$0xf]
  %v285 = vld [vmem:[%s1 + $0x3fc] sm:$0xf]
  %v286 = vld [vmem:[%s1 + $0x400] sm:$0xf]
  %v287 = vld [vmem:[%s1 + $0x404] sm:$0xf]
  %v288 = vld [vmem:[%s1 + $0x408] sm:$0xf]
  %v289 = vld [vmem:[%s1 + $0x40c] sm:$0xf]
  %v290 = vld [vmem:[%s1 + $0x410] sm:$0xf]
  %v291 = vld [vmem:[%s1 + $0x414] sm:$0xf]
  %v292 = vld [vmem:[%s1 + $0x418] sm:$0xf]
  %v293 = vld [vmem:[%s1 + $0x41c] sm:$0xf]
  %v294 = vld [vmem:[%s1 + $0x420] sm:$0xf]
  %v295 = vld [vmem:[%s1 + $0x424] sm:$0xf]
  %v296 = vld [vmem:[%s1 + $0x428] sm:$0xf]
  %v297 = vld [vmem:[%s1 + $0x42c] sm:$0xf]
  %v298 = vld [vmem:[%s1 + $0x430] sm:$0xf]
  %v299 = vld [vmem:[%s1 + $0x434] sm:$0xf]
  %v300 = vld [vmem:[%s1 + $0x438] sm:$0xf]
  %v301 = vld [vmem:[%s1 + $0x43c] sm:$0xf]
  %v302 = vld [vmem:[%s1 + $0x440] sm:$0xf]
  %v303 = vld [vmem:[%s1 + $0x444] sm:$0xf]
  %v304 = vld [vmem:[%s1 + $0x448] sm:$0xf]
  %v305 = vld [vmem:[%s1 + $0x44c] sm:$0xf]
  %v306 = vld [vmem:[%s1 + $0x450] sm:$0xf]
  %v307 = vld [vmem:[%s1 + $0x454] sm:$0xf]
  %v308 = vld [vmem:[%s1 + $0x458] sm:$0xf]
  %v309 = vld [vmem:[%s1 + $0x45c] sm:$0xf]
  %v310 = vld [vmem:[%s1 + $0x460] sm:$0xf]
  %v311 = vld [vmem:[%s1 + $0x464] sm:$0xf]
  %v312 = vld [vmem:[%s1 + $0x468] sm:$0xf]
  %v313 = vld [vmem:[%s1 + $0x46c] sm:$0xf]
  %v314 = vld [vmem:[%s1 + $0x470] sm:$0xf]
  %v315 = vld [vmem:[%s1 + $0x474] sm:$0xf]
  %v316 = vld [vmem:[%s1 + $0x478] sm:$0xf]
  %v317 = vld [vmem:[%s1 + $0x47c] sm:$0xf]
  %v318 = vld [vmem:[%s1 + $0x480] sm:$0xf]
  %v319 = vld [vmem:[%s1 + $0x484] sm:$0xf]
  %v320 = vld [vmem:[%s1 + $0x488] sm:$0xf]
  %v321 = vld [vmem:[%s1 + $0x48c] sm:$0xf]
  %v322 = vld [vmem:[%s1 + $0x490] sm:$0xf]
  %v323 = vld [vmem:[%s1 + $0x494] sm:$0xf]
  %v324 = vld [vmem:[%s1 + $0x498] sm:$0xf]
  %v325 = vld [vmem:[%s1 + $0x49c] sm:$0xf]
  %v326 = vld [vmem:[%s1 + $0x4a0] sm:$0xf]
  %v327 = vld [vmem:[%s1 + $0x4a4] sm:$0xf]
  %v328 = vld [vmem:[%s1 + $0x4a8] sm:$0xf]
  %v329 = vld [vmem:[%s1 + $0x4ac] sm:$0xf]
  %v330 = vld [vmem:[%s1 + $0x4b0] sm:$0xf]
  %v331 = vld [vmem:[%s1 + $0x4b4] sm:$0xf]
  %v332 = vld [vmem:[%s1 + $0x4b8] sm:$0xf]
  %v333 = vld [vmem:[%s1 + $0x4bc] sm:$0xf]
  %v334 = vld [vmem:[%s1 + $0x4c0] sm:$0xf]
  %v335 = vld [vmem:[%s1 + $0x4c4] sm:$0xf]
  %v336 = vld [vmem:[%s1 + $0x4c8] sm:$0xf]
  %v337 = vld [vmem:[%s1 + $0x4cc] sm:$0xf]
  %v338 = vld [vmem:[%s1 + $0x4d0] sm:$0xf]
  %v339 = vld [vmem:[%s1 + $0x4d4] sm:$0xf]
  %v340 = vld [vmem:[%s1 + $0x4d8] sm:$0xf]
  %v341 = vld [vmem:[%s1 + $0x4dc] sm:$0xf]
  %v342 = vld [vmem:[%s1 + $0x4e0] sm:$0xf]
  %v343 = vld [vmem:[%s1 + $0x4e4] sm:$0xf]
  %v344 = vld [vmem:[%s1 + $0x4e8] sm:$0xf]
  %v345 = vld [vmem:[%s1 + $0x4ec] sm:$0xf]
  %v346 = vld [vmem:[%s1 + $0x4f0] sm:$0xf]
  %v347 = vld [vmem:[%s1 + $0x4f4] sm:$0xf]
  %v348 = vld [vmem:[%s1 + $0x4f8] sm:$0xf]
  %v349 = vld [vmem:[%s1 + $0x4fc] sm:$0xf]
  %v350 = vld [vmem:[%s1 + $0x500] sm:$0xf]
  %v351 = vld [vmem:[%s1 + $0x504] sm:$0xf]
  %v352 = vld [vmem:[%s1 + $0x508] sm:$0xf]
  %v353 = vld [vmem:[%s1 + $0x50c] sm:$0xf]
  %v354 = vld [vmem:[%s1 + $0x510] sm:$0xf]
  %v355 = vld [vmem:[%s1 + $0x514] sm:$0xf]
  %v356 = vld [vmem:[%s1 + $0x518] sm:$0xf]
  %v357 = vld [vmem:[%s1 + $0x51c] sm:$0xf]
  %v358 = vld [vmem:[%s1 + $0x520] sm:$0xf]
  %v359 = vld [vmem:[%s1 + $0x524] sm:$0xf]
  %v360 = vld [vmem:[%s1 + $0x528] sm:$0xf]
  %v361 = vld [vmem:[%s1 + $0x52c] sm:$0xf]
  %v362 = vld [vmem:[%s1 + $0x530] sm:$0xf]
  %v363 = vld [vmem:[%s1 + $0x534] sm:$0xf]
  %v364 = vld [vmem:[%s1 + $0x538] sm:$0xf]
  %v365 = vld [vmem:[%s1 + $0x53c] sm:$0xf]
  %v366 = vld [vmem:[%s1 + $0x540] sm:$0xf]
  %v367 = vld [vmem:[%s1 + $0x544] sm:$0xf]
  %v368 = vld [vmem:[%s1 + $0x548] sm:$0xf]
  %v369 = vld [vmem:[%s1 + $0x54c] sm:$0xf]
  %v370 = vld [vmem:[%s1 + $0x550] sm:$0xf]
  %v371 = vld [vmem:[%s1 + $0x554] sm:$0xf]
  %v372 = vld [vmem:[%s1 + $0x558] sm:$0xf]
  %v373 = vld [vmem:[%s1 + $0x55c] sm:$0xf]
  %v374 = vld [vmem:[%s1 + $0x560] sm:$0xf]
  %v375 = vld [vmem:[%s1 + $0x564] sm:$0xf]
  %v376 = vld [vmem:[%s1 + $0x568] sm:$0xf]
  %v377 = vld [vmem:[%s1 + $0x56c] sm:$0xf]
  %v378 = vld [vmem:[%s1 + $0x570] sm:$0xf]
  %v379 = vld [vmem:[%s1 + $0x574] sm:$0xf]
  %v380 = vld [vmem:[%s1 + $0x578] sm:$0xf]
  %v381 = vld [vmem:[%s1 + $0x57c] sm:$0xf]
  %v382 = vld [vmem:[%s1 + $0x580] sm:$0xf]
  %v383 = vld [vmem:[%s1 + $0x584] sm:$0xf]
  %v384 = vld [vmem:[%s1 + $0x588] sm:$0xf]
  %v385 = vld [vmem:[%s1 + $0x58c] sm:$0xf]
  %v386 = vld [vmem:[%s1 + $0x590] sm:$0xf]
  %v387 = vld [vmem:[%s1 + $0x594] sm:$0xf]
  %v388 = vld [vmem:[%s1 + $0x598] sm:$0xf]
  %v389 = vld [vmem:[%s1 + $0x59c] sm:$0xf]
  %v390 = vld [vmem:[%s1 + $0x5a0] sm:$0xf]
  %v391 = vld [vmem:[%s1 + $0x5a4] sm:$0xf]
  %v392 = vld [vmem:[%s1 + $0x5a8] sm:$0xf]
  %v393 = vld [vmem:[%s1 + $0x5ac] sm:$0xf]
  %v394 = vld [vmem:[%s1 + $0x5b0] sm:$0xf]
  %v395 = vld [vmem:[%s1 + $0x5b4] sm:$0xf]
  %v396 = vld [vmem:[%s1 + $0x5b8] sm:$0xf]
  %v397 = vld [vmem:[%s1 + $0x5bc] sm:$0xf]
  %v398 = vld [vmem:[%s1 + $0x5c0] sm:$0xf]
  %v399 = vld [vmem:[%s1 + $0x5c4] sm:$0xf]
  %v400 = vld [vmem:[%s1 + $0x5c8] sm:$0xf]
  %v401 = vld [vmem:[%s1 + $0x5cc] sm:$0xf]
  %v402 = vld [vmem:[%s1 + $0x5d0] sm:$0xf]
  %v403 = vld [vmem:[%s1 + $0x5d4] sm:$0xf]
  %v404 = vld [vmem:[%s1 + $0x5d8] sm:$0xf]
  %v405 = vld [vmem:[%s1 + $0x5dc] sm:$0xf]
  %v406 = vld [vmem:[%s1 + $0x5e0] sm:$0xf]
  %v407 = vld [vmem:[%s1 + $0x5e4] sm:$0xf]
  %v408 = vld [vmem:[%s1 + $0x5e8] sm:$0xf]
  %v409 = vld [vmem:[%s1 + $0x5ec] sm:$0xf]
  %v410 = vld [vmem:[%s1 + $0x5f0] sm:$0xf]
  %v411 = vld [vmem:[%s1 + $0x5f4] sm:$0xf]
  %v412 = vld [vmem:[%s1 + $0x5f8] sm:$0xf]
  %v413 = vld [vmem:[%s1 + $0x5fc] sm:$0xf]
  %v414 = vld [vmem:[%s1 + $0x600] sm:$0xf]
  %v415 = vld [vmem:[%s1 + $0x604] sm:$0xf]
  %v416 = vld [vmem:[%s1 + $0x608] sm:$0xf]
  %v417 = vld [vmem:[%s1 + $0x60c] sm:$0xf]
  %v418 = vld [vmem:[%s1 + $0x610] sm:$0xf]
  %v419 = vld [vmem:[%s1 + $0x614] sm:$0xf]
  %v420 = vld [vmem:[%s1 + $0x618] sm:$0xf]
  %v421 = vld [vmem:[%s1 + $0x61c] sm:$0xf]
  %v422 = vld [vmem:[%s1 + $0x620] sm:$0xf]
  %v423 = vld [vmem:[%s1 + $0x624] sm:$0xf]
  %v424 = vld [vmem:[%s1 + $0x628] sm:$0xf]
  %v425 = vld [vmem:[%s1 + $0x62c] sm:$0xf]
  %v426 = vld [vmem:[%s1 + $0x630] sm:$0xf]
  %v427 = vld [vmem:[%s1 + $0x634] sm:$0xf]
  %v428 = vld [vmem:[%s1 + $0x638] sm:$0xf]
  %v429 = vld [vmem:[%s1 + $0x63c] sm:$0xf]
  %v430 = vld [vmem:[%s1 + $0x640] sm:$0xf]
  %v431 = vld [vmem:[%s1 + $0x644] sm:$0xf]
  %v432 = vld [vmem:[%s1 + $0x648] sm:$0xf]
  %v433 = vld [vmem:[%s1 + $0x64c] sm:$0xf]
  %v434 = vld [vmem:[%s1 + $0x650] sm:$0xf]
  %v435 = vld [vmem:[%s1 + $0x654] sm:$0xf]
  %v436 = vld [vmem:[%s1 + $0x658] sm:$0xf]
  %v437 = vld [vmem:[%s1 + $0x65c] sm:$0xf]
  %v438 = vld [vmem:[%s1 + $0x660] sm:$0xf]
  %v439 = vld [vmem:[%s1 + $0x664] sm:$0xf]
  %v440 = vld [vmem:[%s1 + $0x668] sm:$0xf]
  %v441 = vld [vmem:[%s1 + $0x66c] sm:$0xf]
  %v442 = vld [vmem:[%s1 + $0x670] sm:$0xf]
  %v443 = vld [vmem:[%s1 + $0x674] sm:$0xf]
  %v444 = vld [vmem:[%s1 + $0x678] sm:$0xf]
  %v445 = vld [vmem:[%s1 + $0x67c] sm:$0xf]
  %v446 = vld [vmem:[%s1 + $0x680] sm:$0xf]
  %v447 = vld [vmem:[%s1 + $0x684] sm:$0xf]
  %v448 = vld [vmem:[%s1 + $0x688] sm:$0xf]
  %v449 = vld [vmem:[%s1 + $0x68c] sm:$0xf]
  %v450 = vld [vmem:[%s1 + $0x690] sm:$0xf]
  %v451 = vld [vmem:[%s1 + $0x694] sm:$0xf]
  %v452 = vld [vmem:[%s1 + $0x698] sm:$0xf]
  %v453 = vld [vmem:[%s1 + $0x69c] sm:$0xf]
  %v454 = vld [vmem:[%s1 + $0x6a0] sm:$0xf]
  %v455 = vld [vmem:[%s1 + $0x6a4] sm:$0xf]
  %v456 = vld [vmem:[%s1 + $0x6a8] sm:$0xf]
  %v457 = vld [vmem:[%s1 + $0x6ac] sm:$0xf]
  %v458 = vld [vmem:[%s1 + $0x6b0] sm:$0xf]
  %v459 = vld [vmem:[%s1 + $0x6b4] sm:$0xf]
  %v460 = vld [vmem:[%s1 + $0x6b8] sm:$0xf]
  %v461 = vld [vmem:[%s1 + $0x6bc] sm:$0xf]
  %v462 = vld [vmem:[%s1 + $0x6c0] sm:$0xf]
  %v463 = vld [vmem:[%s1 + $0x6c4] sm:$0xf]
  %v464 = vld [vmem:[%s1 + $0x6c8] sm:$0xf]
  %v465 = vld [vmem:[%s1 + $0x6cc] sm:$0xf]
  %v466 = vld [vmem:[%s1 + $0x6d0] sm:$0xf]
  %v467 = vld [vmem:[%s1 + $0x6d4] sm:$0xf]
  %v468 = vld [vmem:[%s1 + $0x6d8] sm:$0xf]
  %v469 = vld [vmem:[%s1 + $0x6dc] sm:$0xf]
  %v470 = vld [vmem:[%s1 + $0x6e0] sm:$0xf]
  %v471 = vld [vmem:[%s1 + $0x6e4] sm:$0xf]
  %v472 = vld [vmem:[%s1 + $0x6e8] sm:$0xf]
  %v473 = vld [vmem:[%s1 + $0x6ec] sm:$0xf]
  %v474 = vld [vmem:[%s1 + $0x6f0] sm:$0xf]
  %v475 = vld [vmem:[%s1 + $0x6f4] sm:$0xf]
  %v476 = vld [vmem:[%s1 + $0x6f8] sm:$0xf]
  %v477 = vld [vmem:[%s1 + $0x6fc] sm:$0xf]
  %v478 = vld [vmem:[%s1 + $0x700] sm:$0xf]
  %v479 = vld [vmem:[%s1 + $0x704] sm:$0xf]
  %v480 = vld [vmem:[%s1 + $0x708] sm:$0xf]
  %v481 = vld [vmem:[%s1 + $0x70c] sm:$0xf]
  %v482 = vld [vmem:[%s1 + $0x710] sm:$0xf]
  %v483 = vld [vmem:[%s1 + $0x714] sm:$0xf]
  %v484 = vld [vmem:[%s1 + $0x718] sm:$0xf]
  %v485 = vld [vmem:[%s1 + $0x71c] sm:$0xf]
  %v486 = vld [vmem:[%s1 + $0x720] sm:$0xf]
  %v487 = vld [vmem:[%s1 + $0x724] sm:$0xf]
  %v488 = vld [vmem:[%s1 + $0x728] sm:$0xf]
  %v489 = vld [vmem:[%s1 + $0x72c] sm:$0xf]
  %v490 = vld [vmem:[%s1 + $0x730] sm:$0xf]
  %v491 = vld [vmem:[%s1 + $0x734] sm:$0xf]
  %v492 = vld [vmem:[%s1 + $0x738] sm:$0xf]
  %v493 = vld [vmem:[%s1 + $0x73c] sm:$0xf]
  %v494 = vld [vmem:[%s1 + $0x740] sm:$0xf]
  %v495 = vld [vmem:[%s1 + $0x744] sm:$0xf]
  %v496 = vld [vmem:[%s1 + $0x748] sm:$0xf]
  %v497 = vld [vmem:[%s1 + $0x74c] sm:$0xf]
  %v498 = vld [vmem:[%s1 + $0x750] sm:$0xf]
  %v499 = vld [vmem:[%s1 + $0x754] sm:$0xf]
  %v500 = vld [vmem:[%s1 + $0x758] sm:$0xf]
  %v501 = vld [vmem:[%s1 + $0x75c] sm:$0xf]
  %v502 = vld [vmem:[%s1 + $0x760] sm:$0xf]
  %v503 = vld [vmem:[%s1 + $0x764] sm:$0xf]
  %v504 = vld [vmem:[%s1 + $0x768] sm:$0xf]
  %v505 = vld [vmem:[%s1 + $0x76c] sm:$0xf]
  %v506 = vld [vmem:[%s1 + $0x770] sm:$0xf]
  %v507 = vld [vmem:[%s1 + $0x774] sm:$0xf]
  %v508 = vld [vmem:[%s1 + $0x778] sm:$0xf]
  %v509 = vld [vmem:[%s1 + $0x77c] sm:$0xf]
  %v510 = vld [vmem:[%s1 + $0x780] sm:$0xf]
  %v511 = vld [vmem:[%s1 + $0x784] sm:$0xf]
  %v512 = vld [vmem:[%s1 + $0x788] sm:$0xf]
  %v513 = vld [vmem:[%s1 + $0x78c] sm:$0xf]
  %v514 = vld [vmem:[%s1 + $0x790] sm:$0xf]
  %v515 = vld [vmem:[%s1 + $0x794] sm:$0xf]
  %v516 = vld [vmem:[%s1 + $0x798] sm:$0xf]
  %v517 = vld [vmem:[%s1 + $0x79c] sm:$0xf]
  %v518 = vld [vmem:[%s1 + $0x7a0] sm:$0xf]
  %v519 = vld [vmem:[%s1 + $0x7a4] sm:$0xf]
  %v520 = vld [vmem:[%s1 + $0x7a8] sm:$0xf]
  %v521 = vld [vmem:[%s1 + $0x7ac] sm:$0xf]
  %v522 = vld [vmem:[%s1 + $0x7b0] sm:$0xf]
  %v523 = vld [vmem:[%s1 + $0x7b4] sm:$0xf]
  %v524 = vld [vmem:[%s1 + $0x7b8] sm:$0xf]
  %v525 = vld [vmem:[%s1 + $0x7bc] sm:$0xf]
  %v526 = vld [vmem:[%s1 + $0x7c0] sm:$0xf]
  %v527 = vld [vmem:[%s1 + $0x7c4] sm:$0xf]
  %v528 = vld [vmem:[%s1 + $0x7c8] sm:$0xf]
  %v529 = vld [vmem:[%s1 + $0x7cc] sm:$0xf]
  %v530 = vld [vmem:[%s1 + $0x7d0] sm:$0xf]
  %v531 = vld [vmem:[%s1 + $0x7d4] sm:$0xf]
  %v532 = vld [vmem:[%s1 + $0x7d8] sm:$0xf]
  %v533 = vld [vmem:[%s1 + $0x7dc] sm:$0xf]
  %v534 = vld [vmem:[%s1 + $0x7e0] sm:$0xf]
  %v535 = vld [vmem:[%s1 + $0x7e4] sm:$0xf]
  %v536 = vld [vmem:[%s1 + $0x7e8] sm:$0xf]
  %v537 = vld [vmem:[%s1 + $0x7ec] sm:$0xf]
  %v538 = vld [vmem:[%s1 + $0x7f0] sm:$0xf]
  %v539 = vld [vmem:[%s1 + $0x7f4] sm:$0xf]
  %v540 = vld [vmem:[%s1 + $0x7f8] sm:$0xf]
  %v541 = vld [vmem:[%s1 + $0x7fc] sm:$0xf]
  %v542 = vld [vmem:[%s2] sm:$0x1]
  %v544 = vperm.slane %v542, 0
  %v562 = vunpack.c.l.b16 %v14
  %v563 = vunpack.c.h.b16 %v14
  %v564 = vunpack.c.l.b16 %v15
  %v565 = vunpack.c.h.b16 %v15
  %v566 = vunpack.c.l.b16 %v16
  %v567 = vunpack.c.h.b16 %v16
  %v568 = vunpack.c.l.b16 %v17
  %v569 = vunpack.c.h.b16 %v17
  %v570 = vunpack.c.l.b16 %v18
  %v571 = vunpack.c.h.b16 %v18
  %v572 = vunpack.c.l.b16 %v19
  %v573 = vunpack.c.h.b16 %v19
  %v574 = vunpack.c.l.b16 %v20
  %v575 = vunpack.c.h.b16 %v20
  %v576 = vunpack.c.l.b16 %v21
  %v577 = vunpack.c.h.b16 %v21
  %v578 = vunpack.c.l.b16 %v22
  %v579 = vunpack.c.h.b16 %v22
  %v580 = vunpack.c.l.b16 %v23
  %v581 = vunpack.c.h.b16 %v23
  %v582 = vunpack.c.l.b16 %v24
  %v583 = vunpack.c.h.b16 %v24
  %v584 = vunpack.c.l.b16 %v25
  %v585 = vunpack.c.h.b16 %v25
  %v586 = vunpack.c.l.b16 %v26
  %v587 = vunpack.c.h.b16 %v26
  %v588 = vunpack.c.l.b16 %v27
  %v589 = vunpack.c.h.b16 %v27
  %v590 = vunpack.c.l.b16 %v28
  %v591 = vunpack.c.h.b16 %v28
  %v592 = vunpack.c.l.b16 %v29
  %v593 = vunpack.c.h.b16 %v29
  %v594 = vpack.c.b16 %v562, %v562
  %v595 = vpack.c.b16 %v563, %v563
  %v596 = vpack.c.b16 %v564, %v564
  %v597 = vpack.c.b16 %v565, %v565
  %v598 = vpack.c.b16 %v566, %v566
  %v599 = vpack.c.b16 %v567, %v567
  %v600 = vpack.c.b16 %v568, %v568
  %v601 = vpack.c.b16 %v569, %v569
  %v602 = vpack.c.b16 %v570, %v570
  %v603 = vpack.c.b16 %v571, %v571
  %v604 = vpack.c.b16 %v572, %v572
  %v605 = vpack.c.b16 %v573, %v573
  %v606 = vpack.c.b16 %v574, %v574
  %v607 = vpack.c.b16 %v575, %v575
  %v608 = vpack.c.b16 %v576, %v576
  %v609 = vpack.c.b16 %v577, %v577
  %v610 = vpack.c.b16 %v578, %v578
  %v611 = vpack.c.b16 %v579, %v579
  %v612 = vpack.c.b16 %v580, %v580
  %v613 = vpack.c.b16 %v581, %v581
  %v614 = vpack.c.b16 %v582, %v582
  %v615 = vpack.c.b16 %v583, %v583
  %v616 = vpack.c.b16 %v584, %v584
  %v617 = vpack.c.b16 %v585, %v585
  %v618 = vpack.c.b16 %v586, %v586
  %v619 = vpack.c.b16 %v587, %v587
  %v620 = vpack.c.b16 %v588, %v588
  %v621 = vpack.c.b16 %v589, %v589
  %v622 = vpack.c.b16 %v590, %v590
  %v623 = vpack.c.b16 %v591, %v591
  %v624 = vpack.c.b16 %v592, %v592
  %v625 = vpack.c.b16 %v593, %v593
  %v1170 = vunpack.c.l.b16 %v30
  %v1171 = vunpack.c.l.b16 %v31
  %v1172 = vunpack.c.l.b16 %v32
  %v1173 = vunpack.c.l.b16 %v33
  %v1174 = vunpack.c.l.b16 %v34
  %v1175 = vunpack.c.l.b16 %v35
  %v1176 = vunpack.c.l.b16 %v36
  %v1177 = vunpack.c.l.b16 %v37
  %v1178 = vunpack.c.l.b16 %v38
  %v1179 = vunpack.c.l.b16 %v39
  %v1180 = vunpack.c.l.b16 %v40
  %v1181 = vunpack.c.l.b16 %v41
  %v1182 = vunpack.c.l.b16 %v42
  %v1183 = vunpack.c.l.b16 %v43
  %v1184 = vunpack.c.l.b16 %v44
  %v1185 = vunpack.c.l.b16 %v45
  %v1186 = vunpack.c.l.b16 %v46
  %v1187 = vunpack.c.l.b16 %v47
  %v1188 = vunpack.c.l.b16 %v48
  %v1189 = vunpack.c.l.b16 %v49
  %v1190 = vunpack.c.l.b16 %v50
  %v1191 = vunpack.c.l.b16 %v51
  %v1192 = vunpack.c.l.b16 %v52
  %v1193 = vunpack.c.l.b16 %v53
  %v1194 = vunpack.c.l.b16 %v54
  %v1195 = vunpack.c.l.b16 %v55
  %v1196 = vunpack.c.l.b16 %v56
  %v1197 = vunpack.c.l.b16 %v57
  %v1198 = vunpack.c.l.b16 %v58
  %v1199 = vunpack.c.l.b16 %v59
  %v1200 = vunpack.c.l.b16 %v60
  %v1201 = vunpack.c.l.b16 %v61
  %v1202 = vunpack.c.l.b16 %v62
  %v1203 = vunpack.c.l.b16 %v63
  %v1204 = vunpack.c.l.b16 %v64
  %v1205 = vunpack.c.l.b16 %v65
  %v1206 = vunpack.c.l.b16 %v66
  %v1207 = vunpack.c.l.b16 %v67
  %v1208 = vunpack.c.l.b16 %v68
  %v1209 = vunpack.c.l.b16 %v69
  %v1210 = vunpack.c.l.b16 %v70
  %v1211 = vunpack.c.l.b16 %v71
  %v1212 = vunpack.c.l.b16 %v72
  %v1213 = vunpack.c.l.b16 %v73
  %v1214 = vunpack.c.l.b16 %v74
  %v1215 = vunpack.c.l.b16 %v75
  %v1216 = vunpack.c.l.b16 %v76
  %v1217 = vunpack.c.l.b16 %v77
  %v1218 = vunpack.c.l.b16 %v78
  %v1219 = vunpack.c.l.b16 %v79
  %v1220 = vunpack.c.l.b16 %v80
  %v1221 = vunpack.c.l.b16 %v81
  %v1222 = vunpack.c.l.b16 %v82
  %v1223 = vunpack.c.l.b16 %v83
  %v1224 = vunpack.c.l.b16 %v84
  %v1225 = vunpack.c.l.b16 %v85
  %v1226 = vunpack.c.l.b16 %v86
  %v1227 = vunpack.c.l.b16 %v87
  %v1228 = vunpack.c.l.b16 %v88
  %v1229 = vunpack.c.l.b16 %v89
  %v1230 = vunpack.c.l.b16 %v90
  %v1231 = vunpack.c.l.b16 %v91
  %v1232 = vunpack.c.l.b16 %v92
  %v1233 = vunpack.c.l.b16 %v93
  %v1234 = vunpack.c.l.b16 %v94
  %v1235 = vunpack.c.l.b16 %v95
  %v1236 = vunpack.c.l.b16 %v96
  %v1237 = vunpack.c.l.b16 %v97
  %v1238 = vunpack.c.l.b16 %v98
  %v1239 = vunpack.c.l.b16 %v99
  %v1240 = vunpack.c.l.b16 %v100
  %v1241 = vunpack.c.l.b16 %v101
  %v1242 = vunpack.c.l.b16 %v102
  %v1243 = vunpack.c.l.b16 %v103
  %v1244 = vunpack.c.l.b16 %v104
  %v1245 = vunpack.c.l.b16 %v105
  %v1246 = vunpack.c.l.b16 %v106
  %v1247 = vunpack.c.l.b16 %v107
  %v1248 = vunpack.c.l.b16 %v108
  %v1249 = vunpack.c.l.b16 %v109
  %v1250 = vunpack.c.l.b16 %v110
  %v1251 = vunpack.c.l.b16 %v111
  %v1252 = vunpack.c.l.b16 %v112
  %v1253 = vunpack.c.l.b16 %v113
  %v1254 = vunpack.c.l.b16 %v114
  %v1255 = vunpack.c.l.b16 %v115
  %v1256 = vunpack.c.l.b16 %v116
  %v1257 = vunpack.c.l.b16 %v117
  %v1258 = vunpack.c.l.b16 %v118
  %v1259 = vunpack.c.l.b16 %v119
  %v1260 = vunpack.c.l.b16 %v120
  %v1261 = vunpack.c.l.b16 %v121
  %v1262 = vunpack.c.l.b16 %v122
  %v1263 = vunpack.c.l.b16 %v123
  %v1264 = vunpack.c.l.b16 %v124
  %v1265 = vunpack.c.l.b16 %v125
  %v1266 = vunpack.c.l.b16 %v126
  %v1267 = vunpack.c.l.b16 %v127
  %v1268 = vunpack.c.l.b16 %v128
  %v1269 = vunpack.c.l.b16 %v129
  %v1270 = vunpack.c.l.b16 %v130
  %v1271 = vunpack.c.l.b16 %v131
  %v1272 = vunpack.c.l.b16 %v132
  %v1273 = vunpack.c.l.b16 %v133
  %v1274 = vunpack.c.l.b16 %v134
  %v1275 = vunpack.c.l.b16 %v135
  %v1276 = vunpack.c.l.b16 %v136
  %v1277 = vunpack.c.l.b16 %v137
  %v1278 = vunpack.c.l.b16 %v138
  %v1279 = vunpack.c.l.b16 %v139
  %v1280 = vunpack.c.l.b16 %v140
  %v1281 = vunpack.c.l.b16 %v141
  %v1282 = vunpack.c.l.b16 %v142
  %v1283 = vunpack.c.l.b16 %v143
  %v1284 = vunpack.c.l.b16 %v144
  %v1285 = vunpack.c.l.b16 %v145
  %v1286 = vunpack.c.l.b16 %v146
  %v1287 = vunpack.c.l.b16 %v147
  %v1288 = vunpack.c.l.b16 %v148
  %v1289 = vunpack.c.l.b16 %v149
  %v1290 = vunpack.c.l.b16 %v150
  %v1291 = vunpack.c.l.b16 %v151
  %v1292 = vunpack.c.l.b16 %v152
  %v1293 = vunpack.c.l.b16 %v153
  %v1294 = vunpack.c.l.b16 %v154
  %v1295 = vunpack.c.l.b16 %v155
  %v1296 = vunpack.c.l.b16 %v156
  %v1297 = vunpack.c.l.b16 %v157
  %v1298 = vunpack.c.l.b16 %v158
  %v1299 = vunpack.c.l.b16 %v159
  %v1300 = vunpack.c.l.b16 %v160
  %v1301 = vunpack.c.l.b16 %v161
  %v1302 = vunpack.c.l.b16 %v162
  %v1303 = vunpack.c.l.b16 %v163
  %v1304 = vunpack.c.l.b16 %v164
  %v1305 = vunpack.c.l.b16 %v165
  %v1306 = vunpack.c.l.b16 %v166
  %v1307 = vunpack.c.l.b16 %v167
  %v1308 = vunpack.c.l.b16 %v168
  %v1309 = vunpack.c.l.b16 %v169
  %v1310 = vunpack.c.l.b16 %v170
  %v1311 = vunpack.c.l.b16 %v171
  %v1312 = vunpack.c.l.b16 %v172
  %v1313 = vunpack.c.l.b16 %v173
  %v1314 = vunpack.c.l.b16 %v174
  %v1315 = vunpack.c.l.b16 %v175
  %v1316 = vunpack.c.l.b16 %v176
  %v1317 = vunpack.c.l.b16 %v177
  %v1318 = vunpack.c.l.b16 %v178
  %v1319 = vunpack.c.l.b16 %v179
  %v1320 = vunpack.c.l.b16 %v180
  %v1321 = vunpack.c.l.b16 %v181
  %v1322 = vunpack.c.l.b16 %v182
  %v1323 = vunpack.c.l.b16 %v183
  %v1324 = vunpack.c.l.b16 %v184
  %v1325 = vunpack.c.l.b16 %v185
  %v1326 = vunpack.c.l.b16 %v186
  %v1327 = vunpack.c.l.b16 %v187
  %v1328 = vunpack.c.l.b16 %v188
  %v1329 = vunpack.c.l.b16 %v189
  %v1330 = vunpack.c.l.b16 %v190
  %v1331 = vunpack.c.l.b16 %v191
  %v1332 = vunpack.c.l.b16 %v192
  %v1333 = vunpack.c.l.b16 %v193
  %v1334 = vunpack.c.l.b16 %v194
  %v1335 = vunpack.c.l.b16 %v195
  %v1336 = vunpack.c.l.b16 %v196
  %v1337 = vunpack.c.l.b16 %v197
  %v1338 = vunpack.c.l.b16 %v198
  %v1339 = vunpack.c.l.b16 %v199
  %v1340 = vunpack.c.l.b16 %v200
  %v1341 = vunpack.c.l.b16 %v201
  %v1342 = vunpack.c.l.b16 %v202
  %v1343 = vunpack.c.l.b16 %v203
  %v1344 = vunpack.c.l.b16 %v204
  %v1345 = vunpack.c.l.b16 %v205
  %v1346 = vunpack.c.l.b16 %v206
  %v1347 = vunpack.c.l.b16 %v207
  %v1348 = vunpack.c.l.b16 %v208
  %v1349 = vunpack.c.l.b16 %v209
  %v1350 = vunpack.c.l.b16 %v210
  %v1351 = vunpack.c.l.b16 %v211
  %v1352 = vunpack.c.l.b16 %v212
  %v1353 = vunpack.c.l.b16 %v213
  %v1354 = vunpack.c.l.b16 %v214
  %v1355 = vunpack.c.l.b16 %v215
  %v1356 = vunpack.c.l.b16 %v216
  %v1357 = vunpack.c.l.b16 %v217
  %v1358 = vunpack.c.l.b16 %v218
  %v1359 = vunpack.c.l.b16 %v219
  %v1360 = vunpack.c.l.b16 %v220
  %v1361 = vunpack.c.l.b16 %v221
  %v1362 = vunpack.c.l.b16 %v222
  %v1363 = vunpack.c.l.b16 %v223
  %v1364 = vunpack.c.l.b16 %v224
  %v1365 = vunpack.c.l.b16 %v225
  %v1366 = vunpack.c.l.b16 %v226
  %v1367 = vunpack.c.l.b16 %v227
  %v1368 = vunpack.c.l.b16 %v228
  %v1369 = vunpack.c.l.b16 %v229
  %v1370 = vunpack.c.l.b16 %v230
  %v1371 = vunpack.c.l.b16 %v231
  %v1372 = vunpack.c.l.b16 %v232
  %v1373 = vunpack.c.l.b16 %v233
  %v1374 = vunpack.c.l.b16 %v234
  %v1375 = vunpack.c.l.b16 %v235
  %v1376 = vunpack.c.l.b16 %v236
  %v1377 = vunpack.c.l.b16 %v237
  %v1378 = vunpack.c.l.b16 %v238
  %v1379 = vunpack.c.l.b16 %v239
  %v1380 = vunpack.c.l.b16 %v240
  %v1381 = vunpack.c.l.b16 %v241
  %v1382 = vunpack.c.l.b16 %v242
  %v1383 = vunpack.c.l.b16 %v243
  %v1384 = vunpack.c.l.b16 %v244
  %v1385 = vunpack.c.l.b16 %v245
  %v1386 = vunpack.c.l.b16 %v246
  %v1387 = vunpack.c.l.b16 %v247
  %v1388 = vunpack.c.l.b16 %v248
  %v1389 = vunpack.c.l.b16 %v249
  %v1390 = vunpack.c.l.b16 %v250
  %v1391 = vunpack.c.l.b16 %v251
  %v1392 = vunpack.c.l.b16 %v252
  %v1393 = vunpack.c.l.b16 %v253
  %v1394 = vunpack.c.l.b16 %v254
  %v1395 = vunpack.c.l.b16 %v255
  %v1396 = vunpack.c.l.b16 %v256
  %v1397 = vunpack.c.l.b16 %v257
  %v1398 = vunpack.c.l.b16 %v258
  %v1399 = vunpack.c.l.b16 %v259
  %v1400 = vunpack.c.l.b16 %v260
  %v1401 = vunpack.c.l.b16 %v261
  %v1402 = vunpack.c.l.b16 %v262
  %v1403 = vunpack.c.l.b16 %v263
  %v1404 = vunpack.c.l.b16 %v264
  %v1405 = vunpack.c.l.b16 %v265
  %v1406 = vunpack.c.l.b16 %v266
  %v1407 = vunpack.c.l.b16 %v267
  %v1408 = vunpack.c.l.b16 %v268
  %v1409 = vunpack.c.l.b16 %v269
  %v1410 = vunpack.c.l.b16 %v270
  %v1411 = vunpack.c.l.b16 %v271
  %v1412 = vunpack.c.l.b16 %v272
  %v1413 = vunpack.c.l.b16 %v273
  %v1414 = vunpack.c.l.b16 %v274
  %v1415 = vunpack.c.l.b16 %v275
  %v1416 = vunpack.c.l.b16 %v276
  %v1417 = vunpack.c.l.b16 %v277
  %v1418 = vunpack.c.l.b16 %v278
  %v1419 = vunpack.c.l.b16 %v279
  %v1420 = vunpack.c.l.b16 %v280
  %v1421 = vunpack.c.l.b16 %v281
  %v1422 = vunpack.c.l.b16 %v282
  %v1423 = vunpack.c.l.b16 %v283
  %v1424 = vunpack.c.l.b16 %v284
  %v1425 = vunpack.c.l.b16 %v285
  %v1426 = vunpack.c.l.b16 %v286
  %v1427 = vunpack.c.l.b16 %v287
  %v1428 = vunpack.c.l.b16 %v288
  %v1429 = vunpack.c.l.b16 %v289
  %v1430 = vunpack.c.l.b16 %v290
  %v1431 = vunpack.c.l.b16 %v291
  %v1432 = vunpack.c.l.b16 %v292
  %v1433 = vunpack.c.l.b16 %v293
  %v1434 = vunpack.c.l.b16 %v294
  %v1435 = vunpack.c.l.b16 %v295
  %v1436 = vunpack.c.l.b16 %v296
  %v1437 = vunpack.c.l.b16 %v297
  %v1438 = vunpack.c.l.b16 %v298
  %v1439 = vunpack.c.l.b16 %v299
  %v1440 = vunpack.c.l.b16 %v300
  %v1441 = vunpack.c.l.b16 %v301
  %v1442 = vunpack.c.l.b16 %v302
  %v1443 = vunpack.c.l.b16 %v303
  %v1444 = vunpack.c.l.b16 %v304
  %v1445 = vunpack.c.l.b16 %v305
  %v1446 = vunpack.c.l.b16 %v306
  %v1447 = vunpack.c.l.b16 %v307
  %v1448 = vunpack.c.l.b16 %v308
  %v1449 = vunpack.c.l.b16 %v309
  %v1450 = vunpack.c.l.b16 %v310
  %v1451 = vunpack.c.l.b16 %v311
  %v1452 = vunpack.c.l.b16 %v312
  %v1453 = vunpack.c.l.b16 %v313
  %v1454 = vunpack.c.l.b16 %v314
  %v1455 = vunpack.c.l.b16 %v315
  %v1456 = vunpack.c.l.b16 %v316
  %v1457 = vunpack.c.l.b16 %v317
  %v1458 = vunpack.c.l.b16 %v318
  %v1459 = vunpack.c.l.b16 %v319
  %v1460 = vunpack.c.l.b16 %v320
  %v1461 = vunpack.c.l.b16 %v321
  %v1462 = vunpack.c.l.b16 %v322
  %v1463 = vunpack.c.l.b16 %v323
  %v1464 = vunpack.c.l.b16 %v324
  %v1465 = vunpack.c.l.b16 %v325
  %v1466 = vunpack.c.l.b16 %v326
  %v1467 = vunpack.c.l.b16 %v327
  %v1468 = vunpack.c.l.b16 %v328
  %v1469 = vunpack.c.l.b16 %v329
  %v1470 = vunpack.c.l.b16 %v330
  %v1471 = vunpack.c.l.b16 %v331
  %v1472 = vunpack.c.l.b16 %v332
  %v1473 = vunpack.c.l.b16 %v333
  %v1474 = vunpack.c.l.b16 %v334
  %v1475 = vunpack.c.l.b16 %v335
  %v1476 = vunpack.c.l.b16 %v336
  %v1477 = vunpack.c.l.b16 %v337
  %v1478 = vunpack.c.l.b16 %v338
  %v1479 = vunpack.c.l.b16 %v339
  %v1480 = vunpack.c.l.b16 %v340
  %v1481 = vunpack.c.l.b16 %v341
  %v1482 = vunpack.c.l.b16 %v342
  %v1483 = vunpack.c.l.b16 %v343
  %v1484 = vunpack.c.l.b16 %v344
  %v1485 = vunpack.c.l.b16 %v345
  %v1486 = vunpack.c.l.b16 %v346
  %v1487 = vunpack.c.l.b16 %v347
  %v1488 = vunpack.c.l.b16 %v348
  %v1489 = vunpack.c.l.b16 %v349
  %v1490 = vunpack.c.l.b16 %v350
  %v1491 = vunpack.c.l.b16 %v351
  %v1492 = vunpack.c.l.b16 %v352
  %v1493 = vunpack.c.l.b16 %v353
  %v1494 = vunpack.c.l.b16 %v354
  %v1495 = vunpack.c.l.b16 %v355
  %v1496 = vunpack.c.l.b16 %v356
  %v1497 = vunpack.c.l.b16 %v357
  %v1498 = vunpack.c.l.b16 %v358
  %v1499 = vunpack.c.l.b16 %v359
  %v1500 = vunpack.c.l.b16 %v360
  %v1501 = vunpack.c.l.b16 %v361
  %v1502 = vunpack.c.l.b16 %v362
  %v1503 = vunpack.c.l.b16 %v363
  %v1504 = vunpack.c.l.b16 %v364
  %v1505 = vunpack.c.l.b16 %v365
  %v1506 = vunpack.c.l.b16 %v366
  %v1507 = vunpack.c.l.b16 %v367
  %v1508 = vunpack.c.l.b16 %v368
  %v1509 = vunpack.c.l.b16 %v369
  %v1510 = vunpack.c.l.b16 %v370
  %v1511 = vunpack.c.l.b16 %v371
  %v1512 = vunpack.c.l.b16 %v372
  %v1513 = vunpack.c.l.b16 %v373
  %v1514 = vunpack.c.l.b16 %v374
  %v1515 = vunpack.c.l.b16 %v375
  %v1516 = vunpack.c.l.b16 %v376
  %v1517 = vunpack.c.l.b16 %v377
  %v1518 = vunpack.c.l.b16 %v378
  %v1519 = vunpack.c.l.b16 %v379
  %v1520 = vunpack.c.l.b16 %v380
  %v1521 = vunpack.c.l.b16 %v381
  %v1522 = vunpack.c.l.b16 %v382
  %v1523 = vunpack.c.l.b16 %v383
  %v1524 = vunpack.c.l.b16 %v384
  %v1525 = vunpack.c.l.b16 %v385
  %v1526 = vunpack.c.l.b16 %v386
  %v1527 = vunpack.c.l.b16 %v387
  %v1528 = vunpack.c.l.b16 %v388
  %v1529 = vunpack.c.l.b16 %v389
  %v1530 = vunpack.c.l.b16 %v390
  %v1531 = vunpack.c.l.b16 %v391
  %v1532 = vunpack.c.l.b16 %v392
  %v1533 = vunpack.c.l.b16 %v393
  %v1534 = vunpack.c.l.b16 %v394
  %v1535 = vunpack.c.l.b16 %v395
  %v1536 = vunpack.c.l.b16 %v396
  %v1537 = vunpack.c.l.b16 %v397
  %v1538 = vunpack.c.l.b16 %v398
  %v1539 = vunpack.c.l.b16 %v399
  %v1540 = vunpack.c.l.b16 %v400
  %v1541 = vunpack.c.l.b16 %v401
  %v1542 = vunpack.c.l.b16 %v402
  %v1543 = vunpack.c.l.b16 %v403
  %v1544 = vunpack.c.l.b16 %v404
  %v1545 = vunpack.c.l.b16 %v405
  %v1546 = vunpack.c.l.b16 %v406
  %v1547 = vunpack.c.l.b16 %v407
  %v1548 = vunpack.c.l.b16 %v408
  %v1549 = vunpack.c.l.b16 %v409
  %v1550 = vunpack.c.l.b16 %v410
  %v1551 = vunpack.c.l.b16 %v411
  %v1552 = vunpack.c.l.b16 %v412
  %v1553 = vunpack.c.l.b16 %v413
  %v1554 = vunpack.c.l.b16 %v414
  %v1555 = vunpack.c.l.b16 %v415
  %v1556 = vunpack.c.l.b16 %v416
  %v1557 = vunpack.c.l.b16 %v417
  %v1558 = vunpack.c.l.b16 %v418
  %v1559 = vunpack.c.l.b16 %v419
  %v1560 = vunpack.c.l.b16 %v420
  %v1561 = vunpack.c.l.b16 %v421
  %v1562 = vunpack.c.l.b16 %v422
  %v1563 = vunpack.c.l.b16 %v423
  %v1564 = vunpack.c.l.b16 %v424
  %v1565 = vunpack.c.l.b16 %v425
  %v1566 = vunpack.c.l.b16 %v426
  %v1567 = vunpack.c.l.b16 %v427
  %v1568 = vunpack.c.l.b16 %v428
  %v1569 = vunpack.c.l.b16 %v429
  %v1570 = vunpack.c.l.b16 %v430
  %v1571 = vunpack.c.l.b16 %v431
  %v1572 = vunpack.c.l.b16 %v432
  %v1573 = vunpack.c.l.b16 %v433
  %v1574 = vunpack.c.l.b16 %v434
  %v1575 = vunpack.c.l.b16 %v435
  %v1576 = vunpack.c.l.b16 %v436
  %v1577 = vunpack.c.l.b16 %v437
  %v1578 = vunpack.c.l.b16 %v438
  %v1579 = vunpack.c.l.b16 %v439
  %v1580 = vunpack.c.l.b16 %v440
  %v1581 = vunpack.c.l.b16 %v441
  %v1582 = vunpack.c.l.b16 %v442
  %v1583 = vunpack.c.l.b16 %v443
  %v1584 = vunpack.c.l.b16 %v444
  %v1585 = vunpack.c.l.b16 %v445
  %v1586 = vunpack.c.l.b16 %v446
  %v1587 = vunpack.c.l.b16 %v447
  %v1588 = vunpack.c.l.b16 %v448
  %v1589 = vunpack.c.l.b16 %v449
  %v1590 = vunpack.c.l.b16 %v450
  %v1591 = vunpack.c.l.b16 %v451
  %v1592 = vunpack.c.l.b16 %v452
  %v1593 = vunpack.c.l.b16 %v453
  %v1594 = vunpack.c.l.b16 %v454
  %v1595 = vunpack.c.l.b16 %v455
  %v1596 = vunpack.c.l.b16 %v456
  %v1597 = vunpack.c.l.b16 %v457
  %v1598 = vunpack.c.l.b16 %v458
  %v1599 = vunpack.c.l.b16 %v459
  %v1600 = vunpack.c.l.b16 %v460
  %v1601 = vunpack.c.l.b16 %v461
  %v1602 = vunpack.c.l.b16 %v462
  %v1603 = vunpack.c.l.b16 %v463
  %v1604 = vunpack.c.l.b16 %v464
  %v1605 = vunpack.c.l.b16 %v465
  %v1606 = vunpack.c.l.b16 %v466
  %v1607 = vunpack.c.l.b16 %v467
  %v1608 = vunpack.c.l.b16 %v468
  %v1609 = vunpack.c.l.b16 %v469
  %v1610 = vunpack.c.l.b16 %v470
  %v1611 = vunpack.c.l.b16 %v471
  %v1612 = vunpack.c.l.b16 %v472
  %v1613 = vunpack.c.l.b16 %v473
  %v1614 = vunpack.c.l.b16 %v474
  %v1615 = vunpack.c.l.b16 %v475
  %v1616 = vunpack.c.l.b16 %v476
  %v1617 = vunpack.c.l.b16 %v477
  %v1618 = vunpack.c.l.b16 %v478
  %v1619 = vunpack.c.l.b16 %v479
  %v1620 = vunpack.c.l.b16 %v480
  %v1621 = vunpack.c.l.b16 %v481
  %v1622 = vunpack.c.l.b16 %v482
  %v1623 = vunpack.c.l.b16 %v483
  %v1624 = vunpack.c.l.b16 %v484
  %v1625 = vunpack.c.l.b16 %v485
  %v1626 = vunpack.c.l.b16 %v486
  %v1627 = vunpack.c.l.b16 %v487
  %v1628 = vunpack.c.l.b16 %v488
  %v1629 = vunpack.c.l.b16 %v489
  %v1630 = vunpack.c.l.b16 %v490
  %v1631 = vunpack.c.l.b16 %v491
  %v1632 = vunpack.c.l.b16 %v492
  %v1633 = vunpack.c.l.b16 %v493
  %v1634 = vunpack.c.l.b16 %v494
  %v1635 = vunpack.c.l.b16 %v495
  %v1636 = vunpack.c.l.b16 %v496
  %v1637 = vunpack.c.l.b16 %v497
  %v1638 = vunpack.c.l.b16 %v498
  %v1639 = vunpack.c.l.b16 %v499
  %v1640 = vunpack.c.l.b16 %v500
  %v1641 = vunpack.c.l.b16 %v501
  %v1642 = vunpack.c.l.b16 %v502
  %v1643 = vunpack.c.l.b16 %v503
  %v1644 = vunpack.c.l.b16 %v504
  %v1645 = vunpack.c.l.b16 %v505
  %v1646 = vunpack.c.l.b16 %v506
  %v1647 = vunpack.c.l.b16 %v507
  %v1648 = vunpack.c.l.b16 %v508
  %v1649 = vunpack.c.l.b16 %v509
  %v1650 = vunpack.c.l.b16 %v510
  %v1651 = vunpack.c.l.b16 %v511
  %v1652 = vunpack.c.l.b16 %v512
  %v1653 = vunpack.c.l.b16 %v513
  %v1654 = vunpack.c.l.b16 %v514
  %v1655 = vunpack.c.l.b16 %v515
  %v1656 = vunpack.c.l.b16 %v516
  %v1657 = vunpack.c.l.b16 %v517
  %v1658 = vunpack.c.l.b16 %v518
  %v1659 = vunpack.c.l.b16 %v519
  %v1660 = vunpack.c.l.b16 %v520
  %v1661 = vunpack.c.l.b16 %v521
  %v1662 = vunpack.c.l.b16 %v522
  %v1663 = vunpack.c.l.b16 %v523
  %v1664 = vunpack.c.l.b16 %v524
  %v1665 = vunpack.c.l.b16 %v525
  %v1666 = vunpack.c.l.b16 %v526
  %v1667 = vunpack.c.l.b16 %v527
  %v1668 = vunpack.c.l.b16 %v528
  %v1669 = vunpack.c.l.b16 %v529
  %v1670 = vunpack.c.l.b16 %v530
  %v1671 = vunpack.c.l.b16 %v531
  %v1672 = vunpack.c.l.b16 %v532
  %v1673 = vunpack.c.l.b16 %v533
  %v1674 = vunpack.c.l.b16 %v534
  %v1675 = vunpack.c.l.b16 %v535
  %v1676 = vunpack.c.l.b16 %v536
  %v1677 = vunpack.c.l.b16 %v537
  %v1678 = vunpack.c.l.b16 %v538
  %v1679 = vunpack.c.l.b16 %v539
  %v1680 = vunpack.c.l.b16 %v540
  %v1681 = vunpack.c.l.b16 %v541
  %v1682 = vpack.c.b16 %v1171, %v1170
  %v1683 = vpack.c.b16 %v1173, %v1172
  %v1684 = vpack.c.b16 %v1175, %v1174
  %v1685 = vpack.c.b16 %v1177, %v1176
  %v1686 = vpack.c.b16 %v1179, %v1178
  %v1687 = vpack.c.b16 %v1181, %v1180
  %v1688 = vpack.c.b16 %v1183, %v1182
  %v1689 = vpack.c.b16 %v1185, %v1184
  %v1690 = vpack.c.b16 %v1187, %v1186
  %v1691 = vpack.c.b16 %v1189, %v1188
  %v1692 = vpack.c.b16 %v1191, %v1190
  %v1693 = vpack.c.b16 %v1193, %v1192
  %v1694 = vpack.c.b16 %v1195, %v1194
  %v1695 = vpack.c.b16 %v1197, %v1196
  %v1696 = vpack.c.b16 %v1199, %v1198
  %v1697 = vpack.c.b16 %v1201, %v1200
  %v1698 = vpack.c.b16 %v1203, %v1202
  %v1699 = vpack.c.b16 %v1205, %v1204
  %v1700 = vpack.c.b16 %v1207, %v1206
  %v1701 = vpack.c.b16 %v1209, %v1208
  %v1702 = vpack.c.b16 %v1211, %v1210
  %v1703 = vpack.c.b16 %v1213, %v1212
  %v1704 = vpack.c.b16 %v1215, %v1214
  %v1705 = vpack.c.b16 %v1217, %v1216
  %v1706 = vpack.c.b16 %v1219, %v1218
  %v1707 = vpack.c.b16 %v1221, %v1220
  %v1708 = vpack.c.b16 %v1223, %v1222
  %v1709 = vpack.c.b16 %v1225, %v1224
  %v1710 = vpack.c.b16 %v1227, %v1226
  %v1711 = vpack.c.b16 %v1229, %v1228
  %v1712 = vpack.c.b16 %v1231, %v1230
  %v1713 = vpack.c.b16 %v1233, %v1232
  %v1714 = vpack.c.b16 %v1235, %v1234
  %v1715 = vpack.c.b16 %v1237, %v1236
  %v1716 = vpack.c.b16 %v1239, %v1238
  %v1717 = vpack.c.b16 %v1241, %v1240
  %v1718 = vpack.c.b16 %v1243, %v1242
  %v1719 = vpack.c.b16 %v1245, %v1244
  %v1720 = vpack.c.b16 %v1247, %v1246
  %v1721 = vpack.c.b16 %v1249, %v1248
  %v1722 = vpack.c.b16 %v1251, %v1250
  %v1723 = vpack.c.b16 %v1253, %v1252
  %v1724 = vpack.c.b16 %v1255, %v1254
  %v1725 = vpack.c.b16 %v1257, %v1256
  %v1726 = vpack.c.b16 %v1259, %v1258
  %v1727 = vpack.c.b16 %v1261, %v1260
  %v1728 = vpack.c.b16 %v1263, %v1262
  %v1729 = vpack.c.b16 %v1265, %v1264
  %v1730 = vpack.c.b16 %v1267, %v1266
  %v1731 = vpack.c.b16 %v1269, %v1268
  %v1732 = vpack.c.b16 %v1271, %v1270
  %v1733 = vpack.c.b16 %v1273, %v1272
  %v1734 = vpack.c.b16 %v1275, %v1274
  %v1735 = vpack.c.b16 %v1277, %v1276
  %v1736 = vpack.c.b16 %v1279, %v1278
  %v1737 = vpack.c.b16 %v1281, %v1280
  %v1738 = vpack.c.b16 %v1283, %v1282
  %v1739 = vpack.c.b16 %v1285, %v1284
  %v1740 = vpack.c.b16 %v1287, %v1286
  %v1741 = vpack.c.b16 %v1289, %v1288
  %v1742 = vpack.c.b16 %v1291, %v1290
  %v1743 = vpack.c.b16 %v1293, %v1292
  %v1744 = vpack.c.b16 %v1295, %v1294
  %v1745 = vpack.c.b16 %v1297, %v1296
  %v1746 = vpack.c.b16 %v1299, %v1298
  %v1747 = vpack.c.b16 %v1301, %v1300
  %v1748 = vpack.c.b16 %v1303, %v1302
  %v1749 = vpack.c.b16 %v1305, %v1304
  %v1750 = vpack.c.b16 %v1307, %v1306
  %v1751 = vpack.c.b16 %v1309, %v1308
  %v1752 = vpack.c.b16 %v1311, %v1310
  %v1753 = vpack.c.b16 %v1313, %v1312
  %v1754 = vpack.c.b16 %v1315, %v1314
  %v1755 = vpack.c.b16 %v1317, %v1316
  %v1756 = vpack.c.b16 %v1319, %v1318
  %v1757 = vpack.c.b16 %v1321, %v1320
  %v1758 = vpack.c.b16 %v1323, %v1322
  %v1759 = vpack.c.b16 %v1325, %v1324
  %v1760 = vpack.c.b16 %v1327, %v1326
  %v1761 = vpack.c.b16 %v1329, %v1328
  %v1762 = vpack.c.b16 %v1331, %v1330
  %v1763 = vpack.c.b16 %v1333, %v1332
  %v1764 = vpack.c.b16 %v1335, %v1334
  %v1765 = vpack.c.b16 %v1337, %v1336
  %v1766 = vpack.c.b16 %v1339, %v1338
  %v1767 = vpack.c.b16 %v1341, %v1340
  %v1768 = vpack.c.b16 %v1343, %v1342
  %v1769 = vpack.c.b16 %v1345, %v1344
  %v1770 = vpack.c.b16 %v1347, %v1346
  %v1771 = vpack.c.b16 %v1349, %v1348
  %v1772 = vpack.c.b16 %v1351, %v1350
  %v1773 = vpack.c.b16 %v1353, %v1352
  %v1774 = vpack.c.b16 %v1355, %v1354
  %v1775 = vpack.c.b16 %v1357, %v1356
  %v1776 = vpack.c.b16 %v1359, %v1358
  %v1777 = vpack.c.b16 %v1361, %v1360
  %v1778 = vpack.c.b16 %v1363, %v1362
  %v1779 = vpack.c.b16 %v1365, %v1364
  %v1780 = vpack.c.b16 %v1367, %v1366
  %v1781 = vpack.c.b16 %v1369, %v1368
  %v1782 = vpack.c.b16 %v1371, %v1370
  %v1783 = vpack.c.b16 %v1373, %v1372
  %v1784 = vpack.c.b16 %v1375, %v1374
  %v1785 = vpack.c.b16 %v1377, %v1376
  %v1786 = vpack.c.b16 %v1379, %v1378
  %v1787 = vpack.c.b16 %v1381, %v1380
  %v1788 = vpack.c.b16 %v1383, %v1382
  %v1789 = vpack.c.b16 %v1385, %v1384
  %v1790 = vpack.c.b16 %v1387, %v1386
  %v1791 = vpack.c.b16 %v1389, %v1388
  %v1792 = vpack.c.b16 %v1391, %v1390
  %v1793 = vpack.c.b16 %v1393, %v1392
  %v1794 = vpack.c.b16 %v1395, %v1394
  %v1795 = vpack.c.b16 %v1397, %v1396
  %v1796 = vpack.c.b16 %v1399, %v1398
  %v1797 = vpack.c.b16 %v1401, %v1400
  %v1798 = vpack.c.b16 %v1403, %v1402
  %v1799 = vpack.c.b16 %v1405, %v1404
  %v1800 = vpack.c.b16 %v1407, %v1406
  %v1801 = vpack.c.b16 %v1409, %v1408
  %v1802 = vpack.c.b16 %v1411, %v1410
  %v1803 = vpack.c.b16 %v1413, %v1412
  %v1804 = vpack.c.b16 %v1415, %v1414
  %v1805 = vpack.c.b16 %v1417, %v1416
  %v1806 = vpack.c.b16 %v1419, %v1418
  %v1807 = vpack.c.b16 %v1421, %v1420
  %v1808 = vpack.c.b16 %v1423, %v1422
  %v1809 = vpack.c.b16 %v1425, %v1424
  %v1810 = vpack.c.b16 %v1427, %v1426
  %v1811 = vpack.c.b16 %v1429, %v1428
  %v1812 = vpack.c.b16 %v1431, %v1430
  %v1813 = vpack.c.b16 %v1433, %v1432
  %v1814 = vpack.c.b16 %v1435, %v1434
  %v1815 = vpack.c.b16 %v1437, %v1436
  %v1816 = vpack.c.b16 %v1439, %v1438
  %v1817 = vpack.c.b16 %v1441, %v1440
  %v1818 = vpack.c.b16 %v1443, %v1442
  %v1819 = vpack.c.b16 %v1445, %v1444
  %v1820 = vpack.c.b16 %v1447, %v1446
  %v1821 = vpack.c.b16 %v1449, %v1448
  %v1822 = vpack.c.b16 %v1451, %v1450
  %v1823 = vpack.c.b16 %v1453, %v1452
  %v1824 = vpack.c.b16 %v1455, %v1454
  %v1825 = vpack.c.b16 %v1457, %v1456
  %v1826 = vpack.c.b16 %v1459, %v1458
  %v1827 = vpack.c.b16 %v1461, %v1460
  %v1828 = vpack.c.b16 %v1463, %v1462
  %v1829 = vpack.c.b16 %v1465, %v1464
  %v1830 = vpack.c.b16 %v1467, %v1466
  %v1831 = vpack.c.b16 %v1469, %v1468
  %v1832 = vpack.c.b16 %v1471, %v1470
  %v1833 = vpack.c.b16 %v1473, %v1472
  %v1834 = vpack.c.b16 %v1475, %v1474
  %v1835 = vpack.c.b16 %v1477, %v1476
  %v1836 = vpack.c.b16 %v1479, %v1478
  %v1837 = vpack.c.b16 %v1481, %v1480
  %v1838 = vpack.c.b16 %v1483, %v1482
  %v1839 = vpack.c.b16 %v1485, %v1484
  %v1840 = vpack.c.b16 %v1487, %v1486
  %v1841 = vpack.c.b16 %v1489, %v1488
  %v1842 = vpack.c.b16 %v1491, %v1490
  %v1843 = vpack.c.b16 %v1493, %v1492
  %v1844 = vpack.c.b16 %v1495, %v1494
  %v1845 = vpack.c.b16 %v1497, %v1496
  %v1846 = vpack.c.b16 %v1499, %v1498
  %v1847 = vpack.c.b16 %v1501, %v1500
  %v1848 = vpack.c.b16 %v1503, %v1502
  %v1849 = vpack.c.b16 %v1505, %v1504
  %v1850 = vpack.c.b16 %v1507, %v1506
  %v1851 = vpack.c.b16 %v1509, %v1508
  %v1852 = vpack.c.b16 %v1511, %v1510
  %v1853 = vpack.c.b16 %v1513, %v1512
  %v1854 = vpack.c.b16 %v1515, %v1514
  %v1855 = vpack.c.b16 %v1517, %v1516
  %v1856 = vpack.c.b16 %v1519, %v1518
  %v1857 = vpack.c.b16 %v1521, %v1520
  %v1858 = vpack.c.b16 %v1523, %v1522
  %v1859 = vpack.c.b16 %v1525, %v1524
  %v1860 = vpack.c.b16 %v1527, %v1526
  %v1861 = vpack.c.b16 %v1529, %v1528
  %v1862 = vpack.c.b16 %v1531, %v1530
  %v1863 = vpack.c.b16 %v1533, %v1532
  %v1864 = vpack.c.b16 %v1535, %v1534
  %v1865 = vpack.c.b16 %v1537, %v1536
  %v1866 = vpack.c.b16 %v1539, %v1538
  %v1867 = vpack.c.b16 %v1541, %v1540
  %v1868 = vpack.c.b16 %v1543, %v1542
  %v1869 = vpack.c.b16 %v1545, %v1544
  %v1870 = vpack.c.b16 %v1547, %v1546
  %v1871 = vpack.c.b16 %v1549, %v1548
  %v1872 = vpack.c.b16 %v1551, %v1550
  %v1873 = vpack.c.b16 %v1553, %v1552
  %v1874 = vpack.c.b16 %v1555, %v1554
  %v1875 = vpack.c.b16 %v1557, %v1556
  %v1876 = vpack.c.b16 %v1559, %v1558
  %v1877 = vpack.c.b16 %v1561, %v1560
  %v1878 = vpack.c.b16 %v1563, %v1562
  %v1879 = vpack.c.b16 %v1565, %v1564
  %v1880 = vpack.c.b16 %v1567, %v1566
  %v1881 = vpack.c.b16 %v1569, %v1568
  %v1882 = vpack.c.b16 %v1571, %v1570
  %v1883 = vpack.c.b16 %v1573, %v1572
  %v1884 = vpack.c.b16 %v1575, %v1574
  %v1885 = vpack.c.b16 %v1577, %v1576
  %v1886 = vpack.c.b16 %v1579, %v1578
  %v1887 = vpack.c.b16 %v1581, %v1580
  %v1888 = vpack.c.b16 %v1583, %v1582
  %v1889 = vpack.c.b16 %v1585, %v1584
  %v1890 = vpack.c.b16 %v1587, %v1586
  %v1891 = vpack.c.b16 %v1589, %v1588
  %v1892 = vpack.c.b16 %v1591, %v1590
  %v1893 = vpack.c.b16 %v1593, %v1592
  %v1894 = vpack.c.b16 %v1595, %v1594
  %v1895 = vpack.c.b16 %v1597, %v1596
  %v1896 = vpack.c.b16 %v1599, %v1598
  %v1897 = vpack.c.b16 %v1601, %v1600
  %v1898 = vpack.c.b16 %v1603, %v1602
  %v1899 = vpack.c.b16 %v1605, %v1604
  %v1900 = vpack.c.b16 %v1607, %v1606
  %v1901 = vpack.c.b16 %v1609, %v1608
  %v1902 = vpack.c.b16 %v1611, %v1610
  %v1903 = vpack.c.b16 %v1613, %v1612
  %v1904 = vpack.c.b16 %v1615, %v1614
  %v1905 = vpack.c.b16 %v1617, %v1616
  %v1906 = vpack.c.b16 %v1619, %v1618
  %v1907 = vpack.c.b16 %v1621, %v1620
  %v1908 = vpack.c.b16 %v1623, %v1622
  %v1909 = vpack.c.b16 %v1625, %v1624
  %v1910 = vpack.c.b16 %v1627, %v1626
  %v1911 = vpack.c.b16 %v1629, %v1628
  %v1912 = vpack.c.b16 %v1631, %v1630
  %v1913 = vpack.c.b16 %v1633, %v1632
  %v1914 = vpack.c.b16 %v1635, %v1634
  %v1915 = vpack.c.b16 %v1637, %v1636
  %v1916 = vpack.c.b16 %v1639, %v1638
  %v1917 = vpack.c.b16 %v1641, %v1640
  %v1918 = vpack.c.b16 %v1643, %v1642
  %v1919 = vpack.c.b16 %v1645, %v1644
  %v1920 = vpack.c.b16 %v1647, %v1646
  %v1921 = vpack.c.b16 %v1649, %v1648
  %v1922 = vpack.c.b16 %v1651, %v1650
  %v1923 = vpack.c.b16 %v1653, %v1652
  %v1924 = vpack.c.b16 %v1655, %v1654
  %v1925 = vpack.c.b16 %v1657, %v1656
  %v1926 = vpack.c.b16 %v1659, %v1658
  %v1927 = vpack.c.b16 %v1661, %v1660
  %v1928 = vpack.c.b16 %v1663, %v1662
  %v1929 = vpack.c.b16 %v1665, %v1664
  %v1930 = vpack.c.b16 %v1667, %v1666
  %v1931 = vpack.c.b16 %v1669, %v1668
  %v1932 = vpack.c.b16 %v1671, %v1670
  %v1933 = vpack.c.b16 %v1673, %v1672
  %v1934 = vpack.c.b16 %v1675, %v1674
  %v1935 = vpack.c.b16 %v1677, %v1676
  %v1936 = vpack.c.b16 %v1679, %v1678
  %v1937 = vpack.c.b16 %v1681, %v1680
  %2194 = vmatpush.bf16.msra.mxu0 %v1689
  %2195 = vmatpush.bf16.msra.mxu0 %v1688
  %2196 = vmatpush.bf16.msra.mxu0 %v1687
  %2197 = vmatpush.bf16.msra.mxu0 %v1686
  %2198 = vmatpush.bf16.msra.mxu0 %v1685
  %2199 = vmatpush.bf16.msra.mxu0 %v1684
  %2200 = vmatpush.bf16.msra.mxu0 %v1683
  %2201 = vmatpush.bf16.msra.mxu0 %v1682
  %2202 = vmatmul.bf16.gmra.mxu0 %v594
  %v2203 = vpop.f32.mrf.mxu0
  %v2204 = vadd.f32 %v544, %v2203
  %v2205 = vpop.f32.mrf.mxu0
  %2206 = vdwg.mxu0
  %2207 = vmatpush.bf16.msra.mxu0 %v1697
  %2208 = vmatpush.bf16.msra.mxu0 %v1696
  %2209 = vmatpush.bf16.msra.mxu0 %v1695
  %2210 = vmatpush.bf16.msra.mxu0 %v1694
  %2211 = vmatpush.bf16.msra.mxu0 %v1693
  %2212 = vmatpush.bf16.msra.mxu0 %v1692
  %2213 = vmatpush.bf16.msra.mxu0 %v1691
  %2214 = vmatpush.bf16.msra.mxu0 %v1690
  %2215 = vmatmul.bf16.gmra.mxu0 %v595
  %v2216 = vpop.f32.mrf.mxu0
  %v2217 = vadd.f32 %v2204, %v2216
  %v2218 = vpop.f32.mrf.mxu0
  %2219 = vdwg.mxu0
  %2220 = vmatpush.bf16.msra.mxu0 %v1705
  %2221 = vmatpush.bf16.msra.mxu0 %v1704
  %2222 = vmatpush.bf16.msra.mxu0 %v1703
  %2223 = vmatpush.bf16.msra.mxu0 %v1702
  %2224 = vmatpush.bf16.msra.mxu0 %v1701
  %2225 = vmatpush.bf16.msra.mxu0 %v1700
  %2226 = vmatpush.bf16.msra.mxu0 %v1699
  %2227 = vmatpush.bf16.msra.mxu0 %v1698
  %2228 = vmatmul.bf16.gmra.mxu0 %v596
  %v2229 = vpop.f32.mrf.mxu0
  %v2230 = vadd.f32 %v2217, %v2229
  %v2231 = vpop.f32.mrf.mxu0
  %2232 = vdwg.mxu0
  %2233 = vmatpush.bf16.msra.mxu0 %v1713
  %2234 = vmatpush.bf16.msra.mxu0 %v1712
  %2235 = vmatpush.bf16.msra.mxu0 %v1711
  %2236 = vmatpush.bf16.msra.mxu0 %v1710
  %2237 = vmatpush.bf16.msra.mxu0 %v1709
  %2238 = vmatpush.bf16.msra.mxu0 %v1708
  %2239 = vmatpush.bf16.msra.mxu0 %v1707
  %2240 = vmatpush.bf16.msra.mxu0 %v1706
  %2241 = vmatmul.bf16.gmra.mxu0 %v597
  %v2242 = vpop.f32.mrf.mxu0
  %v2243 = vadd.f32 %v2230, %v2242
  %v2244 = vpop.f32.mrf.mxu0
  %2245 = vdwg.mxu0
  %2246 = vmatpush.bf16.msra.mxu0 %v1721
  %2247 = vmatpush.bf16.msra.mxu0 %v1720
  %2248 = vmatpush.bf16.msra.mxu0 %v1719
  %2249 = vmatpush.bf16.msra.mxu0 %v1718
  %2250 = vmatpush.bf16.msra.mxu0 %v1717
  %2251 = vmatpush.bf16.msra.mxu0 %v1716
  %2252 = vmatpush.bf16.msra.mxu0 %v1715
  %2253 = vmatpush.bf16.msra.mxu0 %v1714
  %2254 = vmatmul.bf16.gmra.mxu0 %v598
  %v2255 = vpop.f32.mrf.mxu0
  %v2256 = vadd.f32 %v2243, %v2255
  %v2257 = vpop.f32.mrf.mxu0
  %2258 = vdwg.mxu0
  %2259 = vmatpush.bf16.msra.mxu0 %v1729
  %2260 = vmatpush.bf16.msra.mxu0 %v1728
  %2261 = vmatpush.bf16.msra.mxu0 %v1727
  %2262 = vmatpush.bf16.msra.mxu0 %v1726
  %2263 = vmatpush.bf16.msra.mxu0 %v1725
  %2264 = vmatpush.bf16.msra.mxu0 %v1724
  %2265 = vmatpush.bf16.msra.mxu0 %v1723
  %2266 = vmatpush.bf16.msra.mxu0 %v1722
  %2267 = vmatmul.bf16.gmra.mxu0 %v599
  %v2268 = vpop.f32.mrf.mxu0
  %v2269 = vadd.f32 %v2256, %v2268
  %v2270 = vpop.f32.mrf.mxu0
  %2271 = vdwg.mxu0
  %2272 = vmatpush.bf16.msra.mxu0 %v1737
  %2273 = vmatpush.bf16.msra.mxu0 %v1736
  %2274 = vmatpush.bf16.msra.mxu0 %v1735
  %2275 = vmatpush.bf16.msra.mxu0 %v1734
  %2276 = vmatpush.bf16.msra.mxu0 %v1733
  %2277 = vmatpush.bf16.msra.mxu0 %v1732
  %2278 = vmatpush.bf16.msra.mxu0 %v1731
  %2279 = vmatpush.bf16.msra.mxu0 %v1730
  %2280 = vmatmul.bf16.gmra.mxu0 %v600
  %v2281 = vpop.f32.mrf.mxu0
  %v2282 = vadd.f32 %v2269, %v2281
  %v2283 = vpop.f32.mrf.mxu0
  %2284 = vdwg.mxu0
  %2285 = vmatpush.bf16.msra.mxu0 %v1745
  %2286 = vmatpush.bf16.msra.mxu0 %v1744
  %2287 = vmatpush.bf16.msra.mxu0 %v1743
  %2288 = vmatpush.bf16.msra.mxu0 %v1742
  %2289 = vmatpush.bf16.msra.mxu0 %v1741
  %2290 = vmatpush.bf16.msra.mxu0 %v1740
  %2291 = vmatpush.bf16.msra.mxu0 %v1739
  %2292 = vmatpush.bf16.msra.mxu0 %v1738
  %2293 = vmatmul.bf16.gmra.mxu0 %v601
  %v2294 = vpop.f32.mrf.mxu0
  %v2295 = vadd.f32 %v2282, %v2294
  %v2296 = vpop.f32.mrf.mxu0
  %2297 = vdwg.mxu0
  %2298 = vmatpush.bf16.msra.mxu0 %v1753
  %2299 = vmatpush.bf16.msra.mxu0 %v1752
  %2300 = vmatpush.bf16.msra.mxu0 %v1751
  %2301 = vmatpush.bf16.msra.mxu0 %v1750
  %2302 = vmatpush.bf16.msra.mxu0 %v1749
  %2303 = vmatpush.bf16.msra.mxu0 %v1748
  %2304 = vmatpush.bf16.msra.mxu0 %v1747
  %2305 = vmatpush.bf16.msra.mxu0 %v1746
  %2306 = vmatmul.bf16.gmra.mxu0 %v602
  %v2307 = vpop.f32.mrf.mxu0
  %v2308 = vadd.f32 %v2295, %v2307
  %v2309 = vpop.f32.mrf.mxu0
  %2310 = vdwg.mxu0
  %2311 = vmatpush.bf16.msra.mxu0 %v1761
  %2312 = vmatpush.bf16.msra.mxu0 %v1760
  %2313 = vmatpush.bf16.msra.mxu0 %v1759
  %2314 = vmatpush.bf16.msra.mxu0 %v1758
  %2315 = vmatpush.bf16.msra.mxu0 %v1757
  %2316 = vmatpush.bf16.msra.mxu0 %v1756
  %2317 = vmatpush.bf16.msra.mxu0 %v1755
  %2318 = vmatpush.bf16.msra.mxu0 %v1754
  %2319 = vmatmul.bf16.gmra.mxu0 %v603
  %v2320 = vpop.f32.mrf.mxu0
  %v2321 = vadd.f32 %v2308, %v2320
  %v2322 = vpop.f32.mrf.mxu0
  %2323 = vdwg.mxu0
  %2324 = vmatpush.bf16.msra.mxu0 %v1769
  %2325 = vmatpush.bf16.msra.mxu0 %v1768
  %2326 = vmatpush.bf16.msra.mxu0 %v1767
  %2327 = vmatpush.bf16.msra.mxu0 %v1766
  %2328 = vmatpush.bf16.msra.mxu0 %v1765
  %2329 = vmatpush.bf16.msra.mxu0 %v1764
  %2330 = vmatpush.bf16.msra.mxu0 %v1763
  %2331 = vmatpush.bf16.msra.mxu0 %v1762
  %2332 = vmatmul.bf16.gmra.mxu0 %v604
  %v2333 = vpop.f32.mrf.mxu0
  %v2334 = vadd.f32 %v2321, %v2333
  %v2335 = vpop.f32.mrf.mxu0
  %2336 = vdwg.mxu0
  %2337 = vmatpush.bf16.msra.mxu0 %v1777
  %2338 = vmatpush.bf16.msra.mxu0 %v1776
  %2339 = vmatpush.bf16.msra.mxu0 %v1775
  %2340 = vmatpush.bf16.msra.mxu0 %v1774
  %2341 = vmatpush.bf16.msra.mxu0 %v1773
  %2342 = vmatpush.bf16.msra.mxu0 %v1772
  %2343 = vmatpush.bf16.msra.mxu0 %v1771
  %2344 = vmatpush.bf16.msra.mxu0 %v1770
  %2345 = vmatmul.bf16.gmra.mxu0 %v605
  %v2346 = vpop.f32.mrf.mxu0
  %v2347 = vadd.f32 %v2334, %v2346
  %v2348 = vpop.f32.mrf.mxu0
  %2349 = vdwg.mxu0
  %2350 = vmatpush.bf16.msra.mxu0 %v1785
  %2351 = vmatpush.bf16.msra.mxu0 %v1784
  %2352 = vmatpush.bf16.msra.mxu0 %v1783
  %2353 = vmatpush.bf16.msra.mxu0 %v1782
  %2354 = vmatpush.bf16.msra.mxu0 %v1781
  %2355 = vmatpush.bf16.msra.mxu0 %v1780
  %2356 = vmatpush.bf16.msra.mxu0 %v1779
  %2357 = vmatpush.bf16.msra.mxu0 %v1778
  %2358 = vmatmul.bf16.gmra.mxu0 %v606
  %v2359 = vpop.f32.mrf.mxu0
  %v2360 = vadd.f32 %v2347, %v2359
  %v2361 = vpop.f32.mrf.mxu0
  %2362 = vdwg.mxu0
  %2363 = vmatpush.bf16.msra.mxu0 %v1793
  %2364 = vmatpush.bf16.msra.mxu0 %v1792
  %2365 = vmatpush.bf16.msra.mxu0 %v1791
  %2366 = vmatpush.bf16.msra.mxu0 %v1790
  %2367 = vmatpush.bf16.msra.mxu0 %v1789
  %2368 = vmatpush.bf16.msra.mxu0 %v1788
  %2369 = vmatpush.bf16.msra.mxu0 %v1787
  %2370 = vmatpush.bf16.msra.mxu0 %v1786
  %2371 = vmatmul.bf16.gmra.mxu0 %v607
  %v2372 = vpop.f32.mrf.mxu0
  %v2373 = vadd.f32 %v2360, %v2372
  %v2374 = vpop.f32.mrf.mxu0
  %2375 = vdwg.mxu0
  %2376 = vmatpush.bf16.msra.mxu0 %v1801
  %2377 = vmatpush.bf16.msra.mxu0 %v1800
  %2378 = vmatpush.bf16.msra.mxu0 %v1799
  %2379 = vmatpush.bf16.msra.mxu0 %v1798
  %2380 = vmatpush.bf16.msra.mxu0 %v1797
  %2381 = vmatpush.bf16.msra.mxu0 %v1796
  %2382 = vmatpush.bf16.msra.mxu0 %v1795
  %2383 = vmatpush.bf16.msra.mxu0 %v1794
  %2384 = vmatmul.bf16.gmra.mxu0 %v608
  %v2385 = vpop.f32.mrf.mxu0
  %v2386 = vadd.f32 %v2373, %v2385
  %v2387 = vpop.f32.mrf.mxu0
  %2388 = vdwg.mxu0
  %2389 = vmatpush.bf16.msra.mxu0 %v1809
  %2390 = vmatpush.bf16.msra.mxu0 %v1808
  %2391 = vmatpush.bf16.msra.mxu0 %v1807
  %2392 = vmatpush.bf16.msra.mxu0 %v1806
  %2393 = vmatpush.bf16.msra.mxu0 %v1805
  %2394 = vmatpush.bf16.msra.mxu0 %v1804
  %2395 = vmatpush.bf16.msra.mxu0 %v1803
  %2396 = vmatpush.bf16.msra.mxu0 %v1802
  %2397 = vmatmul.bf16.gmra.mxu0 %v609
  %v2398 = vpop.f32.mrf.mxu0
  %v2399 = vadd.f32 %v2386, %v2398
  %v2400 = vpop.f32.mrf.mxu0
  %2401 = vdwg.mxu0
  %2402 = vmatpush.bf16.msra.mxu0 %v1817
  %2403 = vmatpush.bf16.msra.mxu0 %v1816
  %2404 = vmatpush.bf16.msra.mxu0 %v1815
  %2405 = vmatpush.bf16.msra.mxu0 %v1814
  %2406 = vmatpush.bf16.msra.mxu0 %v1813
  %2407 = vmatpush.bf16.msra.mxu0 %v1812
  %2408 = vmatpush.bf16.msra.mxu0 %v1811
  %2409 = vmatpush.bf16.msra.mxu0 %v1810
  %2410 = vmatmul.bf16.gmra.mxu0 %v610
  %v2411 = vpop.f32.mrf.mxu0
  %v2412 = vadd.f32 %v2399, %v2411
  %v2413 = vpop.f32.mrf.mxu0
  %2414 = vdwg.mxu0
  %2415 = vmatpush.bf16.msra.mxu0 %v1825
  %2416 = vmatpush.bf16.msra.mxu0 %v1824
  %2417 = vmatpush.bf16.msra.mxu0 %v1823
  %2418 = vmatpush.bf16.msra.mxu0 %v1822
  %2419 = vmatpush.bf16.msra.mxu0 %v1821
  %2420 = vmatpush.bf16.msra.mxu0 %v1820
  %2421 = vmatpush.bf16.msra.mxu0 %v1819
  %2422 = vmatpush.bf16.msra.mxu0 %v1818
  %2423 = vmatmul.bf16.gmra.mxu0 %v611
  %v2424 = vpop.f32.mrf.mxu0
  %v2425 = vadd.f32 %v2412, %v2424
  %v2426 = vpop.f32.mrf.mxu0
  %2427 = vdwg.mxu0
  %2428 = vmatpush.bf16.msra.mxu0 %v1833
  %2429 = vmatpush.bf16.msra.mxu0 %v1832
  %2430 = vmatpush.bf16.msra.mxu0 %v1831
  %2431 = vmatpush.bf16.msra.mxu0 %v1830
  %2432 = vmatpush.bf16.msra.mxu0 %v1829
  %2433 = vmatpush.bf16.msra.mxu0 %v1828
  %2434 = vmatpush.bf16.msra.mxu0 %v1827
  %2435 = vmatpush.bf16.msra.mxu0 %v1826
  %2436 = vmatmul.bf16.gmra.mxu0 %v612
  %v2437 = vpop.f32.mrf.mxu0
  %v2438 = vadd.f32 %v2425, %v2437
  %v2439 = vpop.f32.mrf.mxu0
  %2440 = vdwg.mxu0
  %2441 = vmatpush.bf16.msra.mxu0 %v1841
  %2442 = vmatpush.bf16.msra.mxu0 %v1840
  %2443 = vmatpush.bf16.msra.mxu0 %v1839
  %2444 = vmatpush.bf16.msra.mxu0 %v1838
  %2445 = vmatpush.bf16.msra.mxu0 %v1837
  %2446 = vmatpush.bf16.msra.mxu0 %v1836
  %2447 = vmatpush.bf16.msra.mxu0 %v1835
  %2448 = vmatpush.bf16.msra.mxu0 %v1834
  %2449 = vmatmul.bf16.gmra.mxu0 %v613
  %v2450 = vpop.f32.mrf.mxu0
  %v2451 = vadd.f32 %v2438, %v2450
  %v2452 = vpop.f32.mrf.mxu0
  %2453 = vdwg.mxu0
  %2454 = vmatpush.bf16.msra.mxu0 %v1849
  %2455 = vmatpush.bf16.msra.mxu0 %v1848
  %2456 = vmatpush.bf16.msra.mxu0 %v1847
  %2457 = vmatpush.bf16.msra.mxu0 %v1846
  %2458 = vmatpush.bf16.msra.mxu0 %v1845
  %2459 = vmatpush.bf16.msra.mxu0 %v1844
  %2460 = vmatpush.bf16.msra.mxu0 %v1843
  %2461 = vmatpush.bf16.msra.mxu0 %v1842
  %2462 = vmatmul.bf16.gmra.mxu0 %v614
  %v2463 = vpop.f32.mrf.mxu0
  %v2464 = vadd.f32 %v2451, %v2463
  %v2465 = vpop.f32.mrf.mxu0
  %2466 = vdwg.mxu0
  %2467 = vmatpush.bf16.msra.mxu0 %v1857
  %2468 = vmatpush.bf16.msra.mxu0 %v1856
  %2469 = vmatpush.bf16.msra.mxu0 %v1855
  %2470 = vmatpush.bf16.msra.mxu0 %v1854
  %2471 = vmatpush.bf16.msra.mxu0 %v1853
  %2472 = vmatpush.bf16.msra.mxu0 %v1852
  %2473 = vmatpush.bf16.msra.mxu0 %v1851
  %2474 = vmatpush.bf16.msra.mxu0 %v1850
  %2475 = vmatmul.bf16.gmra.mxu0 %v615
  %v2476 = vpop.f32.mrf.mxu0
  %v2477 = vadd.f32 %v2464, %v2476
  %v2478 = vpop.f32.mrf.mxu0
  %2479 = vdwg.mxu0
  %2480 = vmatpush.bf16.msra.mxu0 %v1865
  %2481 = vmatpush.bf16.msra.mxu0 %v1864
  %2482 = vmatpush.bf16.msra.mxu0 %v1863
  %2483 = vmatpush.bf16.msra.mxu0 %v1862
  %2484 = vmatpush.bf16.msra.mxu0 %v1861
  %2485 = vmatpush.bf16.msra.mxu0 %v1860
  %2486 = vmatpush.bf16.msra.mxu0 %v1859
  %2487 = vmatpush.bf16.msra.mxu0 %v1858
  %2488 = vmatmul.bf16.gmra.mxu0 %v616
  %v2489 = vpop.f32.mrf.mxu0
  %v2490 = vadd.f32 %v2477, %v2489
  %v2491 = vpop.f32.mrf.mxu0
  %2492 = vdwg.mxu0
  %2493 = vmatpush.bf16.msra.mxu0 %v1873
  %2494 = vmatpush.bf16.msra.mxu0 %v1872
  %2495 = vmatpush.bf16.msra.mxu0 %v1871
  %2496 = vmatpush.bf16.msra.mxu0 %v1870
  %2497 = vmatpush.bf16.msra.mxu0 %v1869
  %2498 = vmatpush.bf16.msra.mxu0 %v1868
  %2499 = vmatpush.bf16.msra.mxu0 %v1867
  %2500 = vmatpush.bf16.msra.mxu0 %v1866
  %2501 = vmatmul.bf16.gmra.mxu0 %v617
  %v2502 = vpop.f32.mrf.mxu0
  %v2503 = vadd.f32 %v2490, %v2502
  %v2504 = vpop.f32.mrf.mxu0
  %2505 = vdwg.mxu0
  %2506 = vmatpush.bf16.msra.mxu0 %v1881
  %2507 = vmatpush.bf16.msra.mxu0 %v1880
  %2508 = vmatpush.bf16.msra.mxu0 %v1879
  %2509 = vmatpush.bf16.msra.mxu0 %v1878
  %2510 = vmatpush.bf16.msra.mxu0 %v1877
  %2511 = vmatpush.bf16.msra.mxu0 %v1876
  %2512 = vmatpush.bf16.msra.mxu0 %v1875
  %2513 = vmatpush.bf16.msra.mxu0 %v1874
  %2514 = vmatmul.bf16.gmra.mxu0 %v618
  %v2515 = vpop.f32.mrf.mxu0
  %v2516 = vadd.f32 %v2503, %v2515
  %v2517 = vpop.f32.mrf.mxu0
  %2518 = vdwg.mxu0
  %2519 = vmatpush.bf16.msra.mxu0 %v1889
  %2520 = vmatpush.bf16.msra.mxu0 %v1888
  %2521 = vmatpush.bf16.msra.mxu0 %v1887
  %2522 = vmatpush.bf16.msra.mxu0 %v1886
  %2523 = vmatpush.bf16.msra.mxu0 %v1885
  %2524 = vmatpush.bf16.msra.mxu0 %v1884
  %2525 = vmatpush.bf16.msra.mxu0 %v1883
  %2526 = vmatpush.bf16.msra.mxu0 %v1882
  %2527 = vmatmul.bf16.gmra.mxu0 %v619
  %v2528 = vpop.f32.mrf.mxu0
  %v2529 = vadd.f32 %v2516, %v2528
  %v2530 = vpop.f32.mrf.mxu0
  %2531 = vdwg.mxu0
  %2532 = vmatpush.bf16.msra.mxu0 %v1897
  %2533 = vmatpush.bf16.msra.mxu0 %v1896
  %2534 = vmatpush.bf16.msra.mxu0 %v1895
  %2535 = vmatpush.bf16.msra.mxu0 %v1894
  %2536 = vmatpush.bf16.msra.mxu0 %v1893
  %2537 = vmatpush.bf16.msra.mxu0 %v1892
  %2538 = vmatpush.bf16.msra.mxu0 %v1891
  %2539 = vmatpush.bf16.msra.mxu0 %v1890
  %2540 = vmatmul.bf16.gmra.mxu0 %v620
  %v2541 = vpop.f32.mrf.mxu0
  %v2542 = vadd.f32 %v2529, %v2541
  %v2543 = vpop.f32.mrf.mxu0
  %2544 = vdwg.mxu0
  %2545 = vmatpush.bf16.msra.mxu0 %v1905
  %2546 = vmatpush.bf16.msra.mxu0 %v1904
  %2547 = vmatpush.bf16.msra.mxu0 %v1903
  %2548 = vmatpush.bf16.msra.mxu0 %v1902
  %2549 = vmatpush.bf16.msra.mxu0 %v1901
  %2550 = vmatpush.bf16.msra.mxu0 %v1900
  %2551 = vmatpush.bf16.msra.mxu0 %v1899
  %2552 = vmatpush.bf16.msra.mxu0 %v1898
  %2553 = vmatmul.bf16.gmra.mxu0 %v621
  %v2554 = vpop.f32.mrf.mxu0
  %v2555 = vadd.f32 %v2542, %v2554
  %v2556 = vpop.f32.mrf.mxu0
  %2557 = vdwg.mxu0
  %2558 = vmatpush.bf16.msra.mxu0 %v1913
  %2559 = vmatpush.bf16.msra.mxu0 %v1912
  %2560 = vmatpush.bf16.msra.mxu0 %v1911
  %2561 = vmatpush.bf16.msra.mxu0 %v1910
  %2562 = vmatpush.bf16.msra.mxu0 %v1909
  %2563 = vmatpush.bf16.msra.mxu0 %v1908
  %2564 = vmatpush.bf16.msra.mxu0 %v1907
  %2565 = vmatpush.bf16.msra.mxu0 %v1906
  %2566 = vmatmul.bf16.gmra.mxu0 %v622
  %v2567 = vpop.f32.mrf.mxu0
  %v2568 = vadd.f32 %v2555, %v2567
  %v2569 = vpop.f32.mrf.mxu0
  %2570 = vdwg.mxu0
  %2571 = vmatpush.bf16.msra.mxu0 %v1921
  %2572 = vmatpush.bf16.msra.mxu0 %v1920
  %2573 = vmatpush.bf16.msra.mxu0 %v1919
  %2574 = vmatpush.bf16.msra.mxu0 %v1918
  %2575 = vmatpush.bf16.msra.mxu0 %v1917
  %2576 = vmatpush.bf16.msra.mxu0 %v1916
  %2577 = vmatpush.bf16.msra.mxu0 %v1915
  %2578 = vmatpush.bf16.msra.mxu0 %v1914
  %2579 = vmatmul.bf16.gmra.mxu0 %v623
  %v2580 = vpop.f32.mrf.mxu0
  %v2581 = vadd.f32 %v2568, %v2580
  %v2582 = vpop.f32.mrf.mxu0
  %2583 = vdwg.mxu0
  %2584 = vmatpush.bf16.msra.mxu0 %v1929
  %2585 = vmatpush.bf16.msra.mxu0 %v1928
  %2586 = vmatpush.bf16.msra.mxu0 %v1927
  %2587 = vmatpush.bf16.msra.mxu0 %v1926
  %2588 = vmatpush.bf16.msra.mxu0 %v1925
  %2589 = vmatpush.bf16.msra.mxu0 %v1924
  %2590 = vmatpush.bf16.msra.mxu0 %v1923
  %2591 = vmatpush.bf16.msra.mxu0 %v1922
  %2592 = vmatmul.bf16.gmra.mxu0 %v624
  %v2593 = vpop.f32.mrf.mxu0
  %v2594 = vadd.f32 %v2581, %v2593
  %v2595 = vpop.f32.mrf.mxu0
  %2596 = vdwg.mxu0
  %2597 = vmatpush.bf16.msra.mxu0 %v1937
  %2598 = vmatpush.bf16.msra.mxu0 %v1936
  %2599 = vmatpush.bf16.msra.mxu0 %v1935
  %2600 = vmatpush.bf16.msra.mxu0 %v1934
  %2601 = vmatpush.bf16.msra.mxu0 %v1933
  %2602 = vmatpush.bf16.msra.mxu0 %v1932
  %2603 = vmatpush.bf16.msra.mxu0 %v1931
  %2604 = vmatpush.bf16.msra.mxu0 %v1930
  %2605 = vmatmul.bf16.gmra.mxu0 %v625
  %v2606 = vpop.f32.mrf.mxu0
  %v2607 = vadd.f32 %v2594, %v2606
  %v2608 = vpop.f32.mrf.mxu0
  %2609 = vdwg.mxu0
  %v2610 = vlaneseq
  %v2611 = vand.u32 %v2610, 127
  %vm2612 = vcmp.lt.s32.totalorder %v2611, 64
  %v2613 = vsel %vm2612, %v2607, -1e+30
  %2614 = vmax.xlane.f32.xlu0 %v2613
  %v2615 = vpop.xlane.xlu0 %2614
  %v2616 = vsub.f32 %v2613, %v2615
  %v2617 = vmul.f32 %v2616, 1.442695
  %v2618 = vpow.pop %v2617
  %2619 = vadd.xlane.f32.xlu0 %v2618
  %v2620 = vpop.xlane.xlu0 %2619
  %v2621 = vrcp.pop %v2620
  %v2622 = vmul.f32 %v2620, %v2621
  %v2623 = vsub.f32 1.0, %v2622
  %v2624 = vmul.f32 %v2621, %v2623
  %v2625 = vadd.f32 %v2621, %v2624
  %vm2626 = vweird.f32 %v2620
  %vm2627 = vweird.f32 %v2621
  %vm2628 = vmor %vm2626, %vm2627
  %v2629 = vsel %vm2628, %v2621, %v2625
  %v2630 = vand.u32 2147483647, %v2620
  %vm2631 = vcmp.eq.f32.partialorder %v2630, 8.507059e+37
  %v2632 = vand.u32 %v2620, 2147483648
  %v2633 = vor.u32 1.1754944e-38, %v2632
  %v2634 = vsel %vm2631, %v2633, %v2629
  %v2635 = vmul.f32 %v2618, %v2634
  %vm2636 = vcmp.eq.s32.totalorder %v2611, 64
  %v2637 = vtanh.pop %v2607
  %v2638 = vsel %vm2636, %v2637, %v2635
  %2639 = vst [vmem:[%s3] sm:$0xff] %v2638
  // Predicated region
  $region14: #{go_nn_forward.3} parent=0 // pred_check
    _
  $region15: #{go_nn_forward.3} parent=0 // pred_check_branch
    %2641 = sbr.rel (0) target = $region17
  $region16: #{go_nn_forward.3} parent=0 // pred_region
    _
  $region17: #{go_nn_forward.3} parent=0 // pred_fallthru
    _
  // Predicated region
  $region18: #{go_nn_forward.3} parent=0 // pred_check
    _
  $region19: #{go_nn_forward.3} parent=0 // pred_check_branch
    %2643 = sbr.rel (0) target = $region21
  $region20: #{go_nn_forward.3} parent=0 // pred_region
    _
  $region21: #{go_nn_forward.3} parent=0 // pred_fallthru
    _

// kernel: go_nn_forward.2
$region0: #{go_nn_forward.2}
  #allocation0 [shape = 'u32[]', space=smem, size = 0x4, offset = 0x4, fixed_abs, tag = 'smem constant byte address 0x4 - core index']
  #allocation1 [shape = 'u32[72,128]{1,0:T(1,128)}', space=vmem, size = 0x9000, scoped, tag = 'internal scratch']
  #allocation2 [shape = 'f32[4,10,10,64]{3,2,1,0:T(8,128)}', space=vmem, size = 0x50000, scoped, tag = 'scratch operand']
  %s0 = inlined_call_operand.vmem [shape: bf16[8,64,18], index: 0, kind: input, shape index: {}]
  %s1 = inlined_call_operand.vmem [shape: bf16[18,64], index: 1, kind: input, shape index: {}]
  %s2 = inlined_call_operand.vmem [shape: f32[1,64], index: 2, kind: input, shape index: {}]
  %s3 = inlined_call_operand.vmem [shape: bf16[576,64], index: 3, kind: input, shape index: {}]
  %s4 = inlined_call_operand.vmem [shape: f32[1,64], index: 4, kind: input, shape index: {}]
  %s5 = inlined_call_operand.vmem [shape: bf16[576,64], index: 5, kind: input, shape index: {}]
  %s6 = inlined_call_operand.vmem [shape: f32[1,64], index: 6, kind: input, shape index: {}]
  %s7 = inlined_call_operand.vmem [shape: bf16[8,64,64], index: 7, kind: output, shape index: {}]
  %s8 = sld [smem:[#allocation0]]
  $region61: #{go_nn_forward.2} parent=0
    _
  %s10 = ssub.s32 1, %s8
  %s11 = scalar_select 0, %s10, %s8
  loop: start=0, step=1, limit=4
  $region2: #{go_nn_forward.2} parent=0 // loop_pre_header
    _
  $region3: #{go_nn_forward.2} parent=0 // loop_header
    %s13 = sphi 0, %s17
    %p14 = scmp.ge.s32.totalorder %s13, 4
    %s23 = sphi 0, %s25
    %s26 = sphi 0, %s23
    %s27 = sphi 0, %s26
    %s43 = sphi 0, %s27
    %s47 = sphi 0, %s47
    %s49 = sphi 0, %s47
    %s50 = sphi 0, %s49
    %s64 = sphi 0, %s50
    %s68 = sphi 0, %s68
    %s70 = sphi 0, %s68
    %s71 = sphi 0, %s70
    %s85 = sphi 0, %s71
    %s89 = sphi 0, %s89
    %s91 = sphi 0, %s89
    %s92 = sphi 0, %s91
    %s106 = sphi 0, %s92
    %s110 = sphi 0, %s110
    %s112 = sphi 0, %s110
    %s113 = sphi 0, %s112
    %s127 = sphi 0, %s113
    %s131 = sphi 0, %s131
    %s133 = sphi 0, %s131
    %s134 = sphi 0, %s133
    %s148 = sphi 0, %s134
    %s152 = sphi 0, %s152
    %s154 = sphi 0, %s152
    %s155 = sphi 0, %s154
    %s169 = sphi 0, %s155
    %s175 = sphi 0, %s177
    %s178 = sphi 0, %s175
    %s179 = sphi 0, %s178
    %s195 = sphi 0, %s179
  $region4: #{go_nn_forward.2} parent=0 // loop_header_branch
    %16 = sbr.rel (%p14) target = $region8
  $region5: #{go_nn_forward.2} parent=0 // loop_body
    %s18 = ssub.s32 %s13, 1
    %s19 = ssub.s32 %s13, 2
    %s20 = sadd.s32 %s13, 1
    %s21 = ssub.s32 %s13, %s20
    %p22 = scmp.eq.s32.totalorder %s21, 0
    %s24 = sadd.s32 %s23, 1
    %s25 = scalar_select %p22, %s23, %s24
    %p28 = pneg %p22
    %p29 = scmp.eq.s32.totalorder %s13, 1
    %p30 = por %p28, %p29
    %p31 = scmp.ne.s32.totalorder %s23, %s26
    %p32 = scmp.eq.s32.totalorder %s13, 0
    %p33 = por %p31, %p32
    %p34 = scmp.ne.s32.totalorder %s23, %s26
    %p35 = scmp.eq.s32.totalorder %s18, 1
    %p36 = por %p34, %p35
    %p37 = scmp.ne.s32.totalorder %s26, %s27
    %p38 = scmp.eq.s32.totalorder %s18, 0
    %p39 = por %p37, %p38
    %p40 = scmp.ne.s32.totalorder %s26, %s27
    %p41 = scmp.eq.s32.totalorder %s19, 1
    %p42 = por %p40, %p41
    %p44 = scmp.ne.s32.totalorder %s27, %s43
    %p45 = scmp.eq.s32.totalorder %s19, 0
    %p46 = por %p44, %p45
    %s48 = sadd.s32 %s47, 1
    %p51 = scmp.eq.s32.totalorder %s13, 1
    %p52 = scmp.ne.s32.totalorder %s47, %s49
    %p53 = scmp.eq.s32.totalorder %s13, 0
    %p54 = por %p52, %p53
    %p55 = scmp.ne.s32.totalorder %s47, %s49
    %p56 = scmp.eq.s32.totalorder %s18, 1
    %p57 = por %p55, %p56
    %p58 = scmp.ne.s32.totalorder %s49, %s50
    %p59 = scmp.eq.s32.totalorder %s18, 0
    %p60 = por %p58, %p59
    %p61 = scmp.ne.s32.totalorder %s49, %s50
    %p62 = scmp.eq.s32.totalorder %s19, 1
    %p63 = por %p61, %p62
    %p65 = scmp.ne.s32.totalorder %s50, %s64
    %p66 = scmp.eq.s32.totalorder %s19, 0
    %p67 = por %p65, %p66
    %s69 = sadd.s32 %s68, 1
    %p72 = scmp.eq.s32.totalorder %s13, 1
    %p73 = scmp.ne.s32.totalorder %s68, %s70
    %p74 = scmp.eq.s32.totalorder %s13, 0
    %p75 = por %p73, %p74
    %p76 = scmp.ne.s32.totalorder %s68, %s70
    %p77 = scmp.eq.s32.totalorder %s18, 1
    %p78 = por %p76, %p77
    %p79 = scmp.ne.s32.totalorder %s70, %s71
    %p80 = scmp.eq.s32.totalorder %s18, 0
    %p81 = por %p79, %p80
    %p82 = scmp.ne.s32.totalorder %s70, %s71
    %p83 = scmp.eq.s32.totalorder %s19, 1
    %p84 = por %p82, %p83
    %p86 = scmp.ne.s32.totalorder %s71, %s85
    %p87 = scmp.eq.s32.totalorder %s19, 0
    %p88 = por %p86, %p87
    %s90 = sadd.s32 %s89, 1
    %p93 = scmp.eq.s32.totalorder %s13, 1
    %p94 = scmp.ne.s32.totalorder %s89, %s91
    %p95 = scmp.eq.s32.totalorder %s13, 0
    %p96 = por %p94, %p95
    %p97 = scmp.ne.s32.totalorder %s89, %s91
    %p98 = scmp.eq.s32.totalorder %s18, 1
    %p99 = por %p97, %p98
    %p100 = scmp.ne.s32.totalorder %s91, %s92
    %p101 = scmp.eq.s32.totalorder %s18, 0
    %p102 = por %p100, %p101
    %p103 = scmp.ne.s32.totalorder %s91, %s92
    %p104 = scmp.eq.s32.totalorder %s19, 1
    %p105 = por %p103, %p104
    %p107 = scmp.ne.s32.totalorder %s92, %s106
    %p108 = scmp.eq.s32.totalorder %s19, 0
    %p109 = por %p107, %p108
    %s111 = sadd.s32 %s110, 1
    %p114 = scmp.eq.s32.totalorder %s13, 1
    %p115 = scmp.ne.s32.totalorder %s110, %s112
    %p116 = scmp.eq.s32.totalorder %s13, 0
    %p117 = por %p115, %p116
    %p118 = scmp.ne.s32.totalorder %s110, %s112
    %p119 = scmp.eq.s32.totalorder %s18, 1
    %p120 = por %p118, %p119
    %p121 = scmp.ne.s32.totalorder %s112, %s113
    %p122 = scmp.eq.s32.totalorder %s18, 0
    %p123 = por %p121, %p122
    %p124 = scmp.ne.s32.totalorder %s112, %s113
    %p125 = scmp.eq.s32.totalorder %s19, 1
    %p126 = por %p124, %p125
    %p128 = scmp.ne.s32.totalorder %s113, %s127
    %p129 = scmp.eq.s32.totalorder %s19, 0
    %p130 = por %p128, %p129
    %s132 = sadd.s32 %s131, 1
    %p135 = scmp.eq.s32.totalorder %s13, 1
    %p136 = scmp.ne.s32.totalorder %s131, %s133
    %p137 = scmp.eq.s32.totalorder %s13, 0
    %p138 = por %p136, %p137
    %p139 = scmp.ne.s32.totalorder %s131, %s133
    %p140 = scmp.eq.s32.totalorder %s18, 1
    %p141 = por %p139, %p140
    %p142 = scmp.ne.s32.totalorder %s133, %s134
    %p143 = scmp.eq.s32.totalorder %s18, 0
    %p144 = por %p142, %p143
    %p145 = scmp.ne.s32.totalorder %s133, %s134
    %p146 = scmp.eq.s32.totalorder %s19, 1
    %p147 = por %p145, %p146
    %p149 = scmp.ne.s32.totalorder %s134, %s148
    %p150 = scmp.eq.s32.totalorder %s19, 0
    %p151 = por %p149, %p150
    %s153 = sadd.s32 %s152, 1
    %p156 = scmp.eq.s32.totalorder %s13, 1
    %p157 = scmp.ne.s32.totalorder %s152, %s154
    %p158 = scmp.eq.s32.totalorder %s13, 0
    %p159 = por %p157, %p158
    %p160 = scmp.ne.s32.totalorder %s152, %s154
    %p161 = scmp.eq.s32.totalorder %s18, 1
    %p162 = por %p160, %p161
    %p163 = scmp.ne.s32.totalorder %s154, %s155
    %p164 = scmp.eq.s32.totalorder %s18, 0
    %p165 = por %p163, %p164
    %p166 = scmp.ne.s32.totalorder %s154, %s155
    %p167 = scmp.eq.s32.totalorder %s19, 1
    %p168 = por %p166, %p167
    %p170 = scmp.ne.s32.totalorder %s155, %s169
    %p171 = scmp.eq.s32.totalorder %s19, 0
    %p172 = por %p170, %p171
    %s173 = ssub.s32 %s13, %s20
    %p174 = scmp.eq.s32.totalorder %s173, 0
    %s176 = sadd.s32 %s175, 1
    %s177 = scalar_select %p174, %s175, %s176
    %p180 = pneg %p174
    %p181 = scmp.eq.s32.totalorder %s13, 1
    %p182 = por %p180, %p181
    %p183 = scmp.ne.s32.totalorder %s175, %s178
    %p184 = scmp.eq.s32.totalorder %s13, 0
    %p185 = por %p183, %p184
    %p186 = scmp.ne.s32.totalorder %s175, %s178
    %p187 = scmp.eq.s32.totalorder %s18, 1
    %p188 = por %p186, %p187
    %p189 = scmp.ne.s32.totalorder %s178, %s179
    %p190 = scmp.eq.s32.totalorder %s18, 0
    %p191 = por %p189, %p190
    %p192 = scmp.ne.s32.totalorder %s178, %s179
    %p193 = scmp.eq.s32.totalorder %s19, 1
    %p194 = por %p192, %p193
    %p196 = scmp.ne.s32.totalorder %s179, %s195
    %p197 = scmp.eq.s32.totalorder %s19, 0
    %p198 = por %p196, %p197
    %p199 = scmp.le.s32.totalorder 1, %s13
    %p200 = scmp.lt.s32.totalorder %s13, 3
    %p201 = pnand %p199, %p200
    %p202 = pneg %p201
    // Predicated region
    $region9: #{go_nn_forward.2} parent=5 // pred_check
      _
    $region10: #{go_nn_forward.2} parent=5 // pred_check_branch
      %204 = sbr.rel (%p201) target = $region12
    $region11: #{go_nn_forward.2} parent=5 // pred_region
      %s205 = ssub.s32 %s13, 1
      // Predicated region
      $region13: #{go_nn_forward.2} parent=11 // pred_check
        %p206 = pneg %p60
      $region14: #{go_nn_forward.2} parent=11 // pred_check_branch
        %208 = sbr.rel (%p206) target = $region16
      $region15: #{go_nn_forward.2} parent=11 // pred_region
        _
      $region16: #{go_nn_forward.2} parent=11 // pred_fallthru
        _
      // Predicated region
      $region17: #{go_nn_forward.2} parent=11 // pred_check
        %p209 = pneg %p81
      $region18: #{go_nn_forward.2} parent=11 // pred_check_branch
        %211 = sbr.rel (%p209) target = $region20
      $region19: #{go_nn_forward.2} parent=11 // pred_region
        _
      $region20: #{go_nn_forward.2} parent=11 // pred_fallthru
        _
      // Predicated region
      $region21: #{go_nn_forward.2} parent=11 // pred_check
        %p212 = pneg %p102
      $region22: #{go_nn_forward.2} parent=11 // pred_check_branch
        %214 = sbr.rel (%p212) target = $region24
      $region23: #{go_nn_forward.2} parent=11 // pred_region
        _
      $region24: #{go_nn_forward.2} parent=11 // pred_fallthru
        _
      // Predicated region
      $region25: #{go_nn_forward.2} parent=11 // pred_check
        %p215 = pneg %p123
      $region26: #{go_nn_forward.2} parent=11 // pred_check_branch
        %217 = sbr.rel (%p215) target = $region28
      $region27: #{go_nn_forward.2} parent=11 // pred_region
        _
      $region28: #{go_nn_forward.2} parent=11 // pred_fallthru
        _
      // Predicated region
      $region29: #{go_nn_forward.2} parent=11 // pred_check
        %p218 = pneg %p144
      $region30: #{go_nn_forward.2} parent=11 // pred_check_branch
        %220 = sbr.rel (%p218) target = $region32
      $region31: #{go_nn_forward.2} parent=11 // pred_region
        _
      $region32: #{go_nn_forward.2} parent=11 // pred_fallthru
        _
      // Predicated region
      $region33: #{go_nn_forward.2} parent=11 // pred_check
        %p221 = pneg %p165
      $region34: #{go_nn_forward.2} parent=11 // pred_check_branch
        %223 = sbr.rel (%p221) target = $region36
      $region35: #{go_nn_forward.2} parent=11 // pred_region
        _
      $region36: #{go_nn_forward.2} parent=11 // pred_fallthru
        _
    $region12: #{go_nn_forward.2} parent=5 // pred_fallthru
      _
    %p224 = scmp.lt.s32.totalorder %s13, 2
    // Predicated region
    $region37: #{go_nn_forward.2} parent=5 // pred_check
      %p225 = pneg %p224
    $region38: #{go_nn_forward.2} parent=5 // pred_check_branch
      %227 = sbr.rel (%p225) target = $region40
    $region39: #{go_nn_forward.2} parent=5 // pred_region
      // Predicated region
      $region41: #{go_nn_forward.2} parent=39 // pred_check
        %p228 = pneg %p33
      $region42: #{go_nn_forward.2} parent=39 // pred_check_branch
        %230 = sbr.rel (%p228) target = $region44
      $region43: #{go_nn_forward.2} parent=39 // pred_region
        %s231 = smul.u32 4, %s13
        %p232 = scmp.lt.s32.totalorder %s231, 7
        %s233 = scalar_select %p232, %s231, 7
        %s234 = smul.addr %s233, 8
        %s235 = smul.addr %s234, 4
        %s236 = scalar_lea.vmem %s0, %s235
        %s237 = smul.u32 4, %s13
      $region44: #{go_nn_forward.2} parent=39 // pred_fallthru
        _
    $region40: #{go_nn_forward.2} parent=5 // pred_fallthru
      _
    %p238 = scmp.le.s32.totalorder 1, %s13
    %p239 = scmp.lt.s32.totalorder %s13, 3
    %p240 = pnand %p238, %p239
    %p241 = pneg %p240
    // Predicated region
    $region45: #{go_nn_forward.2} parent=5 // pred_check
      _
    $region46: #{go_nn_forward.2} parent=5 // pred_check_branch
      %243 = sbr.rel (%p240) target = $region48
    $region47: #{go_nn_forward.2} parent=5 // pred_region
      %s244 = ssub.s32 %s13, 1
      %s245 = smul.u32 4, %s18
      %p246 = scmp.lt.s32.totalorder %s245, 7
      %s247 = scalar_select %p246, %s245, 7
      %s248 = smul.addr %s247, 8
      %s249 = smul.addr %s248, 4
      %s250 = scalar_lea.vmem %s0, %s249
      %p251 = pneg %p39
      %p252 = pneg %p36
      %p253 = pneg %p60
      %p254 = pneg %p57
      %p255 = pneg %p81
      %p256 = pneg %p78
      %p257 = pneg %p102
      %p258 = pneg %p99
      %p259 = pneg %p123
      %p260 = pneg %p120
      %p261 = pneg %p144
      %p262 = pneg %p141
      %p263 = pneg %p165
      %p264 = pneg %p162
      %p265 = pneg %p191
      %p266 = pneg %p188
      %s267 = smul.u32 4, %s18
      %p268 = scmp.lt.s32.totalorder %s267, 7
      %s269 = scalar_select %p268, %s267, 7
      %s270 = smul.addr %s269, 8
      %s271 = smul.addr %s270, 4
      %s272 = scalar_lea.vmem %s7, %s271
      %s273 = smul.u32 4, %s18
      %p274 = scmp.lt.s32.totalorder %s273, 7
      %s275 = scalar_select %p274, %s273, 7
      %s276 = smul.addr %s275, 8
      %s277 = smul.addr %s276, 4
      %s278 = scalar_lea.vmem %s0, %s277
      %s279 = smul.u32 4, %s18
      %s280 = smul.u32 4, %s18
      %p281 = scmp.lt.s32.totalorder %s280, 7
      %s282 = scalar_select %p281, %s280, 7
      %s283 = smul.addr %s282, 8
      %s284 = smul.addr %s283, 4
      %s285 = scalar_lea.vmem %s7, %s284
      %s286 = smul.u32 4, %s18
      %vm288 = vcmask 523264
      %289 = vst.msk [vmem:[#allocation2] sm:$0xff] %vm288, 0.0
      %vm290 = vcmask 517120
      %291 = vst.msk [vmem:[#allocation2 + $0x8] sm:$0x3] %vm290, 0.0
      %292 = vst.msk [vmem:[#allocation2 + $0xa0] sm:$0xff] %vm288, 0.0
      %293 = vst.msk [vmem:[#allocation2 + $0xa8] sm:$0x3] %vm290, 0.0
      %294 = vst.msk [vmem:[#allocation2 + $0x140] sm:$0xff] %vm288, 0.0
      %295 = vst.msk [vmem:[#allocation2 + $0x148] sm:$0x3] %vm290, 0.0
      %296 = vst.msk [vmem:[#allocation2 + $0x1e0] sm:$0xff] %vm288, 0.0
      %297 = vst.msk [vmem:[#allocation2 + $0x1e8] sm:$0x3] %vm290, 0.0
      %s298 = scalar_lea.vmem [#allocation2], 144
      %299 = vst.msk [vmem:[%s298] sm:$0xff] %vm288, 0.0
      %300 = vst.msk [vmem:[%s298 + $0x8] sm:$0x3] %vm290, 0.0
      %301 = vst.msk [vmem:[%s298 + $0xa0] sm:$0xff] %vm288, 0.0
      %302 = vst.msk [vmem:[%s298 + $0xa8] sm:$0x3] %vm290, 0.0
      %303 = vst.msk [vmem:[%s298 + $0x140] sm:$0xff] %vm288, 0.0
      %304 = vst.msk [vmem:[%s298 + $0x148] sm:$0x3] %vm290, 0.0
      %305 = vst.msk [vmem:[%s298 + $0x1e0] sm:$0xff] %vm288, 0.0
      %306 = vst.msk [vmem:[%s298 + $0x1e8] sm:$0x3] %vm290, 0.0
      %vm307 = vcmask 516096
      %308 = vst.msk [vmem:[#allocation2] sm:$0x1] %vm307, 0.0
      %309 = vst.msk [vmem:[#allocation2 + $0x10] sm:$0x1] %vm307, 0.0
      %310 = vst.msk [vmem:[#allocation2 + $0x20] sm:$0x1] %vm307, 0.0
      %311 = vst.msk [vmem:[#allocation2 + $0x30] sm:$0x1] %vm307, 0.0
      %312 = vst.msk [vmem:[#allocation2 + $0x40] sm:$0x1] %vm307, 0.0
      %313 = vst.msk [vmem:[#allocation2 + $0x50] sm:$0x1] %vm307, 0.0
      %314 = vst.msk [vmem:[#allocation2 + $0x60] sm:$0x1] %vm307, 0.0
      %315 = vst.msk [vmem:[#allocation2 + $0x70] sm:$0x1] %vm307, 0.0
      %316 = vst.msk [vmem:[#allocation2 + $0x80] sm:$0x1] %vm307, 0.0
      %317 = vst.msk [vmem:[#allocation2 + $0x90] sm:$0x1] %vm307, 0.0
      %318 = vst.msk [vmem:[#allocation2 + $0xa0] sm:$0x1] %vm307, 0.0
      %319 = vst.msk [vmem:[#allocation2 + $0xb0] sm:$0x1] %vm307, 0.0
      %320 = vst.msk [vmem:[#allocation2 + $0xc0] sm:$0x1] %vm307, 0.0
      %321 = vst.msk [vmem:[#allocation2 + $0xd0] sm:$0x1] %vm307, 0.0
      %322 = vst.msk [vmem:[#allocation2 + $0xe0] sm:$0x1] %vm307, 0.0
      %323 = vst.msk [vmem:[#allocation2 + $0xf0] sm:$0x1] %vm307, 0.0
      %324 = vst.msk [vmem:[#allocation2 + $0x100] sm:$0x1] %vm307, 0.0
      %325 = vst.msk [vmem:[#allocation2 + $0x110] sm:$0x1] %vm307, 0.0
      %326 = vst.msk [vmem:[#allocation2 + $0x120] sm:$0x1] %vm307, 0.0
      %327 = vst.msk [vmem:[#allocation2 + $0x130] sm:$0x1] %vm307, 0.0
      %328 = vst.msk [vmem:[#allocation2 + $0x140] sm:$0x1] %vm307, 0.0
      %329 = vst.msk [vmem:[#allocation2 + $0x150] sm:$0x1] %vm307, 0.0
      %330 = vst.msk [vmem:[#allocation2 + $0x160] sm:$0x1] %vm307, 0.0
      %331 = vst.msk [vmem:[#allocation2 + $0x170] sm:$0x1] %vm307, 0.0
      %332 = vst.msk [vmem:[#allocation2 + $0x180] sm:$0x1] %vm307, 0.0
      %333 = vst.msk [vmem:[#allocation2 + $0x190] sm:$0x1] %vm307, 0.0
      %334 = vst.msk [vmem:[#allocation2 + $0x1a0] sm:$0x1] %vm307, 0.0
      %335 = vst.msk [vmem:[#allocation2 + $0x1b0] sm:$0x1] %vm307, 0.0
      %336 = vst.msk [vmem:[#allocation2 + $0x1c0] sm:$0x1] %vm307, 0.0
      %337 = vst.msk [vmem:[#allocation2 + $0x1d0] sm:$0x1] %vm307, 0.0
      %338 = vst.msk [vmem:[#allocation2 + $0x1e0] sm:$0x1] %vm307, 0.0
      %339 = vst.msk [vmem:[#allocation2 + $0x1f0] sm:$0x1] %vm307, 0.0
      %340 = vst.msk [vmem:[#allocation2 + $0x200] sm:$0x1] %vm307, 0.0
      %341 = vst.msk [vmem:[#allocation2 + $0x210] sm:$0x1] %vm307, 0.0
      %342 = vst.msk [vmem:[#allocation2 + $0x220] sm:$0x1] %vm307, 0.0
      %343 = vst.msk [vmem:[#allocation2 + $0x230] sm:$0x1] %vm307, 0.0
      %344 = vst.msk [vmem:[#allocation2 + $0x240] sm:$0x1] %vm307, 0.0
      %345 = vst.msk [vmem:[#allocation2 + $0x250] sm:$0x1] %vm307, 0.0
      %346 = vst.msk [vmem:[#allocation2 + $0x260] sm:$0x1] %vm307, 0.0
      %347 = vst.msk [vmem:[#allocation2 + $0x270] sm:$0x1] %vm307, 0.0
      %348 = vst.msk [vmem:[#allocation2 + $0x9] sm:$0x1] %vm307, 0.0
      %349 = vst.msk [vmem:[#allocation2 + $0x19] sm:$0x1] %vm307, 0.0
      %350 = vst.msk [vmem:[#allocation2 + $0x29] sm:$0x1] %vm307, 0.0
      %351 = vst.msk [vmem:[#allocation2 + $0x39] sm:$0x1] %vm307, 0.0
      %352 = vst.msk [vmem:[#allocation2 + $0x49] sm:$0x1] %vm307, 0.0
      %353 = vst.msk [vmem:[#allocation2 + $0x59] sm:$0x1] %vm307, 0.0
      %354 = vst.msk [vmem:[#allocation2 + $0x69] sm:$0x1] %vm307, 0.0
      %355 = vst.msk [vmem:[#allocation2 + $0x79] sm:$0x1] %vm307, 0.0
      %356 = vst.msk [vmem:[#allocation2 + $0x89] sm:$0x1] %vm307, 0.0
      %357 = vst.msk [vmem:[#allocation2 + $0x99] sm:$0x1] %vm307, 0.0
      %358 = vst.msk [vmem:[#allocation2 + $0xa9] sm:$0x1] %vm307, 0.0
      %359 = vst.msk [vmem:[#allocation2 + $0xb9] sm:$0x1] %vm307, 0.0
      %360 = vst.msk [vmem:[#allocation2 + $0xc9] sm:$0x1] %vm307, 0.0
      %361 = vst.msk [vmem:[#allocation2 + $0xd9] sm:$0x1] %vm307, 0.0
      %362 = vst.msk [vmem:[#allocation2 + $0xe9] sm:$0x1] %vm307, 0.0
      %363 = vst.msk [vmem:[#allocation2 + $0xf9] sm:$0x1] %vm307, 0.0
      %364 = vst.msk [vmem:[#allocation2 + $0x109] sm:$0x1] %vm307, 0.0
      %365 = vst.msk [vmem:[#allocation2 + $0x119] sm:$0x1] %vm307, 0.0
      %366 = vst.msk [vmem:[#allocation2 + $0x129] sm:$0x1] %vm307, 0.0
      %367 = vst.msk [vmem:[#allocation2 + $0x139] sm:$0x1] %vm307, 0.0
      %368 = vst.msk [vmem:[#allocation2 + $0x149] sm:$0x1] %vm307, 0.0
      %369 = vst.msk [vmem:[#allocation2 + $0x159] sm:$0x1] %vm307, 0.0
      %370 = vst.msk [vmem:[#allocation2 + $0x169] sm:$0x1] %vm307, 0.0
      %371 = vst.msk [vmem:[#allocation2 + $0x179] sm:$0x1] %vm307, 0.0
      %372 = vst.msk [vmem:[#allocation2 + $0x189] sm:$0x1] %vm307, 0.0
      %373 = vst.msk [vmem:[#allocation2 + $0x199] sm:$0x1] %vm307, 0.0
      %374 = vst.msk [vmem:[#allocation2 + $0x1a9] sm:$0x1] %vm307, 0.0
      %375 = vst.msk [vmem:[#allocation2 + $0x1b9] sm:$0x1] %vm307, 0.0
      %376 = vst.msk [vmem:[#allocation2 + $0x1c9] sm:$0x1] %vm307, 0.0
      %377 = vst.msk [vmem:[#allocation2 + $0x1d9] sm:$0x1] %vm307, 0.0
      %378 = vst.msk [vmem:[#allocation2 + $0x1e9] sm:$0x1] %vm307, 0.0
      %379 = vst.msk [vmem:[#allocation2 + $0x1f9] sm:$0x1] %vm307, 0.0
      %380 = vst.msk [vmem:[#allocation2 + $0x209] sm:$0x1] %vm307, 0.0
      %381 = vst.msk [vmem:[#allocation2 + $0x219] sm:$0x1] %vm307, 0.0
      %382 = vst.msk [vmem:[#allocation2 + $0x229] sm:$0x1] %vm307, 0.0
      %383 = vst.msk [vmem:[#allocation2 + $0x239] sm:$0x1] %vm307, 0.0
      %384 = vst.msk [vmem:[#allocation2 + $0x249] sm:$0x1] %vm307, 0.0
      %385 = vst.msk [vmem:[#allocation2 + $0x259] sm:$0x1] %vm307, 0.0
      %386 = vst.msk [vmem:[#allocation2 + $0x269] sm:$0x1] %vm307, 0.0
      %387 = vst.msk [vmem:[#allocation2 + $0x279] sm:$0x1] %vm307, 0.0
      %v388 = vld [vmem:[%s278] sm:$0xf]
      %v389 = vld [vmem:[%s278 + $0x4] sm:$0xf]
      %v390 = vld [vmem:[%s278 + $0x8] sm:$0xf]
      %v391 = vld [vmem:[%s278 + $0xc] sm:$0xf]
      %v392 = vld [vmem:[%s278 + $0x10] sm:$0xf]
      %v393 = vld [vmem:[%s278 + $0x14] sm:$0xf]
      %v394 = vld [vmem:[%s278 + $0x18] sm:$0xf]
      %v395 = vld [vmem:[%s278 + $0x1c] sm:$0xf]
      %v396 = vld [vmem:[%s278 + $0x20] sm:$0xf]
      %v397 = vld [vmem:[%s278 + $0x24] sm:$0xf]
      %v398 = vld [vmem:[%s278 + $0x28] sm:$0xf]
      %v399 = vld [vmem:[%s278 + $0x2c] sm:$0xf]
      %v400 = vld [vmem:[%s278 + $0x30] sm:$0xf]
      %v401 = vld [vmem:[%s278 + $0x34] sm:$0xf]
      %v402 = vld [vmem:[%s278 + $0x38] sm:$0xf]
      %v403 = vld [vmem:[%s278 + $0x3c] sm:$0xf]
      %v404 = vld [vmem:[%s278 + $0x40] sm:$0xf]
      %v405 = vld [vmem:[%s278 + $0x44] sm:$0xf]
      %v406 = vld [vmem:[%s278 + $0x48] sm:$0xf]
      %v407 = vld [vmem:[%s278 + $0x4c] sm:$0xf]
      %v408 = vld [vmem:[%s278 + $0x50] sm:$0xf]
      %v409 = vld [vmem:[%s278 + $0x54] sm:$0xf]
      %v410 = vld [vmem:[%s278 + $0x58] sm:$0xf]
      %v411 = vld [vmem:[%s278 + $0x5c] sm:$0xf]
      %v412 = vld [vmem:[%s278 + $0x60] sm:$0xf]
      %v413 = vld [vmem:[%s278 + $0x64] sm:$0xf]
      %v414 = vld [vmem:[%s278 + $0x68] sm:$0xf]
      %v415 = vld [vmem:[%s278 + $0x6c] sm:$0xf]
      %v416 = vld [vmem:[%s278 + $0x70] sm:$0xf]
      %v417 = vld [vmem:[%s278 + $0x74] sm:$0xf]
      %v418 = vld [vmem:[%s278 + $0x78] sm:$0xf]
      %v419 = vld [vmem:[%s278 + $0x7c] sm:$0xf]
      %v420 = vld [vmem:[%s1] sm:$0xf]
      %v421 = vld [vmem:[%s1 + $0x4] sm:$0xf]
      %v422 = vld [vmem:[%s1 + $0x8] sm:$0x1]
      %v423 = vld [vmem:[%s2] sm:$0x1]
      %v425 = vperm.slane %v423, 0
      %v459 = vunpack.c.l.b16 %v388
      %v460 = vunpack.c.l.b16 %v389
      %v461 = vunpack.c.l.b16 %v390
      %v462 = vunpack.c.l.b16 %v391
      %v463 = vunpack.c.l.b16 %v392
      %v464 = vunpack.c.l.b16 %v393
      %v465 = vunpack.c.l.b16 %v394
      %v466 = vunpack.c.l.b16 %v395
      %v467 = vunpack.c.l.b16 %v396
      %v468 = vunpack.c.l.b16 %v397
      %v469 = vunpack.c.l.b16 %v398
      %v470 = vunpack.c.l.b16 %v399
      %v471 = vunpack.c.l.b16 %v400
      %v472 = vunpack.c.l.b16 %v401
      %v473 = vunpack.c.l.b16 %v402
      %v474 = vunpack.c.l.b16 %v403
      %v475 = vunpack.c.l.b16 %v404
      %v476 = vunpack.c.l.b16 %v405
      %v477 = vunpack.c.l.b16 %v406
      %v478 = vunpack.c.l.b16 %v407
      %v479 = vunpack.c.l.b16 %v408
      %v480 = vunpack.c.l.b16 %v409
      %v481 = vunpack.c.l.b16 %v410
      %v482 = vunpack.c.l.b16 %v411
      %v483 = vunpack.c.l.b16 %v412
      %v484 = vunpack.c.l.b16 %v413
      %v485 = vunpack.c.l.b16 %v414
      %v486 = vunpack.c.l.b16 %v415
      %v487 = vunpack.c.l.b16 %v416
      %v488 = vunpack.c.l.b16 %v417
      %v489 = vunpack.c.l.b16 %v418
      %v490 = vunpack.c.l.b16 %v419
      %v491 = vpack.c.b16 %v460, %v459
      %v492 = vpack.c.b16 %v462, %v461
      %v493 = vpack.c.b16 %v464, %v463
      %v494 = vpack.c.b16 %v466, %v465
      %v495 = vpack.c.b16 %v468, %v467
      %v496 = vpack.c.b16 %v470, %v469
      %v497 = vpack.c.b16 %v472, %v471
      %v498 = vpack.c.b16 %v474, %v473
      %v499 = vpack.c.b16 %v476, %v475
      %v500 = vpack.c.b16 %v478, %v477
      %v501 = vpack.c.b16 %v480, %v479
      %v502 = vpack.c.b16 %v482, %v481
      %v503 = vpack.c.b16 %v484, %v483
      %v504 = vpack.c.b16 %v486, %v485
      %v505 = vpack.c.b16 %v488, %v487
      %v506 = vpack.c.b16 %v490, %v489
      %v510 = vunpack.c.l.b16 %v420
      %v511 = vunpack.c.l.b16 %v421
      %v512 = vunpack.c.l.b16 %v422
      %v513 = vpack.c.b16 %v511, %v510
      %v514 = vpack.c.b16 %v512, %v512
      %vm516 = vcmask 146432
      %v518 = vsel %vm516, %v491, 0
      %v521 = vsel %vm516, %v492, 0
      %v524 = vsel %vm516, %v493, 0
      %v527 = vsel %vm516, %v494, 0
      %v530 = vsel %vm516, %v495, 0
      %v533 = vsel %vm516, %v496, 0
      %v536 = vsel %vm516, %v497, 0
      %v539 = vsel %vm516, %v498, 0
      %v542 = vsel %vm516, %v499, 0
      %v545 = vsel %vm516, %v500, 0
      %v548 = vsel %vm516, %v501, 0
      %v551 = vsel %vm516, %v502, 0
      %v554 = vsel %vm516, %v503, 0
      %v557 = vsel %vm516, %v504, 0
      %v560 = vsel %vm516, %v505, 0
      %v563 = vsel %vm516, %v506, 0
      %vm565 = vcmask 1040384
      %v567 = vsel %vm565, %v514, 0
      %569 = vmatpush.bf16.msra.mxu0 0
      %570 = vmatpush.bf16.msra.mxu0 0
      %571 = vmatpush.bf16.msra.mxu0 0
      %572 = vmatpush.bf16.msra.mxu0 0
      %573 = vmatpush.bf16.msra.mxu0 0
      %574 = vmatpush.bf16.msra.mxu0 0
      %575 = vmatpush.bf16.msra.mxu0 %v567
      %576 = vmatpush.bf16.msra.mxu0 %v513
      %577 = vmatmul.bf16.gmra.mxu0 %v518
      %v578 = vpop.f32.mrf.mxu0
      %v579 = vadd.f32 %v425, %v578
      %v580 = vpop.f32.mrf.mxu0
      %v581 = vadd.f32 %v425, %v580
      %582 = vmatmul.bf16.gmra.mxu0 %v521
      %v583 = vpop.f32.mrf.mxu0
      %v584 = vadd.f32 %v425, %v583
      %v585 = vpop.f32.mrf.mxu0
      %v586 = vadd.f32 %v425, %v585
      %587 = vmatmul.bf16.gmra.mxu0 %v524
      %v588 = vpop.f32.mrf.mxu0
      %v589 = vadd.f32 %v425, %v588
      %v590 = vpop.f32.mrf.mxu0
      %v591 = vadd.f32 %v425, %v590
      %592 = vmatmul.bf16.gmra.mxu0 %v527
      %v593 = vpop.f32.mrf.mxu0
      %v594 = vadd.f32 %v425, %v593
      %v595 = vpop.f32.mrf.mxu0
      %v596 = vadd.f32 %v425, %v595
      %597 = vmatmul.bf16.gmra.mxu0 %v530
      %v598 = vpop.f32.mrf.mxu0
      %v599 = vadd.f32 %v425, %v598
      %v600 = vpop.f32.mrf.mxu0
      %v601 = vadd.f32 %v425, %v600
      %602 = vmatmul.bf16.gmra.mxu0 %v533
      %v603 = vpop.f32.mrf.mxu0
      %v604 = vadd.f32 %v425, %v603
      %v605 = vpop.f32.mrf.mxu0
      %v606 = vadd.f32 %v425, %v605
      %607 = vmatmul.bf16.gmra.mxu0 %v536
      %v608 = vpop.f32.mrf.mxu0
      %v609 = vadd.f32 %v425, %v608
      %v610 = vpop.f32.mrf.mxu0
      %v611 = vadd.f32 %v425, %v610
      %612 = vmatmul.bf16.gmra.mxu0 %v539
      %v613 = vpop.f32.mrf.mxu0
      %v614 = vadd.f32 %v425, %v613
      %v615 = vpop.f32.mrf.mxu0
      %v616 = vadd.f32 %v425, %v615
      %617 = vmatmul.bf16.gmra.mxu0 %v542
      %v618 = vpop.f32.mrf.mxu0
      %v619 = vadd.f32 %v425, %v618
      %v620 = vpop.f32.mrf.mxu0
      %v621 = vadd.f32 %v425, %v620
      %622 = vmatmul.bf16.gmra.mxu0 %v545
      %v623 = vpop.f32.mrf.mxu0
      %v624 = vadd.f32 %v425, %v623
      %v625 = vpop.f32.mrf.mxu0
      %v626 = vadd.f32 %v425, %v625
      %627 = vmatmul.bf16.gmra.mxu0 %v548
      %v628 = vpop.f32.mrf.mxu0
      %v629 = vadd.f32 %v425, %v628
      %v630 = vpop.f32.mrf.mxu0
      %v631 = vadd.f32 %v425, %v630
      %632 = vmatmul.bf16.gmra.mxu0 %v551
      %v633 = vpop.f32.mrf.mxu0
      %v634 = vadd.f32 %v425, %v633
      %v635 = vpop.f32.mrf.mxu0
      %v636 = vadd.f32 %v425, %v635
      %637 = vmatmul.bf16.gmra.mxu0 %v554
      %v638 = vpop.f32.mrf.mxu0
      %v639 = vadd.f32 %v425, %v638
      %v640 = vpop.f32.mrf.mxu0
      %v641 = vadd.f32 %v425, %v640
      %642 = vmatmul.bf16.gmra.mxu0 %v557
      %v643 = vpop.f32.mrf.mxu0
      %v644 = vadd.f32 %v425, %v643
      %v645 = vpop.f32.mrf.mxu0
      %v646 = vadd.f32 %v425, %v645
      %647 = vmatmul.bf16.gmra.mxu0 %v560
      %v648 = vpop.f32.mrf.mxu0
      %v649 = vadd.f32 %v425, %v648
      %v650 = vpop.f32.mrf.mxu0
      %v651 = vadd.f32 %v425, %v650
      %652 = vmatmul.bf16.gmra.mxu0 %v563
      %v653 = vpop.f32.mrf.mxu0
      %v654 = vadd.f32 %v425, %v653
      %v655 = vpop.f32.mrf.mxu0
      %v656 = vadd.f32 %v425, %v655
      %657 = vdwg.mxu0
      %v658 = vmax.f32 %v579, 0.0
      %v659 = vmax.f32 %v581, 0.0
      %v660 = vmax.f32 %v584, 0.0
      %v661 = vmax.f32 %v586, 0.0
      %v662 = vmax.f32 %v589, 0.0
      %v663 = vmax.f32 %v591, 0.0
      %v664 = vmax.f32 %v594, 0.0
      %v665 = vmax.f32 %v596, 0.0
      %v666 = vmax.f32 %v599, 0.0
      %v667 = vmax.f32 %v601, 0.0
      %v668 = vmax.f32 %v604, 0.0
      %v669 = vmax.f32 %v606, 0.0
      %v670 = vmax.f32 %v609, 0.0
      %v671 = vmax.f32 %v611, 0.0
      %v672 = vmax.f32 %v614, 0.0
      %v673 = vmax.f32 %v616, 0.0
      %v674 = vmax.f32 %v619, 0.0
      %v675 = vmax.f32 %v621, 0.0
      %v676 = vmax.f32 %v624, 0.0
      %v677 = vmax.f32 %v626, 0.0
      %v678 = vmax.f32 %v629, 0.0
      %v679 = vmax.f32 %v631, 0.0
      %v680 = vmax.f32 %v634, 0.0
      %v681 = vmax.f32 %v636, 0.0
      %v682 = vmax.f32 %v639, 0.0
      %v683 = vmax.f32 %v641, 0.0
      %v684 = vmax.f32 %v644, 0.0
      %v685 = vmax.f32 %v646, 0.0
      %v686 = vmax.f32 %v649, 0.0
      %v687 = vmax.f32 %v651, 0.0
      %v688 = vmax.f32 %v654, 0.0
      %v689 = vmax.f32 %v656, 0.0
      %s690 = scalar_lea.vmem [#allocation2], 16
      %691 = vst.msk [vmem:[%s690 + $0x1] sm:$0xff] %vm288, %v658
      %692 = vst.msk [vmem:[%s690 + $0x11] sm:$0xff] %vm288, %v659
      %693 = vst.msk [vmem:[%s690 + $0x21] sm:$0xff] %vm288, %v660
      %694 = vst.msk [vmem:[%s690 + $0x31] sm:$0xff] %vm288, %v661
      %695 = vst.msk [vmem:[%s690 + $0x41] sm:$0xff] %vm288, %v662
      %696 = vst.msk [vmem:[%s690 + $0x51] sm:$0xff] %vm288, %v663
      %697 = vst.msk [vmem:[%s690 + $0x61] sm:$0xff] %vm288, %v664
      %698 = vst.msk [vmem:[%s690 + $0x71] sm:$0xff] %vm288, %v665
      %699 = vst.msk [vmem:[%s690 + $0xa1] sm:$0xff] %vm288, %v666
      %700 = vst.msk [vmem:[%s690 + $0xb1] sm:$0xff] %vm288, %v667
      %701 = vst.msk [vmem:[%s690 + $0xc1] sm:$0xff] %vm288, %v668
      %702 = vst.msk [vmem:[%s690 + $0xd1] sm:$0xff] %vm288, %v669
      %703 = vst.msk [vmem:[%s690 + $0xe1] sm:$0xff] %vm288, %v670
      %704 = vst.msk [vmem:[%s690 + $0xf1] sm:$0xff] %vm288, %v671
      %705 = vst.msk [vmem:[%s690 + $0x101] sm:$0xff] %vm288, %v672
      %706 = vst.msk [vmem:[%s690 + $0x111] sm:$0xff] %vm288, %v673
      %707 = vst.msk [vmem:[%s690 + $0x141] sm:$0xff] %vm288, %v674
      %708 = vst.msk [vmem:[%s690 + $0x151] sm:$0xff] %vm288, %v675
      %709 = vst.msk [vmem:[%s690 + $0x161] sm:$0xff] %vm288, %v676
      %710 = vst.msk [vmem:[%s690 + $0x171] sm:$0xff] %vm288, %v677
      %711 = vst.msk [vmem:[%s690 + $0x181] sm:$0xff] %vm288, %v678
      %712 = vst.msk [vmem:[%s690 + $0x191] sm:$0xff] %vm288, %v679
      %713 = vst.msk [vmem:[%s690 + $0x1a1] sm:$0xff] %vm288, %v680
      %714 = vst.msk [vmem:[%s690 + $0x1b1] sm:$0xff] %vm288, %v681
      %715 = vst.msk [vmem:[%s690 + $0x1e1] sm:$0xff] %vm288, %v682
      %716 = vst.msk [vmem:[%s690 + $0x1f1] sm:$0xff] %vm288, %v683
      %717 = vst.msk [vmem:[%s690 + $0x201] sm:$0xff] %vm288, %v684
      %718 = vst.msk [vmem:[%s690 + $0x211] sm:$0xff] %vm288, %v685
      %719 = vst.msk [vmem:[%s690 + $0x221] sm:$0xff] %vm288, %v686
      %720 = vst.msk [vmem:[%s690 + $0x231] sm:$0xff] %vm288, %v687
      %721 = vst.msk [vmem:[%s690 + $0x241] sm:$0xff] %vm288, %v688
      %722 = vst.msk [vmem:[%s690 + $0x251] sm:$0xff] %vm288, %v689
      %v723 = vld [vmem:[#allocation2] sm:$0xff]
      %v724 = vld [vmem:[#allocation2 + $0x10] sm:$0xff]
      %v725 = vld [vmem:[#allocation2 + $0x20] sm:$0xff]
      %v726 = vld [vmem:[#allocation2 + $0x30] sm:$0xff]
      %v727 = vld [vmem:[#allocation2 + $0x40] sm:$0xff]
      %v728 = vld [vmem:[#allocation2 + $0x50] sm:$0xff]
      %v729 = vld [vmem:[#allocation2 + $0x60] sm:$0xff]
      %v730 = vld [vmem:[#allocation2 + $0x70] sm:$0xff]
      %v731 = vld [vmem:[#allocation2 + $0xa0] sm:$0xff]
      %v732 = vld [vmem:[#allocation2 + $0xb0] sm:$0xff]
      %v733 = vld [vmem:[#allocation2 + $0xc0] sm:$0xff]
      %v734 = vld [vmem:[#allocation2 + $0xd0] sm:$0xff]
      %v735 = vld [vmem:[#allocation2 + $0xe0] sm:$0xff]
      %v736 = vld [vmem:[#allocation2 + $0xf0] sm:$0xff]
      %v737 = vld [vmem:[#allocation2 + $0x100] sm:$0xff]
      %v738 = vld [vmem:[#allocation2 + $0x110] sm:$0xff]
      %v739 = vld [vmem:[#allocation2 + $0x140] sm:$0xff]
      %v740 = vld [vmem:[#allocation2 + $0x150] sm:$0xff]
      %v741 = vld [vmem:[#allocation2 + $0x160] sm:$0xff]
      %v742 = vld [vmem:[#allocation2 + $0x170] sm:$0xff]
      %v743 = vld [vmem:[#allocation2 + $0x180] sm:$0xff]
      %v744 = vld [vmem:[#allocation2 + $0x190] sm:$0xff]
      %v745 = vld [vmem:[#allocation2 + $0x1a0] sm:$0xff]
      %v746 = vld [vmem:[#allocation2 + $0x1b0] sm:$0xff]
      %v747 = vld [vmem:[#allocation2 + $0x1e0] sm:$0xff]
      %v748 = vld [vmem:[#allocation2 + $0x1f0] sm:$0xff]
      %v749 = vld [vmem:[#allocation2 + $0x200] sm:$0xff]
      %v750 = vld [vmem:[#allocation2 + $0x210] sm:$0xff]
      %v751 = vld [vmem:[#allocation2 + $0x220] sm:$0xff]
      %v752 = vld [vmem:[#allocation2 + $0x230] sm:$0xff]
      %v753 = vld [vmem:[#allocation2 + $0x240] sm:$0xff]
      %v754 = vld [vmem:[#allocation2 + $0x250] sm:$0xff]
      %v755 = vld [vmem:[#allocation2 + $0x1] sm:$0xff]
      %v756 = vld [vmem:[#allocation2 + $0x11] sm:$0xff]
      %v757 = vld [vmem:[#allocation2 + $0x21] sm:$0xff]
      %v758 = vld [vmem:[#allocation2 + $0x31] sm:$0xff]
      %v759 = vld [vmem:[#allocation2 + $0x41] sm:$0xff]
      %v760 = vld [vmem:[#allocation2 + $0x51] sm:$0xff]
      %v761 = vld [vmem:[#allocation2 + $0x61] sm:$0xff]
      %v762 = vld [vmem:[#allocation2 + $0x71] sm:$0xff]
      %v763 = vld [vmem:[#allocation2 + $0xa1] sm:$0xff]
      %v764 = vld [vmem:[#allocation2 + $0xb1] sm:$0xff]
      %v765 = vld [vmem:[#allocation2 + $0xc1] sm:$0xff]
      %v766 = vld [vmem:[#allocation2 + $0xd1] sm:$0xff]
      %v767 = vld [vmem:[#allocation2 + $0xe1] sm:$0xff]
      %v768 = vld [vmem:[#allocation2 + $0xf1] sm:$0xff]
      %v769 = vld [vmem:[#allocation2 + $0x101] sm:$0xff]
      %v770 = vld [vmem:[#allocation2 + $0x111] sm:$0xff]
      %v771 = vld [vmem:[#allocation2 + $0x141] sm:$0xff]
      %v772 = vld [vmem:[#allocation2 + $0x151] sm:$0xff]
      %v773 = vld [vmem:[#allocation2 + $0x161] sm:$0xff]
      %v774 = vld [vmem:[#allocation2 + $0x171] sm:$0xff]
      %v775 = vld [vmem:[#allocation2 + $0x181] sm:$0xff]
      %v776 = vld [vmem:[#allocation2 + $0x191] sm:$0xff]
      %v777 = vld [vmem:[#allocation2 + $0x1a1] sm:$0xff]
      %v778 = vld [vmem:[#allocation2 + $0x1b1] sm:$0xff]
      %v779 = vld [vmem:[#allocation2 + $0x1e1] sm:$0xff]
      %v780 = vld [vmem:[#allocation2 + $0x1f1] sm:$0xff]
      %v781 = vld [vmem:[#allocation2 + $0x201] sm:$0xff]
      %v782 = vld [vmem:[#allocation2 + $0x211] sm:$0xff]
      %v783 = vld [vmem:[#allocation2 + $0x221] sm:$0xff]
      %v784 = vld [vmem:[#allocation2 + $0x231] sm:$0xff]
      %v785 = vld [vmem:[#allocation2 + $0x241] sm:$0xff]
      %v786 = vld [vmem:[#allocation2 + $0x251] sm:$0xff]
      %v787 = vld [vmem:[#allocation2 + $0x2] sm:$0xff]
      %v788 = vld [vmem:[#allocation2 + $0x12] sm:$0xff]
      %v789 = vld [vmem:[#allocation2 + $0x22] sm:$0xff]
      %v790 = vld [vmem:[#allocation2 + $0x32] sm:$0xff]
      %v791 = vld [vmem:[#allocation2 + $0x42] sm:$0xff]
      %v792 = vld [vmem:[#allocation2 + $0x52] sm:$0xff]
      %v793 = vld [vmem:[#allocation2 + $0x62] sm:$0xff]
      %v794 = vld [vmem:[#allocation2 + $0x72] sm:$0xff]
      %v795 = vld [vmem:[#allocation2 + $0xa2] sm:$0xff]
      %v796 = vld [vmem:[#allocation2 + $0xb2] sm:$0xff]
      %v797 = vld [vmem:[#allocation2 + $0xc2] sm:$0xff]
      %v798 = vld [vmem:[#allocation2 + $0xd2] sm:$0xff]
      %v799 = vld [vmem:[#allocation2 + $0xe2] sm:$0xff]
      %v800 = vld [vmem:[#allocation2 + $0xf2] sm:$0xff]
      %v801 = vld [vmem:[#allocation2 + $0x102] sm:$0xff]
      %v802 = vld [vmem:[#allocation2 + $0x112] sm:$0xff]
      %v803 = vld [vmem:[#allocation2 + $0x142] sm:$0xff]
      %v804 = vld [vmem:[#allocation2 + $0x152] sm:$0xff]
      %v805 = vld [vmem:[#allocation2 + $0x162] sm:$0xff]
      %v806 = vld [vmem:[#allocation2 + $0x172] sm:$0xff]
      %v807 = vld [vmem:[#allocation2 + $0x182] sm:$0xff]
      %v808 = vld [vmem:[#allocation2 + $0x192] sm:$0xff]
      %v809 = vld [vmem:[#allocation2 + $0x1a2] sm:$0xff]
      %v810 = vld [vmem:[#allocation2 + $0x1b2] sm:$0xff]
      %v811 = vld [vmem:[#allocation2 + $0x1e2] sm:$0xff]
      %v812 = vld [vmem:[#allocation2 + $0x1f2] sm:$0xff]
      %v813 = vld [vmem:[#allocation2 + $0x202] sm:$0xff]
      %v814 = vld [vmem:[#allocation2 + $0x212] sm:$0xff]
      %v815 = vld [vmem:[#allocation2 + $0x222] sm:$0xff]
      %v816 = vld [vmem:[#allocation2 + $0x232] sm:$0xff]
      %v817 = vld [vmem:[#allocation2 + $0x242] sm:$0xff]
      %v818 = vld [vmem:[#allocation2 + $0x252] sm:$0xff]
      %v819 = vld [vmem:[%s690] sm:$0xff]
      %v820 = vld [vmem:[%s690 + $0x10] sm:$0xff]
      %v821 = vld [vmem:[%s690 + $0x20] sm:$0xff]
      %v822 = vld [vmem:[%s690 + $0x30] sm:$0xff]
      %v823 = vld [vmem:[%s690 + $0x40] sm:$0xff]
      %v824 = vld [vmem:[%s690 + $0x50] sm:$0xff]
      %v825 = vld [vmem:[%s690 + $0x60] sm:$0xff]
      %v826 = vld [vmem:[%s690 + $0x70] sm:$0xff]
      %v827 = vld [vmem:[%s690 + $0xa0] sm:$0xff]
      %v828 = vld [vmem:[%s690 + $0xb0] sm:$0xff]
      %v829 = vld [vmem:[%s690 + $0xc0] sm:$0xff]
      %v830 = vld [vmem:[%s690 + $0xd0] sm:$0xff]
      %v831 = vld [vmem:[%s690 + $0xe0] sm:$0xff]
      %v832 = vld [vmem:[%s690 + $0xf0] sm:$0xff]
      %v833 = vld [vmem:[%s690 + $0x100] sm:$0xff]
      %v834 = vld [vmem:[%s690 + $0x110] sm:$0xff]
      %v835 = vld [vmem:[%s690 + $0x140] sm:$0xff]
      %v836 = vld [vmem:[%s690 + $0x150] sm:$0xff]
      %v837 = vld [vmem:[%s690 + $0x160] sm:$0xff]
      %v838 = vld [vmem:[%s690 + $0x170] sm:$0xff]
      %v839 = vld [vmem:[%s690 + $0x180] sm:$0xff]
      %v840 = vld [vmem:[%s690 + $0x190] sm:$0xff]
      %v841 = vld [vmem:[%s690 + $0x1a0] sm:$0xff]
      %v842 = vld [vmem:[%s690 + $0x1b0] sm:$0xff]
      %v843 = vld [vmem:[%s690 + $0x1e0] sm:$0xff]
      %v844 = vld [vmem:[%s690 + $0x1f0] sm:$0xff]
      %v845 = vld [vmem:[%s690 + $0x200] sm:$0xff]
      %v846 = vld [vmem:[%s690 + $0x210] sm:$0xff]
      %v847 = vld [vmem:[%s690 + $0x220] sm:$0xff]
      %v848 = vld [vmem:[%s690 + $0x230] sm:$0xff]
      %v849 = vld [vmem:[%s690 + $0x240] sm:$0xff]
      %v850 = vld [vmem:[%s690 + $0x250] sm:$0xff]
      %v851 = vld [vmem:[%s690 + $0x1] sm:$0xff]
      %v852 = vld [vmem:[%s690 + $0x11] sm:$0xff]
      %v853 = vld [vmem:[%s690 + $0x21] sm:$0xff]
      %v854 = vld [vmem:[%s690 + $0x31] sm:$0xff]
      %v855 = vld [vmem:[%s690 + $0x41] sm:$0xff]
      %v856 = vld [vmem:[%s690 + $0x51] sm:$0xff]
      %v857 = vld [vmem:[%s690 + $0x61] sm:$0xff]
      %v858 = vld [vmem:[%s690 + $0x71] sm:$0xff]
      %v859 = vld [vmem:[%s690 + $0xa1] sm:$0xff]
      %v860 = vld [vmem:[%s690 + $0xb1] sm:$0xff]
      %v861 = vld [vmem:[%s690 + $0xc1] sm:$0xff]
      %v862 = vld [vmem:[%s690 + $0xd1] sm:$0xff]
      %v863 = vld [vmem:[%s690 + $0xe1] sm:$0xff]
      %v864 = vld [vmem:[%s690 + $0xf1] sm:$0xff]
      %v865 = vld [vmem:[%s690 + $0x101] sm:$0xff]
      %v866 = vld [vmem:[%s690 + $0x111] sm:$0xff]
      %v867 = vld [vmem:[%s690 + $0x141] sm:$0xff]
      %v868 = vld [vmem:[%s690 + $0x151] sm:$0xff]
      %v869 = vld [vmem:[%s690 + $0x161] sm:$0xff]
      %v870 = vld [vmem:[%s690 + $0x171] sm:$0xff]
      %v871 = vld [vmem:[%s690 + $0x181] sm:$0xff]
      %v872 = vld [vmem:[%s690 + $0x191] sm:$0xff]
      %v873 = vld [vmem:[%s690 + $0x1a1] sm:$0xff]
      %v874 = vld [vmem:[%s690 + $0x1b1] sm:$0xff]
      %v875 = vld [vmem:[%s690 + $0x1e1] sm:$0xff]
      %v876 = vld [vmem:[%s690 + $0x1f1] sm:$0xff]
      %v877 = vld [vmem:[%s690 + $0x201] sm:$0xff]
      %v878 = vld [vmem:[%s690 + $0x211] sm:$0xff]
      %v879 = vld [vmem:[%s690 + $0x221] sm:$0xff]
      %v880 = vld [vmem:[%s690 + $0x231] sm:$0xff]
      %v881 = vld [vmem:[%s690 + $0x241] sm:$0xff]
      %v882 = vld [vmem:[%s690 + $0x251] sm:$0xff]
      %v883 = vld [vmem:[%s690 + $0x2] sm:$0xff]
      %v884 = vld [vmem:[%s690 + $0x12] sm:$0xff]
      %v885 = vld [vmem:[%s690 + $0x22] sm:$0xff]
      %v886 = vld [vmem:[%s690 + $0x32] sm:$0xff]
      %v887 = vld [vmem:[%s690 + $0x42] sm:$0xff]
      %v888 = vld [vmem:[%s690 + $0x52] sm:$0xff]
      %v889 = vld [vmem:[%s690 + $0x62] sm:$0xff]
      %v890 = vld [vmem:[%s690 + $0x72] sm:$0xff]
      %v891 = vld [vmem:[%s690 + $0xa2] sm:$0xff]
      %v892 = vld [vmem:[%s690 + $0xb2] sm:$0xff]
      %v893 = vld [vmem:[%s690 + $0xc2] sm:$0xff]
      %v894 = vld [vmem:[%s690 + $0xd2] sm:$0xff]
      %v895 = vld [vmem:[%s690 + $0xe2] sm:$0xff]
      %v896 = vld [vmem:[%s690 + $0xf2] sm:$0xff]
      %v897 = vld [vmem:[%s690 + $0x102] sm:$0xff]
      %v898 = vld [vmem:[%s690 + $0x112] sm:$0xff]
      %v899 = vld [vmem:[%s690 + $0x142] sm:$0xff]
      %v900 = vld [vmem:[%s690 + $0x152] sm:$0xff]
      %v901 = vld [vmem:[%s690 + $0x162] sm:$0xff]
      %v902 = vld [vmem:[%s690 + $0x172] sm:$0xff]
      %v903 = vld [vmem:[%s690 + $0x182] sm:$0xff]
      %v904 = vld [vmem:[%s690 + $0x192] sm:$0xff]
      %v905 = vld [vmem:[%s690 + $0x1a2] sm:$0xff]
      %v906 = vld [vmem:[%s690 + $0x1b2] sm:$0xff]
      %v907 = vld [vmem:[%s690 + $0x1e2] sm:$0xff]
      %v908 = vld [vmem:[%s690 + $0x1f2] sm:$0xff]
      %v909 = vld [vmem:[%s690 + $0x202] sm:$0xff]
      %v910 = vld [vmem:[%s690 + $0x212] sm:$0xff]
      %v911 = vld [vmem:[%s690 + $0x222] sm:$0xff]
      %v912 = vld [vmem:[%s690 + $0x232] sm:$0xff]
      %v913 = vld [vmem:[%s690 + $0x242] sm:$0xff]
      %v914 = vld [vmem:[%s690 + $0x252] sm:$0xff]
      %s915 = scalar_lea.vmem [#allocation2], 32
      %v916 = vld [vmem:[%s915] sm:$0xff]
      %v917 = vld [vmem:[%s915 + $0x10] sm:$0xff]
      %v918 = vld [vmem:[%s915 + $0x20] sm:$0xff]
      %v919 = vld [vmem:[%s915 + $0x30] sm:$0xff]
      %v920 = vld [vmem:[%s915 + $0x40] sm:$0xff]
      %v921 = vld [vmem:[%s915 + $0x50] sm:$0xff]
      %v922 = vld [vmem:[%s915 + $0x60] sm:$0xff]
      %v923 = vld [vmem:[%s915 + $0x70] sm:$0xff]
      %v924 = vld [vmem:[%s915 + $0xa0] sm:$0xff]
      %v925 = vld [vmem:[%s915 + $0xb0] sm:$0xff]
      %v926 = vld [vmem:[%s915 + $0xc0] sm:$0xff]
      %v927 = vld [vmem:[%s915 + $0xd0] sm:$0xff]
      %v928 = vld [vmem:[%s915 + $0xe0] sm:$0xff]
      %v929 = vld [vmem:[%s915 + $0xf0] sm:$0xff]
      %v930 = vld [vmem:[%s915 + $0x100] sm:$0xff]
      %v931 = vld [vmem:[%s915 + $0x110] sm:$0xff]
      %v932 = vld [vmem:[%s915 + $0x140] sm:$0xff]
      %v933 = vld [vmem:[%s915 + $0x150] sm:$0xff]
      %v934 = vld [vmem:[%s915 + $0x160] sm:$0xff]
      %v935 = vld [vmem:[%s915 + $0x170] sm:$0xff]
      %v936 = vld [vmem:[%s915 + $0x180] sm:$0xff]
      %v937 = vld [vmem:[%s915 + $0x190] sm:$0xff]
      %v938 = vld [vmem:[%s915 + $0x1a0] sm:$0xff]
      %v939 = vld [vmem:[%s915 + $0x1b0] sm:$0xff]
      %v940 = vld [vmem:[%s915 + $0x1e0] sm:$0xff]
      %v941 = vld [vmem:[%s915 + $0x1f0] sm:$0xff]
      %v942 = vld [vmem:[%s915 + $0x200] sm:$0xff]
      %v943 = vld [vmem:[%s915 + $0x210] sm:$0xff]
      %v944 = vld [vmem:[%s915 + $0x220] sm:$0xff]
      %v945 = vld [vmem:[%s915 + $0x230] sm:$0xff]
      %v946 = vld [vmem:[%s915 + $0x240] sm:$0xff]
      %v947 = vld [vmem:[%s915 + $0x250] sm:$0xff]
      %v948 = vld [vmem:[%s915 + $0x1] sm:$0xff]
      %v949 = vld [vmem:[%s915 + $0x11] sm:$0xff]
      %v950 = vld [vmem:[%s915 + $0x21] sm:$0xff]
      %v951 = vld [vmem:[%s915 + $0x31] sm:$0xff]
      %v952 = vld [vmem:[%s915 + $0x41] sm:$0xff]
      %v953 = vld [vmem:[%s915 + $0x51] sm:$0xff]
      %v954 = vld [vmem:[%s915 + $0x61] sm:$0xff]
      %v955 = vld [vmem:[%s915 + $0x71] sm:$0xff]
      %v956 = vld [vmem:[%s915 + $0xa1] sm:$0xff]
      %v957 = vld [vmem:[%s915 + $0xb1] sm:$0xff]
      %v958 = vld [vmem:[%s915 + $0xc1] sm:$0xff]
      %v959 = vld [vmem:[%s915 + $0xd1] sm:$0xff]
      %v960 = vld [vmem:[%s915 + $0xe1] sm:$0xff]
      %v961 = vld [vmem:[%s915 + $0xf1] sm:$0xff]
      %v962 = vld [vmem:[%s915 + $0x101] sm:$0xff]
      %v963 = vld [vmem:[%s915 + $0x111] sm:$0xff]
      %v964 = vld [vmem:[%s915 + $0x141] sm:$0xff]
      %v965 = vld [vmem:[%s915 + $0x151] sm:$0xff]
      %v966 = vld [vmem:[%s915 + $0x161] sm:$0xff]
      %v967 = vld [vmem:[%s915 + $0x171] sm:$0xff]
      %v968 = vld [vmem:[%s915 + $0x181] sm:$0xff]
      %v969 = vld [vmem:[%s915 + $0x191] sm:$0xff]
      %v970 = vld [vmem:[%s915 + $0x1a1] sm:$0xff]
      %v971 = vld [vmem:[%s915 + $0x1b1] sm:$0xff]
      %v972 = vld [vmem:[%s915 + $0x1e1] sm:$0xff]
      %v973 = vld [vmem:[%s915 + $0x1f1] sm:$0xff]
      %v974 = vld [vmem:[%s915 + $0x201] sm:$0xff]
      %v975 = vld [vmem:[%s915 + $0x211] sm:$0xff]
      %v976 = vld [vmem:[%s915 + $0x221] sm:$0xff]
      %v977 = vld [vmem:[%s915 + $0x231] sm:$0xff]
      %v978 = vld [vmem:[%s915 + $0x241] sm:$0xff]
      %v979 = vld [vmem:[%s915 + $0x251] sm:$0xff]
      %v980 = vld [vmem:[%s915 + $0x2] sm:$0xff]
      %v981 = vld [vmem:[%s915 + $0x12] sm:$0xff]
      %v982 = vld [vmem:[%s915 + $0x22] sm:$0xff]
      %v983 = vld [vmem:[%s915 + $0x32] sm:$0xff]
      %v984 = vld [vmem:[%s915 + $0x42] sm:$0xff]
      %v985 = vld [vmem:[%s915 + $0x52] sm:$0xff]
      %v986 = vld [vmem:[%s915 + $0x62] sm:$0xff]
      %v987 = vld [vmem:[%s915 + $0x72] sm:$0xff]
      %v988 = vld [vmem:[%s915 + $0xa2] sm:$0xff]
      %v989 = vld [vmem:[%s915 + $0xb2] sm:$0xff]
      %v990 = vld [vmem:[%s915 + $0xc2] sm:$0xff]
      %v991 = vld [vmem:[%s915 + $0xd2] sm:$0xff]
      %v992 = vld [vmem:[%s915 + $0xe2] sm:$0xff]
      %v993 = vld [vmem:[%s915 + $0xf2] sm:$0xff]
      %v994 = vld [vmem:[%s915 + $0x102] sm:$0xff]
      %v995 = vld [vmem:[%s915 + $0x112] sm:$0xff]
      %v996 = vld [vmem:[%s915 + $0x142] sm:$0xff]
      %v997 = vld [vmem:[%s915 + $0x152] sm:$0xff]
      %v998 = vld [vmem:[%s915 + $0x162] sm:$0xff]
      %v999 = vld [vmem:[%s915 + $0x172] sm:$0xff]
      %v1000 = vld [vmem:[%s915 + $0x182] sm:$0xff]
      %v1001 = vld [vmem:[%s915 + $0x192] sm:$0xff]
      %v1002 = vld [vmem:[%s915 + $0x1a2] sm:$0xff]
      %v1003 = vld [vmem:[%s915 + $0x1b2] sm:$0xff]
      %v1004 = vld [vmem:[%s915 + $0x1e2] sm:$0xff]
      %v1005 = vld [vmem:[%s915 + $0x1f2] sm:$0xff]
      %v1006 = vld [vmem:[%s915 + $0x202] sm:$0xff]
      %v1007 = vld [vmem:[%s915 + $0x212] sm:$0xff]
      %v1008 = vld [vmem:[%s915 + $0x222] sm:$0xff]
      %v1009 = vld [vmem:[%s915 + $0x232] sm:$0xff]
      %v1010 = vld [vmem:[%s915 + $0x242] sm:$0xff]
      %v1011 = vld [vmem:[%s915 + $0x252] sm:$0xff]
      %1044 = vrot.lane.b32.xlu0 %v755, 64
      %v1045 = vpop.permute.xlu0 %1044
      %1046 = vrot.lane.b32.xlu0 %v756, 64
      %v1047 = vpop.permute.xlu0 %1046
      %1048 = vrot.lane.b32.xlu0 %v757, 64
      %v1049 = vpop.permute.xlu0 %1048
      %1050 = vrot.lane.b32.xlu0 %v758, 64
      %v1051 = vpop.permute.xlu0 %1050
      %1052 = vrot.lane.b32.xlu0 %v759, 64
      %v1053 = vpop.permute.xlu0 %1052
      %1054 = vrot.lane.b32.xlu0 %v760, 64
      %v1055 = vpop.permute.xlu0 %1054
      %1056 = vrot.lane.b32.xlu0 %v761, 64
      %v1057 = vpop.permute.xlu0 %1056
      %1058 = vrot.lane.b32.xlu0 %v762, 64
      %v1059 = vpop.permute.xlu0 %1058
      %1060 = vrot.lane.b32.xlu0 %v763, 64
      %v1061 = vpop.permute.xlu0 %1060
      %1062 = vrot.lane.b32.xlu0 %v764, 64
      %v1063 = vpop.permute.xlu0 %1062
      %1064 = vrot.lane.b32.xlu0 %v765, 64
      %v1065 = vpop.permute.xlu0 %1064
      %1066 = vrot.lane.b32.xlu0 %v766, 64
      %v1067 = vpop.permute.xlu0 %1066
      %1068 = vrot.lane.b32.xlu0 %v767, 64
      %v1069 = vpop.permute.xlu0 %1068
      %1070 = vrot.lane.b32.xlu0 %v768, 64
      %v1071 = vpop.permute.xlu0 %1070
      %1072 = vrot.lane.b32.xlu0 %v769, 64
      %v1073 = vpop.permute.xlu0 %1072
      %1074 = vrot.lane.b32.xlu0 %v770, 64
      %v1075 = vpop.permute.xlu0 %1074
      %1076 = vrot.lane.b32.xlu0 %v771, 64
      %v1077 = vpop.permute.xlu0 %1076
      %1078 = vrot.lane.b32.xlu0 %v772, 64
      %v1079 = vpop.permute.xlu0 %1078
      %1080 = vrot.lane.b32.xlu0 %v773, 64
      %v1081 = vpop.permute.xlu0 %1080
      %1082 = vrot.lane.b32.xlu0 %v774, 64
      %v1083 = vpop.permute.xlu0 %1082
      %1084 = vrot.lane.b32.xlu0 %v775, 64
      %v1085 = vpop.permute.xlu0 %1084
      %1086 = vrot.lane.b32.xlu0 %v776, 64
      %v1087 = vpop.permute.xlu0 %1086
      %1088 = vrot.lane.b32.xlu0 %v777, 64
      %v1089 = vpop.permute.xlu0 %1088
      %1090 = vrot.lane.b32.xlu0 %v778, 64
      %v1091 = vpop.permute.xlu0 %1090
      %1092 = vrot.lane.b32.xlu0 %v779, 64
      %v1093 = vpop.permute.xlu0 %1092
      %1094 = vrot.lane.b32.xlu0 %v780, 64
      %v1095 = vpop.permute.xlu0 %1094
      %1096 = vrot.lane.b32.xlu0 %v781, 64
      %v1097 = vpop.permute.xlu0 %1096
      %1098 = vrot.lane.b32.xlu0 %v782, 64
      %v1099 = vpop.permute.xlu0 %1098
      %1100 = vrot.lane.b32.xlu0 %v783, 64
      %v1101 = vpop.permute.xlu0 %1100
      %1102 = vrot.lane.b32.xlu0 %v784, 64
      %v1103 = vpop.permute.xlu0 %1102
      %1104 = vrot.lane.b32.xlu0 %v785, 64
      %v1105 = vpop.permute.xlu0 %1104
      %1106 = vrot.lane.b32.xlu0 %v786, 64
      %v1107 = vpop.permute.xlu0 %1106
      %1172 = vrot.lane.b32.xlu0 %v819, 64
      %v1173 = vpop.permute.xlu0 %1172
      %1174 = vrot.lane.b32.xlu0 %v820, 64
      %v1175 = vpop.permute.xlu0 %1174
      %1176 = vrot.lane.b32.xlu0 %v821, 64
      %v1177 = vpop.permute.xlu0 %1176
      %1178 = vrot.lane.b32.xlu0 %v822, 64
      %v1179 = vpop.permute.xlu0 %1178
      %1180 = vrot.lane.b32.xlu0 %v823, 64
      %v1181 = vpop.permute.xlu0 %1180
      %1182 = vrot.lane.b32.xlu0 %v824, 64
      %v1183 = vpop.permute.xlu0 %1182
      %1184 = vrot.lane.b32.xlu0 %v825, 64
      %v1185 = vpop.permute.xlu0 %1184
      %1186 = vrot.lane.b32.xlu0 %v826, 64
      %v1187 = vpop.permute.xlu0 %1186
      %1188 = vrot.lane.b32.xlu0 %v827, 64
      %v1189 = vpop.permute.xlu0 %1188
      %1190 = vrot.lane.b32.xlu0 %v828, 64
      %v1191 = vpop.permute.xlu0 %1190
      %1192 = vrot.lane.b32.xlu0 %v829, 64
      %v1193 = vpop.permute.xlu0 %1192
      %1194 = vrot.lane.b32.xlu0 %v830, 64
      %v1195 = vpop.permute.xlu0 %1194
      %1196 = vrot.lane.b32.xlu0 %v831, 64
      %v1197 = vpop.permute.xlu0 %1196
      %1198 = vrot.lane.b32.xlu0 %v832, 64
      %v1199 = vpop.permute.xlu0 %1198
      %1200 = vrot.lane.b32.xlu0 %v833, 64
      %v1201 = vpop.permute.xlu0 %1200
      %1202 = vrot.lane.b32.xlu0 %v834, 64
      %v1203 = vpop.permute.xlu0 %1202
      %1204 = vrot.lane.b32.xlu0 %v835, 64
      %v1205 = vpop.permute.xlu0 %1204
      %1206 = vrot.lane.b32.xlu0 %v836, 64
      %v1207 = vpop.permute.xlu0 %1206
      %1208 = vrot.lane.b32.xlu0 %v837, 64
      %v1209 = vpop.permute.xlu0 %1208
      %1210 = vrot.lane.b32.xlu0 %v838, 64
      %v1211 = vpop.permute.xlu0 %1210
      %1212 = vrot.lane.b32.xlu0 %v839, 64
      %v1213 = vpop.permute.xlu0 %1212
      %1214 = vrot.lane.b32.xlu0 %v840, 64
      %v1215 = vpop.permute.xlu0 %1214
      %1216 = vrot.lane.b32.xlu0 %v841, 64
      %v1217 = vpop.permute.xlu0 %1216
      %1218 = vrot.lane.b32.xlu0 %v842, 64
      %v1219 = vpop.permute.xlu0 %1218
      %1220 = vrot.lane.b32.xlu0 %v843, 64
      %v1221 = vpop.permute.xlu0 %1220
      %1222 = vrot.lane.b32.xlu0 %v844, 64
      %v1223 = vpop.permute.xlu0 %1222
      %1224 = vrot.lane.b32.xlu0 %v845, 64
      %v1225 = vpop.permute.xlu0 %1224
      %1226 = vrot.lane.b32.xlu0 %v846, 64
      %v1227 = vpop.permute.xlu0 %1226
      %1228 = vrot.lane.b32.xlu0 %v847, 64
      %v1229 = vpop.permute.xlu0 %1228
      %1230 = vrot.lane.b32.xlu0 %v848, 64
      %v1231 = vpop.permute.xlu0 %1230
      %1232 = vrot.lane.b32.xlu0 %v849, 64
      %v1233 = vpop.permute.xlu0 %1232
      %1234 = vrot.lane.b32.xlu0 %v850, 64
      %v1235 = vpop.permute.xlu0 %1234
      %1300 = vrot.lane.b32.xlu0 %v883, 64
      %v1301 = vpop.permute.xlu0 %1300
      %1302 = vrot.lane.b32.xlu0 %v884, 64
      %v1303 = vpop.permute.xlu0 %1302
      %1304 = vrot.lane.b32.xlu0 %v885, 64
      %v1305 = vpop.permute.xlu0 %1304
      %1306 = vrot.lane.b32.xlu0 %v886, 64
      %v1307 = vpop.permute.xlu0 %1306
      %1308 = vrot.lane.b32.xlu0 %v887, 64
      %v1309 = vpop.permute.xlu0 %1308
      %1310 = vrot.lane.b32.xlu0 %v888, 64
      %v1311 = vpop.permute.xlu0 %1310
      %1312 = vrot.lane.b32.xlu0 %v889, 64
      %v1313 = vpop.permute.xlu0 %1312
      %1314 = vrot.lane.b32.xlu0 %v890, 64
      %v1315 = vpop.permute.xlu0 %1314
      %1316 = vrot.lane.b32.xlu0 %v891, 64
      %v1317 = vpop.permute.xlu0 %1316
      %1318 = vrot.lane.b32.xlu0 %v892, 64
      %v1319 = vpop.permute.xlu0 %1318
      %1320 = vrot.lane.b32.xlu0 %v893, 64
      %v1321 = vpop.permute.xlu0 %1320
      %1322 = vrot.lane.b32.xlu0 %v894, 64
      %v1323 = vpop.permute.xlu0 %1322
      %1324 = vrot.lane.b32.xlu0 %v895, 64
      %v1325 = vpop.permute.xlu0 %1324
      %1326 = vrot.lane.b32.xlu0 %v896, 64
      %v1327 = vpop.permute.xlu0 %1326
      %1328 = vrot.lane.b32.xlu0 %v897, 64
      %v1329 = vpop.permute.xlu0 %1328
      %1330 = vrot.lane.b32.xlu0 %v898, 64
      %v1331 = vpop.permute.xlu0 %1330
      %1332 = vrot.lane.b32.xlu0 %v899, 64
      %v1333 = vpop.permute.xlu0 %1332
      %1334 = vrot.lane.b32.xlu0 %v900, 64
      %v1335 = vpop.permute.xlu0 %1334
      %1336 = vrot.lane.b32.xlu0 %v901, 64
      %v1337 = vpop.permute.xlu0 %1336
      %1338 = vrot.lane.b32.xlu0 %v902, 64
      %v1339 = vpop.permute.xlu0 %1338
      %1340 = vrot.lane.b32.xlu0 %v903, 64
      %v1341 = vpop.permute.xlu0 %1340
      %1342 = vrot.lane.b32.xlu0 %v904, 64
      %v1343 = vpop.permute.xlu0 %1342
      %1344 = vrot.lane.b32.xlu0 %v905, 64
      %v1345 = vpop.permute.xlu0 %1344
      %1346 = vrot.lane.b32.xlu0 %v906, 64
      %v1347 = vpop.permute.xlu0 %1346
      %1348 = vrot.lane.b32.xlu0 %v907, 64
      %v1349 = vpop.permute.xlu0 %1348
      %1350 = vrot.lane.b32.xlu0 %v908, 64
      %v1351 = vpop.permute.xlu0 %1350
      %1352 = vrot.lane.b32.xlu0 %v909, 64
      %v1353 = vpop.permute.xlu0 %1352
      %1354 = vrot.lane.b32.xlu0 %v910, 64
      %v1355 = vpop.permute.xlu0 %1354
      %1356 = vrot.lane.b32.xlu0 %v911, 64
      %v1357 = vpop.permute.xlu0 %1356
      %1358 = vrot.lane.b32.xlu0 %v912, 64
      %v1359 = vpop.permute.xlu0 %1358
      %1360 = vrot.lane.b32.xlu0 %v913, 64
      %v1361 = vpop.permute.xlu0 %1360
      %1362 = vrot.lane.b32.xlu0 %v914, 64
      %v1363 = vpop.permute.xlu0 %1362
      %1428 = vrot.lane.b32.xlu0 %v948, 64
      %v1429 = vpop.permute.xlu0 %1428
      %1430 = vrot.lane.b32.xlu0 %v949, 64
      %v1431 = vpop.permute.xlu0 %1430
      %1432 = vrot.lane.b32.xlu0 %v950, 64
      %v1433 = vpop.permute.xlu0 %1432
      %1434 = vrot.lane.b32.xlu0 %v951, 64
      %v1435 = vpop.permute.xlu0 %1434
      %1436 = vrot.lane.b32.xlu0 %v952, 64
      %v1437 = vpop.permute.xlu0 %1436
      %1438 = vrot.lane.b32.xlu0 %v953, 64
      %v1439 = vpop.permute.xlu0 %1438
      %1440 = vrot.lane.b32.xlu0 %v954, 64
      %v1441 = vpop.permute.xlu0 %1440
      %1442 = vrot.lane.b32.xlu0 %v955, 64
      %v1443 = vpop.permute.xlu0 %1442
      %1444 = vrot.lane.b32.xlu0 %v956, 64
      %v1445 = vpop.permute.xlu0 %1444
      %1446 = vrot.lane.b32.xlu0 %v957, 64
      %v1447 = vpop.permute.xlu0 %1446
      %1448 = vrot.lane.b32.xlu0 %v958, 64
      %v1449 = vpop.permute.xlu0 %1448
      %1450 = vrot.lane.b32.xlu0 %v959, 64
      %v1451 = vpop.permute.xlu0 %1450
      %1452 = vrot.lane.b32.xlu0 %v960, 64
      %v1453 = vpop.permute.xlu0 %1452
      %1454 = vrot.lane.b32.xlu0 %v961, 64
      %v1455 = vpop.permute.xlu0 %1454
      %1456 = vrot.lane.b32.xlu0 %v962, 64
      %v1457 = vpop.permute.xlu0 %1456
      %1458 = vrot.lane.b32.xlu0 %v963, 64
      %v1459 = vpop.permute.xlu0 %1458
      %1460 = vrot.lane.b32.xlu0 %v964, 64
      %v1461 = vpop.permute.xlu0 %1460
      %1462 = vrot.lane.b32.xlu0 %v965, 64
      %v1463 = vpop.permute.xlu0 %1462
      %1464 = vrot.lane.b32.xlu0 %v966, 64
      %v1465 = vpop.permute.xlu0 %1464
      %1466 = vrot.lane.b32.xlu0 %v967, 64
      %v1467 = vpop.permute.xlu0 %1466
      %1468 = vrot.lane.b32.xlu0 %v968, 64
      %v1469 = vpop.permute.xlu0 %1468
      %1470 = vrot.lane.b32.xlu0 %v969, 64
      %v1471 = vpop.permute.xlu0 %1470
      %1472 = vrot.lane.b32.xlu0 %v970, 64
      %v1473 = vpop.permute.xlu0 %1472
      %1474 = vrot.lane.b32.xlu0 %v971, 64
      %v1475 = vpop.permute.xlu0 %1474
      %1476 = vrot.lane.b32.xlu0 %v972, 64
      %v1477 = vpop.permute.xlu0 %1476
      %1478 = vrot.lane.b32.xlu0 %v973, 64
      %v1479 = vpop.permute.xlu0 %1478
      %1480 = vrot.lane.b32.xlu0 %v974, 64
      %v1481 = vpop.permute.xlu0 %1480
      %1482 = vrot.lane.b32.xlu0 %v975, 64
      %v1483 = vpop.permute.xlu0 %1482
      %1484 = vrot.lane.b32.xlu0 %v976, 64
      %v1485 = vpop.permute.xlu0 %1484
      %1486 = vrot.lane.b32.xlu0 %v977, 64
      %v1487 = vpop.permute.xlu0 %1486
      %1488 = vrot.lane.b32.xlu0 %v978, 64
      %v1489 = vpop.permute.xlu0 %1488
      %1490 = vrot.lane.b32.xlu0 %v979, 64
      %v1491 = vpop.permute.xlu0 %1490
      %v1524 = vsel %vm288, %v723, %v1045
      %v1525 = vsel %vm288, %v724, %v1047
      %v1526 = vsel %vm288, %v725, %v1049
      %v1527 = vsel %vm288, %v726, %v1051
      %v1528 = vsel %vm288, %v727, %v1053
      %v1529 = vsel %vm288, %v728, %v1055
      %v1530 = vsel %vm288, %v729, %v1057
      %v1531 = vsel %vm288, %v730, %v1059
      %v1532 = vsel %vm288, %v731, %v1061
      %v1533 = vsel %vm288, %v732, %v1063
      %v1534 = vsel %vm288, %v733, %v1065
      %v1535 = vsel %vm288, %v734, %v1067
      %v1536 = vsel %vm288, %v735, %v1069
      %v1537 = vsel %vm288, %v736, %v1071
      %v1538 = vsel %vm288, %v737, %v1073
      %v1539 = vsel %vm288, %v738, %v1075
      %v1540 = vsel %vm288, %v739, %v1077
      %v1541 = vsel %vm288, %v740, %v1079
      %v1542 = vsel %vm288, %v741, %v1081
      %v1543 = vsel %vm288, %v742, %v1083
      %v1544 = vsel %vm288, %v743, %v1085
      %v1545 = vsel %vm288, %v744, %v1087
      %v1546 = vsel %vm288, %v745, %v1089
      %v1547 = vsel %vm288, %v746, %v1091
      %v1548 = vsel %vm288, %v747, %v1093
      %v1549 = vsel %vm288, %v748, %v1095
      %v1550 = vsel %vm288, %v749, %v1097
      %v1551 = vsel %vm288, %v750, %v1099
      %v1552 = vsel %vm288, %v751, %v1101
      %v1553 = vsel %vm288, %v752, %v1103
      %v1554 = vsel %vm288, %v753, %v1105
      %v1555 = vsel %vm288, %v754, %v1107
      %v1556 = vsel %vm288, %v787, %v1173
      %v1557 = vsel %vm288, %v788, %v1175
      %v1558 = vsel %vm288, %v789, %v1177
      %v1559 = vsel %vm288, %v790, %v1179
      %v1560 = vsel %vm288, %v791, %v1181
      %v1561 = vsel %vm288, %v792, %v1183
      %v1562 = vsel %vm288, %v793, %v1185
      %v1563 = vsel %vm288, %v794, %v1187
      %v1564 = vsel %vm288, %v795, %v1189
      %v1565 = vsel %vm288, %v796, %v1191
      %v1566 = vsel %vm288, %v797, %v1193
      %v1567 = vsel %vm288, %v798, %v1195
      %v1568 = vsel %vm288, %v799, %v1197
      %v1569 = vsel %vm288, %v800, %v1199
      %v1570 = vsel %vm288, %v801, %v1201
      %v1571 = vsel %vm288, %v802, %v1203
      %v1572 = vsel %vm288, %v803, %v1205
      %v1573 = vsel %vm288, %v804, %v1207
      %v1574 = vsel %vm288, %v805, %v1209
      %v1575 = vsel %vm288, %v806, %v1211
      %v1576 = vsel %vm288, %v807, %v1213
      %v1577 = vsel %vm288, %v808, %v1215
      %v1578 = vsel %vm288, %v809, %v1217
      %v1579 = vsel %vm288, %v810, %v1219
      %v1580 = vsel %vm288, %v811, %v1221
      %v1581 = vsel %vm288, %v812, %v1223
      %v1582 = vsel %vm288, %v813, %v1225
      %v1583 = vsel %vm288, %v814, %v1227
      %v1584 = vsel %vm288, %v815, %v1229
      %v1585 = vsel %vm288, %v816, %v1231
      %v1586 = vsel %vm288, %v817, %v1233
      %v1587 = vsel %vm288, %v818, %v1235
      %v1588 = vsel %vm288, %v851, %v1301
      %v1589 = vsel %vm288, %v852, %v1303
      %v1590 = vsel %vm288, %v853, %v1305
      %v1591 = vsel %vm288, %v854, %v1307
      %v1592 = vsel %vm288, %v855, %v1309
      %v1593 = vsel %vm288, %v856, %v1311
      %v1594 = vsel %vm288, %v857, %v1313
      %v1595 = vsel %vm288, %v858, %v1315
      %v1596 = vsel %vm288, %v859, %v1317
      %v1597 = vsel %vm288, %v860, %v1319
      %v1598 = vsel %vm288, %v861, %v1321
      %v1599 = vsel %vm288, %v862, %v1323
      %v1600 = vsel %vm288, %v863, %v1325
      %v1601 = vsel %vm288, %v864, %v1327
      %v1602 = vsel %vm288, %v865, %v1329
      %v1603 = vsel %vm288, %v866, %v1331
      %v1604 = vsel %vm288, %v867, %v1333
      %v1605 = vsel %vm288, %v868, %v1335
      %v1606 = vsel %vm288, %v869, %v1337
      %v1607 = vsel %vm288, %v870, %v1339
      %v1608 = vsel %vm288, %v871, %v1341
      %v1609 = vsel %vm288, %v872, %v1343
      %v1610 = vsel %vm288, %v873, %v1345
      %v1611 = vsel %vm288, %v874, %v1347
      %v1612 = vsel %vm288, %v875, %v1349
      %v1613 = vsel %vm288, %v876, %v1351
      %v1614 = vsel %vm288, %v877, %v1353
      %v1615 = vsel %vm288, %v878, %v1355
      %v1616 = vsel %vm288, %v879, %v1357
      %v1617 = vsel %vm288, %v880, %v1359
      %v1618 = vsel %vm288, %v881, %v1361
      %v1619 = vsel %vm288, %v882, %v1363
      %v1620 = vsel %vm288, %v916, %v1429
      %v1621 = vsel %vm288, %v917, %v1431
      %v1622 = vsel %vm288, %v918, %v1433
      %v1623 = vsel %vm288, %v919, %v1435
      %v1624 = vsel %vm288, %v920, %v1437
      %v1625 = vsel %vm288, %v921, %v1439
      %v1626 = vsel %vm288, %v922, %v1441
      %v1627 = vsel %vm288, %v923, %v1443
      %v1628 = vsel %vm288, %v924, %v1445
      %v1629 = vsel %vm288, %v925, %v1447
      %v1630 = vsel %vm288, %v926, %v1449
      %v1631 = vsel %vm288, %v927, %v1451
      %v1632 = vsel %vm288, %v928, %v1453
      %v1633 = vsel %vm288, %v929, %v1455
      %v1634 = vsel %vm288, %v930, %v1457
      %v1635 = vsel %vm288, %v931, %v1459
      %v1636 = vsel %vm288, %v932, %v1461
      %v1637 = vsel %vm288, %v933, %v1463
      %v1638 = vsel %vm288, %v934, %v1465
      %v1639 = vsel %vm288, %v935, %v1467
      %v1640 = vsel %vm288, %v936, %v1469
      %v1641 = vsel %vm288, %v937, %v1471
      %v1642 = vsel %vm288, %v938, %v1473
      %v1643 = vsel %vm288, %v939, %v1475
      %v1644 = vsel %vm288, %v940, %v1477
      %v1645 = vsel %vm288, %v941, %v1479
      %v1646 = vsel %vm288, %v942, %v1481
      %v1647 = vsel %vm288, %v943, %v1483
      %v1648 = vsel %vm288, %v944, %v1485
      %v1649 = vsel %vm288, %v945, %v1487
      %v1650 = vsel %vm288, %v946, %v1489
      %v1651 = vsel %vm288, %v947, %v1491
      %v1652 = vpack.c.bf16 %v1525, %v1524
      %v1653 = vpack.c.bf16 %v1557, %v1556
      %v1654 = vpack.c.bf16 %v1589, %v1588
      %v1655 = vpack.c.bf16 %v1621, %v1620
      %v1656 = vpack.c.bf16 %v981, %v980
      %v1657 = vpack.c.bf16 %v1527, %v1526
      %v1658 = vpack.c.bf16 %v1559, %v1558
      %v1659 = vpack.c.bf16 %v1591, %v1590
      %v1660 = vpack.c.bf16 %v1623, %v1622
      %v1661 = vpack.c.bf16 %v983, %v982
      %v1662 = vpack.c.bf16 %v1529, %v1528
      %v1663 = vpack.c.bf16 %v1561, %v1560
      %v1664 = vpack.c.bf16 %v1593, %v1592
      %v1665 = vpack.c.bf16 %v1625, %v1624
      %v1666 = vpack.c.bf16 %v985, %v984
      %v1667 = vpack.c.bf16 %v1531, %v1530
      %v1668 = vpack.c.bf16 %v1563, %v1562
      %v1669 = vpack.c.bf16 %v1595, %v1594
      %v1670 = vpack.c.bf16 %v1627, %v1626
      %v1671 = vpack.c.bf16 %v987, %v986
      %v1672 = vpack.c.bf16 %v1533, %v1532
      %v1673 = vpack.c.bf16 %v1565, %v1564
      %v1674 = vpack.c.bf16 %v1597, %v1596
      %v1675 = vpack.c.bf16 %v1629, %v1628
      %v1676 = vpack.c.bf16 %v989, %v988
      %v1677 = vpack.c.bf16 %v1535, %v1534
      %v1678 = vpack.c.bf16 %v1567, %v1566
      %v1679 = vpack.c.bf16 %v1599, %v1598
      %v1680 = vpack.c.bf16 %v1631, %v1630
      %v1681 = vpack.c.bf16 %v991, %v990
      %v1682 = vpack.c.bf16 %v1537, %v1536
      %v1683 = vpack.c.bf16 %v1569, %v1568
      %v1684 = vpack.c.bf16 %v1601, %v1600
      %v1685 = vpack.c.bf16 %v1633, %v1632
      %v1686 = vpack.c.bf16 %v993, %v992
      %v1687 = vpack.c.bf16 %v1539, %v1538
      %v1688 = vpack.c.bf16 %v1571, %v1570
      %v1689 = vpack.c.bf16 %v1603, %v1602
      %v1690 = vpack.c.bf16 %v1635, %v1634
      %v1691 = vpack.c.bf16 %v995, %v994
      %v1692 = vpack.c.bf16 %v1541, %v1540
      %v1693 = vpack.c.bf16 %v1573, %v1572
      %v1694 = vpack.c.bf16 %v1605, %v1604
      %v1695 = vpack.c.bf16 %v1637, %v1636
      %v1696 = vpack.c.bf16 %v997, %v996
      %v1697 = vpack.c.bf16 %v1543, %v1542
      %v1698 = vpack.c.bf16 %v1575, %v1574
      %v1699 = vpack.c.bf16 %v1607, %v1606
      %v1700 = vpack.c.bf16 %v1639, %v1638
      %v1701 = vpack.c.bf16 %v999, %v998
      %v1702 = vpack.c.bf16 %v1545, %v1544
      %v1703 = vpack.c.bf16 %v1577, %v1576
      %v1704 = vpack.c.bf16 %v1609, %v1608
      %v1705 = vpack.c.bf16 %v1641, %v1640
      %v1706 = vpack.c.bf16 %v1001, %v1000
      %v1707 = vpack.c.bf16 %v1547, %v1546
      %v1708 = vpack.c.bf16 %v1579, %v1578
      %v1709 = vpack.c.bf16 %v1611, %v1610
      %v1710 = vpack.c.bf16 %v1643, %v1642
      %v1711 = vpack.c.bf16 %v1003, %v1002
      %v1712 = vpack.c.bf16 %v1549, %v1548
      %v1713 = vpack.c.bf16 %v1581, %v1580
      %v1714 = vpack.c.bf16 %v1613, %v1612
      %v1715 = vpack.c.bf16 %v1645, %v1644
      %v1716 = vpack.c.bf16 %v1005, %v1004
      %v1717 = vpack.c.bf16 %v1551, %v1550
      %v1718 = vpack.c.bf16 %v1583, %v1582
      %v1719 = vpack.c.bf16 %v1615, %v1614
      %v1720 = vpack.c.bf16 %v1647, %v1646
      %v1721 = vpack.c.bf16 %v1007, %v1006
      %v1722 = vpack.c.bf16 %v1553, %v1552
      %v1723 = vpack.c.bf16 %v1585, %v1584
      %v1724 = vpack.c.bf16 %v1617, %v1616
      %v1725 = vpack.c.bf16 %v1649, %v1648
      %v1726 = vpack.c.bf16 %v1009, %v1008
      %v1727 = vpack.c.bf16 %v1555, %v1554
      %v1728 = vpack.c.bf16 %v1587, %v1586
      %v1729 = vpack.c.bf16 %v1619, %v1618
      %v1730 = vpack.c.bf16 %v1651, %v1650
      %v1731 = vpack.c.bf16 %v1011, %v1010
      %v1732 = vld [vmem:[%s3] sm:$0xf]
      %v1733 = vld [vmem:[%s3 + $0x4] sm:$0xf]
      %v1734 = vld [vmem:[%s3 + $0x8] sm:$0xf]
      %v1735 = vld [vmem:[%s3 + $0xc] sm:$0xf]
      %v1736 = vld [vmem:[%s3 + $0x10] sm:$0xf]
      %v1737 = vld [vmem:[%s3 + $0x14] sm:$0xf]
      %v1738 = vld [vmem:[%s3 + $0x18] sm:$0xf]
      %v1739 = vld [vmem:[%s3 + $0x1c] sm:$0xf]
      %v1740 = vld [vmem:[%s3 + $0x20] sm:$0xf]
      %v1741 = vld [vmem:[%s3 + $0x24] sm:$0xf]
      %v1742 = vld [vmem:[%s3 + $0x28] sm:$0xf]
      %v1743 = vld [vmem:[%s3 + $0x2c] sm:$0xf]
      %v1744 = vld [vmem:[%s3 + $0x30] sm:$0xf]
      %v1745 = vld [vmem:[%s3 + $0x34] sm:$0xf]
      %v1746 = vld [vmem:[%s3 + $0x38] sm:$0xf]
      %v1747 = vld [vmem:[%s3 + $0x3c] sm:$0xf]
      %v1748 = vld [vmem:[%s3 + $0x40] sm:$0xf]
      %v1749 = vld [vmem:[%s3 + $0x44] sm:$0xf]
      %v1750 = vld [vmem:[%s3 + $0x48] sm:$0xf]
      %v1751 = vld [vmem:[%s3 + $0x4c] sm:$0xf]
      %v1752 = vld [vmem:[%s3 + $0x50] sm:$0xf]
      %v1753 = vld [vmem:[%s3 + $0x54] sm:$0xf]
      %v1754 = vld [vmem:[%s3 + $0x58] sm:$0xf]
      %v1755 = vld [vmem:[%s3 + $0x5c] sm:$0xf]
      %v1756 = vld [vmem:[%s3 + $0x60] sm:$0xf]
      %v1757 = vld [vmem:[%s3 + $0x64] sm:$0xf]
      %v1758 = vld [vmem:[%s3 + $0x68] sm:$0xf]
      %v1759 = vld [vmem:[%s3 + $0x6c] sm:$0xf]
      %v1760 = vld [vmem:[%s3 + $0x70] sm:$0xf]
      %v1761 = vld [vmem:[%s3 + $0x74] sm:$0xf]
      %v1762 = vld [vmem:[%s3 + $0x78] sm:$0xf]
      %v1763 = vld [vmem:[%s3 + $0x7c] sm:$0xf]
      %v1764 = vld [vmem:[%s3 + $0x80] sm:$0xf]
      %v1765 = vld [vmem:[%s3 + $0x84] sm:$0xf]
      %v1766 = vld [vmem:[%s3 + $0x88] sm:$0xf]
      %v1767 = vld [vmem:[%s3 + $0x8c] sm:$0xf]
      %v1768 = vld [vmem:[%s3 + $0x90] sm:$0xf]
      %v1769 = vld [vmem:[%s3 + $0x94] sm:$0xf]
      %v1770 = vld [vmem:[%s3 + $0x98] sm:$0xf]
      %v1771 = vld [vmem:[%s3 + $0x9c] sm:$0xf]
      %v1772 = vld [vmem:[%s3 + $0xa0] sm:$0xf]
      %v1773 = vld [vmem:[%s3 + $0xa4] sm:$0xf]
      %v1774 = vld [vmem:[%s3 + $0xa8] sm:$0xf]
      %v1775 = vld [vmem:[%s3 + $0xac] sm:$0xf]
      %v1776 = vld [vmem:[%s3 + $0xb0] sm:$0xf]
      %v1777 = vld [vmem:[%s3 + $0xb4] sm:$0xf]
      %v1778 = vld [vmem:[%s3 + $0xb8] sm:$0xf]
      %v1779 = vld [vmem:[%s3 + $0xbc] sm:$0xf]
      %v1780 = vld [vmem:[%s3 + $0xc0] sm:$0xf]
      %v1781 = vld [vmem:[%s3 + $0xc4] sm:$0xf]
      %v1782 = vld [vmem:[%s3 + $0xc8] sm:$0xf]
      %v1783 = vld [vmem:[%s3 + $0xcc] sm:$0xf]
      %v1784 = vld [vmem:[%s3 + $0xd0] sm:$0xf]
      %v1785 = vld [vmem:[%s3 + $0xd4] sm:$0xf]
      %v1786 = vld [vmem:[%s3 + $0xd8] sm:$0xf]
      %v1787 = vld [vmem:[%s3 + $0xdc] sm:$0xf]
      %v1788 = vld [vmem:[%s3 + $0xe0] sm:$0xf]
      %v1789 = vld [vmem:[%s3 + $0xe4] sm:$0xf]
      %v1790 = vld [vmem:[%s3 + $0xe8] sm:$0xf]
      %v1791 = vld [vmem:[%s3 + $0xec] sm:$0xf]
      %v1792 = vld [vmem:[%s3 + $0xf0] sm:$0xf]
      %v1793 = vld [vmem:[%s3 + $0xf4] sm:$0xf]
      %v1794 = vld [vmem:[%s3 + $0xf8] sm:$0xf]
      %v1795 = vld [vmem:[%s3 + $0xfc] sm:$0xf]
      %v1796 = vld [vmem:[%s3 + $0x100] sm:$0xf]
      %v1797 = vld [vmem:[%s3 + $0x104] sm:$0xf]
      %v1798 = vld [vmem:[%s3 + $0x108] sm:$0xf]
      %v1799 = vld [vmem:[%s3 + $0x10c] sm:$0xf]
      %v1800 = vld [vmem:[%s3 + $0x110] sm:$0xf]
      %v1801 = vld [vmem:[%s3 + $0x114] sm:$0xf]
      %v1802 = vld [vmem:[%s3 + $0x118] sm:$0xf]
      %v1803 = vld [vmem:[%s3 + $0x11c] sm:$0xf]
      %v1804 = vld [vmem:[%s4] sm:$0x1]
      %v1806 = vperm.slane %v1804, 0
      %v1880 = vunpack.c.l.b16 %v1732
      %v1881 = vunpack.c.l.b16 %v1733
      %v1882 = vunpack.c.l.b16 %v1734
      %v1883 = vunpack.c.l.b16 %v1735
      %v1884 = vunpack.c.l.b16 %v1736
      %v1885 = vunpack.c.l.b16 %v1737
      %v1886 = vunpack.c.l.b16 %v1738
      %v1887 = vunpack.c.l.b16 %v1739
      %v1888 = vunpack.c.l.b16 %v1740
      %v1889 = vunpack.c.l.b16 %v1741
      %v1890 = vunpack.c.l.b16 %v1742
      %v1891 = vunpack.c.l.b16 %v1743
      %v1892 = vunpack.c.l.b16 %v1744
      %v1893 = vunpack.c.l.b16 %v1745
      %v1894 = vunpack.c.l.b16 %v1746
      %v1895 = vunpack.c.l.b16 %v1747
      %v1896 = vunpack.c.l.b16 %v1748
      %v1897 = vunpack.c.l.b16 %v1749
      %v1898 = vunpack.c.l.b16 %v1750
      %v1899 = vunpack.c.l.b16 %v1751
      %v1900 = vunpack.c.l.b16 %v1752
      %v1901 = vunpack.c.l.b16 %v1753
      %v1902 = vunpack.c.l.b16 %v1754
      %v1903 = vunpack.c.l.b16 %v1755
      %v1904 = vunpack.c.l.b16 %v1756
      %v1905 = vunpack.c.l.b16 %v1757
      %v1906 = vunpack.c.l.b16 %v1758
      %v1907 = vunpack.c.l.b16 %v1759
      %v1908 = vunpack.c.l.b16 %v1760
      %v1909 = vunpack.c.l.b16 %v1761
      %v1910 = vunpack.c.l.b16 %v1762
      %v1911 = vunpack.c.l.b16 %v1763
      %v1912 = vunpack.c.l.b16 %v1764
      %v1913 = vunpack.c.l.b16 %v1765
      %v1914 = vunpack.c.l.b16 %v1766
      %v1915 = vunpack.c.l.b16 %v1767
      %v1916 = vunpack.c.l.b16 %v1768
      %v1917 = vunpack.c.l.b16 %v1769
      %v1918 = vunpack.c.l.b16 %v1770
      %v1919 = vunpack.c.l.b16 %v1771
      %v1920 = vunpack.c.l.b16 %v1772
      %v1921 = vunpack.c.l.b16 %v1773
      %v1922 = vunpack.c.l.b16 %v1774
      %v1923 = vunpack.c.l.b16 %v1775
      %v1924 = vunpack.c.l.b16 %v1776
      %v1925 = vunpack.c.l.b16 %v1777
      %v1926 = vunpack.c.l.b16 %v1778
      %v1927 = vunpack.c.l.b16 %v1779
      %v1928 = vunpack.c.l.b16 %v1780
      %v1929 = vunpack.c.l.b16 %v1781
      %v1930 = vunpack.c.l.b16 %v1782
      %v1931 = vunpack.c.l.b16 %v1783
      %v1932 = vunpack.c.l.b16 %v1784
      %v1933 = vunpack.c.l.b16 %v1785
      %v1934 = vunpack.c.l.b16 %v1786
      %v1935 = vunpack.c.l.b16 %v1787
      %v1936 = vunpack.c.l.b16 %v1788
      %v1937 = vunpack.c.l.b16 %v1789
      %v1938 = vunpack.c.l.b16 %v1790
      %v1939 = vunpack.c.l.b16 %v1791
      %v1940 = vunpack.c.l.b16 %v1792
      %v1941 = vunpack.c.l.b16 %v1793
      %v1942 = vunpack.c.l.b16 %v1794
      %v1943 = vunpack.c.l.b16 %v1795
      %v1944 = vunpack.c.l.b16 %v1796
      %v1945 = vunpack.c.l.b16 %v1797
      %v1946 = vunpack.c.l.b16 %v1798
      %v1947 = vunpack.c.l.b16 %v1799
      %v1948 = vunpack.c.l.b16 %v1800
      %v1949 = vunpack.c.l.b16 %v1801
      %v1950 = vunpack.c.l.b16 %v1802
      %v1951 = vunpack.c.l.b16 %v1803
      %v1952 = vpack.c.b16 %v1881, %v1880
      %v1953 = vpack.c.b16 %v1883, %v1882
      %v1954 = vpack.c.b16 %v1885, %v1884
      %v1955 = vpack.c.b16 %v1887, %v1886
      %v1956 = vpack.c.b16 %v1889, %v1888
      %v1957 = vpack.c.b16 %v1891, %v1890
      %v1958 = vpack.c.b16 %v1893, %v1892
      %v1959 = vpack.c.b16 %v1895, %v1894
      %v1960 = vpack.c.b16 %v1897, %v1896
      %v1961 = vpack.c.b16 %v1899, %v1898
      %v1962 = vpack.c.b16 %v1901, %v1900
      %v1963 = vpack.c.b16 %v1903, %v1902
      %v1964 = vpack.c.b16 %v1905, %v1904
      %v1965 = vpack.c.b16 %v1907, %v1906
      %v1966 = vpack.c.b16 %v1909, %v1908
      %v1967 = vpack.c.b16 %v1911, %v1910
      %v1968 = vpack.c.b16 %v1913, %v1912
      %v1969 = vpack.c.b16 %v1915, %v1914
      %v1970 = vpack.c.b16 %v1917, %v1916
      %v1971 = vpack.c.b16 %v1919, %v1918
      %v1972 = vpack.c.b16 %v1921, %v1920
      %v1973 = vpack.c.b16 %v1923, %v1922
      %v1974 = vpack.c.b16 %v1925, %v1924
      %v1975 = vpack.c.b16 %v1927, %v1926
      %v1976 = vpack.c.b16 %v1929, %v1928
      %v1977 = vpack.c.b16 %v1931, %v1930
      %v1978 = vpack.c.b16 %v1933, %v1932
      %v1979 = vpack.c.b16 %v1935, %v1934
      %v1980 = vpack.c.b16 %v1937, %v1936
      %v1981 = vpack.c.b16 %v1939, %v1938
      %v1982 = vpack.c.b16 %v1941, %v1940
      %v1983 = vpack.c.b16 %v1943, %v1942
      %v1984 = vpack.c.b16 %v1945, %v1944
      %v1985 = vpack.c.b16 %v1947, %v1946
      %v1986 = vpack.c.b16 %v1949, %v1948
      %v1987 = vpack.c.b16 %v1951, %v1950
      %v2025 = vsel %vm288, %v1656, 0
      %v2028 = vsel %vm288, %v1661, 0
      %v2031 = vsel %vm288, %v1666, 0
      %v2034 = vsel %vm288, %v1671, 0
      %v2037 = vsel %vm288, %v1676, 0
      %v2040 = vsel %vm288, %v1681, 0
      %v2043 = vsel %vm288, %v1686, 0
      %v2046 = vsel %vm288, %v1691, 0
      %v2049 = vsel %vm288, %v1696, 0
      %v2052 = vsel %vm288, %v1701, 0
      %v2055 = vsel %vm288, %v1706, 0
      %v2058 = vsel %vm288, %v1711, 0
      %v2061 = vsel %vm288, %v1716, 0
      %v2064 = vsel %vm288, %v1721, 0
      %v2067 = vsel %vm288, %v1726, 0
      %v2070 = vsel %vm288, %v1731, 0
      %2072 = vmatpush.bf16.msra.mxu0 %v1959
      %2073 = vmatpush.bf16.msra.mxu0 %v1958
      %2074 = vmatpush.bf16.msra.mxu0 %v1957
      %2075 = vmatpush.bf16.msra.mxu0 %v1956
      %2076 = vmatpush.bf16.msra.mxu0 %v1955
      %2077 = vmatpush.bf16.msra.mxu0 %v1954
      %2078 = vmatpush.bf16.msra.mxu0 %v1953
      %2079 = vmatpush.bf16.msra.mxu0 %v1952
      %2080 = vmatmul.bf16.gmra.mxu0 %v1652
      %v2081 = vpop.f32.mrf.mxu0
      %v2082 = vadd.f32 %v1806, %v2081
      %v2083 = vpop.f32.mrf.mxu0
      %v2084 = vadd.f32 %v1806, %v2083
      %2085 = vmatmul.bf16.gmra.mxu0 %v1657
      %v2086 = vpop.f32.mrf.mxu0
      %v2087 = vadd.f32 %v1806, %v2086
      %v2088 = vpop.f32.mrf.mxu0
      %v2089 = vadd.f32 %v1806, %v2088
      %2090 = vmatmul.bf16.gmra.mxu0 %v1662
      %v2091 = vpop.f32.mrf.mxu0
      %v2092 = vadd.f32 %v1806, %v2091
      %v2093 = vpop.f32.mrf.mxu0
      %v2094 = vadd.f32 %v1806, %v2093
      %2095 = vmatmul.bf16.gmra.mxu0 %v1667
      %v2096 = vpop.f32.mrf.mxu0
      %v2097 = vadd.f32 %v1806, %v2096
      %v2098 = vpop.f32.mrf.mxu0
      %v2099 = vadd.f32 %v1806, %v2098
      %2100 = vmatmul.bf16.gmra.mxu0 %v1672
      %v2101 = vpop.f32.mrf.mxu0
      %v2102 = vadd.f32 %v1806, %v2101
      %v2103 = vpop.f32.mrf.mxu0
      %v2104 = vadd.f32 %v1806, %v2103
      %2105 = vmatmul.bf16.gmra.mxu0 %v1677
      %v2106 = vpop.f32.mrf.mxu0
      %v2107 = vadd.f32 %v1806, %v2106
      %v2108 = vpop.f32.mrf.mxu0
      %v2109 = vadd.f32 %v1806, %v2108
      %2110 = vmatmul.bf16.gmra.mxu0 %v1682
      %v2111 = vpop.f32.mrf.mxu0
      %v2112 = vadd.f32 %v1806, %v2111
      %v2113 = vpop.f32.mrf.mxu0
      %v2114 = vadd.f32 %v1806, %v2113
      %2115 = vmatmul.bf16.gmra.mxu0 %v1687
      %v2116 = vpop.f32.mrf.mxu0
      %v2117 = vadd.f32 %v1806, %v2116
      %v2118 = vpop.f32.mrf.mxu0
      %v2119 = vadd.f32 %v1806, %v2118
      %2120 = vmatmul.bf16.gmra.mxu0 %v1692
      %v2121 = vpop.f32.mrf.mxu0
      %v2122 = vadd.f32 %v1806, %v2121
      %v2123 = vpop.f32.mrf.mxu0
      %v2124 = vadd.f32 %v1806, %v2123
      %2125 = vmatmul.bf16.gmra.mxu0 %v1697
      %v2126 = vpop.f32.mrf.mxu0
      %v2127 = vadd.f32 %v1806, %v2126
      %v2128 = vpop.f32.mrf.mxu0
      %v2129 = vadd.f32 %v1806, %v2128
      %2130 = vmatmul.bf16.gmra.mxu0 %v1702
      %v2131 = vpop.f32.mrf.mxu0
      %v2132 = vadd.f32 %v1806, %v2131
      %v2133 = vpop.f32.mrf.mxu0
      %v2134 = vadd.f32 %v1806, %v2133
      %2135 = vmatmul.bf16.gmra.mxu0 %v1707
      %v2136 = vpop.f32.mrf.mxu0
      %v2137 = vadd.f32 %v1806, %v2136
      %v2138 = vpop.f32.mrf.mxu0
      %v2139 = vadd.f32 %v1806, %v2138
      %2140 = vmatmul.bf16.gmra.mxu0 %v1712
      %v2141 = vpop.f32.mrf.mxu0
      %v2142 = vadd.f32 %v1806, %v2141
      %v2143 = vpop.f32.mrf.mxu0
      %v2144 = vadd.f32 %v1806, %v2143
      %2145 = vmatmul.bf16.gmra.mxu0 %v1717
      %v2146 = vpop.f32.mrf.mxu0
      %v2147 = vadd.f32 %v1806, %v2146
      %v2148 = vpop.f32.mrf.mxu0
      %v2149 = vadd.f32 %v1806, %v2148
      %2150 = vmatmul.bf16.gmra.mxu0 %v1722
      %v2151 = vpop.f32.mrf.mxu0
      %v2152 = vadd.f32 %v1806, %v2151
      %v2153 = vpop.f32.mrf.mxu0
      %v2154 = vadd.f32 %v1806, %v2153
      %2155 = vmatmul.bf16.gmra.mxu0 %v1727
      %v2156 = vpop.f32.mrf.mxu0
      %v2157 = vadd.f32 %v1806, %v2156
      %v2158 = vpop.f32.mrf.mxu0
      %v2159 = vadd.f32 %v1806, %v2158
      %2160 = vdwg.mxu0
      %2161 = vmatpush.bf16.msra.mxu0 %v1967
      %2162 = vmatpush.bf16.msra.mxu0 %v1966
      %2163 = vmatpush.bf16.msra.mxu0 %v1965
      %2164 = vmatpush.bf16.msra.mxu0 %v1964
      %2165 = vmatpush.bf16.msra.mxu0 %v1963
      %2166 = vmatpush.bf16.msra.mxu0 %v1962
      %2167 = vmatpush.bf16.msra.mxu0 %v1961
      %2168 = vmatpush.bf16.msra.mxu0 %v1960
      %2169 = vmatmul.bf16.gmra.mxu0 %v1653
      %v2170 = vpop.f32.mrf.mxu0
      %v2171 = vadd.f32 %v2082, %v2170
      %v2172 = vpop.f32.mrf.mxu0
      %v2173 = vadd.f32 %v2084, %v2172
      %2174 = vmatmul.bf16.gmra.mxu0 %v1658
      %v2175 = vpop.f32.mrf.mxu0
      %v2176 = vadd.f32 %v2087, %v2175
      %v2177 = vpop.f32.mrf.mxu0
      %v2178 = vadd.f32 %v2089, %v2177
      %2179 = vmatmul.bf16.gmra.mxu0 %v1663
      %v2180 = vpop.f32.mrf.mxu0
      %v2181 = vadd.f32 %v2092, %v2180
      %v2182 = vpop.f32.mrf.mxu0
      %v2183 = vadd.f32 %v2094, %v2182
      %2184 = vmatmul.bf16.gmra.mxu0 %v1668
      %v2185 = vpop.f32.mrf.mxu0
      %v2186 = vadd.f32 %v2097, %v2185
      %v2187 = vpop.f32.mrf.mxu0
      %v2188 = vadd.f32 %v2099, %v2187
      %2189 = vmatmul.bf16.gmra.mxu0 %v1673
      %v2190 = vpop.f32.mrf.mxu0
      %v2191 = vadd.f32 %v2102, %v2190
      %v2192 = vpop.f32.mrf.mxu0
      %v2193 = vadd.f32 %v2104, %v2192
      %2194 = vmatmul.bf16.gmra.mxu0 %v1678
      %v2195 = vpop.f32.mrf.mxu0
      %v2196 = vadd.f32 %v2107, %v2195
      %v2197 = vpop.f32.mrf.mxu0
      %v2198 = vadd.f32 %v2109, %v2197
      %2199 = vmatmul.bf16.gmra.mxu0 %v1683
      %v2200 = vpop.f32.mrf.mxu0
      %v2201 = vadd.f32 %v2112, %v2200
      %v2202 = vpop.f32.mrf.mxu0
      %v2203 = vadd.f32 %v2114, %v2202
      %2204 = vmatmul.bf16.gmra.mxu0 %v1688
      %v2205 = vpop.f32.mrf.mxu0
      %v2206 = vadd.f32 %v2117, %v2205
      %v2207 = vpop.f32.mrf.mxu0
      %v2208 = vadd.f32 %v2119, %v2207
      %2209 = vmatmul.bf16.gmra.mxu0 %v1693
      %v2210 = vpop.f32.mrf.mxu0
      %v2211 = vadd.f32 %v2122, %v2210
      %v2212 = vpop.f32.mrf.mxu0
      %v2213 = vadd.f32 %v2124, %v2212
      %2214 = vmatmul.bf16.gmra.mxu0 %v1698
      %v2215 = vpop.f32.mrf.mxu0
      %v2216 = vadd.f32 %v2127, %v2215
      %v2217 = vpop.f32.mrf.mxu0
      %v2218 = vadd.f32 %v2129, %v2217
      %2219 = vmatmul.bf16.gmra.mxu0 %v1703
      %v2220 = vpop.f32.mrf.mxu0
      %v2221 = vadd.f32 %v2132, %v2220
      %v2222 = vpop.f32.mrf.mxu0
      %v2223 = vadd.f32 %v2134, %v2222
      %2224 = vmatmul.bf16.gmra.mxu0 %v1708
      %v2225 = vpop.f32.mrf.mxu0
      %v2226 = vadd.f32 %v2137, %v2225
      %v2227 = vpop.f32.mrf.mxu0
      %v2228 = vadd.f32 %v2139, %v2227
      %2229 = vmatmul.bf16.gmra.mxu0 %v1713
      %v2230 = vpop.f32.mrf.mxu0
      %v2231 = vadd.f32 %v2142, %v2230
      %v2232 = vpop.f32.mrf.mxu0
      %v2233 = vadd.f32 %v2144, %v2232
      %2234 = vmatmul.bf16.gmra.mxu0 %v1718
      %v2235 = vpop.f32.mrf.mxu0
      %v2236 = vadd.f32 %v2147, %v2235
      %v2237 = vpop.f32.mrf.mxu0
      %v2238 = vadd.f32 %v2149, %v2237
      %2239 = vmatmul.bf16.gmra.mxu0 %v1723
      %v2240 = vpop.f32.mrf.mxu0
      %v2241 = vadd.f32 %v2152, %v2240
      %v2242 = vpop.f32.mrf.mxu0
      %v2243 = vadd.f32 %v2154, %v2242
      %2244 = vmatmul.bf16.gmra.mxu0 %v1728
      %v2245 = vpop.f32.mrf.mxu0
      %v2246 = vadd.f32 %v2157, %v2245
      %v2247 = vpop.f32.mrf.mxu0
      %v2248 = vadd.f32 %v2159, %v2247
      %2249 = vdwg.mxu0
      %2250 = vmatpush.bf16.msra.mxu0 %v1975
      %2251 = vmatpush.bf16.msra.mxu0 %v1974
      %2252 = vmatpush.bf16.msra.mxu0 %v1973
      %2253 = vmatpush.bf16.msra.mxu0 %v1972
      %2254 = vmatpush.bf16.msra.mxu0 %v1971
      %2255 = vmatpush.bf16.msra.mxu0 %v1970
      %2256 = vmatpush.bf16.msra.mxu0 %v1969
      %2257 = vmatpush.bf16.msra.mxu0 %v1968
      %2258 = vmatmul.bf16.gmra.mxu0 %v1654
      %v2259 = vpop.f32.mrf.mxu0
      %v2260 = vadd.f32 %v2171, %v2259
      %v2261 = vpop.f32.mrf.mxu0
      %v2262 = vadd.f32 %v2173, %v2261
      %2263 = vmatmul.bf16.gmra.mxu0 %v1659
      %v2264 = vpop.f32.mrf.mxu0
      %v2265 = vadd.f32 %v2176, %v2264
      %v2266 = vpop.f32.mrf.mxu0
      %v2267 = vadd.f32 %v2178, %v2266
      %2268 = vmatmul.bf16.gmra.mxu0 %v1664
      %v2269 = vpop.f32.mrf.mxu0
      %v2270 = vadd.f32 %v2181, %v2269
      %v2271 = vpop.f32.mrf.mxu0
      %v2272 = vadd.f32 %v2183, %v2271
      %2273 = vmatmul.bf16.gmra.mxu0 %v1669
      %v2274 = vpop.f32.mrf.mxu0
      %v2275 = vadd.f32 %v2186, %v2274
      %v2276 = vpop.f32.mrf.mxu0
      %v2277 = vadd.f32 %v2188, %v2276
      %2278 = vmatmul.bf16.gmra.mxu0 %v1674
      %v2279 = vpop.f32.mrf.mxu0
      %v2280 = vadd.f32 %v2191, %v2279
      %v2281 = vpop.f32.mrf.mxu0
      %v2282 = vadd.f32 %v2193, %v2281
      %2283 = vmatmul.bf16.gmra.mxu0 %v1679
      %v2284 = vpop.f32.mrf.mxu0
      %v2285 = vadd.f32 %v2196, %v2284
      %v2286 = vpop.f32.mrf.mxu0
      %v2287 = vadd.f32 %v2198, %v2286
      %2288 = vmatmul.bf16.gmra.mxu0 %v1684
      %v2289 = vpop.f32.mrf.mxu0
      %v2290 = vadd.f32 %v2201, %v2289
      %v2291 = vpop.f32.mrf.mxu0
      %v2292 = vadd.f32 %v2203, %v2291
      %2293 = vmatmul.bf16.gmra.mxu0 %v1689
      %v2294 = vpop.f32.mrf.mxu0
      %v2295 = vadd.f32 %v2206, %v2294
      %v2296 = vpop.f32.mrf.mxu0
      %v2297 = vadd.f32 %v2208, %v2296
      %2298 = vmatmul.bf16.gmra.mxu0 %v1694
      %v2299 = vpop.f32.mrf.mxu0
      %v2300 = vadd.f32 %v2211, %v2299
      %v2301 = vpop.f32.mrf.mxu0
      %v2302 = vadd.f32 %v2213, %v2301
      %2303 = vmatmul.bf16.gmra.mxu0 %v1699
      %v2304 = vpop.f32.mrf.mxu0
      %v2305 = vadd.f32 %v2216, %v2304
      %v2306 = vpop.f32.mrf.mxu0
      %v2307 = vadd.f32 %v2218, %v2306
      %2308 = vmatmul.bf16.gmra.mxu0 %v1704
      %v2309 = vpop.f32.mrf.mxu0
      %v2310 = vadd.f32 %v2221, %v2309
      %v2311 = vpop.f32.mrf.mxu0
      %v2312 = vadd.f32 %v2223, %v2311
      %2313 = vmatmul.bf16.gmra.mxu0 %v1709
      %v2314 = vpop.f32.mrf.mxu0
      %v2315 = vadd.f32 %v2226, %v2314
      %v2316 = vpop.f32.mrf.mxu0
      %v2317 = vadd.f32 %v2228, %v2316
      %2318 = vmatmul.bf16.gmra.mxu0 %v1714
      %v2319 = vpop.f32.mrf.mxu0
      %v2320 = vadd.f32 %v2231, %v2319
      %v2321 = vpop.f32.mrf.mxu0
      %v2322 = vadd.f32 %v2233, %v2321
      %2323 = vmatmul.bf16.gmra.mxu0 %v1719
      %v2324 = vpop.f32.mrf.mxu0
      %v2325 = vadd.f32 %v2236, %v2324
      %v2326 = vpop.f32.mrf.mxu0
      %v2327 = vadd.f32 %v2238, %v2326
      %2328 = vmatmul.bf16.gmra.mxu0 %v1724
      %v2329 = vpop.f32.mrf.mxu0
      %v2330 = vadd.f32 %v2241, %v2329
      %v2331 = vpop.f32.mrf.mxu0
      %v2332 = vadd.f32 %v2243, %v2331
      %2333 = vmatmul.bf16.gmra.mxu0 %v1729
      %v2334 = vpop.f32.mrf.mxu0
      %v2335 = vadd.f32 %v2246, %v2334
      %v2336 = vpop.f32.mrf.mxu0
      %v2337 = vadd.f32 %v2248, %v2336
      %2338 = vdwg.mxu0
      %2339 = vmatpush.bf16.msra.mxu0 %v1983
      %2340 = vmatpush.bf16.msra.mxu0 %v1982
      %2341 = vmatpush.bf16.msra.mxu0 %v1981
      %2342 = vmatpush.bf16.msra.mxu0 %v1980
      %2343 = vmatpush.bf16.msra.mxu0 %v1979
      %2344 = vmatpush.bf16.msra.mxu0 %v1978
      %2345 = vmatpush.bf16.msra.mxu0 %v1977
      %2346 = vmatpush.bf16.msra.mxu0 %v1976
      %2347 = vmatmul.bf16.gmra.mxu0 %v1655
      %v2348 = vpop.f32.mrf.mxu0
      %v2349 = vadd.f32 %v2260, %v2348
      %v2350 = vpop.f32.mrf.mxu0
      %v2351 = vadd.f32 %v2262, %v2350
      %2352 = vmatmul.bf16.gmra.mxu0 %v1660
      %v2353 = vpop.f32.mrf.mxu0
      %v2354 = vadd.f32 %v2265, %v2353
      %v2355 = vpop.f32.mrf.mxu0
      %v2356 = vadd.f32 %v2267, %v2355
      %2357 = vmatmul.bf16.gmra.mxu0 %v1665
      %v2358 = vpop.f32.mrf.mxu0
      %v2359 = vadd.f32 %v2270, %v2358
      %v2360 = vpop.f32.mrf.mxu0
      %v2361 = vadd.f32 %v2272, %v2360
      %2362 = vmatmul.bf16.gmra.mxu0 %v1670
      %v2363 = vpop.f32.mrf.mxu0
      %v2364 = vadd.f32 %v2275, %v2363
      %v2365 = vpop.f32.mrf.mxu0
      %v2366 = vadd.f32 %v2277, %v2365
      %2367 = vmatmul.bf16.gmra.mxu0 %v1675
      %v2368 = vpop.f32.mrf.mxu0
      %v2369 = vadd.f32 %v2280, %v2368
      %v2370 = vpop.f32.mrf.mxu0
      %v2371 = vadd.f32 %v2282, %v2370
      %2372 = vmatmul.bf16.gmra.mxu0 %v1680
      %v2373 = vpop.f32.mrf.mxu0
      %v2374 = vadd.f32 %v2285, %v2373
      %v2375 = vpop.f32.mrf.mxu0
      %v2376 = vadd.f32 %v2287, %v2375
      %2377 = vmatmul.bf16.gmra.mxu0 %v1685
      %v2378 = vpop.f32.mrf.mxu0
      %v2379 = vadd.f32 %v2290, %v2378
      %v2380 = vpop.f32.mrf.mxu0
      %v2381 = vadd.f32 %v2292, %v2380
      %2382 = vmatmul.bf16.gmra.mxu0 %v1690
      %v2383 = vpop.f32.mrf.mxu0
      %v2384 = vadd.f32 %v2295, %v2383
      %v2385 = vpop.f32.mrf.mxu0
      %v2386 = vadd.f32 %v2297, %v2385
      %2387 = vmatmul.bf16.gmra.mxu0 %v1695
      %v2388 = vpop.f32.mrf.mxu0
      %v2389 = vadd.f32 %v2300, %v2388
      %v2390 = vpop.f32.mrf.mxu0
      %v2391 = vadd.f32 %v2302, %v2390
      %2392 = vmatmul.bf16.gmra.mxu0 %v1700
      %v2393 = vpop.f32.mrf.mxu0
      %v2394 = vadd.f32 %v2305, %v2393
      %v2395 = vpop.f32.mrf.mxu0
      %v2396 = vadd.f32 %v2307, %v2395
      %2397 = vmatmul.bf16.gmra.mxu0 %v1705
      %v2398 = vpop.f32.mrf.mxu0
      %v2399 = vadd.f32 %v2310, %v2398
      %v2400 = vpop.f32.mrf.mxu0
      %v2401 = vadd.f32 %v2312, %v2400
      %2402 = vmatmul.bf16.gmra.mxu0 %v1710
      %v2403 = vpop.f32.mrf.mxu0
      %v2404 = vadd.f32 %v2315, %v2403
      %v2405 = vpop.f32.mrf.mxu0
      %v2406 = vadd.f32 %v2317, %v2405
      %2407 = vmatmul.bf16.gmra.mxu0 %v1715
      %v2408 = vpop.f32.mrf.mxu0
      %v2409 = vadd.f32 %v2320, %v2408
      %v2410 = vpop.f32.mrf.mxu0
      %v2411 = vadd.f32 %v2322, %v2410
      %2412 = vmatmul.bf16.gmra.mxu0 %v1720
      %v2413 = vpop.f32.mrf.mxu0
      %v2414 = vadd.f32 %v2325, %v2413
      %v2415 = vpop.f32.mrf.mxu0
      %v2416 = vadd.f32 %v2327, %v2415
      %2417 = vmatmul.bf16.gmra.mxu0 %v1725
      %v2418 = vpop.f32.mrf.mxu0
      %v2419 = vadd.f32 %v2330, %v2418
      %v2420 = vpop.f32.mrf.mxu0
      %v2421 = vadd.f32 %v2332, %v2420
      %2422 = vmatmul.bf16.gmra.mxu0 %v1730
      %v2423 = vpop.f32.mrf.mxu0
      %v2424 = vadd.f32 %v2335, %v2423
      %v2425 = vpop.f32.mrf.mxu0
      %v2426 = vadd.f32 %v2337, %v2425
      %2427 = vdwg.mxu0
      %2428 = vmatpush.bf16.msra.mxu0 0
      %2429 = vmatpush.bf16.msra.mxu0 0
      %2430 = vmatpush.bf16.msra.mxu0 0
      %2431 = vmatpush.bf16.msra.mxu0 0
      %2432 = vmatpush.bf16.msra.mxu0 %v1987
      %2433 = vmatpush.bf16.msra.mxu0 %v1986
      %2434 = vmatpush.bf16.msra.mxu0 %v1985
      %2435 = vmatpush.bf16.msra.mxu0 %v1984
      %2436 = vmatmul.bf16.gmra.mxu0 %v2025
      %v2437 = vpop.f32.mrf.mxu0
      %v2438 = vadd.f32 %v2349, %v2437
      %v2439 = vpop.f32.mrf.mxu0
      %v2440 = vadd.f32 %v2351, %v2439
      %2441 = vmatmul.bf16.gmra.mxu0 %v2028
      %v2442 = vpop.f32.mrf.mxu0
      %v2443 = vadd.f32 %v2354, %v2442
      %v2444 = vpop.f32.mrf.mxu0
      %v2445 = vadd.f32 %v2356, %v2444
      %2446 = vmatmul.bf16.gmra.mxu0 %v2031
      %v2447 = vpop.f32.mrf.mxu0
      %v2448 = vadd.f32 %v2359, %v2447
      %v2449 = vpop.f32.mrf.mxu0
      %v2450 = vadd.f32 %v2361, %v2449
      %2451 = vmatmul.bf16.gmra.mxu0 %v2034
      %v2452 = vpop.f32.mrf.mxu0
      %v2453 = vadd.f32 %v2364, %v2452
      %v2454 = vpop.f32.mrf.mxu0
      %v2455 = vadd.f32 %v2366, %v2454
      %2456 = vmatmul.bf16.gmra.mxu0 %v2037
      %v2457 = vpop.f32.mrf.mxu0
      %v2458 = vadd.f32 %v2369, %v2457
      %v2459 = vpop.f32.mrf.mxu0
      %v2460 = vadd.f32 %v2371, %v2459
      %2461 = vmatmul.bf16.gmra.mxu0 %v2040
      %v2462 = vpop.f32.mrf.mxu0
      %v2463 = vadd.f32 %v2374, %v2462
      %v2464 = vpop.f32.mrf.mxu0
      %v2465 = vadd.f32 %v2376, %v2464
      %2466 = vmatmul.bf16.gmra.mxu0 %v2043
      %v2467 = vpop.f32.mrf.mxu0
      %v2468 = vadd.f32 %v2379, %v2467
      %v2469 = vpop.f32.mrf.mxu0
      %v2470 = vadd.f32 %v2381, %v2469
      %2471 = vmatmul.bf16.gmra.mxu0 %v2046
      %v2472 = vpop.f32.mrf.mxu0
      %v2473 = vadd.f32 %v2384, %v2472
      %v2474 = vpop.f32.mrf.mxu0
      %v2475 = vadd.f32 %v2386, %v2474
      %2476 = vmatmul.bf16.gmra.mxu0 %v2049
      %v2477 = vpop.f32.mrf.mxu0
      %v2478 = vadd.f32 %v2389, %v2477
      %v2479 = vpop.f32.mrf.mxu0
      %v2480 = vadd.f32 %v2391, %v2479
      %2481 = vmatmul.bf16.gmra.mxu0 %v2052
      %v2482 = vpop.f32.mrf.mxu0
      %v2483 = vadd.f32 %v2394, %v2482
      %v2484 = vpop.f32.mrf.mxu0
      %v2485 = vadd.f32 %v2396, %v2484
      %2486 = vmatmul.bf16.gmra.mxu0 %v2055
      %v2487 = vpop.f32.mrf.mxu0
      %v2488 = vadd.f32 %v2399, %v2487
      %v2489 = vpop.f32.mrf.mxu0
      %v2490 = vadd.f32 %v2401, %v2489
      %2491 = vmatmul.bf16.gmra.mxu0 %v2058
      %v2492 = vpop.f32.mrf.mxu0
      %v2493 = vadd.f32 %v2404, %v2492
      %v2494 = vpop.f32.mrf.mxu0
      %v2495 = vadd.f32 %v2406, %v2494
      %2496 = vmatmul.bf16.gmra.mxu0 %v2061
      %v2497 = vpop.f32.mrf.mxu0
      %v2498 = vadd.f32 %v2409, %v2497
      %v2499 = vpop.f32.mrf.mxu0
      %v2500 = vadd.f32 %v2411, %v2499
      %2501 = vmatmul.bf16.gmra.mxu0 %v2064
      %v2502 = vpop.f32.mrf.mxu0
      %v2503 = vadd.f32 %v2414, %v2502
      %v2504 = vpop.f32.mrf.mxu0
      %v2505 = vadd.f32 %v2416, %v2504
      %2506 = vmatmul.bf16.gmra.mxu0 %v2067
      %v2507 = vpop.f32.mrf.mxu0
      %v2508 = vadd.f32 %v2419, %v2507
      %v2509 = vpop.f32.mrf.mxu0
      %v2510 = vadd.f32 %v2421, %v2509
      %2511 = vmatmul.bf16.gmra.mxu0 %v2070
      %v2512 = vpop.f32.mrf.mxu0
      %v2513 = vadd.f32 %v2424, %v2512
      %v2514 = vpop.f32.mrf.mxu0
      %v2515 = vadd.f32 %v2426, %v2514
      %2516 = vdwg.mxu0
      %v2517 = vmax.f32 %v2438, 0.0
      %v2518 = vmax.f32 %v2440, 0.0
      %v2519 = vmax.f32 %v2443, 0.0
      %v2520 = vmax.f32 %v2445, 0.0
      %v2521 = vmax.f32 %v2448, 0.0
      %v2522 = vmax.f32 %v2450, 0.0
      %v2523 = vmax.f32 %v2453, 0.0
      %v2524 = vmax.f32 %v2455, 0.0
      %v2525 = vmax.f32 %v2458, 0.0
      %v2526 = vmax.f32 %v2460, 0.0
      %v2527 = vmax.f32 %v2463, 0.0
      %v2528 = vmax.f32 %v2465, 0.0
      %v2529 = vmax.f32 %v2468, 0.0
      %v2530 = vmax.f32 %v2470, 0.0
      %v2531 = vmax.f32 %v2473, 0.0
      %v2532 = vmax.f32 %v2475, 0.0
      %v2533 = vmax.f32 %v2478, 0.0
      %v2534 = vmax.f32 %v2480, 0.0
      %v2535 = vmax.f32 %v2483, 0.0
      %v2536 = vmax.f32 %v2485, 0.0
      %v2537 = vmax.f32 %v2488, 0.0
      %v2538 = vmax.f32 %v2490, 0.0
      %v2539 = vmax.f32 %v2493, 0.0
      %v2540 = vmax.f32 %v2495, 0.0
      %v2541 = vmax.f32 %v2498, 0.0
      %v2542 = vmax.f32 %v2500, 0.0
      %v2543 = vmax.f32 %v2503, 0.0
      %v2544 = vmax.f32 %v2505, 0.0
      %v2545 = vmax.f32 %v2508, 0.0
      %v2546 = vmax.f32 %v2510, 0.0
      %v2547 = vmax.f32 %v2513, 0.0
      %v2548 = vmax.f32 %v2515, 0.0
      %2549 = vst.msk [vmem:[%s690 + $0x1] sm:$0xff] %vm288, %v2517
      %2550 = vst.msk [vmem:[%s690 + $0x11] sm:$0xff] %vm288, %v2518
      %2551 = vst.msk [vmem:[%s690 + $0x21] sm:$0xff] %vm288, %v2519
      %2552 = vst.msk [vmem:[%s690 + $0x31] sm:$0xff] %vm288, %v2520
      %2553 = vst.msk [vmem:[%s690 + $0x41] sm:$0xff] %vm288, %v2521
      %2554 = vst.msk [vmem:[%s690 + $0x51] sm:$0xff] %vm288, %v2522
      %2555 = vst.msk [vmem:[%s690 + $0x61] sm:$0xff] %vm288, %v2523
      %2556 = vst.msk [vmem:[%s690 + $0x71] sm:$0xff] %vm288, %v2524
      %2557 = vst.msk [vmem:[%s690 + $0xa1] sm:$0xff] %vm288, %v2525
      %2558 = vst.msk [vmem:[%s690 + $0xb1] sm:$0xff] %vm288, %v2526
      %2559 = vst.msk [vmem:[%s690 + $0xc1] sm:$0xff] %vm288, %v2527
      %2560 = vst.msk [vmem:[%s690 + $0xd1] sm:$0xff] %vm288, %v2528
      %2561 = vst.msk [vmem:[%s690 + $0xe1] sm:$0xff] %vm288, %v2529
      %2562 = vst.msk [vmem:[%s690 + $0xf1] sm:$0xff] %vm288, %v2530
      %2563 = vst.msk [vmem:[%s690 + $0x101] sm:$0xff] %vm288, %v2531
      %2564 = vst.msk [vmem:[%s690 + $0x111] sm:$0xff] %vm288, %v2532
      %2565 = vst.msk [vmem:[%s690 + $0x141] sm:$0xff] %vm288, %v2533
      %2566 = vst.msk [vmem:[%s690 + $0x151] sm:$0xff] %vm288, %v2534
      %2567 = vst.msk [vmem:[%s690 + $0x161] sm:$0xff] %vm288, %v2535
      %2568 = vst.msk [vmem:[%s690 + $0x171] sm:$0xff] %vm288, %v2536
      %2569 = vst.msk [vmem:[%s690 + $0x181] sm:$0xff] %vm288, %v2537
      %2570 = vst.msk [vmem:[%s690 + $0x191] sm:$0xff] %vm288, %v2538
      %2571 = vst.msk [vmem:[%s690 + $0x1a1] sm:$0xff] %vm288, %v2539
      %2572 = vst.msk [vmem:[%s690 + $0x1b1] sm:$0xff] %vm288, %v2540
      %2573 = vst.msk [vmem:[%s690 + $0x1e1] sm:$0xff] %vm288, %v2541
      %2574 = vst.msk [vmem:[%s690 + $0x1f1] sm:$0xff] %vm288, %v2542
      %2575 = vst.msk [vmem:[%s690 + $0x201] sm:$0xff] %vm288, %v2543
      %2576 = vst.msk [vmem:[%s690 + $0x211] sm:$0xff] %vm288, %v2544
      %2577 = vst.msk [vmem:[%s690 + $0x221] sm:$0xff] %vm288, %v2545
      %2578 = vst.msk [vmem:[%s690 + $0x231] sm:$0xff] %vm288, %v2546
      %2579 = vst.msk [vmem:[%s690 + $0x241] sm:$0xff] %vm288, %v2547
      %2580 = vst.msk [vmem:[%s690 + $0x251] sm:$0xff] %vm288, %v2548
      %v2581 = vld [vmem:[#allocation2] sm:$0xff]
      %v2582 = vld [vmem:[#allocation2 + $0x10] sm:$0xff]
      %v2583 = vld [vmem:[#allocation2 + $0x20] sm:$0xff]
      %v2584 = vld [vmem:[#allocation2 + $0x30] sm:$0xff]
      %v2585 = vld [vmem:[#allocation2 + $0x40] sm:$0xff]
      %v2586 = vld [vmem:[#allocation2 + $0x50] sm:$0xff]
      %v2587 = vld [vmem:[#allocation2 + $0x60] sm:$0xff]
      %v2588 = vld [vmem:[#allocation2 + $0x70] sm:$0xff]
      %v2589 = vld [vmem:[#allocation2 + $0xa0] sm:$0xff]
      %v2590 = vld [vmem:[#allocation2 + $0xb0] sm:$0xff]
      %v2591 = vld [vmem:[#allocation2 + $0xc0] sm:$0xff]
      %v2592 = vld [vmem:[#allocation2 + $0xd0] sm:$0xff]
      %v2593 = vld [vmem:[#allocation2 + $0xe0] sm:$0xff]
      %v2594 = vld [vmem:[#allocation2 + $0xf0] sm:$0xff]
      %v2595 = vld [vmem:[#allocation2 + $0x100] sm:$0xff]
      %v2596 = vld [vmem:[#allocation2 + $0x110] sm:$0xff]
      %v2597 = vld [vmem:[#allocation2 + $0x140] sm:$0xff]
      %v2598 = vld [vmem:[#allocation2 + $0x150] sm:$0xff]
      %v2599 = vld [vmem:[#allocation2 + $0x160] sm:$0xff]
      %v2600 = vld [vmem:[#allocation2 + $0x170] sm:$0xff]
      %v2601 = vld [vmem:[#allocation2 + $0x180] sm:$0xff]
      %v2602 = vld [vmem:[#allocation2 + $0x190] sm:$0xff]
      %v2603 = vld [vmem:[#allocation2 + $0x1a0] sm:$0xff]
      %v2604 = vld [vmem:[#allocation2 + $0x1b0] sm:$0xff]
      %v2605 = vld [vmem:[#allocation2 + $0x1e0] sm:$0xff]
      %v2606 = vld [vmem:[#allocation2 + $0x1f0] sm:$0xff]
      %v2607 = vld [vmem:[#allocation2 + $0x200] sm:$0xff]
      %v2608 = vld [vmem:[#allocation2 + $0x210] sm:$0xff]
      %v2609 = vld [vmem:[#allocation2 + $0x220] sm:$0xff]
      %v2610 = vld [vmem:[#allocation2 + $0x230] sm:$0xff]
      %v2611 = vld [vmem:[#allocation2 + $0x240] sm:$0xff]
      %v2612 = vld [vmem:[#allocation2 + $0x250] sm:$0xff]
      %v2613 = vld [vmem:[#allocation2 + $0x1] sm:$0xff]
      %v2614 = vld [vmem:[#allocation2 + $0x11] sm:$0xff]
      %v2615 = vld [vmem:[#allocation2 + $0x21] sm:$0xff]
      %v2616 = vld [vmem:[#allocation2 + $0x31] sm:$0xff]
      %v2617 = vld [vmem:[#allocation2 + $0x41] sm:$0xff]
      %v2618 = vld [vmem:[#allocation2 + $0x51] sm:$0xff]
      %v2619 = vld [vmem:[#allocation2 + $0x61] sm:$0xff]
      %v2620 = vld [vmem:[#allocation2 + $0x71] sm:$0xff]
      %v2621 = vld [vmem:[#allocation2 + $0xa1] sm:$0xff]
      %v2622 = vld [vmem:[#allocation2 + $0xb1] sm:$0xff]
      %v2623 = vld [vmem:[#allocation2 + $0xc1] sm:$0xff]
      %v2624 = vld [vmem:[#allocation2 + $0xd1] sm:$0xff]
      %v2625 = vld [vmem:[#allocation2 + $0xe1] sm:$0xff]
      %v2626 = vld [vmem:[#allocation2 + $0xf1] sm:$0xff]
      %v2627 = vld [vmem:[#allocation2 + $0x101] sm:$0xff]
      %v2628 = vld [vmem:[#allocation2 + $0x111] sm:$0xff]
      %v2629 = vld [vmem:[#allocation2 + $0x141] sm:$0xff]
      %v2630 = vld [vmem:[#allocation2 + $0x151] sm:$0xff]
      %v2631 = vld [vmem:[#allocation2 + $0x161] sm:$0xff]
      %v2632 = vld [vmem:[#allocation2 + $0x171] sm:$0xff]
      %v2633 = vld [vmem:[#allocation2 + $0x181] sm:$0xff]
      %v2634 = vld [vmem:[#allocation2 + $0x191] sm:$0xff]
      %v2635 = vld [vmem:[#allocation2 + $0x1a1] sm:$0xff]
      %v2636 = vld [vmem:[#allocation2 + $0x1b1] sm:$0xff]
      %v2637 = vld [vmem:[#allocation2 + $0x1e1] sm:$0xff]
      %v2638 = vld [vmem:[#allocation2 + $0x1f1] sm:$0xff]
      %v2639 = vld [vmem:[#allocation2 + $0x201] sm:$0xff]
      %v2640 = vld [vmem:[#allocation2 + $0x211] sm:$0xff]
      %v2641 = vld [vmem:[#allocation2 + $0x221] sm:$0xff]
      %v2642 = vld [vmem:[#allocation2 + $0x231] sm:$0xff]
      %v2643 = vld [vmem:[#allocation2 + $0x241] sm:$0xff]
      %v2644 = vld [vmem:[#allocation2 + $0x251] sm:$0xff]
      %v2645 = vld [vmem:[#allocation2 + $0x2] sm:$0xff]
      %v2646 = vld [vmem:[#allocation2 + $0x12] sm:$0xff]
      %v2647 = vld [vmem:[#allocation2 + $0x22] sm:$0xff]
      %v2648 = vld [vmem:[#allocation2 + $0x32] sm:$0xff]
      %v2649 = vld [vmem:[#allocation2 + $0x42] sm:$0xff]
      %v2650 = vld [vmem:[#allocation2 + $0x52] sm:$0xff]
      %v2651 = vld [vmem:[#allocation2 + $0x62] sm:$0xff]
      %v2652 = vld [vmem:[#allocation2 + $0x72] sm:$0xff]
      %v2653 = vld [vmem:[#allocation2 + $0xa2] sm:$0xff]
      %v2654 = vld [vmem:[#allocation2 + $0xb2] sm:$0xff]
      %v2655 = vld [vmem:[#allocation2 + $0xc2] sm:$0xff]
      %v2656 = vld [vmem:[#allocation2 + $0xd2] sm:$0xff]
      %v2657 = vld [vmem:[#allocation2 + $0xe2] sm:$0xff]
      %v2658 = vld [vmem:[#allocation2 + $0xf2] sm:$0xff]
      %v2659 = vld [vmem:[#allocation2 + $0x102] sm:$0xff]
      %v2660 = vld [vmem:[#allocation2 + $0x112] sm:$0xff]
      %v2661 = vld [vmem:[#allocation2 + $0x142] sm:$0xff]
      %v2662 = vld [vmem:[#allocation2 + $0x152] sm:$0xff]
      %v2663 = vld [vmem:[#allocation2 + $0x162] sm:$0xff]
      %v2664 = vld [vmem:[#allocation2 + $0x172] sm:$0xff]
      %v2665 = vld [vmem:[#allocation2 + $0x182] sm:$0xff]
      %v2666 = vld [vmem:[#allocation2 + $0x192] sm:$0xff]
      %v2667 = vld [vmem:[#allocation2 + $0x1a2] sm:$0xff]
      %v2668 = vld [vmem:[#allocation2 + $0x1b2] sm:$0xff]
      %v2669 = vld [vmem:[#allocation2 + $0x1e2] sm:$0xff]
      %v2670 = vld [vmem:[#allocation2 + $0x1f2] sm:$0xff]
      %v2671 = vld [vmem:[#allocation2 + $0x202] sm:$0xff]
      %v2672 = vld [vmem:[#allocation2 + $0x212] sm:$0xff]
      %v2673 = vld [vmem:[#allocation2 + $0x222] sm:$0xff]
      %v2674 = vld [vmem:[#allocation2 + $0x232] sm:$0xff]
      %v2675 = vld [vmem:[#allocation2 + $0x242] sm:$0xff]
      %v2676 = vld [vmem:[#allocation2 + $0x252] sm:$0xff]
      %v2677 = vld [vmem:[%s690] sm:$0xff]
      %v2678 = vld [vmem:[%s690 + $0x10] sm:$0xff]
      %v2679 = vld [vmem:[%s690 + $0x20] sm:$0xff]
      %v2680 = vld [vmem:[%s690 + $0x30] sm:$0xff]
      %v2681 = vld [vmem:[%s690 + $0x40] sm:$0xff]
      %v2682 = vld [vmem:[%s690 + $0x50] sm:$0xff]
      %v2683 = vld [vmem:[%s690 + $0x60] sm:$0xff]
      %v2684 = vld [vmem:[%s690 + $0x70] sm:$0xff]
      %v2685 = vld [vmem:[%s690 + $0xa0] sm:$0xff]
      %v2686 = vld [vmem:[%s690 + $0xb0] sm:$0xff]
      %v2687 = vld [vmem:[%s690 + $0xc0] sm:$0xff]
      %v2688 = vld [vmem:[%s690 + $0xd0] sm:$0xff]
      %v2689 = vld [vmem:[%s690 + $0xe0] sm:$0xff]
      %v2690 = vld [vmem:[%s690 + $0xf0] sm:$0xff]
      %v2691 = vld [vmem:[%s690 + $0x100] sm:$0xff]
      %v2692 = vld [vmem:[%s690 + $0x110] sm:$0xff]
      %v2693 = vld [vmem:[%s690 + $0x140] sm:$0xff]
      %v2694 = vld [vmem:[%s690 + $0x150] sm:$0xff]
      %v2695 = vld [vmem:[%s690 + $0x160] sm:$0xff]
      %v2696 = vld [vmem:[%s690 + $0x170] sm:$0xff]
      %v2697 = vld [vmem:[%s690 + $0x180] sm:$0xff]
      %v2698 = vld [vmem:[%s690 + $0x190] sm:$0xff]
      %v2699 = vld [vmem:[%s690 + $0x1a0] sm:$0xff]
      %v2700 = vld [vmem:[%s690 + $0x1b0] sm:$0xff]
      %v2701 = vld [vmem:[%s690 + $0x1e0] sm:$0xff]
      %v2702 = vld [vmem:[%s690 + $0x1f0] sm:$0xff]
      %v2703 = vld [vmem:[%s690 + $0x200] sm:$0xff]
      %v2704 = vld [vmem:[%s690 + $0x210] sm:$0xff]
      %v2705 = vld [vmem:[%s690 + $0x220] sm:$0xff]
      %v2706 = vld [vmem:[%s690 + $0x230] sm:$0xff]
      %v2707 = vld [vmem:[%s690 + $0x240] sm:$0xff]
      %v2708 = vld [vmem:[%s690 + $0x250] sm:$0xff]
      %v2709 = vld [vmem:[%s690 + $0x1] sm:$0xff]
      %v2710 = vld [vmem:[%s690 + $0x11] sm:$0xff]
      %v2711 = vld [vmem:[%s690 + $0x21] sm:$0xff]
      %v2712 = vld [vmem:[%s690 + $0x31] sm:$0xff]
      %v2713 = vld [vmem:[%s690 + $0x41] sm:$0xff]
      %v2714 = vld [vmem:[%s690 + $0x51] sm:$0xff]
      %v2715 = vld [vmem:[%s690 + $0x61] sm:$0xff]
      %v2716 = vld [vmem:[%s690 + $0x71] sm:$0xff]
      %v2717 = vld [vmem:[%s690 + $0xa1] sm:$0xff]
      %v2718 = vld [vmem:[%s690 + $0xb1] sm:$0xff]
      %v2719 = vld [vmem:[%s690 + $0xc1] sm:$0xff]
      %v2720 = vld [vmem:[%s690 + $0xd1] sm:$0xff]
      %v2721 = vld [vmem:[%s690 + $0xe1] sm:$0xff]
      %v2722 = vld [vmem:[%s690 + $0xf1] sm:$0xff]
      %v2723 = vld [vmem:[%s690 + $0x101] sm:$0xff]
      %v2724 = vld [vmem:[%s690 + $0x111] sm:$0xff]
      %v2725 = vld [vmem:[%s690 + $0x141] sm:$0xff]
      %v2726 = vld [vmem:[%s690 + $0x151] sm:$0xff]
      %v2727 = vld [vmem:[%s690 + $0x161] sm:$0xff]
      %v2728 = vld [vmem:[%s690 + $0x171] sm:$0xff]
      %v2729 = vld [vmem:[%s690 + $0x181] sm:$0xff]
      %v2730 = vld [vmem:[%s690 + $0x191] sm:$0xff]
      %v2731 = vld [vmem:[%s690 + $0x1a1] sm:$0xff]
      %v2732 = vld [vmem:[%s690 + $0x1b1] sm:$0xff]
      %v2733 = vld [vmem:[%s690 + $0x1e1] sm:$0xff]
      %v2734 = vld [vmem:[%s690 + $0x1f1] sm:$0xff]
      %v2735 = vld [vmem:[%s690 + $0x201] sm:$0xff]
      %v2736 = vld [vmem:[%s690 + $0x211] sm:$0xff]
      %v2737 = vld [vmem:[%s690 + $0x221] sm:$0xff]
      %v2738 = vld [vmem:[%s690 + $0x231] sm:$0xff]
      %v2739 = vld [vmem:[%s690 + $0x241] sm:$0xff]
      %v2740 = vld [vmem:[%s690 + $0x251] sm:$0xff]
      %v2741 = vld [vmem:[%s690 + $0x2] sm:$0xff]
      %v2742 = vld [vmem:[%s690 + $0x12] sm:$0xff]
      %v2743 = vld [vmem:[%s690 + $0x22] sm:$0xff]
      %v2744 = vld [vmem:[%s690 + $0x32] sm:$0xff]
      %v2745 = vld [vmem:[%s690 + $0x42] sm:$0xff]
      %v2746 = vld [vmem:[%s690 + $0x52] sm:$0xff]
      %v2747 = vld [vmem:[%s690 + $0x62] sm:$0xff]
      %v2748 = vld [vmem:[%s690 + $0x72] sm:$0xff]
      %v2749 = vld [vmem:[%s690 + $0xa2] sm:$0xff]
      %v2750 = vld [vmem:[%s690 + $0xb2] sm:$0xff]
      %v2751 = vld [vmem:[%s690 + $0xc2] sm:$0xff]
      %v2752 = vld [vmem:[%s690 + $0xd2] sm:$0xff]
      %v2753 = vld [vmem:[%s690 + $0xe2] sm:$0xff]
      %v2754 = vld [vmem:[%s690 + $0xf2] sm:$0xff]
      %v2755 = vld [vmem:[%s690 + $0x102] sm:$0xff]
      %v2756 = vld [vmem:[%s690 + $0x112] sm:$0xff]
      %v2757 = vld [vmem:[%s690 + $0x142] sm:$0xff]
      %v2758 = vld [vmem:[%s690 + $0x152] sm:$0xff]
      %v2759 = vld [vmem:[%s690 + $0x162] sm:$0xff]
      %v2760 = vld [vmem:[%s690 + $0x172] sm:$0xff]
      %v2761 = vld [vmem:[%s690 + $0x182] sm:$0xff]
      %v2762 = vld [vmem:[%s690 + $0x192] sm:$0xff]
      %v2763 = vld [vmem:[%s690 + $0x1a2] sm:$0xff]
      %v2764 = vld [vmem:[%s690 + $0x1b2] sm:$0xff]
      %v2765 = vld [vmem:[%s690 + $0x1e2] sm:$0xff]
      %v2766 = vld [vmem:[%s690 + $0x1f2] sm:$0xff]
      %v2767 = vld [vmem:[%s690 + $0x202] sm:$0xff]
      %v2768 = vld [vmem:[%s690 + $0x212] sm:$0xff]
      %v2769 = vld [vmem:[%s690 + $0x222] sm:$0xff]
      %v2770 = vld [vmem:[%s690 + $0x232] sm:$0xff]
      %v2771 = vld [vmem:[%s690 + $0x242] sm:$0xff]
      %v2772 = vld [vmem:[%s690 + $0x252] sm:$0xff]
      %v2773 = vld [vmem:[%s915] sm:$0xff]
      %v2774 = vld [vmem:[%s915 + $0x10] sm:$0xff]
      %v2775 = vld [vmem:[%s915 + $0x20] sm:$0xff]
      %v2776 = vld [vmem:[%s915 + $0x30] sm:$0xff]
      %v2777 = vld [vmem:[%s915 + $0x40] sm:$0xff]
      %v2778 = vld [vmem:[%s915 + $0x50] sm:$0xff]
      %v2779 = vld [vmem:[%s915 + $0x60] sm:$0xff]
      %v2780 = vld [vmem:[%s915 + $0x70] sm:$0xff]
      %v2781 = vld [vmem:[%s915 + $0xa0] sm:$0xff]
      %v2782 = vld [vmem:[%s915 + $0xb0] sm:$0xff]
      %v2783 = vld [vmem:[%s915 + $0xc0] sm:$0xff]
      %v2784 = vld [vmem:[%s915 + $0xd0] sm:$0xff]
      %v2785 = vld [vmem:[%s915 + $0xe0] sm:$0xff]
      %v2786 = vld [vmem:[%s915 + $0xf0] sm:$0xff]
      %v2787 = vld [vmem:[%s915 + $0x100] sm:$0xff]
      %v2788 = vld [vmem:[%s915 + $0x110] sm:$0xff]
      %v2789 = vld [vmem:[%s915 + $0x140] sm:$0xff]
      %v2790 = vld [vmem:[%s915 + $0x150] sm:$0xff]
      %v2791 = vld [vmem:[%s915 + $0x160] sm:$0xff]
      %v2792 = vld [vmem:[%s915 + $0x170] sm:$0xff]
      %v2793 = vld [vmem:[%s915 + $0x180] sm:$0xff]
      %v2794 = vld [vmem:[%s915 + $0x190] sm:$0xff]
      %v2795 = vld [vmem:[%s915 + $0x1a0] sm:$0xff]
      %v2796 = vld [vmem:[%s915 + $0x1b0] sm:$0xff]
      %v2797 = vld [vmem:[%s915 + $0x1e0] sm:$0xff]
      %v2798 = vld [vmem:[%s915 + $0x1f0] sm:$0xff]
      %v2799 = vld [vmem:[%s915 + $0x200] sm:$0xff]
      %v2800 = vld [vmem:[%s915 + $0x210] sm:$0xff]
      %v2801 = vld [vmem:[%s915 + $0x220] sm:$0xff]
      %v2802 = vld [vmem:[%s915 + $0x230] sm:$0xff]
      %v2803 = vld [vmem:[%s915 + $0x240] sm:$0xff]
      %v2804 = vld [vmem:[%s915 + $0x250] sm:$0xff]
      %v2805 = vld [vmem:[%s915 + $0x1] sm:$0xff]
      %v2806 = vld [vmem:[%s915 + $0x11] sm:$0xff]
      %v2807 = vld [vmem:[%s915 + $0x21] sm:$0xff]
      %v2808 = vld [vmem:[%s915 + $0x31] sm:$0xff]
      %v2809 = vld [vmem:[%s915 + $0x41] sm:$0xff]
      %v2810 = vld [vmem:[%s915 + $0x51] sm:$0xff]
      %v2811 = vld [vmem:[%s915 + $0x61] sm:$0xff]
      %v2812 = vld [vmem:[%s915 + $0x71] sm:$0xff]
      %v2813 = vld [vmem:[%s915 + $0xa1] sm:$0xff]
      %v2814 = vld [vmem:[%s915 + $0xb1] sm:$0xff]
      %v2815 = vld [vmem:[%s915 + $0xc1] sm:$0xff]
      %v2816 = vld [vmem:[%s915 + $0xd1] sm:$0xff]
      %v2817 = vld [vmem:[%s915 + $0xe1] sm:$0xff]
      %v2818 = vld [vmem:[%s915 + $0xf1] sm:$0xff]
      %v2819 = vld [vmem:[%s915 + $0x101] sm:$0xff]
      %v2820 = vld [vmem:[%s915 + $0x111] sm:$0xff]
      %v2821 = vld [vmem:[%s915 + $0x141] sm:$0xff]
      %v2822 = vld [vmem:[%s915 + $0x151] sm:$0xff]
      %v2823 = vld [vmem:[%s915 + $0x161] sm:$0xff]
      %v2824 = vld [vmem:[%s915 + $0x171] sm:$0xff]
      %v2825 = vld [vmem:[%s915 + $0x181] sm:$0xff]
      %v2826 = vld [vmem:[%s915 + $0x191] sm:$0xff]
      %v2827 = vld [vmem:[%s915 + $0x1a1] sm:$0xff]
      %v2828 = vld [vmem:[%s915 + $0x1b1] sm:$0xff]
      %v2829 = vld [vmem:[%s915 + $0x1e1] sm:$0xff]
      %v2830 = vld [vmem:[%s915 + $0x1f1] sm:$0xff]
      %v2831 = vld [vmem:[%s915 + $0x201] sm:$0xff]
      %v2832 = vld [vmem:[%s915 + $0x211] sm:$0xff]
      %v2833 = vld [vmem:[%s915 + $0x221] sm:$0xff]
      %v2834 = vld [vmem:[%s915 + $0x231] sm:$0xff]
      %v2835 = vld [vmem:[%s915 + $0x241] sm:$0xff]
      %v2836 = vld [vmem:[%s915 + $0x251] sm:$0xff]
      %v2837 = vld [vmem:[%s915 + $0x2] sm:$0xff]
      %v2838 = vld [vmem:[%s915 + $0x12] sm:$0xff]
      %v2839 = vld [vmem:[%s915 + $0x22] sm:$0xff]
      %v2840 = vld [vmem:[%s915 + $0x32] sm:$0xff]
      %v2841 = vld [vmem:[%s915 + $0x42] sm:$0xff]
      %v2842 = vld [vmem:[%s915 + $0x52] sm:$0xff]
      %v2843 = vld [vmem:[%s915 + $0x62] sm:$0xff]
      %v2844 = vld [vmem:[%s915 + $0x72] sm:$0xff]
      %v2845 = vld [vmem:[%s915 + $0xa2] sm:$0xff]
      %v2846 = vld [vmem:[%s915 + $0xb2] sm:$0xff]
      %v2847 = vld [vmem:[%s915 + $0xc2] sm:$0xff]
      %v2848 = vld [vmem:[%s915 + $0xd2] sm:$0xff]
      %v2849 = vld [vmem:[%s915 + $0xe2] sm:$0xff]
      %v2850 = vld [vmem:[%s915 + $0xf2] sm:$0xff]
      %v2851 = vld [vmem:[%s915 + $0x102] sm:$0xff]
      %v2852 = vld [vmem:[%s915 + $0x112] sm:$0xff]
      %v2853 = vld [vmem:[%s915 + $0x142] sm:$0xff]
      %v2854 = vld [vmem:[%s915 + $0x152] sm:$0xff]
      %v2855 = vld [vmem:[%s915 + $0x162] sm:$0xff]
      %v2856 = vld [vmem:[%s915 + $0x172] sm:$0xff]
      %v2857 = vld [vmem:[%s915 + $0x182] sm:$0xff]
      %v2858 = vld [vmem:[%s915 + $0x192] sm:$0xff]
      %v2859 = vld [vmem:[%s915 + $0x1a2] sm:$0xff]
      %v2860 = vld [vmem:[%s915 + $0x1b2] sm:$0xff]
      %v2861 = vld [vmem:[%s915 + $0x1e2] sm:$0xff]
      %v2862 = vld [vmem:[%s915 + $0x1f2] sm:$0xff]
      %v2863 = vld [vmem:[%s915 + $0x202] sm:$0xff]
      %v2864 = vld [vmem:[%s915 + $0x212] sm:$0xff]
      %v2865 = vld [vmem:[%s915 + $0x222] sm:$0xff]
      %v2866 = vld [vmem:[%s915 + $0x232] sm:$0xff]
      %v2867 = vld [vmem:[%s915 + $0x242] sm:$0xff]
      %v2868 = vld [vmem:[%s915 + $0x252] sm:$0xff]
      %2901 = vrot.lane.b32.xlu0 %v2613, 64
      %v2902 = vpop.permute.xlu0 %2901
      %2903 = vrot.lane.b32.xlu0 %v2614, 64
      %v2904 = vpop.permute.xlu0 %2903
      %2905 = vrot.lane.b32.xlu0 %v2615, 64
      %v2906 = vpop.permute.xlu0 %2905
      %2907 = vrot.lane.b32.xlu0 %v2616, 64
      %v2908 = vpop.permute.xlu0 %2907
      %2909 = vrot.lane.b32.xlu0 %v2617, 64
      %v2910 = vpop.permute.xlu0 %2909
      %2911 = vrot.lane.b32.xlu0 %v2618, 64
      %v2912 = vpop.permute.xlu0 %2911
      %2913 = vrot.lane.b32.xlu0 %v2619, 64
      %v2914 = vpop.permute.xlu0 %2913
      %2915 = vrot.lane.b32.xlu0 %v2620, 64
      %v2916 = vpop.permute.xlu0 %2915
      %2917 = vrot.lane.b32.xlu0 %v2621, 64
      %v2918 = vpop.permute.xlu0 %2917
      %2919 = vrot.lane.b32.xlu0 %v2622, 64
      %v2920 = vpop.permute.xlu0 %2919
      %2921 = vrot.lane.b32.xlu0 %v2623, 64
      %v2922 = vpop.permute.xlu0 %2921
      %2923 = vrot.lane.b32.xlu0 %v2624, 64
      %v2924 = vpop.permute.xlu0 %2923
      %2925 = vrot.lane.b32.xlu0 %v2625, 64
      %v2926 = vpop.permute.xlu0 %2925
      %2927 = vrot.lane.b32.xlu0 %v2626, 64
      %v2928 = vpop.permute.xlu0 %2927
      %2929 = vrot.lane.b32.xlu0 %v2627, 64
      %v2930 = vpop.permute.xlu0 %2929
      %2931 = vrot.lane.b32.xlu0 %v2628, 64
      %v2932 = vpop.permute.xlu0 %2931
      %2933 = vrot.lane.b32.xlu0 %v2629, 64
      %v2934 = vpop.permute.xlu0 %2933
      %2935 = vrot.lane.b32.xlu0 %v2630, 64
      %v2936 = vpop.permute.xlu0 %2935
      %2937 = vrot.lane.b32.xlu0 %v2631, 64
      %v2938 = vpop.permute.xlu0 %2937
      %2939 = vrot.lane.b32.xlu0 %v2632, 64
      %v2940 = vpop.permute.xlu0 %2939
      %2941 = vrot.lane.b32.xlu0 %v2633, 64
      %v2942 = vpop.permute.xlu0 %2941
      %2943 = vrot.lane.b32.xlu0 %v2634, 64
      %v2944 = vpop.permute.xlu0 %2943
      %2945 = vrot.lane.b32.xlu0 %v2635, 64
      %v2946 = vpop.permute.xlu0 %2945
      %2947 = vrot.lane.b32.xlu0 %v2636, 64
      %v2948 = vpop.permute.xlu0 %2947
      %2949 = vrot.lane.b32.xlu0 %v2637, 64
      %v2950 = vpop.permute.xlu0 %2949
      %2951 = vrot.lane.b32.xlu0 %v2638, 64
      %v2952 = vpop.permute.xlu0 %2951
      %2953 = vrot.lane.b32.xlu0 %v2639, 64
      %v2954 = vpop.permute.xlu0 %2953
      %2955 = vrot.lane.b32.xlu0 %v2640, 64
      %v2956 = vpop.permute.xlu0 %2955
      %2957 = vrot.lane.b32.xlu0 %v2641, 64
      %v2958 = vpop.permute.xlu0 %2957
      %2959 = vrot.lane.b32.xlu0 %v2642, 64
      %v2960 = vpop.permute.xlu0 %2959
      %2961 = vrot.lane.b32.xlu0 %v2643, 64
      %v2962 = vpop.permute.xlu0 %2961
      %2963 = vrot.lane.b32.xlu0 %v2644, 64
      %v2964 = vpop.permute.xlu0 %2963
      %3029 = vrot.lane.b32.xlu0 %v2677, 64
      %v3030 = vpop.permute.xlu0 %3029
      %3031 = vrot.lane.b32.xlu0 %v2678, 64
      %v3032 = vpop.permute.xlu0 %3031
      %3033 = vrot.lane.b32.xlu0 %v2679, 64
      %v3034 = vpop.permute.xlu0 %3033
      %3035 = vrot.lane.b32.xlu0 %v2680, 64
      %v3036 = vpop.permute.xlu0 %3035
      %3037 = vrot.lane.b32.xlu0 %v2681, 64
      %v3038 = vpop.permute.xlu0 %3037
      %3039 = vrot.lane.b32.xlu0 %v2682, 64
      %v3040 = vpop.permute.xlu0 %3039
      %3041 = vrot.lane.b32.xlu0 %v2683, 64
      %v3042 = vpop.permute.xlu0 %3041
      %3043 = vrot.lane.b32.xlu0 %v2684, 64
      %v3044 = vpop.permute.xlu0 %3043
      %3045 = vrot.lane.b32.xlu0 %v2685, 64
      %v3046 = vpop.permute.xlu0 %3045
      %3047 = vrot.lane.b32.xlu0 %v2686, 64
      %v3048 = vpop.permute.xlu0 %3047
      %3049 = vrot.lane.b32.xlu0 %v2687, 64
      %v3050 = vpop.permute.xlu0 %3049
      %3051 = vrot.lane.b32.xlu0 %v2688, 64
      %v3052 = vpop.permute.xlu0 %3051
      %3053 = vrot.lane.b32.xlu0 %v2689, 64
      %v3054 = vpop.permute.xlu0 %3053
      %3055 = vrot.lane.b32.xlu0 %v2690, 64
      %v3056 = vpop.permute.xlu0 %3055
      %3057 = vrot.lane.b32.xlu0 %v2691, 64
      %v3058 = vpop.permute.xlu0 %3057
      %3059 = vrot.lane.b32.xlu0 %v2692, 64
      %v3060 = vpop.permute.xlu0 %3059
      %3061 = vrot.lane.b32.xlu0 %v2693, 64
      %v3062 = vpop.permute.xlu0 %3061
      %3063 = vrot.lane.b32.xlu0 %v2694, 64
      %v3064 = vpop.permute.xlu0 %3063
      %3065 = vrot.lane.b32.xlu0 %v2695, 64
      %v3066 = vpop.permute.xlu0 %3065
      %3067 = vrot.lane.b32.xlu0 %v2696, 64
      %v3068 = vpop.permute.xlu0 %3067
      %3069 = vrot.lane.b32.xlu0 %v2697, 64
      %v3070 = vpop.permute.xlu0 %3069
      %3071 = vrot.lane.b32.xlu0 %v2698, 64
      %v3072 = vpop.permute.xlu0 %3071
      %3073 = vrot.lane.b32.xlu0 %v2699, 64
      %v3074 = vpop.permute.xlu0 %3073
      %3075 = vrot.lane.b32.xlu0 %v2700, 64
      %v3076 = vpop.permute.xlu0 %3075
      %3077 = vrot.lane.b32.xlu0 %v2701, 64
      %v3078 = vpop.permute.xlu0 %3077
      %3079 = vrot.lane.b32.xlu0 %v2702, 64
      %v3080 = vpop.permute.xlu0 %3079
      %3081 = vrot.lane.b32.xlu0 %v2703, 64
      %v3082 = vpop.permute.xlu0 %3081
      %3083 = vrot.lane.b32.xlu0 %v2704, 64
      %v3084 = vpop.permute.xlu0 %3083
      %3085 = vrot.lane.b32.xlu0 %v2705, 64
      %v3086 = vpop.permute.xlu0 %3085
      %3087 = vrot.lane.b32.xlu0 %v2706, 64
      %v3088 = vpop.permute.xlu0 %3087
      %3089 = vrot.lane.b32.xlu0 %v2707, 64
      %v3090 = vpop.permute.xlu0 %3089
      %3091 = vrot.lane.b32.xlu0 %v2708, 64
      %v3092 = vpop.permute.xlu0 %3091
      %3157 = vrot.lane.b32.xlu0 %v2741, 64
      %v3158 = vpop.permute.xlu0 %3157
      %3159 = vrot.lane.b32.xlu0 %v2742, 64
      %v3160 = vpop.permute.xlu0 %3159
      %3161 = vrot.lane.b32.xlu0 %v2743, 64
      %v3162 = vpop.permute.xlu0 %3161
      %3163 = vrot.lane.b32.xlu0 %v2744, 64
      %v3164 = vpop.permute.xlu0 %3163
      %3165 = vrot.lane.b32.xlu0 %v2745, 64
      %v3166 = vpop.permute.xlu0 %3165
      %3167 = vrot.lane.b32.xlu0 %v2746, 64
      %v3168 = vpop.permute.xlu0 %3167
      %3169 = vrot.lane.b32.xlu0 %v2747, 64
      %v3170 = vpop.permute.xlu0 %3169
      %3171 = vrot.lane.b32.xlu0 %v2748, 64
      %v3172 = vpop.permute.xlu0 %3171
      %3173 = vrot.lane.b32.xlu0 %v2749, 64
      %v3174 = vpop.permute.xlu0 %3173
      %3175 = vrot.lane.b32.xlu0 %v2750, 64
      %v3176 = vpop.permute.xlu0 %3175
      %3177 = vrot.lane.b32.xlu0 %v2751, 64
      %v3178 = vpop.permute.xlu0 %3177
      %3179 = vrot.lane.b32.xlu0 %v2752, 64
      %v3180 = vpop.permute.xlu0 %3179
      %3181 = vrot.lane.b32.xlu0 %v2753, 64
      %v3182 = vpop.permute.xlu0 %3181
      %3183 = vrot.lane.b32.xlu0 %v2754, 64
      %v3184 = vpop.permute.xlu0 %3183
      %3185 = vrot.lane.b32.xlu0 %v2755, 64
      %v3186 = vpop.permute.xlu0 %3185
      %3187 = vrot.lane.b32.xlu0 %v2756, 64
      %v3188 = vpop.permute.xlu0 %3187
      %3189 = vrot.lane.b32.xlu0 %v2757, 64
      %v3190 = vpop.permute.xlu0 %3189
      %3191 = vrot.lane.b32.xlu0 %v2758, 64
      %v3192 = vpop.permute.xlu0 %3191
      %3193 = vrot.lane.b32.xlu0 %v2759, 64
      %v3194 = vpop.permute.xlu0 %3193
      %3195 = vrot.lane.b32.xlu0 %v2760, 64
      %v3196 = vpop.permute.xlu0 %3195
      %3197 = vrot.lane.b32.xlu0 %v2761, 64
      %v3198 = vpop.permute.xlu0 %3197
      %3199 = vrot.lane.b32.xlu0 %v2762, 64
      %v3200 = vpop.permute.xlu0 %3199
      %3201 = vrot.lane.b32.xlu0 %v2763, 64
      %v3202 = vpop.permute.xlu0 %3201
      %3203 = vrot.lane.b32.xlu0 %v2764, 64
      %v3204 = vpop.permute.xlu0 %3203
      %3205 = vrot.lane.b32.xlu0 %v2765, 64
      %v3206 = vpop.permute.xlu0 %3205
      %3207 = vrot.lane.b32.xlu0 %v2766, 64
      %v3208 = vpop.permute.xlu0 %3207
      %3209 = vrot.lane.b32.xlu0 %v2767, 64
      %v3210 = vpop.permute.xlu0 %3209
      %3211 = vrot.lane.b32.xlu0 %v2768, 64
      %v3212 = vpop.permute.xlu0 %3211
      %3213 = vrot.lane.b32.xlu0 %v2769, 64
      %v3214 = vpop.permute.xlu0 %3213
      %3215 = vrot.lane.b32.xlu0 %v2770, 64
      %v3216 = vpop.permute.xlu0 %3215
      %3217 = vrot.lane.b32.xlu0 %v2771, 64
      %v3218 = vpop.permute.xlu0 %3217
      %3219 = vrot.lane.b32.xlu0 %v2772, 64
      %v3220 = vpop.permute.xlu0 %3219
      %3285 = vrot.lane.b32.xlu0 %v2805, 64
      %v3286 = vpop.permute.xlu0 %3285
      %3287 = vrot.lane.b32.xlu0 %v2806, 64
      %v3288 = vpop.permute.xlu0 %3287
      %3289 = vrot.lane.b32.xlu0 %v2807, 64
      %v3290 = vpop.permute.xlu0 %3289
      %3291 = vrot.lane.b32.xlu0 %v2808, 64
      %v3292 = vpop.permute.xlu0 %3291
      %3293 = vrot.lane.b32.xlu0 %v2809, 64
      %v3294 = vpop.permute.xlu0 %3293
      %3295 = vrot.lane.b32.xlu0 %v2810, 64
      %v3296 = vpop.permute.xlu0 %3295
      %3297 = vrot.lane.b32.xlu0 %v2811, 64
      %v3298 = vpop.permute.xlu0 %3297
      %3299 = vrot.lane.b32.xlu0 %v2812, 64
      %v3300 = vpop.permute.xlu0 %3299
      %3301 = vrot.lane.b32.xlu0 %v2813, 64
      %v3302 = vpop.permute.xlu0 %3301
      %3303 = vrot.lane.b32.xlu0 %v2814, 64
      %v3304 = vpop.permute.xlu0 %3303
      %3305 = vrot.lane.b32.xlu0 %v2815, 64
      %v3306 = vpop.permute.xlu0 %3305
      %3307 = vrot.lane.b32.xlu0 %v2816, 64
      %v3308 = vpop.permute.xlu0 %3307
      %3309 = vrot.lane.b32.xlu0 %v2817, 64
      %v3310 = vpop.permute.xlu0 %3309
      %3311 = vrot.lane.b32.xlu0 %v2818, 64
      %v3312 = vpop.permute.xlu0 %3311
      %3313 = vrot.lane.b32.xlu0 %v2819, 64
      %v3314 = vpop.permute.xlu0 %3313
      %3315 = vrot.lane.b32.xlu0 %v2820, 64
      %v3316 = vpop.permute.xlu0 %3315
      %3317 = vrot.lane.b32.xlu0 %v2821, 64
      %v3318 = vpop.permute.xlu0 %3317
      %3319 = vrot.lane.b32.xlu0 %v2822, 64
      %v3320 = vpop.permute.xlu0 %3319
      %3321 = vrot.lane.b32.xlu0 %v2823, 64
      %v3322 = vpop.permute.xlu0 %3321
      %3323 = vrot.lane.b32.xlu0 %v2824, 64
      %v3324 = vpop.permute.xlu0 %3323
      %3325 = vrot.lane.b32.xlu0 %v2825, 64
      %v3326 = vpop.permute.xlu0 %3325
      %3327 = vrot.lane.b32.xlu0 %v2826, 64
      %v3328 = vpop.permute.xlu0 %3327
      %3329 = vrot.lane.b32.xlu0 %v2827, 64
      %v3330 = vpop.permute.xlu0 %3329
      %3331 = vrot.lane.b32.xlu0 %v2828, 64
      %v3332 = vpop.permute.xlu0 %3331
      %3333 = vrot.lane.b32.xlu0 %v2829, 64
      %v3334 = vpop.permute.xlu0 %3333
      %3335 = vrot.lane.b32.xlu0 %v2830, 64
      %v3336 = vpop.permute.xlu0 %3335
      %3337 = vrot.lane.b32.xlu0 %v2831, 64
      %v3338 = vpop.permute.xlu0 %3337
      %3339 = vrot.lane.b32.xlu0 %v2832, 64
      %v3340 = vpop.permute.xlu0 %3339
      %3341 = vrot.lane.b32.xlu0 %v2833, 64
      %v3342 = vpop.permute.xlu0 %3341
      %3343 = vrot.lane.b32.xlu0 %v2834, 64
      %v3344 = vpop.permute.xlu0 %3343
      %3345 = vrot.lane.b32.xlu0 %v2835, 64
      %v3346 = vpop.permute.xlu0 %3345
      %3347 = vrot.lane.b32.xlu0 %v2836, 64
      %v3348 = vpop.permute.xlu0 %3347
      %v3381 = vsel %vm288, %v2581, %v2902
      %v3382 = vsel %vm288, %v2582, %v2904
      %v3383 = vsel %vm288, %v2583, %v2906
      %v3384 = vsel %vm288, %v2584, %v2908
      %v3385 = vsel %vm288, %v2585, %v2910
      %v3386 = vsel %vm288, %v2586, %v2912
      %v3387 = vsel %vm288, %v2587, %v2914
      %v3388 = vsel %vm288, %v2588, %v2916
      %v3389 = vsel %vm288, %v2589, %v2918
      %v3390 = vsel %vm288, %v2590, %v2920
      %v3391 = vsel %vm288, %v2591, %v2922
      %v3392 = vsel %vm288, %v2592, %v2924
      %v3393 = vsel %vm288, %v2593, %v2926
      %v3394 = vsel %vm288, %v2594, %v2928
      %v3395 = vsel %vm288, %v2595, %v2930
      %v3396 = vsel %vm288, %v2596, %v2932
      %v3397 = vsel %vm288, %v2597, %v2934
      %v3398 = vsel %vm288, %v2598, %v2936
      %v3399 = vsel %vm288, %v2599, %v2938
      %v3400 = vsel %vm288, %v2600, %v2940
      %v3401 = vsel %vm288, %v2601, %v2942
      %v3402 = vsel %vm288, %v2602, %v2944
      %v3403 = vsel %vm288, %v2603, %v2946
      %v3404 = vsel %vm288, %v2604, %v2948
      %v3405 = vsel %vm288, %v2605, %v2950
      %v3406 = vsel %vm288, %v2606, %v2952
      %v3407 = vsel %vm288, %v2607, %v2954
      %v3408 = vsel %vm288, %v2608, %v2956
      %v3409 = vsel %vm288, %v2609, %v2958
      %v3410 = vsel %vm288, %v2610, %v2960
      %v3411 = vsel %vm288, %v2611, %v2962
      %v3412 = vsel %vm288, %v2612, %v2964
      %v3413 = vsel %vm288, %v2645, %v3030
      %v3414 = vsel %vm288, %v2646, %v3032
      %v3415 = vsel %vm288, %v2647, %v3034
      %v3416 = vsel %vm288, %v2648, %v3036
      %v3417 = vsel %vm288, %v2649, %v3038
      %v3418 = vsel %vm288, %v2650, %v3040
      %v3419 = vsel %vm288, %v2651, %v3042
      %v3420 = vsel %vm288, %v2652, %v3044
      %v3421 = vsel %vm288, %v2653, %v3046
      %v3422 = vsel %vm288, %v2654, %v3048
      %v3423 = vsel %vm288, %v2655, %v3050
      %v3424 = vsel %vm288, %v2656, %v3052
      %v3425 = vsel %vm288, %v2657, %v3054
      %v3426 = vsel %vm288, %v2658, %v3056
      %v3427 = vsel %vm288, %v2659, %v3058
      %v3428 = vsel %vm288, %v2660, %v3060
      %v3429 = vsel %vm288, %v2661, %v3062
      %v3430 = vsel %vm288, %v2662, %v3064
      %v3431 = vsel %vm288, %v2663, %v3066
      %v3432 = vsel %vm288, %v2664, %v3068
      %v3433 = vsel %vm288, %v2665, %v3070
      %v3434 = vsel %vm288, %v2666, %v3072
      %v3435 = vsel %vm288, %v2667, %v3074
      %v3436 = vsel %vm288, %v2668, %v3076
      %v3437 = vsel %vm288, %v2669, %v3078
      %v3438 = vsel %vm288, %v2670, %v3080
      %v3439 = vsel %vm288, %v2671, %v3082
      %v3440 = vsel %vm288, %v2672, %v3084
      %v3441 = vsel %vm288, %v2673, %v3086
      %v3442 = vsel %vm288, %v2674, %v3088
      %v3443 = vsel %vm288, %v2675, %v3090
      %v3444 = vsel %vm288, %v2676, %v3092
      %v3445 = vsel %vm288, %v2709, %v3158
      %v3446 = vsel %vm288, %v2710, %v3160
      %v3447 = vsel %vm288, %v2711, %v3162
      %v3448 = vsel %vm288, %v2712, %v3164
      %v3449 = vsel %vm288, %v2713, %v3166
      %v3450 = vsel %vm288, %v2714, %v3168
      %v3451 = vsel %vm288, %v2715, %v3170
      %v3452 = vsel %vm288, %v2716, %v3172
      %v3453 = vsel %vm288, %v2717, %v3174
      %v3454 = vsel %vm288, %v2718, %v3176
      %v3455 = vsel %vm288, %v2719, %v3178
      %v3456 = vsel %vm288, %v2720, %v3180
      %v3457 = vsel %vm288, %v2721, %v3182
      %v3458 = vsel %vm288, %v2722, %v3184
      %v3459 = vsel %vm288, %v2723, %v3186
      %v3460 = vsel %vm288, %v2724, %v3188
      %v3461 = vsel %vm288, %v2725, %v3190
      %v3462 = vsel %vm288, %v2726, %v3192
      %v3463 = vsel %vm288, %v2727, %v3194
      %v3464 = vsel %vm288, %v2728, %v3196
      %v3465 = vsel %vm288, %v2729, %v3198
      %v3466 = vsel %vm288, %v2730, %v3200
      %v3467 = vsel %vm288, %v2731, %v3202
      %v3468 = vsel %vm288, %v2732, %v3204
      %v3469 = vsel %vm288, %v2733, %v3206
      %v3470 = vsel %vm288, %v2734, %v3208
      %v3471 = vsel %vm288, %v2735, %v3210
      %v3472 = vsel %vm288, %v2736, %v3212
      %v3473 = vsel %vm288, %v2737, %v3214
      %v3474 = vsel %vm288, %v2738, %v3216
      %v3475 = vsel %vm288, %v2739, %v3218
      %v3476 = vsel %vm288, %v2740, %v3220
      %v3477 = vsel %vm288, %v2773, %v3286
      %v3478 = vsel %vm288, %v2774, %v3288
      %v3479 = vsel %vm288, %v2775, %v3290
      %v3480 = vsel %vm288, %v2776, %v3292
      %v3481 = vsel %vm288, %v2777, %v3294
      %v3482 = vsel %vm288, %v2778, %v3296
      %v3483 = vsel %vm288, %v2779, %v3298
      %v3484 = vsel %vm288, %v2780, %v3300
      %v3485 = vsel %vm288, %v2781, %v3302
      %v3486 = vsel %vm288, %v2782, %v3304
      %v3487 = vsel %vm288, %v2783, %v3306
      %v3488 = vsel %vm288, %v2784, %v3308
      %v3489 = vsel %vm288, %v2785, %v3310
      %v3490 = vsel %vm288, %v2786, %v3312
      %v3491 = vsel %vm288, %v2787, %v3314
      %v3492 = vsel %vm288, %v2788, %v3316
      %v3493 = vsel %vm288, %v2789, %v3318
      %v3494 = vsel %vm288, %v2790, %v3320
      %v3495 = vsel %vm288, %v2791, %v3322
      %v3496 = vsel %vm288, %v2792, %v3324
      %v3497 = vsel %vm288, %v2793, %v3326
      %v3498 = vsel %vm288, %v2794, %v3328
      %v3499 = vsel %vm288, %v2795, %v3330
      %v3500 = vsel %vm288, %v2796, %v3332
      %v3501 = vsel %vm288, %v2797, %v3334
      %v3502 = vsel %vm288, %v2798, %v3336
      %v3503 = vsel %vm288, %v2799, %v3338
      %v3504 = vsel %vm288, %v2800, %v3340
      %v3505 = vsel %vm288, %v2801, %v3342
      %v3506 = vsel %vm288, %v2802, %v3344
      %v3507 = vsel %vm288, %v2803, %v3346
      %v3508 = vsel %vm288, %v2804, %v3348
      %v3509 = vpack.c.bf16 %v3382, %v3381
      %v3510 = vpack.c.bf16 %v3414, %v3413
      %v3511 = vpack.c.bf16 %v3446, %v3445
      %v3512 = vpack.c.bf16 %v3478, %v3477
      %v3513 = vpack.c.bf16 %v2838, %v2837
      %v3514 = vpack.c.bf16 %v3384, %v3383
      %v3515 = vpack.c.bf16 %v3416, %v3415
      %v3516 = vpack.c.bf16 %v3448, %v3447
      %v3517 = vpack.c.bf16 %v3480, %v3479
      %v3518 = vpack.c.bf16 %v2840, %v2839
      %v3519 = vpack.c.bf16 %v3386, %v3385
      %v3520 = vpack.c.bf16 %v3418, %v3417
      %v3521 = vpack.c.bf16 %v3450, %v3449
      %v3522 = vpack.c.bf16 %v3482, %v3481
      %v3523 = vpack.c.bf16 %v2842, %v2841
      %v3524 = vpack.c.bf16 %v3388, %v3387
      %v3525 = vpack.c.bf16 %v3420, %v3419
      %v3526 = vpack.c.bf16 %v3452, %v3451
      %v3527 = vpack.c.bf16 %v3484, %v3483
      %v3528 = vpack.c.bf16 %v2844, %v2843
      %v3529 = vpack.c.bf16 %v3390, %v3389
      %v3530 = vpack.c.bf16 %v3422, %v3421
      %v3531 = vpack.c.bf16 %v3454, %v3453
      %v3532 = vpack.c.bf16 %v3486, %v3485
      %v3533 = vpack.c.bf16 %v2846, %v2845
      %v3534 = vpack.c.bf16 %v3392, %v3391
      %v3535 = vpack.c.bf16 %v3424, %v3423
      %v3536 = vpack.c.bf16 %v3456, %v3455
      %v3537 = vpack.c.bf16 %v3488, %v3487
      %v3538 = vpack.c.bf16 %v2848, %v2847
      %v3539 = vpack.c.bf16 %v3394, %v3393
      %v3540 = vpack.c.bf16 %v3426, %v3425
      %v3541 = vpack.c.bf16 %v3458, %v3457
      %v3542 = vpack.c.bf16 %v3490, %v3489
      %v3543 = vpack.c.bf16 %v2850, %v2849
      %v3544 = vpack.c.bf16 %v3396, %v3395
      %v3545 = vpack.c.bf16 %v3428, %v3427
      %v3546 = vpack.c.bf16 %v3460, %v3459
      %v3547 = vpack.c.bf16 %v3492, %v3491
      %v3548 = vpack.c.bf16 %v2852, %v2851
      %v3549 = vpack.c.bf16 %v3398, %v3397
      %v3550 = vpack.c.bf16 %v3430, %v3429
      %v3551 = vpack.c.bf16 %v3462, %v3461
      %v3552 = vpack.c.bf16 %v3494, %v3493
      %v3553 = vpack.c.bf16 %v2854, %v2853
      %v3554 = vpack.c.bf16 %v3400, %v3399
      %v3555 = vpack.c.bf16 %v3432, %v3431
      %v3556 = vpack.c.bf16 %v3464, %v3463
      %v3557 = vpack.c.bf16 %v3496, %v3495
      %v3558 = vpack.c.bf16 %v2856, %v2855
      %v3559 = vpack.c.bf16 %v3402, %v3401
      %v3560 = vpack.c.bf16 %v3434, %v3433
      %v3561 = vpack.c.bf16 %v3466, %v3465
      %v3562 = vpack.c.bf16 %v3498, %v3497
      %v3563 = vpack.c.bf16 %v2858, %v2857
      %v3564 = vpack.c.bf16 %v3404, %v3403
      %v3565 = vpack.c.bf16 %v3436, %v3435
      %v3566 = vpack.c.bf16 %v3468, %v3467
      %v3567 = vpack.c.bf16 %v3500, %v3499
      %v3568 = vpack.c.bf16 %v2860, %v2859
      %v3569 = vpack.c.bf16 %v3406, %v3405
      %v3570 = vpack.c.bf16 %v3438, %v3437
      %v3571 = vpack.c.bf16 %v3470, %v3469
      %v3572 = vpack.c.bf16 %v3502, %v3501
      %v3573 = vpack.c.bf16 %v2862, %v2861
      %v3574 = vpack.c.bf16 %v3408, %v3407
      %v3575 = vpack.c.bf16 %v3440, %v3439
      %v3576 = vpack.c.bf16 %v3472, %v3471
      %v3577 = vpack.c.bf16 %v3504, %v3503
      %v3578 = vpack.c.bf16 %v2864, %v2863
      %v3579 = vpack.c.bf16 %v3410, %v3409
      %v3580 = vpack.c.bf16 %v3442, %v3441
      %v3581 = vpack.c.bf16 %v3474, %v3473
      %v3582 = vpack.c.bf16 %v3506, %v3505
      %v3583 = vpack.c.bf16 %v2866, %v2865
      %v3584 = vpack.c.bf16 %v3412, %v3411
      %v3585 = vpack.c.bf16 %v3444, %v3443
      %v3586 = vpack.c.bf16 %v3476, %v3475
      %v3587 = vpack.c.bf16 %v3508, %v3507
      %v3588 = vpack.c.bf16 %v2868, %v2867
      %v3589 = vld [vmem:[%s5] sm:$0xf]
      %v3590 = vld [vmem:[%s5 + $0x4] sm:$0xf]
      %v3591 = vld [vmem:[%s5 + $0x8] sm:$0xf]
      %v3592 = vld [vmem:[%s5 + $0xc] sm:$0xf]
      %v3593 = vld [vmem:[%s5 + $0x10] sm:$0xf]
      %v3594 = vld [vmem:[%s5 + $0x14] sm:$0xf]
      %v3595 = vld [vmem:[%s5 + $0x18] sm:$0xf]
      %v3596 = vld [vmem:[%s5 + $0x1c] sm:$0xf]
      %v3597 = vld [vmem:[%s5 + $0x20] sm:$0xf]
      %v3598 = vld [vmem:[%s5 + $0x24] sm:$0xf]
      %v3599 = vld [vmem:[%s5 + $0x28] sm:$0xf]
      %v3600 = vld [vmem:[%s5 + $0x2c] sm:$0xf]
      %v3601 = vld [vmem:[%s5 + $0x30] sm:$0xf]
      %v3602 = vld [vmem:[%s5 + $0x34] sm:$0xf]
      %v3603 = vld [vmem:[%s5 + $0x38] sm:$0xf]
      %v3604 = vld [vmem:[%s5 + $0x3c] sm:$0xf]
      %v3605 = vld [vmem:[%s5 + $0x40] sm:$0xf]
      %v3606 = vld [vmem:[%s5 + $0x44] sm:$0xf]
      %v3607 = vld [vmem:[%s5 + $0x48] sm:$0xf]
      %v3608 = vld [vmem:[%s5 + $0x4c] sm:$0xf]
      %v3609 = vld [vmem:[%s5 + $0x50] sm:$0xf]
      %v3610 = vld [vmem:[%s5 + $0x54] sm:$0xf]
      %v3611 = vld [vmem:[%s5 + $0x58] sm:$0xf]
      %v3612 = vld [vmem:[%s5 + $0x5c] sm:$0xf]
      %v3613 = vld [vmem:[%s5 + $0x60] sm:$0xf]
      %v3614 = vld [vmem:[%s5 + $0x64] sm:$0xf]
      %v3615 = vld [vmem:[%s5 + $0x68] sm:$0xf]
      %v3616 = vld [vmem:[%s5 + $0x6c] sm:$0xf]
      %v3617 = vld [vmem:[%s5 + $0x70] sm:$0xf]
      %v3618 = vld [vmem:[%s5 + $0x74] sm:$0xf]
      %v3619 = vld [vmem:[%s5 + $0x78] sm:$0xf]
      %v3620 = vld [vmem:[%s5 + $0x7c] sm:$0xf]
      %v3621 = vld [vmem:[%s5 + $0x80] sm:$0xf]
      %v3622 = vld [vmem:[%s5 + $0x84] sm:$0xf]
      %v3623 = vld [vmem:[%s5 + $0x88] sm:$0xf]
      %v3624 = vld [vmem:[%s5 + $0x8c] sm:$0xf]
      %v3625 = vld [vmem:[%s5 + $0x90] sm:$0xf]
      %v3626 = vld [vmem:[%s5 + $0x94] sm:$0xf]
      %v3627 = vld [vmem:[%s5 + $0x98] sm:$0xf]
      %v3628 = vld [vmem:[%s5 + $0x9c] sm:$0xf]
      %v3629 = vld [vmem:[%s5 + $0xa0] sm:$0xf]
      %v3630 = vld [vmem:[%s5 + $0xa4] sm:$0xf]
      %v3631 = vld [vmem:[%s5 + $0xa8] sm:$0xf]
      %v3632 = vld [vmem:[%s5 + $0xac] sm:$0xf]
      %v3633 = vld [vmem:[%s5 + $0xb0] sm:$0xf]
      %v3634 = vld [vmem:[%s5 + $0xb4] sm:$0xf]
      %v3635 = vld [vmem:[%s5 + $0xb8] sm:$0xf]
      %v3636 = vld [vmem:[%s5 + $0xbc] sm:$0xf]
      %v3637 = vld [vmem:[%s5 + $0xc0] sm:$0xf]
      %v3638 = vld [vmem:[%s5 + $0xc4] sm:$0xf]
      %v3639 = vld [vmem:[%s5 + $0xc8] sm:$0xf]
      %v3640 = vld [vmem:[%s5 + $0xcc] sm:$0xf]
      %v3641 = vld [vmem:[%s5 + $0xd0] sm:$0xf]
      %v3642 = vld [vmem:[%s5 + $0xd4] sm:$0xf]
      %v3643 = vld [vmem:[%s5 + $0xd8] sm:$0xf]
      %v3644 = vld [vmem:[%s5 + $0xdc] sm:$0xf]
      %v3645 = vld [vmem:[%s5 + $0xe0] sm:$0xf]
      %v3646 = vld [vmem:[%s5 + $0xe4] sm:$0xf]
      %v3647 = vld [vmem:[%s5 + $0xe8] sm:$0xf]
      %v3648 = vld [vmem:[%s5 + $0xec] sm:$0xf]
      %v3649 = vld [vmem:[%s5 + $0xf0] sm:$0xf]
      %v3650 = vld [vmem:[%s5 + $0xf4] sm:$0xf]
      %v3651 = vld [vmem:[%s5 + $0xf8] sm:$0xf]
      %v3652 = vld [vmem:[%s5 + $0xfc] sm:$0xf]
      %v3653 = vld [vmem:[%s5 + $0x100] sm:$0xf]
      %v3654 = vld [vmem:[%s5 + $0x104] sm:$0xf]
      %v3655 = vld [vmem:[%s5 + $0x108] sm:$0xf]
      %v3656 = vld [vmem:[%s5 + $0x10c] sm:$0xf]
      %v3657 = vld [vmem:[%s5 + $0x110] sm:$0xf]
      %v3658 = vld [vmem:[%s5 + $0x114] sm:$0xf]
      %v3659 = vld [vmem:[%s5 + $0x118] sm:$0xf]
      %v3660 = vld [vmem:[%s5 + $0x11c] sm:$0xf]
      %v3661 = vld [vmem:[%s6] sm:$0x1]
      %v3663 = vperm.slane %v3661, 0
      %v3737 = vunpack.c.l.b16 %v3589
      %v3738 = vunpack.c.l.b16 %v3590
      %v3739 = vunpack.c.l.b16 %v3591
      %v3740 = vunpack.c.l.b16 %v3592
      %v3741 = vunpack.c.l.b16 %v3593
      %v3742 = vunpack.c.l.b16 %v3594
      %v3743 = vunpack.c.l.b16 %v3595
      %v3744 = vunpack.c.l.b16 %v3596
      %v3745 = vunpack.c.l.b16 %v3597
      %v3746 = vunpack.c.l.b16 %v3598
      %v3747 = vunpack.c.l.b16 %v3599
      %v3748 = vunpack.c.l.b16 %v3600
      %v3749 = vunpack.c.l.b16 %v3601
      %v3750 = vunpack.c.l.b16 %v3602
      %v3751 = vunpack.c.l.b16 %v3603
      %v3752 = vunpack.c.l.b16 %v3604
      %v3753 = vunpack.c.l.b16 %v3605
      %v3754 = vunpack.c.l.b16 %v3606
      %v3755 = vunpack.c.l.b16 %v3607
      %v3756 = vunpack.c.l.b16 %v3608
      %v3757 = vunpack.c.l.b16 %v3609
      %v3758 = vunpack.c.l.b16 %v3610
      %v3759 = vunpack.c.l.b16 %v3611
      %v3760 = vunpack.c.l.b16 %v3612
      %v3761 = vunpack.c.l.b16 %v3613
      %v3762 = vunpack.c.l.b16 %v3614
      %v3763 = vunpack.c.l.b16 %v3615
      %v3764 = vunpack.c.l.b16 %v3616
      %v3765 = vunpack.c.l.b16 %v3617
      %v3766 = vunpack.c.l.b16 %v3618
      %v3767 = vunpack.c.l.b16 %v3619
      %v3768 = vunpack.c.l.b16 %v3620
      %v3769 = vunpack.c.l.b16 %v3621
      %v3770 = vunpack.c.l.b16 %v3622
      %v3771 = vunpack.c.l.b16 %v3623
      %v3772 = vunpack.c.l.b16 %v3624
      %v3773 = vunpack.c.l.b16 %v3625
      %v3774 = vunpack.c.l.b16 %v3626
      %v3775 = vunpack.c.l.b16 %v3627
      %v3776 = vunpack.c.l.b16 %v3628
      %v3777 = vunpack.c.l.b16 %v3629
      %v3778 = vunpack.c.l.b16 %v3630
      %v3779 = vunpack.c.l.b16 %v3631
      %v3780 = vunpack.c.l.b16 %v3632
      %v3781 = vunpack.c.l.b16 %v3633
      %v3782 = vunpack.c.l.b16 %v3634
      %v3783 = vunpack.c.l.b16 %v3635
      %v3784 = vunpack.c.l.b16 %v3636
      %v3785 = vunpack.c.l.b16 %v3637
      %v3786 = vunpack.c.l.b16 %v3638
      %v3787 = vunpack.c.l.b16 %v3639
      %v3788 = vunpack.c.l.b16 %v3640
      %v3789 = vunpack.c.l.b16 %v3641
      %v3790 = vunpack.c.l.b16 %v3642
      %v3791 = vunpack.c.l.b16 %v3643
      %v3792 = vunpack.c.l.b16 %v3644
      %v3793 = vunpack.c.l.b16 %v3645
      %v3794 = vunpack.c.l.b16 %v3646
      %v3795 = vunpack.c.l.b16 %v3647
      %v3796 = vunpack.c.l.b16 %v3648
      %v3797 = vunpack.c.l.b16 %v3649
      %v3798 = vunpack.c.l.b16 %v3650
      %v3799 = vunpack.c.l.b16 %v3651
      %v3800 = vunpack.c.l.b16 %v3652
      %v3801 = vunpack.c.l.b16 %v3653
      %v3802 = vunpack.c.l.b16 %v3654
      %v3803 = vunpack.c.l.b16 %v3655
      %v3804 = vunpack.c.l.b16 %v3656
      %v3805 = vunpack.c.l.b16 %v3657
      %v3806 = vunpack.c.l.b16 %v3658
      %v3807 = vunpack.c.l.b16 %v3659
      %v3808 = vunpack.c.l.b16 %v3660
      %v3809 = vpack.c.b16 %v3738, %v3737
      %v3810 = vpack.c.b16 %v3740, %v3739
      %v3811 = vpack.c.b16 %v3742, %v3741
      %v3812 = vpack.c.b16 %v3744, %v3743
      %v3813 = vpack.c.b16 %v3746, %v3745
      %v3814 = vpack.c.b16 %v3748, %v3747
      %v3815 = vpack.c.b16 %v3750, %v3749
      %v3816 = vpack.c.b16 %v3752, %v3751
      %v3817 = vpack.c.b16 %v3754, %v3753
      %v3818 = vpack.c.b16 %v3756, %v3755
      %v3819 = vpack.c.b16 %v3758, %v3757
      %v3820 = vpack.c.b16 %v3760, %v3759
      %v3821 = vpack.c.b16 %v3762, %v3761
      %v3822 = vpack.c.b16 %v3764, %v3763
      %v3823 = vpack.c.b16 %v3766, %v3765
      %v3824 = vpack.c.b16 %v3768, %v3767
      %v3825 = vpack.c.b16 %v3770, %v3769
      %v3826 = vpack.c.b16 %v3772, %v3771
      %v3827 = vpack.c.b16 %v3774, %v3773
      %v3828 = vpack.c.b16 %v3776, %v3775
      %v3829 = vpack.c.b16 %v3778, %v3777
      %v3830 = vpack.c.b16 %v3780, %v3779
      %v3831 = vpack.c.b16 %v3782, %v3781
      %v3832 = vpack.c.b16 %v3784, %v3783
      %v3833 = vpack.c.b16 %v3786, %v3785
      %v3834 = vpack.c.b16 %v3788, %v3787
      %v3835 = vpack.c.b16 %v3790, %v3789
      %v3836 = vpack.c.b16 %v3792, %v3791
      %v3837 = vpack.c.b16 %v3794, %v3793
      %v3838 = vpack.c.b16 %v3796, %v3795
      %v3839 = vpack.c.b16 %v3798, %v3797
      %v3840 = vpack.c.b16 %v3800, %v3799
      %v3841 = vpack.c.b16 %v3802, %v3801
      %v3842 = vpack.c.b16 %v3804, %v3803
      %v3843 = vpack.c.b16 %v3806, %v3805
      %v3844 = vpack.c.b16 %v3808, %v3807
      %v3882 = vsel %vm288, %v3513, 0
      %v3885 = vsel %vm288, %v3518, 0
      %v3888 = vsel %vm288, %v3523, 0
      %v3891 = vsel %vm288, %v3528, 0
      %v3894 = vsel %vm288, %v3533, 0
      %v3897 = vsel %vm288, %v3538, 0
      %v3900 = vsel %vm288, %v3543, 0
      %v3903 = vsel %vm288, %v3548, 0
      %v3906 = vsel %vm288, %v3553, 0
      %v3909 = vsel %vm288, %v3558, 0
      %v3912 = vsel %vm288, %v3563, 0
      %v3915 = vsel %vm288, %v3568, 0
      %v3918 = vsel %vm288, %v3573, 0
      %v3921 = vsel %vm288, %v3578, 0
      %v3924 = vsel %vm288, %v3583, 0
      %v3927 = vsel %vm288, %v3588, 0
      %3929 = vmatpush.bf16.msra.mxu0 %v3816
      %3930 = vmatpush.bf16.msra.mxu0 %v3815
      %3931 = vmatpush.bf16.msra.mxu0 %v3814
      %3932 = vmatpush.bf16.msra.mxu0 %v3813
      %3933 = vmatpush.bf16.msra.mxu0 %v3812
      %3934 = vmatpush.bf16.msra.mxu0 %v3811
      %3935 = vmatpush.bf16.msra.mxu0 %v3810
      %3936 = vmatpush.bf16.msra.mxu0 %v3809
      %3937 = vmatmul.bf16.gmra.mxu0 %v3509
      %v3938 = vpop.f32.mrf.mxu0
      %v3939 = vadd.f32 %v3663, %v3938
      %v3940 = vpop.f32.mrf.mxu0
      %v3941 = vadd.f32 %v3663, %v3940
      %3942 = vmatmul.bf16.gmra.mxu0 %v3514
      %v3943 = vpop.f32.mrf.mxu0
      %v3944 = vadd.f32 %v3663, %v3943
      %v3945 = vpop.f32.mrf.mxu0
      %v3946 = vadd.f32 %v3663, %v3945
      %3947 = vmatmul.bf16.gmra.mxu0 %v3519
      %v3948 = vpop.f32.mrf.mxu0
      %v3949 = vadd.f32 %v3663, %v3948
      %v3950 = vpop.f32.mrf.mxu0
      %v3951 = vadd.f32 %v3663, %v3950
      %3952 = vmatmul.bf16.gmra.mxu0 %v3524
      %v3953 = vpop.f32.mrf.mxu0
      %v3954 = vadd.f32 %v3663, %v3953
      %v3955 = vpop.f32.mrf.mxu0
      %v3956 = vadd.f32 %v3663, %v3955
      %3957 = vmatmul.bf16.gmra.mxu0 %v3529
      %v3958 = vpop.f32.mrf.mxu0
      %v3959 = vadd.f32 %v3663, %v3958
      %v3960 = vpop.f32.mrf.mxu0
      %v3961 = vadd.f32 %v3663, %v3960
      %3962 = vmatmul.bf16.gmra.mxu0 %v3534
      %v3963 = vpop.f32.mrf.mxu0
      %v3964 = vadd.f32 %v3663, %v3963
      %v3965 = vpop.f32.mrf.mxu0
      %v3966 = vadd.f32 %v3663, %v3965
      %3967 = vmatmul.bf16.gmra.mxu0 %v3539
      %v3968 = vpop.f32.mrf.mxu0
      %v3969 = vadd.f32 %v3663, %v3968
      %v3970 = vpop.f32.mrf.mxu0
      %v3971 = vadd.f32 %v3663, %v3970
      %3972 = vmatmul.bf16.gmra.mxu0 %v3544
      %v3973 = vpop.f32.mrf.mxu0
      %v3974 = vadd.f32 %v3663, %v3973
      %v3975 = vpop.f32.mrf.mxu0
      %v3976 = vadd.f32 %v3663, %v3975
      %3977 = vmatmul.bf16.gmra.mxu0 %v3549
      %v3978 = vpop.f32.mrf.mxu0
      %v3979 = vadd.f32 %v3663, %v3978
      %v3980 = vpop.f32.mrf.mxu0
      %v3981 = vadd.f32 %v3663, %v3980
      %3982 = vmatmul.bf16.gmra.mxu0 %v3554
      %v3983 = vpop.f32.mrf.mxu0
      %v3984 = vadd.f32 %v3663, %v3983
      %v3985 = vpop.f32.mrf.mxu0
      %v3986 = vadd.f32 %v3663, %v3985
      %3987 = vmatmul.bf16.gmra.mxu0 %v3559
      %v3988 = vpop.f32.mrf.mxu0
      %v3989 = vadd.f32 %v3663, %v3988
      %v3990 = vpop.f32.mrf.mxu0
      %v3991 = vadd.f32 %v3663, %v3990
      %3992 = vmatmul.bf16.gmra.mxu0 %v3564
      %v3993 = vpop.f32.mrf.mxu0
      %v3994 = vadd.f32 %v3663, %v3993
      %v3995 = vpop.f32.mrf.mxu0
      %v3996 = vadd.f32 %v3663, %v3995
      %3997 = vmatmul.bf16.gmra.mxu0 %v3569
      %v3998 = vpop.f32.mrf.mxu0
      %v3999 = vadd.f32 %v3663, %v3998
      %v4000 = vpop.f32.mrf.mxu0
      %v4001 = vadd.f32 %v3663, %v4000
      %4002 = vmatmul.bf16.gmra.mxu0 %v3574
      %v4003 = vpop.f32.mrf.mxu0
      %v4004 = vadd.f32 %v3663, %v4003
      %v4005 = vpop.f32.mrf.mxu0
      %v4006 = vadd.f32 %v3663, %v4005
      %4007 = vmatmul.bf16.gmra.mxu0 %v3579
      %v4008 = vpop.f32.mrf.mxu0
      %v4009 = vadd.f32 %v3663, %v4008
      %v4010 = vpop.f32.mrf.mxu0
      %v4011 = vadd.f32 %v3663, %v4010
      %4012 = vmatmul.bf16.gmra.mxu0 %v3584
      %v4013 = vpop.f32.mrf.mxu0
      %v4014 = vadd.f32 %v3663, %v4013
      %v4015 = vpop.f32.mrf.mxu0
      %v4016 = vadd.f32 %v3663, %v4015
      %4017 = vdwg.mxu0
      %4018 = vmatpush.bf16.msra.mxu0 %v3824
      %4019 = vmatpush.bf16.msra.mxu0 %v3823
      %4020 = vmatpush.bf16.msra.mxu0 %v3822
      %4021 = vmatpush.bf16.msra.mxu0 %v3821
      %4022 = vmatpush.bf16.msra.mxu0 %v3820
      %4023 = vmatpush.bf16.msra.mxu0 %v3819
      %4024 = vmatpush.bf16.msra.mxu0 %v3818
      %4025 = vmatpush.bf16.msra.mxu0 %v3817
      %4026 = vmatmul.bf16.gmra.mxu0 %v3510
      %v4027 = vpop.f32.mrf.mxu0
      %v4028 = vadd.f32 %v3939, %v4027
      %v4029 = vpop.f32.mrf.mxu0
      %v4030 = vadd.f32 %v3941, %v4029
      %4031 = vmatmul.bf16.gmra.mxu0 %v3515
      %v4032 = vpop.f32.mrf.mxu0
      %v4033 = vadd.f32 %v3944, %v4032
      %v4034 = vpop.f32.mrf.mxu0
      %v4035 = vadd.f32 %v3946, %v4034
      %4036 = vmatmul.bf16.gmra.mxu0 %v3520
      %v4037 = vpop.f32.mrf.mxu0
      %v4038 = vadd.f32 %v3949, %v4037
      %v4039 = vpop.f32.mrf.mxu0
      %v4040 = vadd.f32 %v3951, %v4039
      %4041 = vmatmul.bf16.gmra.mxu0 %v3525
      %v4042 = vpop.f32.mrf.mxu0
      %v4043 = vadd.f32 %v3954, %v4042
      %v4044 = vpop.f32.mrf.mxu0
      %v4045 = vadd.f32 %v3956, %v4044
      %4046 = vmatmul.bf16.gmra.mxu0 %v3530
      %v4047 = vpop.f32.mrf.mxu0
      %v4048 = vadd.f32 %v3959, %v4047
      %v4049 = vpop.f32.mrf.mxu0
      %v4050 = vadd.f32 %v3961, %v4049
      %4051 = vmatmul.bf16.gmra.mxu0 %v3535
      %v4052 = vpop.f32.mrf.mxu0
      %v4053 = vadd.f32 %v3964, %v4052
      %v4054 = vpop.f32.mrf.mxu0
      %v4055 = vadd.f32 %v3966, %v4054
      %4056 = vmatmul.bf16.gmra.mxu0 %v3540
      %v4057 = vpop.f32.mrf.mxu0
      %v4058 = vadd.f32 %v3969, %v4057
      %v4059 = vpop.f32.mrf.mxu0
      %v4060 = vadd.f32 %v3971, %v4059
      %4061 = vmatmul.bf16.gmra.mxu0 %v3545
      %v4062 = vpop.f32.mrf.mxu0
      %v4063 = vadd.f32 %v3974, %v4062
      %v4064 = vpop.f32.mrf.mxu0
      %v4065 = vadd.f32 %v3976, %v4064
      %4066 = vmatmul.bf16.gmra.mxu0 %v3550
      %v4067 = vpop.f32.mrf.mxu0
      %v4068 = vadd.f32 %v3979, %v4067
      %v4069 = vpop.f32.mrf.mxu0
      %v4070 = vadd.f32 %v3981, %v4069
      %4071 = vmatmul.bf16.gmra.mxu0 %v3555
      %v4072 = vpop.f32.mrf.mxu0
      %v4073 = vadd.f32 %v3984, %v4072
      %v4074 = vpop.f32.mrf.mxu0
      %v4075 = vadd.f32 %v3986, %v4074
      %4076 = vmatmul.bf16.gmra.mxu0 %v3560
      %v4077 = vpop.f32.mrf.mxu0
      %v4078 = vadd.f32 %v3989, %v4077
      %v4079 = vpop.f32.mrf.mxu0
      %v4080 = vadd.f32 %v3991, %v4079
      %4081 = vmatmul.bf16.gmra.mxu0 %v3565
      %v4082 = vpop.f32.mrf.mxu0
      %v4083 = vadd.f32 %v3994, %v4082
      %v4084 = vpop.f32.mrf.mxu0
      %v4085 = vadd.f32 %v3996, %v4084
      %4086 = vmatmul.bf16.gmra.mxu0 %v3570
      %v4087 = vpop.f32.mrf.mxu0
      %v4088 = vadd.f32 %v3999, %v4087
      %v4089 = vpop.f32.mrf.mxu0
      %v4090 = vadd.f32 %v4001, %v4089
      %4091 = vmatmul.bf16.gmra.mxu0 %v3575
      %v4092 = vpop.f32.mrf.mxu0
      %v4093 = vadd.f32 %v4004, %v4092
      %v4094 = vpop.f32.mrf.mxu0
      %v4095 = vadd.f32 %v4006, %v4094
      %4096 = vmatmul.bf16.gmra.mxu0 %v3580
      %v4097 = vpop.f32.mrf.mxu0
      %v4098 = vadd.f32 %v4009, %v4097
      %v4099 = vpop.f32.mrf.mxu0
      %v4100 = vadd.f32 %v4011, %v4099
      %4101 = vmatmul.bf16.gmra.mxu0 %v3585
      %v4102 = vpop.f32.mrf.mxu0
      %v4103 = vadd.f32 %v4014, %v4102
      %v4104 = vpop.f32.mrf.mxu0
      %v4105 = vadd.f32 %v4016, %v4104
      %4106 = vdwg.mxu0
      %4107 = vmatpush.bf16.msra.mxu0 %v3832
      %4108 = vmatpush.bf16.msra.mxu0 %v3831
      %4109 = vmatpush.bf16.msra.mxu0 %v3830
      %4110 = vmatpush.bf16.msra.mxu0 %v3829
      %4111 = vmatpush.bf16.msra.mxu0 %v3828
      %4112 = vmatpush.bf16.msra.mxu0 %v3827
      %4113 = vmatpush.bf16.msra.mxu0 %v3826
      %4114 = vmatpush.bf16.msra.mxu0 %v3825
      %4115 = vmatmul.bf16.gmra.mxu0 %v3511
      %v4116 = vpop.f32.mrf.mxu0
      %v4117 = vadd.f32 %v4028, %v4116
      %v4118 = vpop.f32.mrf.mxu0
      %v4119 = vadd.f32 %v4030, %v4118
      %4120 = vmatmul.bf16.gmra.mxu0 %v3516
      %v4121 = vpop.f32.mrf.mxu0
      %v4122 = vadd.f32 %v4033, %v4121
      %v4123 = vpop.f32.mrf.mxu0
      %v4124 = vadd.f32 %v4035, %v4123
      %4125 = vmatmul.bf16.gmra.mxu0 %v3521
      %v4126 = vpop.f32.mrf.mxu0
      %v4127 = vadd.f32 %v4038, %v4126
      %v4128 = vpop.f32.mrf.mxu0
      %v4129 = vadd.f32 %v4040, %v4128
      %4130 = vmatmul.bf16.gmra.mxu0 %v3526
      %v4131 = vpop.f32.mrf.mxu0
      %v4132 = vadd.f32 %v4043, %v4131
      %v4133 = vpop.f32.mrf.mxu0
      %v4134 = vadd.f32 %v4045, %v4133
      %4135 = vmatmul.bf16.gmra.mxu0 %v3531
      %v4136 = vpop.f32.mrf.mxu0
      %v4137 = vadd.f32 %v4048, %v4136
      %v4138 = vpop.f32.mrf.mxu0
      %v4139 = vadd.f32 %v4050, %v4138
      %4140 = vmatmul.bf16.gmra.mxu0 %v3536
      %v4141 = vpop.f32.mrf.mxu0
      %v4142 = vadd.f32 %v4053, %v4141
      %v4143 = vpop.f32.mrf.mxu0
      %v4144 = vadd.f32 %v4055, %v4143
      %4145 = vmatmul.bf16.gmra.mxu0 %v3541
      %v4146 = vpop.f32.mrf.mxu0
      %v4147 = vadd.f32 %v4058, %v4146
      %v4148 = vpop.f32.mrf.mxu0
      %v4149 = vadd.f32 %v4060, %v4148
      %4150 = vmatmul.bf16.gmra.mxu0 %v3546
      %v4151 = vpop.f32.mrf.mxu0
      %v4152 = vadd.f32 %v4063, %v4151
      %v4153 = vpop.f32.mrf.mxu0
      %v4154 = vadd.f32 %v4065, %v4153
      %4155 = vmatmul.bf16.gmra.mxu0 %v3551
      %v4156 = vpop.f32.mrf.mxu0
      %v4157 = vadd.f32 %v4068, %v4156
      %v4158 = vpop.f32.mrf.mxu0
      %v4159 = vadd.f32 %v4070, %v4158
      %4160 = vmatmul.bf16.gmra.mxu0 %v3556
      %v4161 = vpop.f32.mrf.mxu0
      %v4162 = vadd.f32 %v4073, %v4161
      %v4163 = vpop.f32.mrf.mxu0
      %v4164 = vadd.f32 %v4075, %v4163
      %4165 = vmatmul.bf16.gmra.mxu0 %v3561
      %v4166 = vpop.f32.mrf.mxu0
      %v4167 = vadd.f32 %v4078, %v4166
      %v4168 = vpop.f32.mrf.mxu0
      %v4169 = vadd.f32 %v4080, %v4168
      %4170 = vmatmul.bf16.gmra.mxu0 %v3566
      %v4171 = vpop.f32.mrf.mxu0
      %v4172 = vadd.f32 %v4083, %v4171
      %v4173 = vpop.f32.mrf.mxu0
      %v4174 = vadd.f32 %v4085, %v4173
      %4175 = vmatmul.bf16.gmra.mxu0 %v3571
      %v4176 = vpop.f32.mrf.mxu0
      %v4177 = vadd.f32 %v4088, %v4176
      %v4178 = vpop.f32.mrf.mxu0
      %v4179 = vadd.f32 %v4090, %v4178
      %4180 = vmatmul.bf16.gmra.mxu0 %v3576
      %v4181 = vpop.f32.mrf.mxu0
      %v4182 = vadd.f32 %v4093, %v4181
      %v4183 = vpop.f32.mrf.mxu0
      %v4184 = vadd.f32 %v4095, %v4183
      %4185 = vmatmul.bf16.gmra.mxu0 %v3581
      %v4186 = vpop.f32.mrf.mxu0
      %v4187 = vadd.f32 %v4098, %v4186
      %v4188 = vpop.f32.mrf.mxu0
      %v4189 = vadd.f32 %v4100, %v4188
      %4190 = vmatmul.bf16.gmra.mxu0 %v3586
      %v4191 = vpop.f32.mrf.mxu0
      %v4192 = vadd.f32 %v4103, %v4191
      %v4193 = vpop.f32.mrf.mxu0
      %v4194 = vadd.f32 %v4105, %v4193
      %4195 = vdwg.mxu0
      %4196 = vmatpush.bf16.msra.mxu0 %v3840
      %4197 = vmatpush.bf16.msra.mxu0 %v3839
      %4198 = vmatpush.bf16.msra.mxu0 %v3838
      %4199 = vmatpush.bf16.msra.mxu0 %v3837
      %4200 = vmatpush.bf16.msra.mxu0 %v3836
      %4201 = vmatpush.bf16.msra.mxu0 %v3835
      %4202 = vmatpush.bf16.msra.mxu0 %v3834
      %4203 = vmatpush.bf16.msra.mxu0 %v3833
      %4204 = vmatmul.bf16.gmra.mxu0 %v3512
      %v4205 = vpop.f32.mrf.mxu0
      %v4206 = vadd.f32 %v4117, %v4205
      %v4207 = vpop.f32.mrf.mxu0
      %v4208 = vadd.f32 %v4119, %v4207
      %4209 = vmatmul.bf16.gmra.mxu0 %v3517
      %v4210 = vpop.f32.mrf.mxu0
      %v4211 = vadd.f32 %v4122, %v4210
      %v4212 = vpop.f32.mrf.mxu0
      %v4213 = vadd.f32 %v4124, %v4212
      %4214 = vmatmul.bf16.gmra.mxu0 %v3522
      %v4215 = vpop.f32.mrf.mxu0
      %v4216 = vadd.f32 %v4127, %v4215
      %v4217 = vpop.f32.mrf.mxu0
      %v4218 = vadd.f32 %v4129, %v4217
      %4219 = vmatmul.bf16.gmra.mxu0 %v3527
      %v4220 = vpop.f32.mrf.mxu0
      %v4221 = vadd.f32 %v4132, %v4220
      %v4222 = vpop.f32.mrf.mxu0
      %v4223 = vadd.f32 %v4134, %v4222
      %4224 = vmatmul.bf16.gmra.mxu0 %v3532
      %v4225 = vpop.f32.mrf.mxu0
      %v4226 = vadd.f32 %v4137, %v4225
      %v4227 = vpop.f32.mrf.mxu0
      %v4228 = vadd.f32 %v4139, %v4227
      %4229 = vmatmul.bf16.gmra.mxu0 %v3537
      %v4230 = vpop.f32.mrf.mxu0
      %v4231 = vadd.f32 %v4142, %v4230
      %v4232 = vpop.f32.mrf.mxu0
      %v4233 = vadd.f32 %v4144, %v4232
      %4234 = vmatmul.bf16.gmra.mxu0 %v3542
      %v4235 = vpop.f32.mrf.mxu0
      %v4236 = vadd.f32 %v4147, %v4235
      %v4237 = vpop.f32.mrf.mxu0
      %v4238 = vadd.f32 %v4149, %v4237
      %4239 = vmatmul.bf16.gmra.mxu0 %v3547
      %v4240 = vpop.f32.mrf.mxu0
      %v4241 = vadd.f32 %v4152, %v4240
      %v4242 = vpop.f32.mrf.mxu0
      %v4243 = vadd.f32 %v4154, %v4242
      %4244 = vmatmul.bf16.gmra.mxu0 %v3552
      %v4245 = vpop.f32.mrf.mxu0
      %v4246 = vadd.f32 %v4157, %v4245
      %v4247 = vpop.f32.mrf.mxu0
      %v4248 = vadd.f32 %v4159, %v4247
      %4249 = vmatmul.bf16.gmra.mxu0 %v3557
      %v4250 = vpop.f32.mrf.mxu0
      %v4251 = vadd.f32 %v4162, %v4250
      %v4252 = vpop.f32.mrf.mxu0
      %v4253 = vadd.f32 %v4164, %v4252
      %4254 = vmatmul.bf16.gmra.mxu0 %v3562
      %v4255 = vpop.f32.mrf.mxu0
      %v4256 = vadd.f32 %v4167, %v4255
      %v4257 = vpop.f32.mrf.mxu0
      %v4258 = vadd.f32 %v4169, %v4257
      %4259 = vmatmul.bf16.gmra.mxu0 %v3567
      %v4260 = vpop.f32.mrf.mxu0
      %v4261 = vadd.f32 %v4172, %v4260
      %v4262 = vpop.f32.mrf.mxu0
      %v4263 = vadd.f32 %v4174, %v4262
      %4264 = vmatmul.bf16.gmra.mxu0 %v3572
      %v4265 = vpop.f32.mrf.mxu0
      %v4266 = vadd.f32 %v4177, %v4265
      %v4267 = vpop.f32.mrf.mxu0
      %v4268 = vadd.f32 %v4179, %v4267
      %4269 = vmatmul.bf16.gmra.mxu0 %v3577
      %v4270 = vpop.f32.mrf.mxu0
      %v4271 = vadd.f32 %v4182, %v4270
      %v4272 = vpop.f32.mrf.mxu0
      %v4273 = vadd.f32 %v4184, %v4272
      %4274 = vmatmul.bf16.gmra.mxu0 %v3582
      %v4275 = vpop.f32.mrf.mxu0
      %v4276 = vadd.f32 %v4187, %v4275
      %v4277 = vpop.f32.mrf.mxu0
      %v4278 = vadd.f32 %v4189, %v4277
      %4279 = vmatmul.bf16.gmra.mxu0 %v3587
      %v4280 = vpop.f32.mrf.mxu0
      %v4281 = vadd.f32 %v4192, %v4280
      %v4282 = vpop.f32.mrf.mxu0
      %v4283 = vadd.f32 %v4194, %v4282
      %4284 = vdwg.mxu0
      %4285 = vmatpush.bf16.msra.mxu0 0
      %4286 = vmatpush.bf16.msra.mxu0 0
      %4287 = vmatpush.bf16.msra.mxu0 0
      %4288 = vmatpush.bf16.msra.mxu0 0
      %4289 = vmatpush.bf16.msra.mxu0 %v3844
      %4290 = vmatpush.bf16.msra.mxu0 %v3843
      %4291 = vmatpush.bf16.msra.mxu0 %v3842
      %4292 = vmatpush.bf16.msra.mxu0 %v3841
      %4293 = vmatmul.bf16.gmra.mxu0 %v3882
      %v4294 = vpop.f32.mrf.mxu0
      %v4295 = vadd.f32 %v4206, %v4294
      %v4296 = vpop.f32.mrf.mxu0
      %v4297 = vadd.f32 %v4208, %v4296
      %4298 = vmatmul.bf16.gmra.mxu0 %v3885
      %v4299 = vpop.f32.mrf.mxu0
      %v4300 = vadd.f32 %v4211, %v4299
      %v4301 = vpop.f32.mrf.mxu0
      %v4302 = vadd.f32 %v4213, %v4301
      %4303 = vmatmul.bf16.gmra.mxu0 %v3888
      %v4304 = vpop.f32.mrf.mxu0
      %v4305 = vadd.f32 %v4216, %v4304
      %v4306 = vpop.f32.mrf.mxu0
      %v4307 = vadd.f32 %v4218, %v4306
      %4308 = vmatmul.bf16.gmra.mxu0 %v3891
      %v4309 = vpop.f32.mrf.mxu0
      %v4310 = vadd.f32 %v4221, %v4309
      %v4311 = vpop.f32.mrf.mxu0
      %v4312 = vadd.f32 %v4223, %v4311
      %4313 = vmatmul.bf16.gmra.mxu0 %v3894
      %v4314 = vpop.f32.mrf.mxu0
      %v4315 = vadd.f32 %v4226, %v4314
      %v4316 = vpop.f32.mrf.mxu0
      %v4317 = vadd.f32 %v4228, %v4316
      %4318 = vmatmul.bf16.gmra.mxu0 %v3897
      %v4319 = vpop.f32.mrf.mxu0
      %v4320 = vadd.f32 %v4231, %v4319
      %v4321 = vpop.f32.mrf.mxu0
      %v4322 = vadd.f32 %v4233, %v4321
      %4323 = vmatmul.bf16.gmra.mxu0 %v3900
      %v4324 = vpop.f32.mrf.mxu0
      %v4325 = vadd.f32 %v4236, %v4324
      %v4326 = vpop.f32.mrf.mxu0
      %v4327 = vadd.f32 %v4238, %v4326
      %4328 = vmatmul.bf16.gmra.mxu0 %v3903
      %v4329 = vpop.f32.mrf.mxu0
      %v4330 = vadd.f32 %v4241, %v4329
      %v4331 = vpop.f32.mrf.mxu0
      %v4332 = vadd.f32 %v4243, %v4331
      %4333 = vmatmul.bf16.gmra.mxu0 %v3906
      %v4334 = vpop.f32.mrf.mxu0
      %v4335 = vadd.f32 %v4246, %v4334
      %v4336 = vpop.f32.mrf.mxu0
      %v4337 = vadd.f32 %v4248, %v4336
      %4338 = vmatmul.bf16.gmra.mxu0 %v3909
      %v4339 = vpop.f32.mrf.mxu0
      %v4340 = vadd.f32 %v4251, %v4339
      %v4341 = vpop.f32.mrf.mxu0
      %v4342 = vadd.f32 %v4253, %v4341
      %4343 = vmatmul.bf16.gmra.mxu0 %v3912
      %v4344 = vpop.f32.mrf.mxu0
      %v4345 = vadd.f32 %v4256, %v4344
      %v4346 = vpop.f32.mrf.mxu0
      %v4347 = vadd.f32 %v4258, %v4346
      %4348 = vmatmul.bf16.gmra.mxu0 %v3915
      %v4349 = vpop.f32.mrf.mxu0
      %v4350 = vadd.f32 %v4261, %v4349
      %v4351 = vpop.f32.mrf.mxu0
      %v4352 = vadd.f32 %v4263, %v4351
      %4353 = vmatmul.bf16.gmra.mxu0 %v3918
      %v4354 = vpop.f32.mrf.mxu0
      %v4355 = vadd.f32 %v4266, %v4354
      %v4356 = vpop.f32.mrf.mxu0
      %v4357 = vadd.f32 %v4268, %v4356
      %4358 = vmatmul.bf16.gmra.mxu0 %v3921
      %v4359 = vpop.f32.mrf.mxu0
      %v4360 = vadd.f32 %v4271, %v4359
      %v4361 = vpop.f32.mrf.mxu0
      %v4362 = vadd.f32 %v4273, %v4361
      %4363 = vmatmul.bf16.gmra.mxu0 %v3924
      %v4364 = vpop.f32.mrf.mxu0
      %v4365 = vadd.f32 %v4276, %v4364
      %v4366 = vpop.f32.mrf.mxu0
      %v4367 = vadd.f32 %v4278, %v4366
      %4368 = vmatmul.bf16.gmra.mxu0 %v3927
      %v4369 = vpop.f32.mrf.mxu0
      %v4370 = vadd.f32 %v4281, %v4369
      %v4371 = vpop.f32.mrf.mxu0
      %v4372 = vadd.f32 %v4283, %v4371
      %4373 = vdwg.mxu0
      %v4374 = vmax.f32 %v4295, 0.0
      %v4375 = vmax.f32 %v4297, 0.0
      %v4376 = vmax.f32 %v4300, 0.0
      %v4377 = vmax.f32 %v4302, 0.0
      %v4378 = vmax.f32 %v4305, 0.0
      %v4379 = vmax.f32 %v4307, 0.0
      %v4380 = vmax.f32 %v4310, 0.0
      %v4381 = vmax.f32 %v4312, 0.0
      %v4382 = vmax.f32 %v4315, 0.0
      %v4383 = vmax.f32 %v4317, 0.0
      %v4384 = vmax.f32 %v4320, 0.0
      %v4385 = vmax.f32 %v4322, 0.0
      %v4386 = vmax.f32 %v4325, 0.0
      %v4387 = vmax.f32 %v4327, 0.0
      %v4388 = vmax.f32 %v4330, 0.0
      %v4389 = vmax.f32 %v4332, 0.0
      %v4390 = vmax.f32 %v4335, 0.0
      %v4391 = vmax.f32 %v4337, 0.0
      %v4392 = vmax.f32 %v4340, 0.0
      %v4393 = vmax.f32 %v4342, 0.0
      %v4394 = vmax.f32 %v4345, 0.0
      %v4395 = vmax.f32 %v4347, 0.0
      %v4396 = vmax.f32 %v4350, 0.0
      %v4397 = vmax.f32 %v4352, 0.0
      %v4398 = vmax.f32 %v4355, 0.0
      %v4399 = vmax.f32 %v4357, 0.0
      %v4400 = vmax.f32 %v4360, 0.0
      %v4401 = vmax.f32 %v4362, 0.0
      %v4402 = vmax.f32 %v4365, 0.0
      %v4403 = vmax.f32 %v4367, 0.0
      %v4404 = vmax.f32 %v4370, 0.0
      %v4405 = vmax.f32 %v4372, 0.0
      %v4406 = vpack.c.bf16 %v4374, %v4374
      %v4407 = vpack.c.bf16 %v4375, %v4375
      %v4408 = vpack.c.bf16 %v4376, %v4376
      %v4409 = vpack.c.bf16 %v4377, %v4377
      %v4410 = vpack.c.bf16 %v4378, %v4378
      %v4411 = vpack.c.bf16 %v4379, %v4379
      %v4412 = vpack.c.bf16 %v4380, %v4380
      %v4413 = vpack.c.bf16 %v4381, %v4381
      %v4414 = vpack.c.bf16 %v4382, %v4382
      %v4415 = vpack.c.bf16 %v4383, %v4383
      %v4416 = vpack.c.bf16 %v4384, %v4384
      %v4417 = vpack.c.bf16 %v4385, %v4385
      %v4418 = vpack.c.bf16 %v4386, %v4386
      %v4419 = vpack.c.bf16 %v4387, %v4387
      %v4420 = vpack.c.bf16 %v4388, %v4388
      %v4421 = vpack.c.bf16 %v4389, %v4389
      %v4422 = vpack.c.bf16 %v4390, %v4390
      %v4423 = vpack.c.bf16 %v4391, %v4391
      %v4424 = vpack.c.bf16 %v4392, %v4392
      %v4425 = vpack.c.bf16 %v4393, %v4393
      %v4426 = vpack.c.bf16 %v4394, %v4394
      %v4427 = vpack.c.bf16 %v4395, %v4395
      %v4428 = vpack.c.bf16 %v4396, %v4396
      %v4429 = vpack.c.bf16 %v4397, %v4397
      %v4430 = vpack.c.bf16 %v4398, %v4398
      %v4431 = vpack.c.bf16 %v4399, %v4399
      %v4432 = vpack.c.bf16 %v4400, %v4400
      %v4433 = vpack.c.bf16 %v4401, %v4401
      %v4434 = vpack.c.bf16 %v4402, %v4402
      %v4435 = vpack.c.bf16 %v4403, %v4403
      %v4436 = vpack.c.bf16 %v4404, %v4404
      %v4437 = vpack.c.bf16 %v4405, %v4405
      %vm4438 = vcmask 519168
      %4439 = vst.msk [vmem:[%s285] sm:$0xf] %vm4438, %v4406
      %4440 = vst.msk [vmem:[%s285 + $0x4] sm:$0xf] %vm4438, %v4407
      %4441 = vst.msk [vmem:[%s285 + $0x8] sm:$0xf] %vm4438, %v4408
      %4442 = vst.msk [vmem:[%s285 + $0xc] sm:$0xf] %vm4438, %v4409
      %4443 = vst.msk [vmem:[%s285 + $0x10] sm:$0xf] %vm4438, %v4410
      %4444 = vst.msk [vmem:[%s285 + $0x14] sm:$0xf] %vm4438, %v4411
      %4445 = vst.msk [vmem:[%s285 + $0x18] sm:$0xf] %vm4438, %v4412
      %4446 = vst.msk [vmem:[%s285 + $0x1c] sm:$0xf] %vm4438, %v4413
      %4447 = vst.msk [vmem:[%s285 + $0x20] sm:$0xf] %vm4438, %v4414
      %4448 = vst.msk [vmem:[%s285 + $0x24] sm:$0xf] %vm4438, %v4415
      %4449 = vst.msk [vmem:[%s285 + $0x28] sm:$0xf] %vm4438, %v4416
      %4450 = vst.msk [vmem:[%s285 + $0x2c] sm:$0xf] %vm4438, %v4417
      %4451 = vst.msk [vmem:[%s285 + $0x30] sm:$0xf] %vm4438, %v4418
      %4452 = vst.msk [vmem:[%s285 + $0x34] sm:$0xf] %vm4438, %v4419
      %4453 = vst.msk [vmem:[%s285 + $0x38] sm:$0xf] %vm4438, %v4420
      %4454 = vst.msk [vmem:[%s285 + $0x3c] sm:$0xf] %vm4438, %v4421
      %4455 = vst.msk [vmem:[%s285 + $0x40] sm:$0xf] %vm4438, %v4422
      %4456 = vst.msk [vmem:[%s285 + $0x44] sm:$0xf] %vm4438, %v4423
      %4457 = vst.msk [vmem:[%s285 + $0x48] sm:$0xf] %vm4438, %v4424
      %4458 = vst.msk [vmem:[%s285 + $0x4c] sm:$0xf] %vm4438, %v4425
      %4459 = vst.msk [vmem:[%s285 + $0x50] sm:$0xf] %vm4438, %v4426
      %4460 = vst.msk [vmem:[%s285 + $0x54] sm:$0xf] %vm4438, %v4427
      %4461 = vst.msk [vmem:[%s285 + $0x58] sm:$0xf] %vm4438, %v4428
      %4462 = vst.msk [vmem:[%s285 + $0x5c] sm:$0xf] %vm4438, %v4429
      %4463 = vst.msk [vmem:[%s285 + $0x60] sm:$0xf] %vm4438, %v4430
      %4464 = vst.msk [vmem:[%s285 + $0x64] sm:$0xf] %vm4438, %v4431
      %4465 = vst.msk [vmem:[%s285 + $0x68] sm:$0xf] %vm4438, %v4432
      %4466 = vst.msk [vmem:[%s285 + $0x6c] sm:$0xf] %vm4438, %v4433
      %4467 = vst.msk [vmem:[%s285 + $0x70] sm:$0xf] %vm4438, %v4434
      %4468 = vst.msk [vmem:[%s285 + $0x74] sm:$0xf] %vm4438, %v4435
      %4469 = vst.msk [vmem:[%s285 + $0x78] sm:$0xf] %vm4438, %v4436
      %4470 = vst.msk [vmem:[%s285 + $0x7c] sm:$0xf] %vm4438, %v4437
      %s4471 = smul.u32 4, %s18
      %p4472 = scmp.lt.s32.totalorder %s4471, 7
      %s4473 = scalar_select %p4472, %s4471, 7
      %s4474 = smul.addr %s4473, 8
      %s4475 = smul.addr %s4474, 4
      %s4476 = scalar_lea.vmem %s7, %s4475
      // Predicated region
      $region49: #{go_nn_forward.2} parent=47 // pred_check
        %p4477 = pneg %p188
      $region50: #{go_nn_forward.2} parent=47 // pred_check_branch
        %4479 = sbr.rel (%p4477) target = $region52
      $region51: #{go_nn_forward.2} parent=47 // pred_region
        %s4480 = smul.u32 4, %s18
      $region52: #{go_nn_forward.2} parent=47 // pred_fallthru
        _
    $region48: #{go_nn_forward.2} parent=5 // pred_fallthru
      _
    %p4481 = scmp.le.s32.totalorder 2, %s13
    // Predicated region
    $region53: #{go_nn_forward.2} parent=5 // pred_check
      %p4482 = pneg %p4481
    $region54: #{go_nn_forward.2} parent=5 // pred_check_branch
      %4484 = sbr.rel (%p4482) target = $region56
    $region55: #{go_nn_forward.2} parent=5 // pred_region
      %s4485 = ssub.s32 %s13, 2
      // Predicated region
      $region57: #{go_nn_forward.2} parent=55 // pred_check
        %p4486 = pneg %p194
      $region58: #{go_nn_forward.2} parent=55 // pred_check_branch
        %4488 = sbr.rel (%p4486) target = $region60
      $region59: #{go_nn_forward.2} parent=55 // pred_region
        %s4489 = smul.u32 4, %s19
        %p4490 = scmp.lt.s32.totalorder %s4489, 7
        %s4491 = scalar_select %p4490, %s4489, 7
        %s4492 = smul.addr %s4491, 8
        %s4493 = smul.addr %s4492, 4
        %s4494 = scalar_lea.vmem %s7, %s4493
      $region60: #{go_nn_forward.2} parent=55 // pred_fallthru
        _
    $region56: #{go_nn_forward.2} parent=5 // pred_fallthru
      _
  $region6: #{go_nn_forward.2} parent=0 // loop_footer
    %s17 = sadd.s32 1, %s13
  $region7: #{go_nn_forward.2} parent=0 // loop_footer_branch
    %12 = sbr.rel target = $region3
  $region8: #{go_nn_forward.2} parent=0 // loop_exit
    _

</llo_original>
